<compile_context>
chip_gen: v5e
topology: v5e:2x2
jax: 0.10.0
libtpu: 0.0.40
codegen_flags: <defaults>
</compile_context>

<pallas_src>
import functools
import math

import jax
import jax.numpy as jnp
from jax.experimental import pallas as pl
from jax.experimental.pallas import tpu as pltpu


# ---------------------------------------------------------------------------
# In-kernel math helpers
# ---------------------------------------------------------------------------
_GELU_C = math.sqrt(2.0 / math.pi)


def _gelu(x):
    # tanh-approximate GELU: the transcendental goes to the EUP (idle slot),
    # leaving only ~8 VALU ops per element on the critical path.
    return 0.5 * x * (1.0 + jnp.tanh(_GELU_C * (x + 0.044715 * (x * x * x))))


def _sigmoid(x):
    # Clamp so exp(-x) cannot overflow to inf before the approximate
    # reciprocal (EUP) — keeps the gate finite for any input magnitude.
    z = jnp.exp(-jnp.clip(x, -30.0, 30.0))
    return pl.reciprocal(1.0 + z, approx=True)


def _dwconv(act, w_ref, b_ref, k, dil, rmask_ref, cmask_ref, W, L):
    """Depthwise k x k 'same' conv (dilation dil) on a (Cx, L) f32 tile.

    The lane axis packs TB samples of HW lanes each.  Loop order: column taps
    outer (one column roll + column mask live at a time), k row accumulators
    inner; a single row roll + row mask per row offset at the end.  Total XLU
    rolls: 2*(k-1) instead of ~k^2, and live tiles are bounded to
    {act, one column-shifted copy, k row accumulators, output}.

    Bit-identical to the naive per-tap form: the per-channel tap weights are
    constant along lanes and the column mask depends only on the column index
    (invariant under row rolls, which shift by multiples of W lanes).
    """
    w_taps = w_ref[...]                      # (Cx, k*k), tap index = ki*k + kj
    pad = dil * (k - 1) // 2

    row_acc = [None] * k
    for kj in range(k):
        dj = dil * kj - pad
        win = act if dj == 0 else pltpu.roll(act, (-dj) % L, axis=1)
        win = cmask_ref[kj:kj + 1, :] * win              # column validity
        for ki in range(k):
            tap = ki * k + kj
            term = w_taps[:, tap:tap + 1] * win
            row_acc[ki] = term if row_acc[ki] is None else row_acc[ki] + term

    out = None
    for ki in range(k):
        di = dil * ki - pad
        src = row_acc[ki]
        rolled = src if di == 0 else pltpu.roll(src, (-di * W) % L, axis=1)
        masked = rmask_ref[ki:ki + 1, :] * rolled        # row validity
        out = masked if out is None else out + masked
    return out + b_ref[...]


# ---------------------------------------------------------------------------
# Kernel
# ---------------------------------------------------------------------------
def _tau_kernel(x_ref, expand_ref,
                rm5_ref, cm5_ref, rm7_ref, cm7_ref, rm3_ref, cm3_ref,
                w_p1_ref, b_p1_ref,
                w_c0_ref, b_c0_ref,
                w_cs_ref, b_cs_ref,
                w_c1_ref, b_c1_ref,
                w_se1_ref, w_se2_ref,
                w_p2_ref, res_s_ref, res_b_ref,
                w_f1_ref, b_f1_ref,
                w_dw_ref, b_dw_ref,
                w_f2_ref, b_f2_ref,
                o_ref,
                *, W, L, inv_hw):
    x = x_ref[...].astype(jnp.float32)                        # (C, L)

    def mm(w_ref, act, b_ref=None):
        # 1x1 conv == (Cout, Cin) @ (Cin, L): bf16 MXU feeds, f32 accumulate.
        out = jnp.dot(w_ref[...], act.astype(jnp.bfloat16),
                      preferred_element_type=jnp.float32)
        return out if b_ref is None else out + b_ref[...]

    # ---- branch 1: x1 = x + ls1 * TemporalAttention(BN1(x)) ----
    # BN1 is folded into proj_1 (w_p1/b_p1) and into res_s/res_b below.
    y = _gelu(mm(w_p1_ref, x, b_p1_ref))                      # proj_1 + GELU
    u = y
    attn = _dwconv(y, w_c0_ref, b_c0_ref, 5, 1, rm5_ref, cm5_ref, W, L)      # dw 5x5
    attn = _dwconv(attn, w_cs_ref, b_cs_ref, 7, 3, rm7_ref, cm7_ref, W, L)   # dw 7x7, dil 3
    f_x = mm(w_c1_ref, attn, b_c1_ref)                        # 1x1

    # SE gate: per-sample global average pool + 2-layer MLP + sigmoid.
    expand = expand_ref[...]                                  # (TP, L) 0/1 bf16
    se = jax.lax.dot_general(                                 # (C, TP) per-sample sums
        y.astype(jnp.bfloat16), expand, (((1,), (1,)), ((), ())),
        preferred_element_type=jnp.float32) * inv_hw
    h_se = jnp.maximum(jnp.dot(w_se1_ref[...], se,
                               preferred_element_type=jnp.float32), 0.0)     # (SE_P, TP)
    gate = _sigmoid(jnp.dot(w_se2_ref[...], h_se,
                            preferred_element_type=jnp.float32))             # (C, TP)
    gate_full = jnp.dot(gate.astype(jnp.bfloat16), expand,
                        preferred_element_type=jnp.float32)                  # (C, L)

    tam = gate_full * f_x * u
    # x1 = x + ls1*(proj_2(tam) + b_p2 + BN1(x))  ==  res_s*x + w_p2'@tam + res_b
    x1 = res_s_ref[...] * x + mm(w_p2_ref, tam) + res_b_ref[...]

    # ---- branch 2: x2 = x1 + ls2 * MixMlp(BN2(x1)) ----
    # BN2 folded into fc1, layer_scale_2 folded into fc2.
    hdn = mm(w_f1_ref, x1, b_f1_ref)                          # fc1 (C -> 4C)
    hdn = _gelu(_dwconv(hdn, w_dw_ref, b_dw_ref, 3, 1, rm3_ref, cm3_ref, W, L))
    x2 = x1 + mm(w_f2_ref, hdn, b_f2_ref)                     # fc2 (4C -> C)

    # ---- outer layerNormFeedForward residual: out = x + TAUSubBlock(x) ----
    o_ref[...] = (x + x2).astype(o_ref.dtype)


# ---------------------------------------------------------------------------
# Parameters (same layout / semantics as the previous revision)
# ---------------------------------------------------------------------------
def make_params(key, d_model):
    C = d_model
    hid = 4 * C
    red = max(C // 16, 4)
    se_h = max(C // red, 1)
    keys = list(jax.random.split(key, 32))

    def rnd(shape, scale=0.1):
        return scale * jax.random.normal(keys.pop(0), shape, dtype=jnp.float32)

    def bn_affine():  # fold eval-mode BatchNorm2d into scale/shift
        w_ = 1.0 + rnd((C, 1))
        b_ = rnd((C, 1))
        running_mean = rnd((C, 1), 0.05)
        running_var = 1.0 + jnp.abs(rnd((C, 1)))
        scale = w_ / jnp.sqrt(running_var + 1e-5)
        shift = b_ - running_mean * scale
        return scale, shift

    bn1_s, bn1_b = bn_affine()
    bn2_s, bn2_b = bn_affine()
    params = [
        bn1_s, bn1_b,
        rnd((C, C)), rnd((C, 1)),                # TemporalAttention.proj_1 (1x1)
        rnd((C, 25)), rnd((C, 1)),               # TAM.conv0 (dw 5x5), flattened taps
        rnd((C, 49)), rnd((C, 1)),               # TAM.conv_spatial (dw 7x7, dil 3)
        rnd((C, C)), rnd((C, 1)),                # TAM.conv1 (1x1)
        rnd((C, se_h)), rnd((C, se_h)),          # TAM.fc SE (Linear1^T, Linear2), no bias
        rnd((C, C)), rnd((C, 1)),                # TemporalAttention.proj_2 (1x1)
        1e-2 * jnp.ones((C, 1), jnp.float32),    # layer_scale_1
        bn2_s, bn2_b,
        rnd((hid, C)), rnd((hid, 1)),            # MixMlp.fc1 (1x1)
        rnd((hid, 9)), rnd((hid, 1)),            # MixMlp.dwconv (dw 3x3)
        rnd((C, hid)), rnd((C, 1)),              # MixMlp.fc2 (1x1)
        1e-2 * jnp.ones((C, 1), jnp.float32),    # layer_scale_2
    ]
    return params


# ---------------------------------------------------------------------------
# Tiling / generation heuristics
# ---------------------------------------------------------------------------
def _hw_config():
    try:
        kind = jax.devices()[0].device_kind.lower()
    except Exception:
        kind = ""
    if ("v7" in kind) or ("tpu7" in kind):
        # v7x: 2 TensorCores, 64 MiB VMEM -> keep >=4 parallel grid steps (>=2
        # per core for DMA pipelining), smaller lane tiles, explicit VMEM cap.
        return dict(target_lanes=1024, min_steps=4, vmem_limit=48 << 20)
    # v5e / v6e: single TensorCore, 128 MiB VMEM -> no forced grid split and
    # larger lane tiles (bounded by the dwconv live-tile estimate).
    return dict(target_lanes=4096, min_steps=1, vmem_limit=64 << 20)


def _vmem_live_bytes(C, L):
    # Rough f32 live-intermediate bound per grid step: ~14 (C, L) tiles in the
    # attention branch (incl. the k+2 live tiles of the 7x7 dwconv) plus ~8
    # (4C, L) tiles for MixMlp fc1 / 3x3 dwconv / fc2, plus the double-buffered
    # input/output blocks.
    return 4 * L * (14 * C + 8 * 4 * C) + 4 * 4 * C * L


def _pick_tb(B, HW, C, cfg):
    """Number of samples batched onto the lane axis per grid step."""
    cands = [tb for tb in range(1, B + 1)
             if B % tb == 0 and (tb * HW) % 128 == 0]
    if not cands:
        raise ValueError("need a divisor TB of b*c with TB*h*w % 128 == 0")
    budget = int(0.75 * cfg["vmem_limit"])

    def fits(tb):
        L = tb * HW
        return L <= cfg["target_lanes"] and _vmem_live_bytes(C, L) <= budget

    good = [tb for tb in cands if fits(tb) and B // tb >= cfg["min_steps"]]
    if good:
        return max(good)
    good = [tb for tb in cands if fits(tb)]
    return max(good) if good else min(cands)


def _edge_masks(k, dil, H, W, L):
    HW = H * W
    pos = jnp.arange(L, dtype=jnp.int32)
    row = (pos % HW) // W
    col = pos % W
    pad = dil * (k - 1) // 2
    offs = [dil * t - pad for t in range(k)]
    rm = jnp.stack([((row + d >= 0) & (row + d < H)).astype(jnp.float32) for d in offs])
    cm = jnp.stack([((col + d >= 0) & (col + d < W)).astype(jnp.float32) for d in offs])
    return rm, cm                                             # (k, L) each


# ---------------------------------------------------------------------------
# Wrapper
# ---------------------------------------------------------------------------
def layer_norm_feed_forward(x, params):
    b, c, t, h, w = x.shape
    C, H, W = t, h, w
    HW = H * W
    B = b * c
    cfg = _hw_config()
    TB = _pick_tb(B, HW, C, cfg)
    L = TB * HW

    # (b,c,t,h,w) -> (C, B*HW): channels on sublanes, samples*spatial on lanes.
    # TODO(synk): review item 6 — replace this transpose pair with a batched
    # (TB, C, HW) in-kernel layout to save 4 HBM passes; deferred restructure.
    xr = x.reshape(B, C, HW).transpose(1, 0, 2).reshape(C, B * HW)

    # Per-sample pool / broadcast matrix (0/1), padded to >=8 rows for the MXU.
    TP = max(8, -(-TB // 8) * 8)
    sample = jnp.arange(L, dtype=jnp.int32) // HW
    expand = (sample[None, :] == jnp.arange(TP, dtype=jnp.int32)[:, None]
              ).astype(jnp.bfloat16)                          # (TP, L)

    # Depthwise-conv boundary masks (identical for every lane block).
    rm5, cm5 = _edge_masks(5, 1, H, W, L)
    rm7, cm7 = _edge_masks(7, 3, H, W, L)
    rm3, cm3 = _edge_masks(3, 1, H, W, L)

    (bn1_s, bn1_b, w_p1, b_p1, w_c0, b_c0, w_cs, b_cs, w_c1, b_c1,
     w_se1_t, w_se2, w_p2, b_p2, ls1, bn2_s, bn2_b,
     w_f1, b_f1, w_dw, b_dw, w_f2, b_f2, ls2) = params

    # ---- host-side constant folding (review item 7) ----
    # proj_1(BN1(x)) == (w_p1 * bn1_s^T) @ x + (b_p1 + w_p1 @ bn1_b)
    w_p1_f = w_p1 * bn1_s[:, 0][None, :]
    b_p1_f = b_p1 + w_p1 @ bn1_b
    # x1 = x + ls1*(proj_2(tam) + b_p2 + BN1(x))
    #    = (1 + ls1*bn1_s)*x + (ls1*w_p2)@tam + ls1*(b_p2 + bn1_b)
    w_p2_f = ls1 * w_p2
    res_s = 1.0 + ls1 * bn1_s
    res_b = ls1 * (b_p2 + bn1_b)
    # fc1(BN2(x1)) == (w_f1 * bn2_s^T) @ x1 + (b_f1 + w_f1 @ bn2_b)
    w_f1_f = w_f1 * bn2_s[:, 0][None, :]
    b_f1_f = b_f1 + w_f1 @ bn2_b
    # x2 = x1 + ls2*fc2(hdn) == x1 + (ls2*w_f2)@hdn + ls2*b_f2
    w_f2_f = ls2 * w_f2
    b_f2_f = ls2 * b_f2

    bf = lambda a: a.astype(jnp.bfloat16)     # bf16 feeds for the 1x1-conv MXU matmuls
    se_h = w_se1_t.shape[1]
    SE_P = max(8, -(-se_h // 8) * 8)
    w_se1_k = jnp.zeros((SE_P, C), jnp.float32).at[:se_h, :].set(w_se1_t.T)
    w_se2_k = jnp.zeros((C, SE_P), jnp.float32).at[:, :se_h].set(w_se2)

    kparams = [bf(w_p1_f), b_p1_f,
               w_c0, b_c0,
               w_cs, b_cs,
               bf(w_c1), b_c1,
               w_se1_k, w_se2_k,
               bf(w_p2_f), res_s, res_b,
               bf(w_f1_f), b_f1_f,
               w_dw, b_dw,
               bf(w_f2_f), b_f2_f]

    kernel = functools.partial(_tau_kernel, W=W, L=L, inv_hw=1.0 / HW)

    aux = [expand, rm5, cm5, rm7, cm7, rm3, cm3]
    in_specs = ([pl.BlockSpec((C, L), lambda i: (0, i))]
                + [pl.BlockSpec(a.shape, lambda i: (0, 0)) for a in aux]
                + [pl.BlockSpec(p.shape, lambda i: (0, 0)) for p in kparams])

    out = pl.pallas_call(
        kernel,
        grid=(B // TB,),
        in_specs=in_specs,
        out_specs=pl.BlockSpec((C, L), lambda i: (0, i)),
        out_shape=jax.ShapeDtypeStruct((C, B * HW), x.dtype),
        compiler_params=pltpu.CompilerParams(
            dimension_semantics=("parallel",),
            vmem_limit_bytes=cfg["vmem_limit"]),
    )(xr, *aux, *kparams)

    return out.reshape(C, B, HW).transpose(1, 0, 2).reshape(b, c, t, h, w)


# ---------------------------------------------------------------------------
# Pure-JAX reference of the eval-mode forward pass (verification only)
# ---------------------------------------------------------------------------
def _reference(x, params):
    (bn1_s, bn1_b, w_p1, b_p1, w_c0, b_c0, w_cs, b_cs, w_c1, b_c1,
     w_se1_t, w_se2, w_p2, b_p2, ls1, bn2_s, bn2_b,
     w_f1, b_f1, w_dw, b_dw, w_f2, b_f2, ls2) = params
    b, c, t, h, w = x.shape
    y = x.reshape(b * c, t, h, w)

    def cvec(v):  # (C,1) -> (1,C,1,1)
        return v[:, 0][None, :, None, None]

    def conv1x1(a, wm, bm):
        return jnp.einsum('oc,bchw->bohw', wm, a) + cvec(bm)

    def dw(a, wt, bt, k, dil):
        Cx = a.shape[1]
        wk = wt.reshape(Cx, 1, k, k)
        pad = dil * (k - 1) // 2
        out = jax.lax.conv_general_dilated(
            a, wk, window_strides=(1, 1), padding=((pad, pad), (pad, pad)),
            rhs_dilation=(dil, dil), dimension_numbers=('NCHW', 'OIHW', 'NCHW'),
            feature_group_count=Cx)
        return out + cvec(bt)

    def gelu(v):
        return 0.5 * v * (1.0 + jax.scipy.special.erf(v / jnp.sqrt(2.0)))

    xn = y * cvec(bn1_s) + cvec(bn1_b)
    sc = xn
    z = gelu(conv1x1(xn, w_p1, b_p1))
    a0 = dw(z, w_c0, b_c0, 5, 1)
    a1 = dw(a0, w_cs, b_cs, 7, 3)
    f_x = conv1x1(a1, w_c1, b_c1)
    se = jnp.mean(z, axis=(2, 3))                      # (B, C)
    se = jnp.maximum(se @ w_se1_t, 0.0)                # Linear1 (weight = w_se1_t.T)
    se = jax.nn.sigmoid(se @ w_se2.T)                  # Linear2
    tam = se[:, :, None, None] * f_x * z
    attn_out = conv1x1(tam, w_p2, b_p2) + sc
    x1 = y + cvec(ls1) * attn_out
    x2n = x1 * cvec(bn2_s) + cvec(bn2_b)
    hdn = conv1x1(x2n, w_f1, b_f1)
    hdn = gelu(dw(hdn, w_dw, b_dw, 3, 1))
    mlp_out = conv1x1(hdn, w_f2, b_f2)
    x2 = x1 + cvec(ls2) * mlp_out
    return x + x2.reshape(b, c, t, h, w)


if __name__ == "__main__":
    b, c, t, h, w = 2, 4, 8, 16, 16         # d_model == t == 8
    x = jax.random.normal(jax.random.PRNGKey(0), (b, c, t, h, w), dtype=jnp.float32)
    params = make_params(jax.random.PRNGKey(42), t)

    out = jax.block_until_ready(layer_norm_feed_forward(x, params))
    ref = jax.block_until_ready(_reference(x, params))

    assert out.shape == x.shape and out.dtype == x.dtype
    assert bool(jnp.all(jnp.isfinite(out)))
    max_err = float(jnp.max(jnp.abs(out - ref)))
    assert max_err < 1e-2, f"mismatch vs reference: max_err={max_err}"
    print("KERNEL_OK")
</pallas_src>

<mosaic_0001>
module attributes {stable_mosaic.version = 11 : i64} {
  func.func @_tau_kernel(%arg0: i32, %arg1: memref<8x2048xf32, #tpu.memory_space<vmem>>, %arg2: memref<8x2048xbf16, #tpu.memory_space<vmem>>, %arg3: memref<5x2048xf32, #tpu.memory_space<vmem>>, %arg4: memref<5x2048xf32, #tpu.memory_space<vmem>>, %arg5: memref<7x2048xf32, #tpu.memory_space<vmem>>, %arg6: memref<7x2048xf32, #tpu.memory_space<vmem>>, %arg7: memref<3x2048xf32, #tpu.memory_space<vmem>>, %arg8: memref<3x2048xf32, #tpu.memory_space<vmem>>, %arg9: memref<8x8xbf16, #tpu.memory_space<vmem>>, %arg10: memref<8x1xf32, #tpu.memory_space<vmem>>, %arg11: memref<8x25xf32, #tpu.memory_space<vmem>>, %arg12: memref<8x1xf32, #tpu.memory_space<vmem>>, %arg13: memref<8x49xf32, #tpu.memory_space<vmem>>, %arg14: memref<8x1xf32, #tpu.memory_space<vmem>>, %arg15: memref<8x8xbf16, #tpu.memory_space<vmem>>, %arg16: memref<8x1xf32, #tpu.memory_space<vmem>>, %arg17: memref<8x8xf32, #tpu.memory_space<vmem>>, %arg18: memref<8x8xf32, #tpu.memory_space<vmem>>, %arg19: memref<8x8xbf16, #tpu.memory_space<vmem>>, %arg20: memref<8x1xf32, #tpu.memory_space<vmem>>, %arg21: memref<8x1xf32, #tpu.memory_space<vmem>>, %arg22: memref<32x8xbf16, #tpu.memory_space<vmem>>, %arg23: memref<32x1xf32, #tpu.memory_space<vmem>>, %arg24: memref<32x9xf32, #tpu.memory_space<vmem>>, %arg25: memref<32x1xf32, #tpu.memory_space<vmem>>, %arg26: memref<8x32xbf16, #tpu.memory_space<vmem>>, %arg27: memref<8x1xf32, #tpu.memory_space<vmem>>, %arg28: memref<8x2048xf32, #tpu.memory_space<vmem>>) attributes {dimension_semantics = [#tpu.dimension_semantics<parallel>], iteration_bounds = array<i64: 1>, scalar_prefetch = 0 : i64, scratch_operands = 0 : i64, tpu.core_type = #tpu.core_type<tc>, window_params = [{transform_indices = @transform_0, window_bounds = array<i64: 8, 2048>}, {pipeline_mode = #tpu.pipeline_mode<synchronous>, transform_indices = @transform_1, window_bounds = array<i64: 8, 2048>}, {pipeline_mode = #tpu.pipeline_mode<synchronous>, transform_indices = @transform_2, window_bounds = array<i64: 5, 2048>}, {pipeline_mode = #tpu.pipeline_mode<synchronous>, transform_indices = @transform_3, window_bounds = array<i64: 5, 2048>}, {pipeline_mode = #tpu.pipeline_mode<synchronous>, transform_indices = @transform_4, window_bounds = array<i64: 7, 2048>}, {pipeline_mode = #tpu.pipeline_mode<synchronous>, transform_indices = @transform_5, window_bounds = array<i64: 7, 2048>}, {pipeline_mode = #tpu.pipeline_mode<synchronous>, transform_indices = @transform_6, window_bounds = array<i64: 3, 2048>}, {pipeline_mode = #tpu.pipeline_mode<synchronous>, transform_indices = @transform_7, window_bounds = array<i64: 3, 2048>}, {pipeline_mode = #tpu.pipeline_mode<synchronous>, transform_indices = @transform_8, window_bounds = array<i64: 8, 8>}, {pipeline_mode = #tpu.pipeline_mode<synchronous>, transform_indices = @transform_9, window_bounds = array<i64: 8, 1>}, {pipeline_mode = #tpu.pipeline_mode<synchronous>, transform_indices = @transform_10, window_bounds = array<i64: 8, 25>}, {pipeline_mode = #tpu.pipeline_mode<synchronous>, transform_indices = @transform_11, window_bounds = array<i64: 8, 1>}, {pipeline_mode = #tpu.pipeline_mode<synchronous>, transform_indices = @transform_12, window_bounds = array<i64: 8, 49>}, {pipeline_mode = #tpu.pipeline_mode<synchronous>, transform_indices = @transform_13, window_bounds = array<i64: 8, 1>}, {pipeline_mode = #tpu.pipeline_mode<synchronous>, transform_indices = @transform_14, window_bounds = array<i64: 8, 8>}, {pipeline_mode = #tpu.pipeline_mode<synchronous>, transform_indices = @transform_15, window_bounds = array<i64: 8, 1>}, {pipeline_mode = #tpu.pipeline_mode<synchronous>, transform_indices = @transform_16, window_bounds = array<i64: 8, 8>}, {pipeline_mode = #tpu.pipeline_mode<synchronous>, transform_indices = @transform_17, window_bounds = array<i64: 8, 8>}, {pipeline_mode = #tpu.pipeline_mode<synchronous>, transform_indices = @transform_18, window_bounds = array<i64: 8, 8>}, {pipeline_mode = #tpu.pipeline_mode<synchronous>, transform_indices = @transform_19, window_bounds = array<i64: 8, 1>}, {pipeline_mode = #tpu.pipeline_mode<synchronous>, transform_indices = @transform_20, window_bounds = array<i64: 8, 1>}, {pipeline_mode = #tpu.pipeline_mode<synchronous>, transform_indices = @transform_21, window_bounds = array<i64: 32, 8>}, {pipeline_mode = #tpu.pipeline_mode<synchronous>, transform_indices = @transform_22, window_bounds = array<i64: 32, 1>}, {pipeline_mode = #tpu.pipeline_mode<synchronous>, transform_indices = @transform_23, window_bounds = array<i64: 32, 9>}, {pipeline_mode = #tpu.pipeline_mode<synchronous>, transform_indices = @transform_24, window_bounds = array<i64: 32, 1>}, {pipeline_mode = #tpu.pipeline_mode<synchronous>, transform_indices = @transform_25, window_bounds = array<i64: 8, 32>}, {pipeline_mode = #tpu.pipeline_mode<synchronous>, transform_indices = @transform_26, window_bounds = array<i64: 8, 1>}, {transform_indices = @transform_27, window_bounds = array<i64: 8, 2048>}]} {
    %c0 = arith.constant 0 : index
    %c0_0 = arith.constant 0 : index
    %0 = vector.load %arg1[%c0, %c0_0] : memref<8x2048xf32, #tpu.memory_space<vmem>>, vector<8x2048xf32>
    %c0_1 = arith.constant 0 : index
    %c0_2 = arith.constant 0 : index
    %1 = vector.load %arg9[%c0_1, %c0_2] : memref<8x8xbf16, #tpu.memory_space<vmem>>, vector<8x8xbf16>
    %2 = arith.truncf %0 : vector<8x2048xf32> to vector<8x2048xbf16>
    %cst = arith.constant dense<0.000000e+00> : vector<8x2048xf32>
    %3 = tpu.matmul %1, %2, %cst {dimension_numbers = #tpu.dot_dimension_numbers<[1], [0], [0], [1], [0, 0, 1, 1], [], []>} : vector<8x8xbf16>, vector<8x2048xbf16>, vector<8x2048xf32> -> vector<8x2048xf32>
    %c0_3 = arith.constant 0 : index
    %c0_4 = arith.constant 0 : index
    %4 = vector.load %arg10[%c0_3, %c0_4] : memref<8x1xf32, #tpu.memory_space<vmem>>, vector<8x1xf32>
    %5 = vector.broadcast %4 : vector<8x1xf32> to vector<8x2048xf32>
    %6 = arith.addf %3, %5 : vector<8x2048xf32>
    %cst_5 = arith.constant 5.000000e-01 : f32
    %7 = vector.broadcast %cst_5 : f32 to vector<8x2048xf32>
    %8 = arith.mulf %7, %6 : vector<8x2048xf32>
    %9 = arith.mulf %6, %6 : vector<8x2048xf32>
    %10 = arith.mulf %9, %6 : vector<8x2048xf32>
    %cst_6 = arith.constant 4.471500e-02 : f32
    %11 = vector.broadcast %cst_6 : f32 to vector<8x2048xf32>
    %12 = arith.mulf %11, %10 : vector<8x2048xf32>
    %13 = arith.addf %6, %12 : vector<8x2048xf32>
    %cst_7 = arith.constant 0.797884583 : f32
    %14 = vector.broadcast %cst_7 : f32 to vector<8x2048xf32>
    %15 = arith.mulf %14, %13 : vector<8x2048xf32>
    %16 = math.tanh %15 : vector<8x2048xf32>
    %cst_8 = arith.constant 1.000000e+00 : f32
    %17 = vector.broadcast %cst_8 : f32 to vector<8x2048xf32>
    %18 = arith.addf %17, %16 : vector<8x2048xf32>
    %19 = arith.mulf %8, %18 : vector<8x2048xf32>
    %c0_9 = arith.constant 0 : index
    %c0_10 = arith.constant 0 : index
    %20 = vector.load %arg11[%c0_9, %c0_10] : memref<8x25xf32, #tpu.memory_space<vmem>>, vector<8x25xf32>
    %c2_i32 = arith.constant 2 : i32
    %21 = tpu.dynamic_rotate %19 by %c2_i32 dim 1 : vector<8x2048xf32>, i32 -> vector<8x2048xf32>
    %c0_11 = arith.constant 0 : index
    %c0_12 = arith.constant 0 : index
    %22 = vector.load %arg4[%c0_11, %c0_12] : memref<5x2048xf32, #tpu.memory_space<vmem>>, vector<1x2048xf32>
    %23 = vector.broadcast %22 : vector<1x2048xf32> to vector<8x2048xf32>
    %24 = arith.mulf %23, %21 : vector<8x2048xf32>
    %25 = vector.extract_strided_slice %20 {offsets = [0, 0], sizes = [8, 1], strides = [1, 1]} : vector<8x25xf32> to vector<8x1xf32>
    %26 = vector.broadcast %25 : vector<8x1xf32> to vector<8x2048xf32>
    %27 = arith.mulf %26, %24 : vector<8x2048xf32>
    %28 = vector.extract_strided_slice %20 {offsets = [0, 5], sizes = [8, 1], strides = [1, 1]} : vector<8x25xf32> to vector<8x1xf32>
    %29 = vector.broadcast %28 : vector<8x1xf32> to vector<8x2048xf32>
    %30 = arith.mulf %29, %24 : vector<8x2048xf32>
    %31 = vector.extract_strided_slice %20 {offsets = [0, 10], sizes = [8, 1], strides = [1, 1]} : vector<8x25xf32> to vector<8x1xf32>
    %32 = vector.broadcast %31 : vector<8x1xf32> to vector<8x2048xf32>
    %33 = arith.mulf %32, %24 : vector<8x2048xf32>
    %34 = vector.extract_strided_slice %20 {offsets = [0, 15], sizes = [8, 1], strides = [1, 1]} : vector<8x25xf32> to vector<8x1xf32>
    %35 = vector.broadcast %34 : vector<8x1xf32> to vector<8x2048xf32>
    %36 = arith.mulf %35, %24 : vector<8x2048xf32>
    %37 = vector.extract_strided_slice %20 {offsets = [0, 20], sizes = [8, 1], strides = [1, 1]} : vector<8x25xf32> to vector<8x1xf32>
    %38 = vector.broadcast %37 : vector<8x1xf32> to vector<8x2048xf32>
    %39 = arith.mulf %38, %24 : vector<8x2048xf32>
    %c1_i32 = arith.constant 1 : i32
    %40 = tpu.dynamic_rotate %19 by %c1_i32 dim 1 : vector<8x2048xf32>, i32 -> vector<8x2048xf32>
    %c1 = arith.constant 1 : index
    %c0_13 = arith.constant 0 : index
    %41 = vector.load %arg4[%c1, %c0_13] : memref<5x2048xf32, #tpu.memory_space<vmem>>, vector<1x2048xf32>
    %42 = vector.broadcast %41 : vector<1x2048xf32> to vector<8x2048xf32>
    %43 = arith.mulf %42, %40 : vector<8x2048xf32>
    %44 = vector.extract_strided_slice %20 {offsets = [0, 1], sizes = [8, 1], strides = [1, 1]} : vector<8x25xf32> to vector<8x1xf32>
    %45 = vector.broadcast %44 : vector<8x1xf32> to vector<8x2048xf32>
    %46 = arith.mulf %45, %43 : vector<8x2048xf32>
    %47 = arith.addf %27, %46 : vector<8x2048xf32>
    %48 = vector.extract_strided_slice %20 {offsets = [0, 6], sizes = [8, 1], strides = [1, 1]} : vector<8x25xf32> to vector<8x1xf32>
    %49 = vector.broadcast %48 : vector<8x1xf32> to vector<8x2048xf32>
    %50 = arith.mulf %49, %43 : vector<8x2048xf32>
    %51 = arith.addf %30, %50 : vector<8x2048xf32>
    %52 = vector.extract_strided_slice %20 {offsets = [0, 11], sizes = [8, 1], strides = [1, 1]} : vector<8x25xf32> to vector<8x1xf32>
    %53 = vector.broadcast %52 : vector<8x1xf32> to vector<8x2048xf32>
    %54 = arith.mulf %53, %43 : vector<8x2048xf32>
    %55 = arith.addf %33, %54 : vector<8x2048xf32>
    %56 = vector.extract_strided_slice %20 {offsets = [0, 16], sizes = [8, 1], strides = [1, 1]} : vector<8x25xf32> to vector<8x1xf32>
    %57 = vector.broadcast %56 : vector<8x1xf32> to vector<8x2048xf32>
    %58 = arith.mulf %57, %43 : vector<8x2048xf32>
    %59 = arith.addf %36, %58 : vector<8x2048xf32>
    %60 = vector.extract_strided_slice %20 {offsets = [0, 21], sizes = [8, 1], strides = [1, 1]} : vector<8x25xf32> to vector<8x1xf32>
    %61 = vector.broadcast %60 : vector<8x1xf32> to vector<8x2048xf32>
    %62 = arith.mulf %61, %43 : vector<8x2048xf32>
    %63 = arith.addf %39, %62 : vector<8x2048xf32>
    %c2 = arith.constant 2 : index
    %c0_14 = arith.constant 0 : index
    %64 = vector.load %arg4[%c2, %c0_14] : memref<5x2048xf32, #tpu.memory_space<vmem>>, vector<1x2048xf32>
    %65 = vector.broadcast %64 : vector<1x2048xf32> to vector<8x2048xf32>
    %66 = arith.mulf %65, %19 : vector<8x2048xf32>
    %67 = vector.extract_strided_slice %20 {offsets = [0, 2], sizes = [8, 1], strides = [1, 1]} : vector<8x25xf32> to vector<8x1xf32>
    %68 = vector.broadcast %67 : vector<8x1xf32> to vector<8x2048xf32>
    %69 = arith.mulf %68, %66 : vector<8x2048xf32>
    %70 = arith.addf %47, %69 : vector<8x2048xf32>
    %71 = vector.extract_strided_slice %20 {offsets = [0, 7], sizes = [8, 1], strides = [1, 1]} : vector<8x25xf32> to vector<8x1xf32>
    %72 = vector.broadcast %71 : vector<8x1xf32> to vector<8x2048xf32>
    %73 = arith.mulf %72, %66 : vector<8x2048xf32>
    %74 = arith.addf %51, %73 : vector<8x2048xf32>
    %75 = vector.extract_strided_slice %20 {offsets = [0, 12], sizes = [8, 1], strides = [1, 1]} : vector<8x25xf32> to vector<8x1xf32>
    %76 = vector.broadcast %75 : vector<8x1xf32> to vector<8x2048xf32>
    %77 = arith.mulf %76, %66 : vector<8x2048xf32>
    %78 = arith.addf %55, %77 : vector<8x2048xf32>
    %79 = vector.extract_strided_slice %20 {offsets = [0, 17], sizes = [8, 1], strides = [1, 1]} : vector<8x25xf32> to vector<8x1xf32>
    %80 = vector.broadcast %79 : vector<8x1xf32> to vector<8x2048xf32>
    %81 = arith.mulf %80, %66 : vector<8x2048xf32>
    %82 = arith.addf %59, %81 : vector<8x2048xf32>
    %83 = vector.extract_strided_slice %20 {offsets = [0, 22], sizes = [8, 1], strides = [1, 1]} : vector<8x25xf32> to vector<8x1xf32>
    %84 = vector.broadcast %83 : vector<8x1xf32> to vector<8x2048xf32>
    %85 = arith.mulf %84, %66 : vector<8x2048xf32>
    %86 = arith.addf %63, %85 : vector<8x2048xf32>
    %c2047_i32 = arith.constant 2047 : i32
    %87 = tpu.dynamic_rotate %19 by %c2047_i32 dim 1 : vector<8x2048xf32>, i32 -> vector<8x2048xf32>
    %c3 = arith.constant 3 : index
    %c0_15 = arith.constant 0 : index
    %88 = vector.load %arg4[%c3, %c0_15] : memref<5x2048xf32, #tpu.memory_space<vmem>>, vector<1x2048xf32>
    %89 = vector.broadcast %88 : vector<1x2048xf32> to vector<8x2048xf32>
    %90 = arith.mulf %89, %87 : vector<8x2048xf32>
    %91 = vector.extract_strided_slice %20 {offsets = [0, 3], sizes = [8, 1], strides = [1, 1]} : vector<8x25xf32> to vector<8x1xf32>
    %92 = vector.broadcast %91 : vector<8x1xf32> to vector<8x2048xf32>
    %93 = arith.mulf %92, %90 : vector<8x2048xf32>
    %94 = arith.addf %70, %93 : vector<8x2048xf32>
    %95 = vector.extract_strided_slice %20 {offsets = [0, 8], sizes = [8, 1], strides = [1, 1]} : vector<8x25xf32> to vector<8x1xf32>
    %96 = vector.broadcast %95 : vector<8x1xf32> to vector<8x2048xf32>
    %97 = arith.mulf %96, %90 : vector<8x2048xf32>
    %98 = arith.addf %74, %97 : vector<8x2048xf32>
    %99 = vector.extract_strided_slice %20 {offsets = [0, 13], sizes = [8, 1], strides = [1, 1]} : vector<8x25xf32> to vector<8x1xf32>
    %100 = vector.broadcast %99 : vector<8x1xf32> to vector<8x2048xf32>
    %101 = arith.mulf %100, %90 : vector<8x2048xf32>
    %102 = arith.addf %78, %101 : vector<8x2048xf32>
    %103 = vector.extract_strided_slice %20 {offsets = [0, 18], sizes = [8, 1], strides = [1, 1]} : vector<8x25xf32> to vector<8x1xf32>
    %104 = vector.broadcast %103 : vector<8x1xf32> to vector<8x2048xf32>
    %105 = arith.mulf %104, %90 : vector<8x2048xf32>
    %106 = arith.addf %82, %105 : vector<8x2048xf32>
    %107 = vector.extract_strided_slice %20 {offsets = [0, 23], sizes = [8, 1], strides = [1, 1]} : vector<8x25xf32> to vector<8x1xf32>
    %108 = vector.broadcast %107 : vector<8x1xf32> to vector<8x2048xf32>
    %109 = arith.mulf %108, %90 : vector<8x2048xf32>
    %110 = arith.addf %86, %109 : vector<8x2048xf32>
    %c2046_i32 = arith.constant 2046 : i32
    %111 = tpu.dynamic_rotate %19 by %c2046_i32 dim 1 : vector<8x2048xf32>, i32 -> vector<8x2048xf32>
    %c4 = arith.constant 4 : index
    %c0_16 = arith.constant 0 : index
    %112 = vector.load %arg4[%c4, %c0_16] : memref<5x2048xf32, #tpu.memory_space<vmem>>, vector<1x2048xf32>
    %113 = vector.broadcast %112 : vector<1x2048xf32> to vector<8x2048xf32>
    %114 = arith.mulf %113, %111 : vector<8x2048xf32>
    %115 = vector.extract_strided_slice %20 {offsets = [0, 4], sizes = [8, 1], strides = [1, 1]} : vector<8x25xf32> to vector<8x1xf32>
    %116 = vector.broadcast %115 : vector<8x1xf32> to vector<8x2048xf32>
    %117 = arith.mulf %116, %114 : vector<8x2048xf32>
    %118 = arith.addf %94, %117 : vector<8x2048xf32>
    %119 = vector.extract_strided_slice %20 {offsets = [0, 9], sizes = [8, 1], strides = [1, 1]} : vector<8x25xf32> to vector<8x1xf32>
    %120 = vector.broadcast %119 : vector<8x1xf32> to vector<8x2048xf32>
    %121 = arith.mulf %120, %114 : vector<8x2048xf32>
    %122 = arith.addf %98, %121 : vector<8x2048xf32>
    %123 = vector.extract_strided_slice %20 {offsets = [0, 14], sizes = [8, 1], strides = [1, 1]} : vector<8x25xf32> to vector<8x1xf32>
    %124 = vector.broadcast %123 : vector<8x1xf32> to vector<8x2048xf32>
    %125 = arith.mulf %124, %114 : vector<8x2048xf32>
    %126 = arith.addf %102, %125 : vector<8x2048xf32>
    %127 = vector.extract_strided_slice %20 {offsets = [0, 19], sizes = [8, 1], strides = [1, 1]} : vector<8x25xf32> to vector<8x1xf32>
    %128 = vector.broadcast %127 : vector<8x1xf32> to vector<8x2048xf32>
    %129 = arith.mulf %128, %114 : vector<8x2048xf32>
    %130 = arith.addf %106, %129 : vector<8x2048xf32>
    %131 = vector.extract_strided_slice %20 {offsets = [0, 24], sizes = [8, 1], strides = [1, 1]} : vector<8x25xf32> to vector<8x1xf32>
    %132 = vector.broadcast %131 : vector<8x1xf32> to vector<8x2048xf32>
    %133 = arith.mulf %132, %114 : vector<8x2048xf32>
    %134 = arith.addf %110, %133 : vector<8x2048xf32>
    %c32_i32 = arith.constant 32 : i32
    %135 = tpu.dynamic_rotate %118 by %c32_i32 dim 1 : vector<8x2048xf32>, i32 -> vector<8x2048xf32>
    %c0_17 = arith.constant 0 : index
    %c0_18 = arith.constant 0 : index
    %136 = vector.load %arg3[%c0_17, %c0_18] : memref<5x2048xf32, #tpu.memory_space<vmem>>, vector<1x2048xf32>
    %137 = vector.broadcast %136 : vector<1x2048xf32> to vector<8x2048xf32>
    %138 = arith.mulf %137, %135 : vector<8x2048xf32>
    %c16_i32 = arith.constant 16 : i32
    %139 = tpu.dynamic_rotate %122 by %c16_i32 dim 1 : vector<8x2048xf32>, i32 -> vector<8x2048xf32>
    %c1_19 = arith.constant 1 : index
    %c0_20 = arith.constant 0 : index
    %140 = vector.load %arg3[%c1_19, %c0_20] : memref<5x2048xf32, #tpu.memory_space<vmem>>, vector<1x2048xf32>
    %141 = vector.broadcast %140 : vector<1x2048xf32> to vector<8x2048xf32>
    %142 = arith.mulf %141, %139 : vector<8x2048xf32>
    %143 = arith.addf %138, %142 : vector<8x2048xf32>
    %c2_21 = arith.constant 2 : index
    %c0_22 = arith.constant 0 : index
    %144 = vector.load %arg3[%c2_21, %c0_22] : memref<5x2048xf32, #tpu.memory_space<vmem>>, vector<1x2048xf32>
    %145 = vector.broadcast %144 : vector<1x2048xf32> to vector<8x2048xf32>
    %146 = arith.mulf %145, %126 : vector<8x2048xf32>
    %147 = arith.addf %143, %146 : vector<8x2048xf32>
    %c2032_i32 = arith.constant 2032 : i32
    %148 = tpu.dynamic_rotate %130 by %c2032_i32 dim 1 : vector<8x2048xf32>, i32 -> vector<8x2048xf32>
    %c3_23 = arith.constant 3 : index
    %c0_24 = arith.constant 0 : index
    %149 = vector.load %arg3[%c3_23, %c0_24] : memref<5x2048xf32, #tpu.memory_space<vmem>>, vector<1x2048xf32>
    %150 = vector.broadcast %149 : vector<1x2048xf32> to vector<8x2048xf32>
    %151 = arith.mulf %150, %148 : vector<8x2048xf32>
    %152 = arith.addf %147, %151 : vector<8x2048xf32>
    %c2016_i32 = arith.constant 2016 : i32
    %153 = tpu.dynamic_rotate %134 by %c2016_i32 dim 1 : vector<8x2048xf32>, i32 -> vector<8x2048xf32>
    %c4_25 = arith.constant 4 : index
    %c0_26 = arith.constant 0 : index
    %154 = vector.load %arg3[%c4_25, %c0_26] : memref<5x2048xf32, #tpu.memory_space<vmem>>, vector<1x2048xf32>
    %155 = vector.broadcast %154 : vector<1x2048xf32> to vector<8x2048xf32>
    %156 = arith.mulf %155, %153 : vector<8x2048xf32>
    %157 = arith.addf %152, %156 : vector<8x2048xf32>
    %c0_27 = arith.constant 0 : index
    %c0_28 = arith.constant 0 : index
    %158 = vector.load %arg12[%c0_27, %c0_28] : memref<8x1xf32, #tpu.memory_space<vmem>>, vector<8x1xf32>
    %159 = vector.broadcast %158 : vector<8x1xf32> to vector<8x2048xf32>
    %160 = arith.addf %157, %159 : vector<8x2048xf32>
    %c0_29 = arith.constant 0 : index
    %c0_30 = arith.constant 0 : index
    %161 = vector.load %arg13[%c0_29, %c0_30] : memref<8x49xf32, #tpu.memory_space<vmem>>, vector<8x49xf32>
    %c9_i32 = arith.constant 9 : i32
    %162 = tpu.dynamic_rotate %160 by %c9_i32 dim 1 : vector<8x2048xf32>, i32 -> vector<8x2048xf32>
    %c0_31 = arith.constant 0 : index
    %c0_32 = arith.constant 0 : index
    %163 = vector.load %arg6[%c0_31, %c0_32] : memref<7x2048xf32, #tpu.memory_space<vmem>>, vector<1x2048xf32>
    %164 = vector.broadcast %163 : vector<1x2048xf32> to vector<8x2048xf32>
    %165 = arith.mulf %164, %162 : vector<8x2048xf32>
    %166 = vector.extract_strided_slice %161 {offsets = [0, 0], sizes = [8, 1], strides = [1, 1]} : vector<8x49xf32> to vector<8x1xf32>
    %167 = vector.broadcast %166 : vector<8x1xf32> to vector<8x2048xf32>
    %168 = arith.mulf %167, %165 : vector<8x2048xf32>
    %169 = vector.extract_strided_slice %161 {offsets = [0, 7], sizes = [8, 1], strides = [1, 1]} : vector<8x49xf32> to vector<8x1xf32>
    %170 = vector.broadcast %169 : vector<8x1xf32> to vector<8x2048xf32>
    %171 = arith.mulf %170, %165 : vector<8x2048xf32>
    %172 = vector.extract_strided_slice %161 {offsets = [0, 14], sizes = [8, 1], strides = [1, 1]} : vector<8x49xf32> to vector<8x1xf32>
    %173 = vector.broadcast %172 : vector<8x1xf32> to vector<8x2048xf32>
    %174 = arith.mulf %173, %165 : vector<8x2048xf32>
    %175 = vector.extract_strided_slice %161 {offsets = [0, 21], sizes = [8, 1], strides = [1, 1]} : vector<8x49xf32> to vector<8x1xf32>
    %176 = vector.broadcast %175 : vector<8x1xf32> to vector<8x2048xf32>
    %177 = arith.mulf %176, %165 : vector<8x2048xf32>
    %178 = vector.extract_strided_slice %161 {offsets = [0, 28], sizes = [8, 1], strides = [1, 1]} : vector<8x49xf32> to vector<8x1xf32>
    %179 = vector.broadcast %178 : vector<8x1xf32> to vector<8x2048xf32>
    %180 = arith.mulf %179, %165 : vector<8x2048xf32>
    %181 = vector.extract_strided_slice %161 {offsets = [0, 35], sizes = [8, 1], strides = [1, 1]} : vector<8x49xf32> to vector<8x1xf32>
    %182 = vector.broadcast %181 : vector<8x1xf32> to vector<8x2048xf32>
    %183 = arith.mulf %182, %165 : vector<8x2048xf32>
    %184 = vector.extract_strided_slice %161 {offsets = [0, 42], sizes = [8, 1], strides = [1, 1]} : vector<8x49xf32> to vector<8x1xf32>
    %185 = vector.broadcast %184 : vector<8x1xf32> to vector<8x2048xf32>
    %186 = arith.mulf %185, %165 : vector<8x2048xf32>
    %c6_i32 = arith.constant 6 : i32
    %187 = tpu.dynamic_rotate %160 by %c6_i32 dim 1 : vector<8x2048xf32>, i32 -> vector<8x2048xf32>
    %c1_33 = arith.constant 1 : index
    %c0_34 = arith.constant 0 : index
    %188 = vector.load %arg6[%c1_33, %c0_34] : memref<7x2048xf32, #tpu.memory_space<vmem>>, vector<1x2048xf32>
    %189 = vector.broadcast %188 : vector<1x2048xf32> to vector<8x2048xf32>
    %190 = arith.mulf %189, %187 : vector<8x2048xf32>
    %191 = vector.extract_strided_slice %161 {offsets = [0, 1], sizes = [8, 1], strides = [1, 1]} : vector<8x49xf32> to vector<8x1xf32>
    %192 = vector.broadcast %191 : vector<8x1xf32> to vector<8x2048xf32>
    %193 = arith.mulf %192, %190 : vector<8x2048xf32>
    %194 = arith.addf %168, %193 : vector<8x2048xf32>
    %195 = vector.extract_strided_slice %161 {offsets = [0, 8], sizes = [8, 1], strides = [1, 1]} : vector<8x49xf32> to vector<8x1xf32>
    %196 = vector.broadcast %195 : vector<8x1xf32> to vector<8x2048xf32>
    %197 = arith.mulf %196, %190 : vector<8x2048xf32>
    %198 = arith.addf %171, %197 : vector<8x2048xf32>
    %199 = vector.extract_strided_slice %161 {offsets = [0, 15], sizes = [8, 1], strides = [1, 1]} : vector<8x49xf32> to vector<8x1xf32>
    %200 = vector.broadcast %199 : vector<8x1xf32> to vector<8x2048xf32>
    %201 = arith.mulf %200, %190 : vector<8x2048xf32>
    %202 = arith.addf %174, %201 : vector<8x2048xf32>
    %203 = vector.extract_strided_slice %161 {offsets = [0, 22], sizes = [8, 1], strides = [1, 1]} : vector<8x49xf32> to vector<8x1xf32>
    %204 = vector.broadcast %203 : vector<8x1xf32> to vector<8x2048xf32>
    %205 = arith.mulf %204, %190 : vector<8x2048xf32>
    %206 = arith.addf %177, %205 : vector<8x2048xf32>
    %207 = vector.extract_strided_slice %161 {offsets = [0, 29], sizes = [8, 1], strides = [1, 1]} : vector<8x49xf32> to vector<8x1xf32>
    %208 = vector.broadcast %207 : vector<8x1xf32> to vector<8x2048xf32>
    %209 = arith.mulf %208, %190 : vector<8x2048xf32>
    %210 = arith.addf %180, %209 : vector<8x2048xf32>
    %211 = vector.extract_strided_slice %161 {offsets = [0, 36], sizes = [8, 1], strides = [1, 1]} : vector<8x49xf32> to vector<8x1xf32>
    %212 = vector.broadcast %211 : vector<8x1xf32> to vector<8x2048xf32>
    %213 = arith.mulf %212, %190 : vector<8x2048xf32>
    %214 = arith.addf %183, %213 : vector<8x2048xf32>
    %215 = vector.extract_strided_slice %161 {offsets = [0, 43], sizes = [8, 1], strides = [1, 1]} : vector<8x49xf32> to vector<8x1xf32>
    %216 = vector.broadcast %215 : vector<8x1xf32> to vector<8x2048xf32>
    %217 = arith.mulf %216, %190 : vector<8x2048xf32>
    %218 = arith.addf %186, %217 : vector<8x2048xf32>
    %c3_i32 = arith.constant 3 : i32
    %219 = tpu.dynamic_rotate %160 by %c3_i32 dim 1 : vector<8x2048xf32>, i32 -> vector<8x2048xf32>
    %c2_35 = arith.constant 2 : index
    %c0_36 = arith.constant 0 : index
    %220 = vector.load %arg6[%c2_35, %c0_36] : memref<7x2048xf32, #tpu.memory_space<vmem>>, vector<1x2048xf32>
    %221 = vector.broadcast %220 : vector<1x2048xf32> to vector<8x2048xf32>
    %222 = arith.mulf %221, %219 : vector<8x2048xf32>
    %223 = vector.extract_strided_slice %161 {offsets = [0, 2], sizes = [8, 1], strides = [1, 1]} : vector<8x49xf32> to vector<8x1xf32>
    %224 = vector.broadcast %223 : vector<8x1xf32> to vector<8x2048xf32>
    %225 = arith.mulf %224, %222 : vector<8x2048xf32>
    %226 = arith.addf %194, %225 : vector<8x2048xf32>
    %227 = vector.extract_strided_slice %161 {offsets = [0, 9], sizes = [8, 1], strides = [1, 1]} : vector<8x49xf32> to vector<8x1xf32>
    %228 = vector.broadcast %227 : vector<8x1xf32> to vector<8x2048xf32>
    %229 = arith.mulf %228, %222 : vector<8x2048xf32>
    %230 = arith.addf %198, %229 : vector<8x2048xf32>
    %231 = vector.extract_strided_slice %161 {offsets = [0, 16], sizes = [8, 1], strides = [1, 1]} : vector<8x49xf32> to vector<8x1xf32>
    %232 = vector.broadcast %231 : vector<8x1xf32> to vector<8x2048xf32>
    %233 = arith.mulf %232, %222 : vector<8x2048xf32>
    %234 = arith.addf %202, %233 : vector<8x2048xf32>
    %235 = vector.extract_strided_slice %161 {offsets = [0, 23], sizes = [8, 1], strides = [1, 1]} : vector<8x49xf32> to vector<8x1xf32>
    %236 = vector.broadcast %235 : vector<8x1xf32> to vector<8x2048xf32>
    %237 = arith.mulf %236, %222 : vector<8x2048xf32>
    %238 = arith.addf %206, %237 : vector<8x2048xf32>
    %239 = vector.extract_strided_slice %161 {offsets = [0, 30], sizes = [8, 1], strides = [1, 1]} : vector<8x49xf32> to vector<8x1xf32>
    %240 = vector.broadcast %239 : vector<8x1xf32> to vector<8x2048xf32>
    %241 = arith.mulf %240, %222 : vector<8x2048xf32>
    %242 = arith.addf %210, %241 : vector<8x2048xf32>
    %243 = vector.extract_strided_slice %161 {offsets = [0, 37], sizes = [8, 1], strides = [1, 1]} : vector<8x49xf32> to vector<8x1xf32>
    %244 = vector.broadcast %243 : vector<8x1xf32> to vector<8x2048xf32>
    %245 = arith.mulf %244, %222 : vector<8x2048xf32>
    %246 = arith.addf %214, %245 : vector<8x2048xf32>
    %247 = vector.extract_strided_slice %161 {offsets = [0, 44], sizes = [8, 1], strides = [1, 1]} : vector<8x49xf32> to vector<8x1xf32>
    %248 = vector.broadcast %247 : vector<8x1xf32> to vector<8x2048xf32>
    %249 = arith.mulf %248, %222 : vector<8x2048xf32>
    %250 = arith.addf %218, %249 : vector<8x2048xf32>
    %c3_37 = arith.constant 3 : index
    %c0_38 = arith.constant 0 : index
    %251 = vector.load %arg6[%c3_37, %c0_38] : memref<7x2048xf32, #tpu.memory_space<vmem>>, vector<1x2048xf32>
    %252 = vector.broadcast %251 : vector<1x2048xf32> to vector<8x2048xf32>
    %253 = arith.mulf %252, %160 : vector<8x2048xf32>
    %254 = vector.extract_strided_slice %161 {offsets = [0, 3], sizes = [8, 1], strides = [1, 1]} : vector<8x49xf32> to vector<8x1xf32>
    %255 = vector.broadcast %254 : vector<8x1xf32> to vector<8x2048xf32>
    %256 = arith.mulf %255, %253 : vector<8x2048xf32>
    %257 = arith.addf %226, %256 : vector<8x2048xf32>
    %258 = vector.extract_strided_slice %161 {offsets = [0, 10], sizes = [8, 1], strides = [1, 1]} : vector<8x49xf32> to vector<8x1xf32>
    %259 = vector.broadcast %258 : vector<8x1xf32> to vector<8x2048xf32>
    %260 = arith.mulf %259, %253 : vector<8x2048xf32>
    %261 = arith.addf %230, %260 : vector<8x2048xf32>
    %262 = vector.extract_strided_slice %161 {offsets = [0, 17], sizes = [8, 1], strides = [1, 1]} : vector<8x49xf32> to vector<8x1xf32>
    %263 = vector.broadcast %262 : vector<8x1xf32> to vector<8x2048xf32>
    %264 = arith.mulf %263, %253 : vector<8x2048xf32>
    %265 = arith.addf %234, %264 : vector<8x2048xf32>
    %266 = vector.extract_strided_slice %161 {offsets = [0, 24], sizes = [8, 1], strides = [1, 1]} : vector<8x49xf32> to vector<8x1xf32>
    %267 = vector.broadcast %266 : vector<8x1xf32> to vector<8x2048xf32>
    %268 = arith.mulf %267, %253 : vector<8x2048xf32>
    %269 = arith.addf %238, %268 : vector<8x2048xf32>
    %270 = vector.extract_strided_slice %161 {offsets = [0, 31], sizes = [8, 1], strides = [1, 1]} : vector<8x49xf32> to vector<8x1xf32>
    %271 = vector.broadcast %270 : vector<8x1xf32> to vector<8x2048xf32>
    %272 = arith.mulf %271, %253 : vector<8x2048xf32>
    %273 = arith.addf %242, %272 : vector<8x2048xf32>
    %274 = vector.extract_strided_slice %161 {offsets = [0, 38], sizes = [8, 1], strides = [1, 1]} : vector<8x49xf32> to vector<8x1xf32>
    %275 = vector.broadcast %274 : vector<8x1xf32> to vector<8x2048xf32>
    %276 = arith.mulf %275, %253 : vector<8x2048xf32>
    %277 = arith.addf %246, %276 : vector<8x2048xf32>
    %278 = vector.extract_strided_slice %161 {offsets = [0, 45], sizes = [8, 1], strides = [1, 1]} : vector<8x49xf32> to vector<8x1xf32>
    %279 = vector.broadcast %278 : vector<8x1xf32> to vector<8x2048xf32>
    %280 = arith.mulf %279, %253 : vector<8x2048xf32>
    %281 = arith.addf %250, %280 : vector<8x2048xf32>
    %c2045_i32 = arith.constant 2045 : i32
    %282 = tpu.dynamic_rotate %160 by %c2045_i32 dim 1 : vector<8x2048xf32>, i32 -> vector<8x2048xf32>
    %c4_39 = arith.constant 4 : index
    %c0_40 = arith.constant 0 : index
    %283 = vector.load %arg6[%c4_39, %c0_40] : memref<7x2048xf32, #tpu.memory_space<vmem>>, vector<1x2048xf32>
    %284 = vector.broadcast %283 : vector<1x2048xf32> to vector<8x2048xf32>
    %285 = arith.mulf %284, %282 : vector<8x2048xf32>
    %286 = vector.extract_strided_slice %161 {offsets = [0, 4], sizes = [8, 1], strides = [1, 1]} : vector<8x49xf32> to vector<8x1xf32>
    %287 = vector.broadcast %286 : vector<8x1xf32> to vector<8x2048xf32>
    %288 = arith.mulf %287, %285 : vector<8x2048xf32>
    %289 = arith.addf %257, %288 : vector<8x2048xf32>
    %290 = vector.extract_strided_slice %161 {offsets = [0, 11], sizes = [8, 1], strides = [1, 1]} : vector<8x49xf32> to vector<8x1xf32>
    %291 = vector.broadcast %290 : vector<8x1xf32> to vector<8x2048xf32>
    %292 = arith.mulf %291, %285 : vector<8x2048xf32>
    %293 = arith.addf %261, %292 : vector<8x2048xf32>
    %294 = vector.extract_strided_slice %161 {offsets = [0, 18], sizes = [8, 1], strides = [1, 1]} : vector<8x49xf32> to vector<8x1xf32>
    %295 = vector.broadcast %294 : vector<8x1xf32> to vector<8x2048xf32>
    %296 = arith.mulf %295, %285 : vector<8x2048xf32>
    %297 = arith.addf %265, %296 : vector<8x2048xf32>
    %298 = vector.extract_strided_slice %161 {offsets = [0, 25], sizes = [8, 1], strides = [1, 1]} : vector<8x49xf32> to vector<8x1xf32>
    %299 = vector.broadcast %298 : vector<8x1xf32> to vector<8x2048xf32>
    %300 = arith.mulf %299, %285 : vector<8x2048xf32>
    %301 = arith.addf %269, %300 : vector<8x2048xf32>
    %302 = vector.extract_strided_slice %161 {offsets = [0, 32], sizes = [8, 1], strides = [1, 1]} : vector<8x49xf32> to vector<8x1xf32>
    %303 = vector.broadcast %302 : vector<8x1xf32> to vector<8x2048xf32>
    %304 = arith.mulf %303, %285 : vector<8x2048xf32>
    %305 = arith.addf %273, %304 : vector<8x2048xf32>
    %306 = vector.extract_strided_slice %161 {offsets = [0, 39], sizes = [8, 1], strides = [1, 1]} : vector<8x49xf32> to vector<8x1xf32>
    %307 = vector.broadcast %306 : vector<8x1xf32> to vector<8x2048xf32>
    %308 = arith.mulf %307, %285 : vector<8x2048xf32>
    %309 = arith.addf %277, %308 : vector<8x2048xf32>
    %310 = vector.extract_strided_slice %161 {offsets = [0, 46], sizes = [8, 1], strides = [1, 1]} : vector<8x49xf32> to vector<8x1xf32>
    %311 = vector.broadcast %310 : vector<8x1xf32> to vector<8x2048xf32>
    %312 = arith.mulf %311, %285 : vector<8x2048xf32>
    %313 = arith.addf %281, %312 : vector<8x2048xf32>
    %c2042_i32 = arith.constant 2042 : i32
    %314 = tpu.dynamic_rotate %160 by %c2042_i32 dim 1 : vector<8x2048xf32>, i32 -> vector<8x2048xf32>
    %c5 = arith.constant 5 : index
    %c0_41 = arith.constant 0 : index
    %315 = vector.load %arg6[%c5, %c0_41] : memref<7x2048xf32, #tpu.memory_space<vmem>>, vector<1x2048xf32>
    %316 = vector.broadcast %315 : vector<1x2048xf32> to vector<8x2048xf32>
    %317 = arith.mulf %316, %314 : vector<8x2048xf32>
    %318 = vector.extract_strided_slice %161 {offsets = [0, 5], sizes = [8, 1], strides = [1, 1]} : vector<8x49xf32> to vector<8x1xf32>
    %319 = vector.broadcast %318 : vector<8x1xf32> to vector<8x2048xf32>
    %320 = arith.mulf %319, %317 : vector<8x2048xf32>
    %321 = arith.addf %289, %320 : vector<8x2048xf32>
    %322 = vector.extract_strided_slice %161 {offsets = [0, 12], sizes = [8, 1], strides = [1, 1]} : vector<8x49xf32> to vector<8x1xf32>
    %323 = vector.broadcast %322 : vector<8x1xf32> to vector<8x2048xf32>
    %324 = arith.mulf %323, %317 : vector<8x2048xf32>
    %325 = arith.addf %293, %324 : vector<8x2048xf32>
    %326 = vector.extract_strided_slice %161 {offsets = [0, 19], sizes = [8, 1], strides = [1, 1]} : vector<8x49xf32> to vector<8x1xf32>
    %327 = vector.broadcast %326 : vector<8x1xf32> to vector<8x2048xf32>
    %328 = arith.mulf %327, %317 : vector<8x2048xf32>
    %329 = arith.addf %297, %328 : vector<8x2048xf32>
    %330 = vector.extract_strided_slice %161 {offsets = [0, 26], sizes = [8, 1], strides = [1, 1]} : vector<8x49xf32> to vector<8x1xf32>
    %331 = vector.broadcast %330 : vector<8x1xf32> to vector<8x2048xf32>
    %332 = arith.mulf %331, %317 : vector<8x2048xf32>
    %333 = arith.addf %301, %332 : vector<8x2048xf32>
    %334 = vector.extract_strided_slice %161 {offsets = [0, 33], sizes = [8, 1], strides = [1, 1]} : vector<8x49xf32> to vector<8x1xf32>
    %335 = vector.broadcast %334 : vector<8x1xf32> to vector<8x2048xf32>
    %336 = arith.mulf %335, %317 : vector<8x2048xf32>
    %337 = arith.addf %305, %336 : vector<8x2048xf32>
    %338 = vector.extract_strided_slice %161 {offsets = [0, 40], sizes = [8, 1], strides = [1, 1]} : vector<8x49xf32> to vector<8x1xf32>
    %339 = vector.broadcast %338 : vector<8x1xf32> to vector<8x2048xf32>
    %340 = arith.mulf %339, %317 : vector<8x2048xf32>
    %341 = arith.addf %309, %340 : vector<8x2048xf32>
    %342 = vector.extract_strided_slice %161 {offsets = [0, 47], sizes = [8, 1], strides = [1, 1]} : vector<8x49xf32> to vector<8x1xf32>
    %343 = vector.broadcast %342 : vector<8x1xf32> to vector<8x2048xf32>
    %344 = arith.mulf %343, %317 : vector<8x2048xf32>
    %345 = arith.addf %313, %344 : vector<8x2048xf32>
    %c2039_i32 = arith.constant 2039 : i32
    %346 = tpu.dynamic_rotate %160 by %c2039_i32 dim 1 : vector<8x2048xf32>, i32 -> vector<8x2048xf32>
    %c6 = arith.constant 6 : index
    %c0_42 = arith.constant 0 : index
    %347 = vector.load %arg6[%c6, %c0_42] : memref<7x2048xf32, #tpu.memory_space<vmem>>, vector<1x2048xf32>
    %348 = vector.broadcast %347 : vector<1x2048xf32> to vector<8x2048xf32>
    %349 = arith.mulf %348, %346 : vector<8x2048xf32>
    %350 = vector.extract_strided_slice %161 {offsets = [0, 6], sizes = [8, 1], strides = [1, 1]} : vector<8x49xf32> to vector<8x1xf32>
    %351 = vector.broadcast %350 : vector<8x1xf32> to vector<8x2048xf32>
    %352 = arith.mulf %351, %349 : vector<8x2048xf32>
    %353 = arith.addf %321, %352 : vector<8x2048xf32>
    %354 = vector.extract_strided_slice %161 {offsets = [0, 13], sizes = [8, 1], strides = [1, 1]} : vector<8x49xf32> to vector<8x1xf32>
    %355 = vector.broadcast %354 : vector<8x1xf32> to vector<8x2048xf32>
    %356 = arith.mulf %355, %349 : vector<8x2048xf32>
    %357 = arith.addf %325, %356 : vector<8x2048xf32>
    %358 = vector.extract_strided_slice %161 {offsets = [0, 20], sizes = [8, 1], strides = [1, 1]} : vector<8x49xf32> to vector<8x1xf32>
    %359 = vector.broadcast %358 : vector<8x1xf32> to vector<8x2048xf32>
    %360 = arith.mulf %359, %349 : vector<8x2048xf32>
    %361 = arith.addf %329, %360 : vector<8x2048xf32>
    %362 = vector.extract_strided_slice %161 {offsets = [0, 27], sizes = [8, 1], strides = [1, 1]} : vector<8x49xf32> to vector<8x1xf32>
    %363 = vector.broadcast %362 : vector<8x1xf32> to vector<8x2048xf32>
    %364 = arith.mulf %363, %349 : vector<8x2048xf32>
    %365 = arith.addf %333, %364 : vector<8x2048xf32>
    %366 = vector.extract_strided_slice %161 {offsets = [0, 34], sizes = [8, 1], strides = [1, 1]} : vector<8x49xf32> to vector<8x1xf32>
    %367 = vector.broadcast %366 : vector<8x1xf32> to vector<8x2048xf32>
    %368 = arith.mulf %367, %349 : vector<8x2048xf32>
    %369 = arith.addf %337, %368 : vector<8x2048xf32>
    %370 = vector.extract_strided_slice %161 {offsets = [0, 41], sizes = [8, 1], strides = [1, 1]} : vector<8x49xf32> to vector<8x1xf32>
    %371 = vector.broadcast %370 : vector<8x1xf32> to vector<8x2048xf32>
    %372 = arith.mulf %371, %349 : vector<8x2048xf32>
    %373 = arith.addf %341, %372 : vector<8x2048xf32>
    %374 = vector.extract_strided_slice %161 {offsets = [0, 48], sizes = [8, 1], strides = [1, 1]} : vector<8x49xf32> to vector<8x1xf32>
    %375 = vector.broadcast %374 : vector<8x1xf32> to vector<8x2048xf32>
    %376 = arith.mulf %375, %349 : vector<8x2048xf32>
    %377 = arith.addf %345, %376 : vector<8x2048xf32>
    %c144_i32 = arith.constant 144 : i32
    %378 = tpu.dynamic_rotate %353 by %c144_i32 dim 1 : vector<8x2048xf32>, i32 -> vector<8x2048xf32>
    %c0_43 = arith.constant 0 : index
    %c0_44 = arith.constant 0 : index
    %379 = vector.load %arg5[%c0_43, %c0_44] : memref<7x2048xf32, #tpu.memory_space<vmem>>, vector<1x2048xf32>
    %380 = vector.broadcast %379 : vector<1x2048xf32> to vector<8x2048xf32>
    %381 = arith.mulf %380, %378 : vector<8x2048xf32>
    %c96_i32 = arith.constant 96 : i32
    %382 = tpu.dynamic_rotate %357 by %c96_i32 dim 1 : vector<8x2048xf32>, i32 -> vector<8x2048xf32>
    %c1_45 = arith.constant 1 : index
    %c0_46 = arith.constant 0 : index
    %383 = vector.load %arg5[%c1_45, %c0_46] : memref<7x2048xf32, #tpu.memory_space<vmem>>, vector<1x2048xf32>
    %384 = vector.broadcast %383 : vector<1x2048xf32> to vector<8x2048xf32>
    %385 = arith.mulf %384, %382 : vector<8x2048xf32>
    %386 = arith.addf %381, %385 : vector<8x2048xf32>
    %c48_i32 = arith.constant 48 : i32
    %387 = tpu.dynamic_rotate %361 by %c48_i32 dim 1 : vector<8x2048xf32>, i32 -> vector<8x2048xf32>
    %c2_47 = arith.constant 2 : index
    %c0_48 = arith.constant 0 : index
    %388 = vector.load %arg5[%c2_47, %c0_48] : memref<7x2048xf32, #tpu.memory_space<vmem>>, vector<1x2048xf32>
    %389 = vector.broadcast %388 : vector<1x2048xf32> to vector<8x2048xf32>
    %390 = arith.mulf %389, %387 : vector<8x2048xf32>
    %391 = arith.addf %386, %390 : vector<8x2048xf32>
    %c3_49 = arith.constant 3 : index
    %c0_50 = arith.constant 0 : index
    %392 = vector.load %arg5[%c3_49, %c0_50] : memref<7x2048xf32, #tpu.memory_space<vmem>>, vector<1x2048xf32>
    %393 = vector.broadcast %392 : vector<1x2048xf32> to vector<8x2048xf32>
    %394 = arith.mulf %393, %365 : vector<8x2048xf32>
    %395 = arith.addf %391, %394 : vector<8x2048xf32>
    %c2000_i32 = arith.constant 2000 : i32
    %396 = tpu.dynamic_rotate %369 by %c2000_i32 dim 1 : vector<8x2048xf32>, i32 -> vector<8x2048xf32>
    %c4_51 = arith.constant 4 : index
    %c0_52 = arith.constant 0 : index
    %397 = vector.load %arg5[%c4_51, %c0_52] : memref<7x2048xf32, #tpu.memory_space<vmem>>, vector<1x2048xf32>
    %398 = vector.broadcast %397 : vector<1x2048xf32> to vector<8x2048xf32>
    %399 = arith.mulf %398, %396 : vector<8x2048xf32>
    %400 = arith.addf %395, %399 : vector<8x2048xf32>
    %c1952_i32 = arith.constant 1952 : i32
    %401 = tpu.dynamic_rotate %373 by %c1952_i32 dim 1 : vector<8x2048xf32>, i32 -> vector<8x2048xf32>
    %c5_53 = arith.constant 5 : index
    %c0_54 = arith.constant 0 : index
    %402 = vector.load %arg5[%c5_53, %c0_54] : memref<7x2048xf32, #tpu.memory_space<vmem>>, vector<1x2048xf32>
    %403 = vector.broadcast %402 : vector<1x2048xf32> to vector<8x2048xf32>
    %404 = arith.mulf %403, %401 : vector<8x2048xf32>
    %405 = arith.addf %400, %404 : vector<8x2048xf32>
    %c1904_i32 = arith.constant 1904 : i32
    %406 = tpu.dynamic_rotate %377 by %c1904_i32 dim 1 : vector<8x2048xf32>, i32 -> vector<8x2048xf32>
    %c6_55 = arith.constant 6 : index
    %c0_56 = arith.constant 0 : index
    %407 = vector.load %arg5[%c6_55, %c0_56] : memref<7x2048xf32, #tpu.memory_space<vmem>>, vector<1x2048xf32>
    %408 = vector.broadcast %407 : vector<1x2048xf32> to vector<8x2048xf32>
    %409 = arith.mulf %408, %406 : vector<8x2048xf32>
    %410 = arith.addf %405, %409 : vector<8x2048xf32>
    %c0_57 = arith.constant 0 : index
    %c0_58 = arith.constant 0 : index
    %411 = vector.load %arg14[%c0_57, %c0_58] : memref<8x1xf32, #tpu.memory_space<vmem>>, vector<8x1xf32>
    %412 = vector.broadcast %411 : vector<8x1xf32> to vector<8x2048xf32>
    %413 = arith.addf %410, %412 : vector<8x2048xf32>
    %c0_59 = arith.constant 0 : index
    %c0_60 = arith.constant 0 : index
    %414 = vector.load %arg15[%c0_59, %c0_60] : memref<8x8xbf16, #tpu.memory_space<vmem>>, vector<8x8xbf16>
    %415 = arith.truncf %413 : vector<8x2048xf32> to vector<8x2048xbf16>
    %cst_61 = arith.constant dense<0.000000e+00> : vector<8x2048xf32>
    %416 = tpu.matmul %414, %415, %cst_61 {dimension_numbers = #tpu.dot_dimension_numbers<[1], [0], [0], [1], [0, 0, 1, 1], [], []>} : vector<8x8xbf16>, vector<8x2048xbf16>, vector<8x2048xf32> -> vector<8x2048xf32>
    %c0_62 = arith.constant 0 : index
    %c0_63 = arith.constant 0 : index
    %417 = vector.load %arg16[%c0_62, %c0_63] : memref<8x1xf32, #tpu.memory_space<vmem>>, vector<8x1xf32>
    %418 = vector.broadcast %417 : vector<8x1xf32> to vector<8x2048xf32>
    %419 = arith.addf %416, %418 : vector<8x2048xf32>
    %c0_64 = arith.constant 0 : index
    %c0_65 = arith.constant 0 : index
    %420 = vector.load %arg2[%c0_64, %c0_65] : memref<8x2048xbf16, #tpu.memory_space<vmem>>, vector<8x2048xbf16>
    %421 = arith.truncf %19 : vector<8x2048xf32> to vector<8x2048xbf16>
    %cst_66 = arith.constant dense<0.000000e+00> : vector<8x8xf32>
    %422 = tpu.matmul %421, %420, %cst_66 {dimension_numbers = #tpu.dot_dimension_numbers<[1], [1], [0], [0], [0, 0, 1, 0], [], []>} : vector<8x2048xbf16>, vector<8x2048xbf16>, vector<8x8xf32> -> vector<8x8xf32>
    %cst_67 = arith.constant 3.906250e-03 : f32
    %423 = vector.broadcast %cst_67 : f32 to vector<8x8xf32>
    %424 = arith.mulf %422, %423 : vector<8x8xf32>
    %c0_68 = arith.constant 0 : index
    %c0_69 = arith.constant 0 : index
    %425 = vector.load %arg17[%c0_68, %c0_69] : memref<8x8xf32, #tpu.memory_space<vmem>>, vector<8x8xf32>
    %cst_70 = arith.constant dense<0.000000e+00> : vector<8x8xf32>
    %426 = tpu.matmul %425, %424, %cst_70 {dimension_numbers = #tpu.dot_dimension_numbers<[1], [0], [0], [1], [0, 0, 1, 1], [], []>} : vector<8x8xf32>, vector<8x8xf32>, vector<8x8xf32> -> vector<8x8xf32>
    %cst_71 = arith.constant 0.000000e+00 : f32
    %427 = vector.broadcast %cst_71 : f32 to vector<8x8xf32>
    %428 = arith.maximumf %426, %427 : vector<8x8xf32>
    %c0_72 = arith.constant 0 : index
    %c0_73 = arith.constant 0 : index
    %429 = vector.load %arg18[%c0_72, %c0_73] : memref<8x8xf32, #tpu.memory_space<vmem>>, vector<8x8xf32>
    %cst_74 = arith.constant dense<0.000000e+00> : vector<8x8xf32>
    %430 = tpu.matmul %429, %428, %cst_74 {dimension_numbers = #tpu.dot_dimension_numbers<[1], [0], [0], [1], [0, 0, 1, 1], [], []>} : vector<8x8xf32>, vector<8x8xf32>, vector<8x8xf32> -> vector<8x8xf32>
    %cst_75 = arith.constant -3.000000e+01 : f32
    %cst_76 = arith.constant 3.000000e+01 : f32
    %431 = vector.broadcast %cst_75 : f32 to vector<8x8xf32>
    %432 = arith.maximumf %431, %430 : vector<8x8xf32>
    %433 = vector.broadcast %cst_76 : f32 to vector<8x8xf32>
    %434 = arith.minimumf %433, %432 : vector<8x8xf32>
    %cst_77 = arith.constant 0.000000e+00 : f32
    %435 = vector.broadcast %cst_77 : f32 to vector<8x8xf32>
    %436 = arith.subf %435, %434 : vector<8x8xf32>
    %437 = math.exp %436 : vector<8x8xf32>
    %cst_78 = arith.constant 1.000000e+00 : f32
    %438 = vector.broadcast %cst_78 : f32 to vector<8x8xf32>
    %439 = arith.addf %438, %437 : vector<8x8xf32>
    %440 = tpu.reciprocal %439 {approx = true} : vector<8x8xf32> -> vector<8x8xf32>
    %441 = arith.truncf %440 : vector<8x8xf32> to vector<8x8xbf16>
    %cst_79 = arith.constant dense<0.000000e+00> : vector<8x2048xf32>
    %442 = tpu.matmul %441, %420, %cst_79 {dimension_numbers = #tpu.dot_dimension_numbers<[1], [0], [0], [1], [0, 0, 1, 1], [], []>} : vector<8x8xbf16>, vector<8x2048xbf16>, vector<8x2048xf32> -> vector<8x2048xf32>
    %443 = arith.mulf %442, %419 : vector<8x2048xf32>
    %444 = arith.mulf %443, %19 : vector<8x2048xf32>
    %c0_80 = arith.constant 0 : index
    %c0_81 = arith.constant 0 : index
    %445 = vector.load %arg20[%c0_80, %c0_81] : memref<8x1xf32, #tpu.memory_space<vmem>>, vector<8x1xf32>
    %446 = vector.broadcast %445 : vector<8x1xf32> to vector<8x2048xf32>
    %447 = arith.mulf %446, %0 : vector<8x2048xf32>
    %c0_82 = arith.constant 0 : index
    %c0_83 = arith.constant 0 : index
    %448 = vector.load %arg19[%c0_82, %c0_83] : memref<8x8xbf16, #tpu.memory_space<vmem>>, vector<8x8xbf16>
    %449 = arith.truncf %444 : vector<8x2048xf32> to vector<8x2048xbf16>
    %cst_84 = arith.constant dense<0.000000e+00> : vector<8x2048xf32>
    %450 = tpu.matmul %448, %449, %cst_84 {dimension_numbers = #tpu.dot_dimension_numbers<[1], [0], [0], [1], [0, 0, 1, 1], [], []>} : vector<8x8xbf16>, vector<8x2048xbf16>, vector<8x2048xf32> -> vector<8x2048xf32>
    %451 = arith.addf %447, %450 : vector<8x2048xf32>
    %c0_85 = arith.constant 0 : index
    %c0_86 = arith.constant 0 : index
    %452 = vector.load %arg21[%c0_85, %c0_86] : memref<8x1xf32, #tpu.memory_space<vmem>>, vector<8x1xf32>
    %453 = vector.broadcast %452 : vector<8x1xf32> to vector<8x2048xf32>
    %454 = arith.addf %451, %453 : vector<8x2048xf32>
    %c0_87 = arith.constant 0 : index
    %c0_88 = arith.constant 0 : index
    %455 = vector.load %arg22[%c0_87, %c0_88] : memref<32x8xbf16, #tpu.memory_space<vmem>>, vector<32x8xbf16>
    %456 = arith.truncf %454 : vector<8x2048xf32> to vector<8x2048xbf16>
    %cst_89 = arith.constant dense<0.000000e+00> : vector<32x2048xf32>
    %457 = tpu.matmul %455, %456, %cst_89 {dimension_numbers = #tpu.dot_dimension_numbers<[1], [0], [0], [1], [0, 0, 1, 1], [], []>} : vector<32x8xbf16>, vector<8x2048xbf16>, vector<32x2048xf32> -> vector<32x2048xf32>
    %c0_90 = arith.constant 0 : index
    %c0_91 = arith.constant 0 : index
    %458 = vector.load %arg23[%c0_90, %c0_91] : memref<32x1xf32, #tpu.memory_space<vmem>>, vector<32x1xf32>
    %459 = vector.broadcast %458 : vector<32x1xf32> to vector<32x2048xf32>
    %460 = arith.addf %457, %459 : vector<32x2048xf32>
    %c0_92 = arith.constant 0 : index
    %c0_93 = arith.constant 0 : index
    %461 = vector.load %arg24[%c0_92, %c0_93] : memref<32x9xf32, #tpu.memory_space<vmem>>, vector<32x9xf32>
    %c1_i32_94 = arith.constant 1 : i32
    %462 = tpu.dynamic_rotate %460 by %c1_i32_94 dim 1 : vector<32x2048xf32>, i32 -> vector<32x2048xf32>
    %c0_95 = arith.constant 0 : index
    %c0_96 = arith.constant 0 : index
    %463 = vector.load %arg8[%c0_95, %c0_96] : memref<3x2048xf32, #tpu.memory_space<vmem>>, vector<1x2048xf32>
    %464 = vector.broadcast %463 : vector<1x2048xf32> to vector<32x2048xf32>
    %465 = arith.mulf %464, %462 : vector<32x2048xf32>
    %466 = vector.extract_strided_slice %461 {offsets = [0, 0], sizes = [32, 1], strides = [1, 1]} : vector<32x9xf32> to vector<32x1xf32>
    %467 = vector.broadcast %466 : vector<32x1xf32> to vector<32x2048xf32>
    %468 = arith.mulf %467, %465 : vector<32x2048xf32>
    %469 = vector.extract_strided_slice %461 {offsets = [0, 3], sizes = [32, 1], strides = [1, 1]} : vector<32x9xf32> to vector<32x1xf32>
    %470 = vector.broadcast %469 : vector<32x1xf32> to vector<32x2048xf32>
    %471 = arith.mulf %470, %465 : vector<32x2048xf32>
    %472 = vector.extract_strided_slice %461 {offsets = [0, 6], sizes = [32, 1], strides = [1, 1]} : vector<32x9xf32> to vector<32x1xf32>
    %473 = vector.broadcast %472 : vector<32x1xf32> to vector<32x2048xf32>
    %474 = arith.mulf %473, %465 : vector<32x2048xf32>
    %c1_97 = arith.constant 1 : index
    %c0_98 = arith.constant 0 : index
    %475 = vector.load %arg8[%c1_97, %c0_98] : memref<3x2048xf32, #tpu.memory_space<vmem>>, vector<1x2048xf32>
    %476 = vector.broadcast %475 : vector<1x2048xf32> to vector<32x2048xf32>
    %477 = arith.mulf %476, %460 : vector<32x2048xf32>
    %478 = vector.extract_strided_slice %461 {offsets = [0, 1], sizes = [32, 1], strides = [1, 1]} : vector<32x9xf32> to vector<32x1xf32>
    %479 = vector.broadcast %478 : vector<32x1xf32> to vector<32x2048xf32>
    %480 = arith.mulf %479, %477 : vector<32x2048xf32>
    %481 = arith.addf %468, %480 : vector<32x2048xf32>
    %482 = vector.extract_strided_slice %461 {offsets = [0, 4], sizes = [32, 1], strides = [1, 1]} : vector<32x9xf32> to vector<32x1xf32>
    %483 = vector.broadcast %482 : vector<32x1xf32> to vector<32x2048xf32>
    %484 = arith.mulf %483, %477 : vector<32x2048xf32>
    %485 = arith.addf %471, %484 : vector<32x2048xf32>
    %486 = vector.extract_strided_slice %461 {offsets = [0, 7], sizes = [32, 1], strides = [1, 1]} : vector<32x9xf32> to vector<32x1xf32>
    %487 = vector.broadcast %486 : vector<32x1xf32> to vector<32x2048xf32>
    %488 = arith.mulf %487, %477 : vector<32x2048xf32>
    %489 = arith.addf %474, %488 : vector<32x2048xf32>
    %c2047_i32_99 = arith.constant 2047 : i32
    %490 = tpu.dynamic_rotate %460 by %c2047_i32_99 dim 1 : vector<32x2048xf32>, i32 -> vector<32x2048xf32>
    %c2_100 = arith.constant 2 : index
    %c0_101 = arith.constant 0 : index
    %491 = vector.load %arg8[%c2_100, %c0_101] : memref<3x2048xf32, #tpu.memory_space<vmem>>, vector<1x2048xf32>
    %492 = vector.broadcast %491 : vector<1x2048xf32> to vector<32x2048xf32>
    %493 = arith.mulf %492, %490 : vector<32x2048xf32>
    %494 = vector.extract_strided_slice %461 {offsets = [0, 2], sizes = [32, 1], strides = [1, 1]} : vector<32x9xf32> to vector<32x1xf32>
    %495 = vector.broadcast %494 : vector<32x1xf32> to vector<32x2048xf32>
    %496 = arith.mulf %495, %493 : vector<32x2048xf32>
    %497 = arith.addf %481, %496 : vector<32x2048xf32>
    %498 = vector.extract_strided_slice %461 {offsets = [0, 5], sizes = [32, 1], strides = [1, 1]} : vector<32x9xf32> to vector<32x1xf32>
    %499 = vector.broadcast %498 : vector<32x1xf32> to vector<32x2048xf32>
    %500 = arith.mulf %499, %493 : vector<32x2048xf32>
    %501 = arith.addf %485, %500 : vector<32x2048xf32>
    %502 = vector.extract_strided_slice %461 {offsets = [0, 8], sizes = [32, 1], strides = [1, 1]} : vector<32x9xf32> to vector<32x1xf32>
    %503 = vector.broadcast %502 : vector<32x1xf32> to vector<32x2048xf32>
    %504 = arith.mulf %503, %493 : vector<32x2048xf32>
    %505 = arith.addf %489, %504 : vector<32x2048xf32>
    %c16_i32_102 = arith.constant 16 : i32
    %506 = tpu.dynamic_rotate %497 by %c16_i32_102 dim 1 : vector<32x2048xf32>, i32 -> vector<32x2048xf32>
    %c0_103 = arith.constant 0 : index
    %c0_104 = arith.constant 0 : index
    %507 = vector.load %arg7[%c0_103, %c0_104] : memref<3x2048xf32, #tpu.memory_space<vmem>>, vector<1x2048xf32>
    %508 = vector.broadcast %507 : vector<1x2048xf32> to vector<32x2048xf32>
    %509 = arith.mulf %508, %506 : vector<32x2048xf32>
    %c1_105 = arith.constant 1 : index
    %c0_106 = arith.constant 0 : index
    %510 = vector.load %arg7[%c1_105, %c0_106] : memref<3x2048xf32, #tpu.memory_space<vmem>>, vector<1x2048xf32>
    %511 = vector.broadcast %510 : vector<1x2048xf32> to vector<32x2048xf32>
    %512 = arith.mulf %511, %501 : vector<32x2048xf32>
    %513 = arith.addf %509, %512 : vector<32x2048xf32>
    %c2032_i32_107 = arith.constant 2032 : i32
    %514 = tpu.dynamic_rotate %505 by %c2032_i32_107 dim 1 : vector<32x2048xf32>, i32 -> vector<32x2048xf32>
    %c2_108 = arith.constant 2 : index
    %c0_109 = arith.constant 0 : index
    %515 = vector.load %arg7[%c2_108, %c0_109] : memref<3x2048xf32, #tpu.memory_space<vmem>>, vector<1x2048xf32>
    %516 = vector.broadcast %515 : vector<1x2048xf32> to vector<32x2048xf32>
    %517 = arith.mulf %516, %514 : vector<32x2048xf32>
    %518 = arith.addf %513, %517 : vector<32x2048xf32>
    %c0_110 = arith.constant 0 : index
    %c0_111 = arith.constant 0 : index
    %519 = vector.load %arg25[%c0_110, %c0_111] : memref<32x1xf32, #tpu.memory_space<vmem>>, vector<32x1xf32>
    %520 = vector.broadcast %519 : vector<32x1xf32> to vector<32x2048xf32>
    %521 = arith.addf %518, %520 : vector<32x2048xf32>
    %cst_112 = arith.constant 5.000000e-01 : f32
    %522 = vector.broadcast %cst_112 : f32 to vector<32x2048xf32>
    %523 = arith.mulf %522, %521 : vector<32x2048xf32>
    %524 = arith.mulf %521, %521 : vector<32x2048xf32>
    %525 = arith.mulf %524, %521 : vector<32x2048xf32>
    %cst_113 = arith.constant 4.471500e-02 : f32
    %526 = vector.broadcast %cst_113 : f32 to vector<32x2048xf32>
    %527 = arith.mulf %526, %525 : vector<32x2048xf32>
    %528 = arith.addf %521, %527 : vector<32x2048xf32>
    %cst_114 = arith.constant 0.797884583 : f32
    %529 = vector.broadcast %cst_114 : f32 to vector<32x2048xf32>
    %530 = arith.mulf %529, %528 : vector<32x2048xf32>
    %531 = math.tanh %530 : vector<32x2048xf32>
    %cst_115 = arith.constant 1.000000e+00 : f32
    %532 = vector.broadcast %cst_115 : f32 to vector<32x2048xf32>
    %533 = arith.addf %532, %531 : vector<32x2048xf32>
    %534 = arith.mulf %523, %533 : vector<32x2048xf32>
    %c0_116 = arith.constant 0 : index
    %c0_117 = arith.constant 0 : index
    %535 = vector.load %arg26[%c0_116, %c0_117] : memref<8x32xbf16, #tpu.memory_space<vmem>>, vector<8x32xbf16>
    %536 = arith.truncf %534 : vector<32x2048xf32> to vector<32x2048xbf16>
    %cst_118 = arith.constant dense<0.000000e+00> : vector<8x2048xf32>
    %537 = tpu.matmul %535, %536, %cst_118 {dimension_numbers = #tpu.dot_dimension_numbers<[1], [0], [0], [1], [0, 0, 1, 1], [], []>} : vector<8x32xbf16>, vector<32x2048xbf16>, vector<8x2048xf32> -> vector<8x2048xf32>
    %c0_119 = arith.constant 0 : index
    %c0_120 = arith.constant 0 : index
    %538 = vector.load %arg27[%c0_119, %c0_120] : memref<8x1xf32, #tpu.memory_space<vmem>>, vector<8x1xf32>
    %539 = vector.broadcast %538 : vector<8x1xf32> to vector<8x2048xf32>
    %540 = arith.addf %537, %539 : vector<8x2048xf32>
    %541 = arith.addf %454, %540 : vector<8x2048xf32>
    %542 = arith.addf %0, %541 : vector<8x2048xf32>
    %c0_121 = arith.constant 0 : index
    %c0_122 = arith.constant 0 : index
    %543 = vector.load %arg28[%c0_121, %c0_122] : memref<8x2048xf32, #tpu.memory_space<vmem>>, vector<8x2048xf32>
    tpu.vector_store %arg28[%c0_121, %c0_122], %542 {strides = array<i32>} : memref<8x2048xf32, #tpu.memory_space<vmem>>, vector<8x2048xf32>,
    return
  }
  func.func @transform_0(%arg0: i32) -> (i32, i32) {
    %c0_i32 = arith.constant 0 : i32
    %c0_i32_0 = arith.constant 0 : i32
    return %c0_i32, %arg0 : i32, i32
  }
  func.func @transform_1(%arg0: i32) -> (i32, i32) {
    %c0_i32 = arith.constant 0 : i32
    %c0_i32_0 = arith.constant 0 : i32
    %c0_i32_1 = arith.constant 0 : i32
    return %c0_i32, %c0_i32_0 : i32, i32
  }
  func.func @transform_2(%arg0: i32) -> (i32, i32) {
    %c0_i32 = arith.constant 0 : i32
    %c0_i32_0 = arith.constant 0 : i32
    %c0_i32_1 = arith.constant 0 : i32
    return %c0_i32, %c0_i32_0 : i32, i32
  }
  func.func @transform_3(%arg0: i32) -> (i32, i32) {
    %c0_i32 = arith.constant 0 : i32
    %c0_i32_0 = arith.constant 0 : i32
    %c0_i32_1 = arith.constant 0 : i32
    return %c0_i32, %c0_i32_0 : i32, i32
  }
  func.func @transform_4(%arg0: i32) -> (i32, i32) {
    %c0_i32 = arith.constant 0 : i32
    %c0_i32_0 = arith.constant 0 : i32
    %c0_i32_1 = arith.constant 0 : i32
    return %c0_i32, %c0_i32_0 : i32, i32
  }
  func.func @transform_5(%arg0: i32) -> (i32, i32) {
    %c0_i32 = arith.constant 0 : i32
    %c0_i32_0 = arith.constant 0 : i32
    %c0_i32_1 = arith.constant 0 : i32
    return %c0_i32, %c0_i32_0 : i32, i32
  }
  func.func @transform_6(%arg0: i32) -> (i32, i32) {
    %c0_i32 = arith.constant 0 : i32
    %c0_i32_0 = arith.constant 0 : i32
    %c0_i32_1 = arith.constant 0 : i32
    return %c0_i32, %c0_i32_0 : i32, i32
  }
  func.func @transform_7(%arg0: i32) -> (i32, i32) {
    %c0_i32 = arith.constant 0 : i32
    %c0_i32_0 = arith.constant 0 : i32
    %c0_i32_1 = arith.constant 0 : i32
    return %c0_i32, %c0_i32_0 : i32, i32
  }
  func.func @transform_8(%arg0: i32) -> (i32, i32) {
    %c0_i32 = arith.constant 0 : i32
    %c0_i32_0 = arith.constant 0 : i32
    %c0_i32_1 = arith.constant 0 : i32
    return %c0_i32, %c0_i32_0 : i32, i32
  }
  func.func @transform_9(%arg0: i32) -> (i32, i32) {
    %c0_i32 = arith.constant 0 : i32
    %c0_i32_0 = arith.constant 0 : i32
    %c0_i32_1 = arith.constant 0 : i32
    return %c0_i32, %c0_i32_0 : i32, i32
  }
  func.func @transform_10(%arg0: i32) -> (i32, i32) {
    %c0_i32 = arith.constant 0 : i32
    %c0_i32_0 = arith.constant 0 : i32
    %c0_i32_1 = arith.constant 0 : i32
    return %c0_i32, %c0_i32_0 : i32, i32
  }
  func.func @transform_11(%arg0: i32) -> (i32, i32) {
    %c0_i32 = arith.constant 0 : i32
    %c0_i32_0 = arith.constant 0 : i32
    %c0_i32_1 = arith.constant 0 : i32
    return %c0_i32, %c0_i32_0 : i32, i32
  }
  func.func @transform_12(%arg0: i32) -> (i32, i32) {
    %c0_i32 = arith.constant 0 : i32
    %c0_i32_0 = arith.constant 0 : i32
    %c0_i32_1 = arith.constant 0 : i32
    return %c0_i32, %c0_i32_0 : i32, i32
  }
  func.func @transform_13(%arg0: i32) -> (i32, i32) {
    %c0_i32 = arith.constant 0 : i32
    %c0_i32_0 = arith.constant 0 : i32
    %c0_i32_1 = arith.constant 0 : i32
    return %c0_i32, %c0_i32_0 : i32, i32
  }
  func.func @transform_14(%arg0: i32) -> (i32, i32) {
    %c0_i32 = arith.constant 0 : i32
    %c0_i32_0 = arith.constant 0 : i32
    %c0_i32_1 = arith.constant 0 : i32
    return %c0_i32, %c0_i32_0 : i32, i32
  }
  func.func @transform_15(%arg0: i32) -> (i32, i32) {
    %c0_i32 = arith.constant 0 : i32
    %c0_i32_0 = arith.constant 0 : i32
    %c0_i32_1 = arith.constant 0 : i32
    return %c0_i32, %c0_i32_0 : i32, i32
  }
  func.func @transform_16(%arg0: i32) -> (i32, i32) {
    %c0_i32 = arith.constant 0 : i32
    %c0_i32_0 = arith.constant 0 : i32
    %c0_i32_1 = arith.constant 0 : i32
    return %c0_i32, %c0_i32_0 : i32, i32
  }
  func.func @transform_17(%arg0: i32) -> (i32, i32) {
    %c0_i32 = arith.constant 0 : i32
    %c0_i32_0 = arith.constant 0 : i32
    %c0_i32_1 = arith.constant 0 : i32
    return %c0_i32, %c0_i32_0 : i32, i32
  }
  func.func @transform_18(%arg0: i32) -> (i32, i32) {
    %c0_i32 = arith.constant 0 : i32
    %c0_i32_0 = arith.constant 0 : i32
    %c0_i32_1 = arith.constant 0 : i32
    return %c0_i32, %c0_i32_0 : i32, i32
  }
  func.func @transform_19(%arg0: i32) -> (i32, i32) {
    %c0_i32 = arith.constant 0 : i32
    %c0_i32_0 = arith.constant 0 : i32
    %c0_i32_1 = arith.constant 0 : i32
    return %c0_i32, %c0_i32_0 : i32, i32
  }
  func.func @transform_20(%arg0: i32) -> (i32, i32) {
    %c0_i32 = arith.constant 0 : i32
    %c0_i32_0 = arith.constant 0 : i32
    %c0_i32_1 = arith.constant 0 : i32
    return %c0_i32, %c0_i32_0 : i32, i32
  }
  func.func @transform_21(%arg0: i32) -> (i32, i32) {
    %c0_i32 = arith.constant 0 : i32
    %c0_i32_0 = arith.constant 0 : i32
    %c0_i32_1 = arith.constant 0 : i32
    return %c0_i32, %c0_i32_0 : i32, i32
  }
  func.func @transform_22(%arg0: i32) -> (i32, i32) {
    %c0_i32 = arith.constant 0 : i32
    %c0_i32_0 = arith.constant 0 : i32
    %c0_i32_1 = arith.constant 0 : i32
    return %c0_i32, %c0_i32_0 : i32, i32
  }
  func.func @transform_23(%arg0: i32) -> (i32, i32) {
    %c0_i32 = arith.constant 0 : i32
    %c0_i32_0 = arith.constant 0 : i32
    %c0_i32_1 = arith.constant 0 : i32
    return %c0_i32, %c0_i32_0 : i32, i32
  }
  func.func @transform_24(%arg0: i32) -> (i32, i32) {
    %c0_i32 = arith.constant 0 : i32
    %c0_i32_0 = arith.constant 0 : i32
    %c0_i32_1 = arith.constant 0 : i32
    return %c0_i32, %c0_i32_0 : i32, i32
  }
  func.func @transform_25(%arg0: i32) -> (i32, i32) {
    %c0_i32 = arith.constant 0 : i32
    %c0_i32_0 = arith.constant 0 : i32
    %c0_i32_1 = arith.constant 0 : i32
    return %c0_i32, %c0_i32_0 : i32, i32
  }
  func.func @transform_26(%arg0: i32) -> (i32, i32) {
    %c0_i32 = arith.constant 0 : i32
    %c0_i32_0 = arith.constant 0 : i32
    %c0_i32_1 = arith.constant 0 : i32
    return %c0_i32, %c0_i32_0 : i32, i32
  }
  func.func @transform_27(%arg0: i32) -> (i32, i32) {
    %c0_i32 = arith.constant 0 : i32
    %c0_i32_0 = arith.constant 0 : i32
    return %c0_i32, %arg0 : i32, i32
  }
}

</mosaic_0001>

<llo_original>
// kernel: tpu_custom_call.1
$region0: #{tpu_custom_call.1}
  #allocation0 [shape = 'u32[]', space=smem, size = 0x4, offset = 0x4, fixed_abs, tag = 'smem constant byte address 0x4 - core index']
  #allocation1 [shape = 'u32[72,128]{1,0:T(1,128)}', space=vmem, size = 0x9000, scoped, tag = 'internal scratch']
  %s0 = inlined_call_operand.hbm [shape: f32[8,2048], index: 0, kind: input, shape index: {}]
  %s1 = inlined_call_operand.vmem [shape: bf16[8,2048], index: 1, kind: input, shape index: {}]
  %s2 = inlined_call_operand.hbm [shape: f32[5,2048], index: 2, kind: input, shape index: {}]
  %s3 = inlined_call_operand.hbm [shape: f32[5,2048], index: 3, kind: input, shape index: {}]
  %s4 = inlined_call_operand.hbm [shape: f32[7,2048], index: 4, kind: input, shape index: {}]
  %s5 = inlined_call_operand.hbm [shape: f32[7,2048], index: 5, kind: input, shape index: {}]
  %s6 = inlined_call_operand.hbm [shape: f32[3,2048], index: 6, kind: input, shape index: {}]
  %s7 = inlined_call_operand.hbm [shape: f32[3,2048], index: 7, kind: input, shape index: {}]
  %s8 = inlined_call_operand.vmem [shape: bf16[8,8], index: 8, kind: input, shape index: {}]
  %s9 = inlined_call_operand.vmem [shape: f32[8,1], index: 9, kind: input, shape index: {}]
  %s10 = inlined_call_operand.vmem [shape: f32[8,25], index: 10, kind: input, shape index: {}]
  %s11 = inlined_call_operand.vmem [shape: f32[8,1], index: 11, kind: input, shape index: {}]
  %s12 = inlined_call_operand.vmem [shape: f32[8,49], index: 12, kind: input, shape index: {}]
  %s13 = inlined_call_operand.vmem [shape: f32[8,1], index: 13, kind: input, shape index: {}]
  %s14 = inlined_call_operand.vmem [shape: bf16[8,8], index: 14, kind: input, shape index: {}]
  %s15 = inlined_call_operand.vmem [shape: f32[8,1], index: 15, kind: input, shape index: {}]
  %s16 = inlined_call_operand.vmem [shape: f32[8,8], index: 16, kind: input, shape index: {}]
  %s17 = inlined_call_operand.vmem [shape: f32[8,8], index: 17, kind: input, shape index: {}]
  %s18 = inlined_call_operand.vmem [shape: bf16[8,8], index: 18, kind: input, shape index: {}]
  %s19 = inlined_call_operand.vmem [shape: f32[8,1], index: 19, kind: input, shape index: {}]
  %s20 = inlined_call_operand.vmem [shape: f32[8,1], index: 20, kind: input, shape index: {}]
  %s21 = inlined_call_operand.vmem [shape: bf16[32,8], index: 21, kind: input, shape index: {}]
  %s22 = inlined_call_operand.vmem [shape: f32[32,1], index: 22, kind: input, shape index: {}]
  %s23 = inlined_call_operand.vmem [shape: f32[32,9], index: 23, kind: input, shape index: {}]
  %s24 = inlined_call_operand.vmem [shape: f32[32,1], index: 24, kind: input, shape index: {}]
  %s25 = inlined_call_operand.vmem [shape: bf16[8,32], index: 25, kind: input, shape index: {}]
  %s26 = inlined_call_operand.vmem [shape: f32[8,1], index: 26, kind: input, shape index: {}]
  %s27 = inlined_call_operand.hbm [shape: f32[8,2048], index: 27, kind: output, shape index: {}]
  %s28 = sld [smem:[#allocation0]]
  $region146: #{tpu_custom_call.1} parent=0
    _
  %s30 = ssub.s32 1, %s28
  %s31 = scalar_select 0, %s30, %s28
  $region1: #{tpu_custom_call.1} parent=0
    #allocation2 [shape = 'u8[65536]{0}', space=vmem, size = 0x10000, scoped, tag = 'input window, operand 0, single buffered']
    #allocation3 [shape = 's32[1]{0}', space=sflag, size = 0x4, scoped, tag = 'scoped memory for tpu_custom_call.1']
    #allocation4 [shape = 's32[1]{0}', space=sflag, size = 0x4, scoped, tag = 'scoped memory for tpu_custom_call.1']
    #allocation5 [shape = 'u8[65536]{0}', space=vmem, size = 0x10000, scoped, tag = 'input window, operand 2, single buffered']
    #allocation6 [shape = 's32[1]{0}', space=sflag, size = 0x4, scoped, tag = 'scoped memory for tpu_custom_call.1']
    #allocation7 [shape = 'u8[65536]{0}', space=vmem, size = 0x10000, scoped, tag = 'input window, operand 3, single buffered']
    #allocation8 [shape = 'u8[65536]{0}', space=vmem, size = 0x10000, scoped, tag = 'input window, operand 4, single buffered']
    #allocation9 [shape = 's32[1]{0}', space=sflag, size = 0x4, scoped, tag = 'scoped memory for tpu_custom_call.1']
    #allocation10 [shape = 'u8[65536]{0}', space=vmem, size = 0x10000, scoped, tag = 'input window, operand 5, single buffered']
    #allocation11 [shape = 'u8[32768]{0}', space=vmem, size = 0x8000, scoped, tag = 'input window, operand 6, single buffered']
    #allocation12 [shape = 's32[1]{0}', space=sflag, size = 0x4, scoped, tag = 'scoped memory for tpu_custom_call.1']
    #allocation13 [shape = 'u8[32768]{0}', space=vmem, size = 0x8000, scoped, tag = 'input window, operand 7, single buffered']
    #allocation14 [shape = 'u8[65536]{0}', space=vmem, size = 0x10000, scoped, tag = 'output window, operand 0, single buffered']
    %32 = vsyncpa [#allocation3], 0
    %33 = vsyncpa [#allocation6], 0
    %34 = vsyncpa [#allocation9], 0
    %35 = vsyncpa [#allocation12], 0
    %36 = vsyncpa [#allocation4], 0
    // Predicated region
    $region2: #{tpu_custom_call.1} parent=1 // pred_check
      _
    $region3: #{tpu_custom_call.1} parent=1 // pred_check_branch
      %38 = sbr.rel (0) target = $region5
    $region4: #{tpu_custom_call.1} parent=1 // pred_region
      %40 = vsyncadd [#allocation3], 0
      %s42 = sshll.u32 %s0, 4
      %s43 = int_to_ptr.hbm [resolvable:$true] %s42
      %s44 = sshll.u32 [#allocation2], 4
      %s45 = int_to_ptr.vmem [resolvable:$true] %s44
      %47 = dma.hbm_to_vmem [thread:$0]  %s43, 2048, %s45, [#allocation3]
    $region5: #{tpu_custom_call.1} parent=1 // pred_fallthru
      _
    // Predicated region
    $region6: #{tpu_custom_call.1} parent=1 // pred_check
      _
    $region7: #{tpu_custom_call.1} parent=1 // pred_check_branch
      %49 = sbr.rel (0) target = $region9
    $region8: #{tpu_custom_call.1} parent=1 // pred_region
      _
    $region9: #{tpu_custom_call.1} parent=1 // pred_fallthru
      _
    // Predicated region
    $region10: #{tpu_custom_call.1} parent=1 // pred_check
      _
    $region11: #{tpu_custom_call.1} parent=1 // pred_check_branch
      %51 = sbr.rel (0) target = $region13
    $region12: #{tpu_custom_call.1} parent=1 // pred_region
      %53 = vsyncadd [#allocation6], 0
      %s55 = sshll.u32 %s2, 4
      %s56 = int_to_ptr.hbm [resolvable:$true] %s55
      %s57 = sshll.u32 [#allocation5], 4
      %s58 = int_to_ptr.vmem [resolvable:$true] %s57
      %60 = dma.hbm_to_vmem [thread:$0]  %s56, 2048, %s58, [#allocation6]
    $region13: #{tpu_custom_call.1} parent=1 // pred_fallthru
      _
    // Predicated region
    $region14: #{tpu_custom_call.1} parent=1 // pred_check
      _
    $region15: #{tpu_custom_call.1} parent=1 // pred_check_branch
      %62 = sbr.rel (0) target = $region17
    $region16: #{tpu_custom_call.1} parent=1 // pred_region
      %64 = vsyncadd [#allocation6], 0
      %s66 = sshll.u32 %s3, 4
      %s67 = int_to_ptr.hbm [resolvable:$true] %s66
      %s68 = sshll.u32 [#allocation7], 4
      %s69 = int_to_ptr.vmem [resolvable:$true] %s68
      %71 = dma.hbm_to_vmem [thread:$0]  %s67, 2048, %s69, [#allocation6]
    $region17: #{tpu_custom_call.1} parent=1 // pred_fallthru
      _
    // Predicated region
    $region18: #{tpu_custom_call.1} parent=1 // pred_check
      _
    $region19: #{tpu_custom_call.1} parent=1 // pred_check_branch
      %73 = sbr.rel (0) target = $region21
    $region20: #{tpu_custom_call.1} parent=1 // pred_region
      %75 = vsyncadd [#allocation9], 0
      %s77 = sshll.u32 %s4, 4
      %s78 = int_to_ptr.hbm [resolvable:$true] %s77
      %s79 = sshll.u32 [#allocation8], 4
      %s80 = int_to_ptr.vmem [resolvable:$true] %s79
      %82 = dma.hbm_to_vmem [thread:$0]  %s78, 2048, %s80, [#allocation9]
    $region21: #{tpu_custom_call.1} parent=1 // pred_fallthru
      _
    // Predicated region
    $region22: #{tpu_custom_call.1} parent=1 // pred_check
      _
    $region23: #{tpu_custom_call.1} parent=1 // pred_check_branch
      %84 = sbr.rel (0) target = $region25
    $region24: #{tpu_custom_call.1} parent=1 // pred_region
      %86 = vsyncadd [#allocation9], 0
      %s88 = sshll.u32 %s5, 4
      %s89 = int_to_ptr.hbm [resolvable:$true] %s88
      %s90 = sshll.u32 [#allocation10], 4
      %s91 = int_to_ptr.vmem [resolvable:$true] %s90
      %93 = dma.hbm_to_vmem [thread:$0]  %s89, 2048, %s91, [#allocation9]
    $region25: #{tpu_custom_call.1} parent=1 // pred_fallthru
      _
    // Predicated region
    $region26: #{tpu_custom_call.1} parent=1 // pred_check
      _
    $region27: #{tpu_custom_call.1} parent=1 // pred_check_branch
      %95 = sbr.rel (0) target = $region29
    $region28: #{tpu_custom_call.1} parent=1 // pred_region
      %97 = vsyncadd [#allocation12], 0
      %s99 = sshll.u32 %s6, 4
      %s100 = int_to_ptr.hbm [resolvable:$true] %s99
      %s101 = sshll.u32 [#allocation11], 4
      %s102 = int_to_ptr.vmem [resolvable:$true] %s101
      %104 = dma.hbm_to_vmem [thread:$0]  %s100, 1024, %s102, [#allocation12]
    $region29: #{tpu_custom_call.1} parent=1 // pred_fallthru
      _
    // Predicated region
    $region30: #{tpu_custom_call.1} parent=1 // pred_check
      _
    $region31: #{tpu_custom_call.1} parent=1 // pred_check_branch
      %106 = sbr.rel (0) target = $region33
    $region32: #{tpu_custom_call.1} parent=1 // pred_region
      %108 = vsyncadd [#allocation12], 0
      %s110 = sshll.u32 %s7, 4
      %s111 = int_to_ptr.hbm [resolvable:$true] %s110
      %s112 = sshll.u32 [#allocation13], 4
      %s113 = int_to_ptr.vmem [resolvable:$true] %s112
      %115 = dma.hbm_to_vmem [thread:$0]  %s111, 1024, %s113, [#allocation12]
    $region33: #{tpu_custom_call.1} parent=1 // pred_fallthru
      _
    // Predicated region
    $region34: #{tpu_custom_call.1} parent=1 // pred_check
      _
    $region35: #{tpu_custom_call.1} parent=1 // pred_check_branch
      %117 = sbr.rel (0) target = $region37
    $region36: #{tpu_custom_call.1} parent=1 // pred_region
      _
    $region37: #{tpu_custom_call.1} parent=1 // pred_fallthru
      _
    // Predicated region
    $region38: #{tpu_custom_call.1} parent=1 // pred_check
      _
    $region39: #{tpu_custom_call.1} parent=1 // pred_check_branch
      %119 = sbr.rel (0) target = $region41
    $region40: #{tpu_custom_call.1} parent=1 // pred_region
      _
    $region41: #{tpu_custom_call.1} parent=1 // pred_fallthru
      _
    // Predicated region
    $region42: #{tpu_custom_call.1} parent=1 // pred_check
      _
    $region43: #{tpu_custom_call.1} parent=1 // pred_check_branch
      %121 = sbr.rel (0) target = $region45
    $region44: #{tpu_custom_call.1} parent=1 // pred_region
      _
    $region45: #{tpu_custom_call.1} parent=1 // pred_fallthru
      _
    // Predicated region
    $region46: #{tpu_custom_call.1} parent=1 // pred_check
      _
    $region47: #{tpu_custom_call.1} parent=1 // pred_check_branch
      %123 = sbr.rel (0) target = $region49
    $region48: #{tpu_custom_call.1} parent=1 // pred_region
      _
    $region49: #{tpu_custom_call.1} parent=1 // pred_fallthru
      _
    // Predicated region
    $region50: #{tpu_custom_call.1} parent=1 // pred_check
      _
    $region51: #{tpu_custom_call.1} parent=1 // pred_check_branch
      %125 = sbr.rel (0) target = $region53
    $region52: #{tpu_custom_call.1} parent=1 // pred_region
      _
    $region53: #{tpu_custom_call.1} parent=1 // pred_fallthru
      _
    // Predicated region
    $region54: #{tpu_custom_call.1} parent=1 // pred_check
      _
    $region55: #{tpu_custom_call.1} parent=1 // pred_check_branch
      %127 = sbr.rel (0) target = $region57
    $region56: #{tpu_custom_call.1} parent=1 // pred_region
      _
    $region57: #{tpu_custom_call.1} parent=1 // pred_fallthru
      _
    // Predicated region
    $region58: #{tpu_custom_call.1} parent=1 // pred_check
      _
    $region59: #{tpu_custom_call.1} parent=1 // pred_check_branch
      %129 = sbr.rel (0) target = $region61
    $region60: #{tpu_custom_call.1} parent=1 // pred_region
      _
    $region61: #{tpu_custom_call.1} parent=1 // pred_fallthru
      _
    // Predicated region
    $region62: #{tpu_custom_call.1} parent=1 // pred_check
      _
    $region63: #{tpu_custom_call.1} parent=1 // pred_check_branch
      %131 = sbr.rel (0) target = $region65
    $region64: #{tpu_custom_call.1} parent=1 // pred_region
      _
    $region65: #{tpu_custom_call.1} parent=1 // pred_fallthru
      _
    // Predicated region
    $region66: #{tpu_custom_call.1} parent=1 // pred_check
      _
    $region67: #{tpu_custom_call.1} parent=1 // pred_check_branch
      %133 = sbr.rel (0) target = $region69
    $region68: #{tpu_custom_call.1} parent=1 // pred_region
      _
    $region69: #{tpu_custom_call.1} parent=1 // pred_fallthru
      _
    // Predicated region
    $region70: #{tpu_custom_call.1} parent=1 // pred_check
      _
    $region71: #{tpu_custom_call.1} parent=1 // pred_check_branch
      %135 = sbr.rel (0) target = $region73
    $region72: #{tpu_custom_call.1} parent=1 // pred_region
      _
    $region73: #{tpu_custom_call.1} parent=1 // pred_fallthru
      _
    // Predicated region
    $region74: #{tpu_custom_call.1} parent=1 // pred_check
      _
    $region75: #{tpu_custom_call.1} parent=1 // pred_check_branch
      %137 = sbr.rel (0) target = $region77
    $region76: #{tpu_custom_call.1} parent=1 // pred_region
      _
    $region77: #{tpu_custom_call.1} parent=1 // pred_fallthru
      _
    // Predicated region
    $region78: #{tpu_custom_call.1} parent=1 // pred_check
      _
    $region79: #{tpu_custom_call.1} parent=1 // pred_check_branch
      %139 = sbr.rel (0) target = $region81
    $region80: #{tpu_custom_call.1} parent=1 // pred_region
      _
    $region81: #{tpu_custom_call.1} parent=1 // pred_fallthru
      _
    // Predicated region
    $region82: #{tpu_custom_call.1} parent=1 // pred_check
      _
    $region83: #{tpu_custom_call.1} parent=1 // pred_check_branch
      %141 = sbr.rel (0) target = $region85
    $region84: #{tpu_custom_call.1} parent=1 // pred_region
      _
    $region85: #{tpu_custom_call.1} parent=1 // pred_fallthru
      _
    // Predicated region
    $region86: #{tpu_custom_call.1} parent=1 // pred_check
      _
    $region87: #{tpu_custom_call.1} parent=1 // pred_check_branch
      %143 = sbr.rel (0) target = $region89
    $region88: #{tpu_custom_call.1} parent=1 // pred_region
      _
    $region89: #{tpu_custom_call.1} parent=1 // pred_fallthru
      _
    // Predicated region
    $region90: #{tpu_custom_call.1} parent=1 // pred_check
      _
    $region91: #{tpu_custom_call.1} parent=1 // pred_check_branch
      %145 = sbr.rel (0) target = $region93
    $region92: #{tpu_custom_call.1} parent=1 // pred_region
      _
    $region93: #{tpu_custom_call.1} parent=1 // pred_fallthru
      _
    // Predicated region
    $region94: #{tpu_custom_call.1} parent=1 // pred_check
      _
    $region95: #{tpu_custom_call.1} parent=1 // pred_check_branch
      %147 = sbr.rel (0) target = $region97
    $region96: #{tpu_custom_call.1} parent=1 // pred_region
      _
    $region97: #{tpu_custom_call.1} parent=1 // pred_fallthru
      _
    // Predicated region
    $region98: #{tpu_custom_call.1} parent=1 // pred_check
      _
    $region99: #{tpu_custom_call.1} parent=1 // pred_check_branch
      %149 = sbr.rel (0) target = $region101
    $region100: #{tpu_custom_call.1} parent=1 // pred_region
      _
    $region101: #{tpu_custom_call.1} parent=1 // pred_fallthru
      _
    // Predicated region
    $region102: #{tpu_custom_call.1} parent=1 // pred_check
      _
    $region103: #{tpu_custom_call.1} parent=1 // pred_check_branch
      %151 = sbr.rel (0) target = $region105
    $region104: #{tpu_custom_call.1} parent=1 // pred_region
      _
    $region105: #{tpu_custom_call.1} parent=1 // pred_fallthru
      _
    // Predicated region
    $region106: #{tpu_custom_call.1} parent=1 // pred_check
      _
    $region107: #{tpu_custom_call.1} parent=1 // pred_check_branch
      %153 = sbr.rel (0) target = $region109
    $region108: #{tpu_custom_call.1} parent=1 // pred_region
      _
    $region109: #{tpu_custom_call.1} parent=1 // pred_fallthru
      _
    // Predicated region
    $region110: #{tpu_custom_call.1} parent=1 // pred_check
      _
    $region111: #{tpu_custom_call.1} parent=1 // pred_check_branch
      %155 = sbr.rel (0) target = $region113
    $region112: #{tpu_custom_call.1} parent=1 // pred_region
      %157 = dma.done [#allocation3], 2048
    $region113: #{tpu_custom_call.1} parent=1 // pred_fallthru
      _
    // Predicated region
    $region114: #{tpu_custom_call.1} parent=1 // pred_check
      _
    $region115: #{tpu_custom_call.1} parent=1 // pred_check_branch
      %159 = sbr.rel (0) target = $region117
    $region116: #{tpu_custom_call.1} parent=1 // pred_region
      %161 = dma.done [#allocation6], 2048
    $region117: #{tpu_custom_call.1} parent=1 // pred_fallthru
      _
    // Predicated region
    $region118: #{tpu_custom_call.1} parent=1 // pred_check
      _
    $region119: #{tpu_custom_call.1} parent=1 // pred_check_branch
      %163 = sbr.rel (0) target = $region121
    $region120: #{tpu_custom_call.1} parent=1 // pred_region
      %165 = dma.done [#allocation6], 2048
    $region121: #{tpu_custom_call.1} parent=1 // pred_fallthru
      _
    // Predicated region
    $region122: #{tpu_custom_call.1} parent=1 // pred_check
      _
    $region123: #{tpu_custom_call.1} parent=1 // pred_check_branch
      %167 = sbr.rel (0) target = $region125
    $region124: #{tpu_custom_call.1} parent=1 // pred_region
      %169 = dma.done [#allocation9], 2048
    $region125: #{tpu_custom_call.1} parent=1 // pred_fallthru
      _
    // Predicated region
    $region126: #{tpu_custom_call.1} parent=1 // pred_check
      _
    $region127: #{tpu_custom_call.1} parent=1 // pred_check_branch
      %171 = sbr.rel (0) target = $region129
    $region128: #{tpu_custom_call.1} parent=1 // pred_region
      %173 = dma.done [#allocation9], 2048
    $region129: #{tpu_custom_call.1} parent=1 // pred_fallthru
      _
    // Predicated region
    $region130: #{tpu_custom_call.1} parent=1 // pred_check
      _
    $region131: #{tpu_custom_call.1} parent=1 // pred_check_branch
      %175 = sbr.rel (0) target = $region133
    $region132: #{tpu_custom_call.1} parent=1 // pred_region
      %177 = dma.done [#allocation12], 1024
    $region133: #{tpu_custom_call.1} parent=1 // pred_fallthru
      _
    // Predicated region
    $region134: #{tpu_custom_call.1} parent=1 // pred_check
      _
    $region135: #{tpu_custom_call.1} parent=1 // pred_check_branch
      %179 = sbr.rel (0) target = $region137
    $region136: #{tpu_custom_call.1} parent=1 // pred_region
      %181 = dma.done [#allocation12], 1024
    $region137: #{tpu_custom_call.1} parent=1 // pred_fallthru
      _
    %v183 = vld [vmem:[#allocation2] sm:$0xff]
    %v184 = vld [vmem:[#allocation2 + $0x8] sm:$0xff]
    %v185 = vld [vmem:[#allocation2 + $0x10] sm:$0xff]
    %v186 = vld [vmem:[#allocation2 + $0x18] sm:$0xff]
    %v187 = vld [vmem:[#allocation2 + $0x20] sm:$0xff]
    %v188 = vld [vmem:[#allocation2 + $0x28] sm:$0xff]
    %v189 = vld [vmem:[#allocation2 + $0x30] sm:$0xff]
    %v190 = vld [vmem:[#allocation2 + $0x38] sm:$0xff]
    %v191 = vld [vmem:[#allocation2 + $0x40] sm:$0xff]
    %v192 = vld [vmem:[#allocation2 + $0x48] sm:$0xff]
    %v193 = vld [vmem:[#allocation2 + $0x50] sm:$0xff]
    %v194 = vld [vmem:[#allocation2 + $0x58] sm:$0xff]
    %v195 = vld [vmem:[#allocation2 + $0x60] sm:$0xff]
    %v196 = vld [vmem:[#allocation2 + $0x68] sm:$0xff]
    %v197 = vld [vmem:[#allocation2 + $0x70] sm:$0xff]
    %v198 = vld [vmem:[#allocation2 + $0x78] sm:$0xff]
    %v199 = vld [vmem:[%s8] sm:$0xf]
    %v200 = vpack.c.bf16 %v183, %v183
    %v201 = vpack.c.bf16 %v184, %v184
    %v202 = vpack.c.bf16 %v185, %v185
    %v203 = vpack.c.bf16 %v186, %v186
    %v204 = vpack.c.bf16 %v187, %v187
    %v205 = vpack.c.bf16 %v188, %v188
    %v206 = vpack.c.bf16 %v189, %v189
    %v207 = vpack.c.bf16 %v190, %v190
    %v208 = vpack.c.bf16 %v191, %v191
    %v209 = vpack.c.bf16 %v192, %v192
    %v210 = vpack.c.bf16 %v193, %v193
    %v211 = vpack.c.bf16 %v194, %v194
    %v212 = vpack.c.bf16 %v195, %v195
    %v213 = vpack.c.bf16 %v196, %v196
    %v214 = vpack.c.bf16 %v197, %v197
    %v215 = vpack.c.bf16 %v198, %v198
    %v216 = vld [vmem:[%s9] sm:$0xff]
    %218 = vset.pattern.permute.xlu0 0
    %219 = vperm.xlu0 %218, %v216
    %v220 = vpop.permute.xlu0 %219
    %vm222 = vcmask 64512
    %v224 = vsel %vm222, %v199, 0
    %vm226 = vcmask 1043456
    %v228 = vsel %vm226, %v200, 0
    %v231 = vsel %vm226, %v201, 0
    %v234 = vsel %vm226, %v202, 0
    %v237 = vsel %vm226, %v203, 0
    %v240 = vsel %vm226, %v204, 0
    %v243 = vsel %vm226, %v205, 0
    %v246 = vsel %vm226, %v206, 0
    %v249 = vsel %vm226, %v207, 0
    %v252 = vsel %vm226, %v208, 0
    %v255 = vsel %vm226, %v209, 0
    %v258 = vsel %vm226, %v210, 0
    %v261 = vsel %vm226, %v211, 0
    %v264 = vsel %vm226, %v212, 0
    %v267 = vsel %vm226, %v213, 0
    %v270 = vsel %vm226, %v214, 0
    %v273 = vsel %vm226, %v215, 0
    %275 = vmatpush.bf16.msra.mxu0 0
    %276 = vmatpush.bf16.msra.mxu0 0
    %277 = vmatpush.bf16.msra.mxu0 0
    %278 = vmatpush.bf16.msra.mxu0 0
    %279 = vmatpush.bf16.msra.mxu0 0
    %280 = vmatpush.bf16.msra.mxu0 0
    %281 = vmatpush.bf16.msra.mxu0 0
    %282 = vmatpush.bf16.msra.mxu0 %v228
    %283 = vmatmul.bf16.gmra.mxu0 %v224
    %v284 = vpop.f32.mrf.mxu0
    %v285 = vadd.f32 %v220, %v284
    %v286 = vpop.f32.mrf.mxu0
    %287 = vdwg.mxu0
    %288 = vmatpush.bf16.msra.mxu0 0
    %289 = vmatpush.bf16.msra.mxu0 0
    %290 = vmatpush.bf16.msra.mxu0 0
    %291 = vmatpush.bf16.msra.mxu0 0
    %292 = vmatpush.bf16.msra.mxu0 0
    %293 = vmatpush.bf16.msra.mxu0 0
    %294 = vmatpush.bf16.msra.mxu0 0
    %295 = vmatpush.bf16.msra.mxu0 %v231
    %296 = vmatmul.bf16.gmra.mxu0 %v224
    %v297 = vpop.f32.mrf.mxu0
    %v298 = vadd.f32 %v220, %v297
    %v299 = vpop.f32.mrf.mxu0
    %300 = vdwg.mxu0
    %301 = vmatpush.bf16.msra.mxu0 0
    %302 = vmatpush.bf16.msra.mxu0 0
    %303 = vmatpush.bf16.msra.mxu0 0
    %304 = vmatpush.bf16.msra.mxu0 0
    %305 = vmatpush.bf16.msra.mxu0 0
    %306 = vmatpush.bf16.msra.mxu0 0
    %307 = vmatpush.bf16.msra.mxu0 0
    %308 = vmatpush.bf16.msra.mxu0 %v234
    %309 = vmatmul.bf16.gmra.mxu0 %v224
    %v310 = vpop.f32.mrf.mxu0
    %v311 = vadd.f32 %v220, %v310
    %v312 = vpop.f32.mrf.mxu0
    %313 = vdwg.mxu0
    %314 = vmatpush.bf16.msra.mxu0 0
    %315 = vmatpush.bf16.msra.mxu0 0
    %316 = vmatpush.bf16.msra.mxu0 0
    %317 = vmatpush.bf16.msra.mxu0 0
    %318 = vmatpush.bf16.msra.mxu0 0
    %319 = vmatpush.bf16.msra.mxu0 0
    %320 = vmatpush.bf16.msra.mxu0 0
    %321 = vmatpush.bf16.msra.mxu0 %v237
    %322 = vmatmul.bf16.gmra.mxu0 %v224
    %v323 = vpop.f32.mrf.mxu0
    %v324 = vadd.f32 %v220, %v323
    %v325 = vpop.f32.mrf.mxu0
    %326 = vdwg.mxu0
    %327 = vmatpush.bf16.msra.mxu0 0
    %328 = vmatpush.bf16.msra.mxu0 0
    %329 = vmatpush.bf16.msra.mxu0 0
    %330 = vmatpush.bf16.msra.mxu0 0
    %331 = vmatpush.bf16.msra.mxu0 0
    %332 = vmatpush.bf16.msra.mxu0 0
    %333 = vmatpush.bf16.msra.mxu0 0
    %334 = vmatpush.bf16.msra.mxu0 %v240
    %335 = vmatmul.bf16.gmra.mxu0 %v224
    %v336 = vpop.f32.mrf.mxu0
    %v337 = vadd.f32 %v220, %v336
    %v338 = vpop.f32.mrf.mxu0
    %339 = vdwg.mxu0
    %340 = vmatpush.bf16.msra.mxu0 0
    %341 = vmatpush.bf16.msra.mxu0 0
    %342 = vmatpush.bf16.msra.mxu0 0
    %343 = vmatpush.bf16.msra.mxu0 0
    %344 = vmatpush.bf16.msra.mxu0 0
    %345 = vmatpush.bf16.msra.mxu0 0
    %346 = vmatpush.bf16.msra.mxu0 0
    %347 = vmatpush.bf16.msra.mxu0 %v243
    %348 = vmatmul.bf16.gmra.mxu0 %v224
    %v349 = vpop.f32.mrf.mxu0
    %v350 = vadd.f32 %v220, %v349
    %v351 = vpop.f32.mrf.mxu0
    %352 = vdwg.mxu0
    %353 = vmatpush.bf16.msra.mxu0 0
    %354 = vmatpush.bf16.msra.mxu0 0
    %355 = vmatpush.bf16.msra.mxu0 0
    %356 = vmatpush.bf16.msra.mxu0 0
    %357 = vmatpush.bf16.msra.mxu0 0
    %358 = vmatpush.bf16.msra.mxu0 0
    %359 = vmatpush.bf16.msra.mxu0 0
    %360 = vmatpush.bf16.msra.mxu0 %v246
    %361 = vmatmul.bf16.gmra.mxu0 %v224
    %v362 = vpop.f32.mrf.mxu0
    %v363 = vadd.f32 %v220, %v362
    %v364 = vpop.f32.mrf.mxu0
    %365 = vdwg.mxu0
    %366 = vmatpush.bf16.msra.mxu0 0
    %367 = vmatpush.bf16.msra.mxu0 0
    %368 = vmatpush.bf16.msra.mxu0 0
    %369 = vmatpush.bf16.msra.mxu0 0
    %370 = vmatpush.bf16.msra.mxu0 0
    %371 = vmatpush.bf16.msra.mxu0 0
    %372 = vmatpush.bf16.msra.mxu0 0
    %373 = vmatpush.bf16.msra.mxu0 %v249
    %374 = vmatmul.bf16.gmra.mxu0 %v224
    %v375 = vpop.f32.mrf.mxu0
    %v376 = vadd.f32 %v220, %v375
    %v377 = vpop.f32.mrf.mxu0
    %378 = vdwg.mxu0
    %379 = vmatpush.bf16.msra.mxu0 0
    %380 = vmatpush.bf16.msra.mxu0 0
    %381 = vmatpush.bf16.msra.mxu0 0
    %382 = vmatpush.bf16.msra.mxu0 0
    %383 = vmatpush.bf16.msra.mxu0 0
    %384 = vmatpush.bf16.msra.mxu0 0
    %385 = vmatpush.bf16.msra.mxu0 0
    %386 = vmatpush.bf16.msra.mxu0 %v252
    %387 = vmatmul.bf16.gmra.mxu0 %v224
    %v388 = vpop.f32.mrf.mxu0
    %v389 = vadd.f32 %v220, %v388
    %v390 = vpop.f32.mrf.mxu0
    %391 = vdwg.mxu0
    %392 = vmatpush.bf16.msra.mxu0 0
    %393 = vmatpush.bf16.msra.mxu0 0
    %394 = vmatpush.bf16.msra.mxu0 0
    %395 = vmatpush.bf16.msra.mxu0 0
    %396 = vmatpush.bf16.msra.mxu0 0
    %397 = vmatpush.bf16.msra.mxu0 0
    %398 = vmatpush.bf16.msra.mxu0 0
    %399 = vmatpush.bf16.msra.mxu0 %v255
    %400 = vmatmul.bf16.gmra.mxu0 %v224
    %v401 = vpop.f32.mrf.mxu0
    %v402 = vadd.f32 %v220, %v401
    %v403 = vpop.f32.mrf.mxu0
    %404 = vdwg.mxu0
    %405 = vmatpush.bf16.msra.mxu0 0
    %406 = vmatpush.bf16.msra.mxu0 0
    %407 = vmatpush.bf16.msra.mxu0 0
    %408 = vmatpush.bf16.msra.mxu0 0
    %409 = vmatpush.bf16.msra.mxu0 0
    %410 = vmatpush.bf16.msra.mxu0 0
    %411 = vmatpush.bf16.msra.mxu0 0
    %412 = vmatpush.bf16.msra.mxu0 %v258
    %413 = vmatmul.bf16.gmra.mxu0 %v224
    %v414 = vpop.f32.mrf.mxu0
    %v415 = vadd.f32 %v220, %v414
    %v416 = vpop.f32.mrf.mxu0
    %417 = vdwg.mxu0
    %418 = vmatpush.bf16.msra.mxu0 0
    %419 = vmatpush.bf16.msra.mxu0 0
    %420 = vmatpush.bf16.msra.mxu0 0
    %421 = vmatpush.bf16.msra.mxu0 0
    %422 = vmatpush.bf16.msra.mxu0 0
    %423 = vmatpush.bf16.msra.mxu0 0
    %424 = vmatpush.bf16.msra.mxu0 0
    %425 = vmatpush.bf16.msra.mxu0 %v261
    %426 = vmatmul.bf16.gmra.mxu0 %v224
    %v427 = vpop.f32.mrf.mxu0
    %v428 = vadd.f32 %v220, %v427
    %v429 = vpop.f32.mrf.mxu0
    %430 = vdwg.mxu0
    %431 = vmatpush.bf16.msra.mxu0 0
    %432 = vmatpush.bf16.msra.mxu0 0
    %433 = vmatpush.bf16.msra.mxu0 0
    %434 = vmatpush.bf16.msra.mxu0 0
    %435 = vmatpush.bf16.msra.mxu0 0
    %436 = vmatpush.bf16.msra.mxu0 0
    %437 = vmatpush.bf16.msra.mxu0 0
    %438 = vmatpush.bf16.msra.mxu0 %v264
    %439 = vmatmul.bf16.gmra.mxu0 %v224
    %v440 = vpop.f32.mrf.mxu0
    %v441 = vadd.f32 %v220, %v440
    %v442 = vpop.f32.mrf.mxu0
    %443 = vdwg.mxu0
    %444 = vmatpush.bf16.msra.mxu0 0
    %445 = vmatpush.bf16.msra.mxu0 0
    %446 = vmatpush.bf16.msra.mxu0 0
    %447 = vmatpush.bf16.msra.mxu0 0
    %448 = vmatpush.bf16.msra.mxu0 0
    %449 = vmatpush.bf16.msra.mxu0 0
    %450 = vmatpush.bf16.msra.mxu0 0
    %451 = vmatpush.bf16.msra.mxu0 %v267
    %452 = vmatmul.bf16.gmra.mxu0 %v224
    %v453 = vpop.f32.mrf.mxu0
    %v454 = vadd.f32 %v220, %v453
    %v455 = vpop.f32.mrf.mxu0
    %456 = vdwg.mxu0
    %457 = vmatpush.bf16.msra.mxu0 0
    %458 = vmatpush.bf16.msra.mxu0 0
    %459 = vmatpush.bf16.msra.mxu0 0
    %460 = vmatpush.bf16.msra.mxu0 0
    %461 = vmatpush.bf16.msra.mxu0 0
    %462 = vmatpush.bf16.msra.mxu0 0
    %463 = vmatpush.bf16.msra.mxu0 0
    %464 = vmatpush.bf16.msra.mxu0 %v270
    %465 = vmatmul.bf16.gmra.mxu0 %v224
    %v466 = vpop.f32.mrf.mxu0
    %v467 = vadd.f32 %v220, %v466
    %v468 = vpop.f32.mrf.mxu0
    %469 = vdwg.mxu0
    %470 = vmatpush.bf16.msra.mxu0 0
    %471 = vmatpush.bf16.msra.mxu0 0
    %472 = vmatpush.bf16.msra.mxu0 0
    %473 = vmatpush.bf16.msra.mxu0 0
    %474 = vmatpush.bf16.msra.mxu0 0
    %475 = vmatpush.bf16.msra.mxu0 0
    %476 = vmatpush.bf16.msra.mxu0 0
    %477 = vmatpush.bf16.msra.mxu0 %v273
    %478 = vmatmul.bf16.gmra.mxu0 %v224
    %v479 = vpop.f32.mrf.mxu0
    %v480 = vadd.f32 %v220, %v479
    %v481 = vpop.f32.mrf.mxu0
    %482 = vdwg.mxu0
    %v483 = vmul.f32 %v285, 0.5
    %v484 = vmul.f32 %v298, 0.5
    %v485 = vmul.f32 %v311, 0.5
    %v486 = vmul.f32 %v324, 0.5
    %v487 = vmul.f32 %v337, 0.5
    %v488 = vmul.f32 %v350, 0.5
    %v489 = vmul.f32 %v363, 0.5
    %v490 = vmul.f32 %v376, 0.5
    %v491 = vmul.f32 %v389, 0.5
    %v492 = vmul.f32 %v402, 0.5
    %v493 = vmul.f32 %v415, 0.5
    %v494 = vmul.f32 %v428, 0.5
    %v495 = vmul.f32 %v441, 0.5
    %v496 = vmul.f32 %v454, 0.5
    %v497 = vmul.f32 %v467, 0.5
    %v498 = vmul.f32 %v480, 0.5
    %v499 = vmul.f32 %v285, %v285
    %v500 = vmul.f32 %v298, %v298
    %v501 = vmul.f32 %v311, %v311
    %v502 = vmul.f32 %v324, %v324
    %v503 = vmul.f32 %v337, %v337
    %v504 = vmul.f32 %v350, %v350
    %v505 = vmul.f32 %v363, %v363
    %v506 = vmul.f32 %v376, %v376
    %v507 = vmul.f32 %v389, %v389
    %v508 = vmul.f32 %v402, %v402
    %v509 = vmul.f32 %v415, %v415
    %v510 = vmul.f32 %v428, %v428
    %v511 = vmul.f32 %v441, %v441
    %v512 = vmul.f32 %v454, %v454
    %v513 = vmul.f32 %v467, %v467
    %v514 = vmul.f32 %v480, %v480
    %v515 = vmul.f32 %v499, %v285
    %v516 = vmul.f32 %v500, %v298
    %v517 = vmul.f32 %v501, %v311
    %v518 = vmul.f32 %v502, %v324
    %v519 = vmul.f32 %v503, %v337
    %v520 = vmul.f32 %v504, %v350
    %v521 = vmul.f32 %v505, %v363
    %v522 = vmul.f32 %v506, %v376
    %v523 = vmul.f32 %v507, %v389
    %v524 = vmul.f32 %v508, %v402
    %v525 = vmul.f32 %v509, %v415
    %v526 = vmul.f32 %v510, %v428
    %v527 = vmul.f32 %v511, %v441
    %v528 = vmul.f32 %v512, %v454
    %v529 = vmul.f32 %v513, %v467
    %v530 = vmul.f32 %v514, %v480
    %v531 = vmul.f32 %v515, 0.044715
    %v532 = vmul.f32 %v516, 0.044715
    %v533 = vmul.f32 %v517, 0.044715
    %v534 = vmul.f32 %v518, 0.044715
    %v535 = vmul.f32 %v519, 0.044715
    %v536 = vmul.f32 %v520, 0.044715
    %v537 = vmul.f32 %v521, 0.044715
    %v538 = vmul.f32 %v522, 0.044715
    %v539 = vmul.f32 %v523, 0.044715
    %v540 = vmul.f32 %v524, 0.044715
    %v541 = vmul.f32 %v525, 0.044715
    %v542 = vmul.f32 %v526, 0.044715
    %v543 = vmul.f32 %v527, 0.044715
    %v544 = vmul.f32 %v528, 0.044715
    %v545 = vmul.f32 %v529, 0.044715
    %v546 = vmul.f32 %v530, 0.044715
    %v547 = vadd.f32 %v285, %v531
    %v548 = vadd.f32 %v298, %v532
    %v549 = vadd.f32 %v311, %v533
    %v550 = vadd.f32 %v324, %v534
    %v551 = vadd.f32 %v337, %v535
    %v552 = vadd.f32 %v350, %v536
    %v553 = vadd.f32 %v363, %v537
    %v554 = vadd.f32 %v376, %v538
    %v555 = vadd.f32 %v389, %v539
    %v556 = vadd.f32 %v402, %v540
    %v557 = vadd.f32 %v415, %v541
    %v558 = vadd.f32 %v428, %v542
    %v559 = vadd.f32 %v441, %v543
    %v560 = vadd.f32 %v454, %v544
    %v561 = vadd.f32 %v467, %v545
    %v562 = vadd.f32 %v480, %v546
    %v563 = vmul.f32 %v547, 0.7978846
    %v564 = vmul.f32 %v548, 0.7978846
    %v565 = vmul.f32 %v549, 0.7978846
    %v566 = vmul.f32 %v550, 0.7978846
    %v567 = vmul.f32 %v551, 0.7978846
    %v568 = vmul.f32 %v552, 0.7978846
    %v569 = vmul.f32 %v553, 0.7978846
    %v570 = vmul.f32 %v554, 0.7978846
    %v571 = vmul.f32 %v555, 0.7978846
    %v572 = vmul.f32 %v556, 0.7978846
    %v573 = vmul.f32 %v557, 0.7978846
    %v574 = vmul.f32 %v558, 0.7978846
    %v575 = vmul.f32 %v559, 0.7978846
    %v576 = vmul.f32 %v560, 0.7978846
    %v577 = vmul.f32 %v561, 0.7978846
    %v578 = vmul.f32 %v562, 0.7978846
    %v579 = vtanh.pop %v563
    %v580 = vtanh.pop %v564
    %v581 = vtanh.pop %v565
    %v582 = vtanh.pop %v566
    %v583 = vtanh.pop %v567
    %v584 = vtanh.pop %v568
    %v585 = vtanh.pop %v569
    %v586 = vtanh.pop %v570
    %v587 = vtanh.pop %v571
    %v588 = vtanh.pop %v572
    %v589 = vtanh.pop %v573
    %v590 = vtanh.pop %v574
    %v591 = vtanh.pop %v575
    %v592 = vtanh.pop %v576
    %v593 = vtanh.pop %v577
    %v594 = vtanh.pop %v578
    %v595 = vadd.f32 %v579, 1.0
    %v596 = vadd.f32 %v580, 1.0
    %v597 = vadd.f32 %v581, 1.0
    %v598 = vadd.f32 %v582, 1.0
    %v599 = vadd.f32 %v583, 1.0
    %v600 = vadd.f32 %v584, 1.0
    %v601 = vadd.f32 %v585, 1.0
    %v602 = vadd.f32 %v586, 1.0
    %v603 = vadd.f32 %v587, 1.0
    %v604 = vadd.f32 %v588, 1.0
    %v605 = vadd.f32 %v589, 1.0
    %v606 = vadd.f32 %v590, 1.0
    %v607 = vadd.f32 %v591, 1.0
    %v608 = vadd.f32 %v592, 1.0
    %v609 = vadd.f32 %v593, 1.0
    %v610 = vadd.f32 %v594, 1.0
    %v611 = vmul.f32 %v483, %v595
    %v612 = vmul.f32 %v484, %v596
    %v613 = vmul.f32 %v485, %v597
    %v614 = vmul.f32 %v486, %v598
    %v615 = vmul.f32 %v487, %v599
    %v616 = vmul.f32 %v488, %v600
    %v617 = vmul.f32 %v489, %v601
    %v618 = vmul.f32 %v490, %v602
    %v619 = vmul.f32 %v491, %v603
    %v620 = vmul.f32 %v492, %v604
    %v621 = vmul.f32 %v493, %v605
    %v622 = vmul.f32 %v494, %v606
    %v623 = vmul.f32 %v495, %v607
    %v624 = vmul.f32 %v496, %v608
    %v625 = vmul.f32 %v497, %v609
    %v626 = vmul.f32 %v498, %v610
    %v627 = vld [vmem:[%s10] sm:$0xff]
    %628 = vrot.lane.b32.xlu0 %v611, 2
    %v629 = vpop.permute.xlu0 %628
    %630 = vrot.lane.b32.xlu0 %v612, 2
    %v631 = vpop.permute.xlu0 %630
    %632 = vrot.lane.b32.xlu0 %v613, 2
    %v633 = vpop.permute.xlu0 %632
    %634 = vrot.lane.b32.xlu0 %v614, 2
    %v635 = vpop.permute.xlu0 %634
    %636 = vrot.lane.b32.xlu0 %v615, 2
    %v637 = vpop.permute.xlu0 %636
    %638 = vrot.lane.b32.xlu0 %v616, 2
    %v639 = vpop.permute.xlu0 %638
    %640 = vrot.lane.b32.xlu0 %v617, 2
    %v641 = vpop.permute.xlu0 %640
    %642 = vrot.lane.b32.xlu0 %v618, 2
    %v643 = vpop.permute.xlu0 %642
    %644 = vrot.lane.b32.xlu0 %v619, 2
    %v645 = vpop.permute.xlu0 %644
    %646 = vrot.lane.b32.xlu0 %v620, 2
    %v647 = vpop.permute.xlu0 %646
    %648 = vrot.lane.b32.xlu0 %v621, 2
    %v649 = vpop.permute.xlu0 %648
    %650 = vrot.lane.b32.xlu0 %v622, 2
    %v651 = vpop.permute.xlu0 %650
    %652 = vrot.lane.b32.xlu0 %v623, 2
    %v653 = vpop.permute.xlu0 %652
    %654 = vrot.lane.b32.xlu0 %v624, 2
    %v655 = vpop.permute.xlu0 %654
    %656 = vrot.lane.b32.xlu0 %v625, 2
    %v657 = vpop.permute.xlu0 %656
    %658 = vrot.lane.b32.xlu0 %v626, 2
    %v659 = vpop.permute.xlu0 %658
    %v660 = vlaneseq
    %v661 = vand.u32 %v660, 127
    %vm662 = vcmp.lt.s32.totalorder %v661, 2
    %v663 = vsel %vm662, %v657, %v659
    %v664 = vsel %vm662, %v655, %v657
    %v665 = vsel %vm662, %v653, %v655
    %v666 = vsel %vm662, %v651, %v653
    %v667 = vsel %vm662, %v649, %v651
    %v668 = vsel %vm662, %v647, %v649
    %v669 = vsel %vm662, %v645, %v647
    %v670 = vsel %vm662, %v643, %v645
    %v671 = vsel %vm662, %v641, %v643
    %v672 = vsel %vm662, %v639, %v641
    %v673 = vsel %vm662, %v637, %v639
    %v674 = vsel %vm662, %v635, %v637
    %v675 = vsel %vm662, %v633, %v635
    %v676 = vsel %vm662, %v631, %v633
    %v677 = vsel %vm662, %v629, %v631
    %v678 = vsel %vm662, %v659, %v629
    %v679 = vld [vmem:[#allocation7] ss:$8 sm:$0xf]
    %v680 = vld [vmem:[#allocation7] ss:$8 sm:$0xf0]
    %v681 = vor.u32 %v679, %v680
    %s682 = scalar_lea.vmem [#allocation7], 64
    %v683 = vld [vmem:[%s682] ss:$8 sm:$0xf]
    %v684 = vld [vmem:[%s682] ss:$8 sm:$0xf0]
    %v685 = vor.u32 %v683, %v684
    %v688 = vperm.slane %v681, 0
    %v689 = vperm.slane %v681, 1
    %v690 = vperm.slane %v681, 2
    %v691 = vperm.slane %v681, 3
    %v692 = vperm.slane %v681, 4
    %v693 = vperm.slane %v681, 5
    %v694 = vperm.slane %v681, 6
    %v695 = vperm.slane %v681, 7
    %v696 = vperm.slane %v685, 0
    %v697 = vperm.slane %v685, 1
    %v698 = vperm.slane %v685, 2
    %v699 = vperm.slane %v685, 3
    %v700 = vperm.slane %v685, 4
    %v701 = vperm.slane %v685, 5
    %v702 = vperm.slane %v685, 6
    %v703 = vperm.slane %v685, 7
    %v720 = vmul.f32 %v688, %v678
    %v721 = vmul.f32 %v689, %v677
    %v722 = vmul.f32 %v690, %v676
    %v723 = vmul.f32 %v691, %v675
    %v724 = vmul.f32 %v692, %v674
    %v725 = vmul.f32 %v693, %v673
    %v726 = vmul.f32 %v694, %v672
    %v727 = vmul.f32 %v695, %v671
    %v728 = vmul.f32 %v696, %v670
    %v729 = vmul.f32 %v697, %v669
    %v730 = vmul.f32 %v698, %v668
    %v731 = vmul.f32 %v699, %v667
    %v732 = vmul.f32 %v700, %v666
    %v733 = vmul.f32 %v701, %v665
    %v734 = vmul.f32 %v702, %v664
    %v735 = vmul.f32 %v703, %v663
    %737 = vset.pattern.permute.xlu0 0
    %738 = vperm.xlu0 %737, %v627
    %v739 = vpop.permute.xlu0 %738
    %v741 = vmul.f32 %v739, %v720
    %v742 = vmul.f32 %v739, %v721
    %v743 = vmul.f32 %v739, %v722
    %v744 = vmul.f32 %v739, %v723
    %v745 = vmul.f32 %v739, %v724
    %v746 = vmul.f32 %v739, %v725
    %v747 = vmul.f32 %v739, %v726
    %v748 = vmul.f32 %v739, %v727
    %v749 = vmul.f32 %v739, %v728
    %v750 = vmul.f32 %v739, %v729
    %v751 = vmul.f32 %v739, %v730
    %v752 = vmul.f32 %v739, %v731
    %v753 = vmul.f32 %v739, %v732
    %v754 = vmul.f32 %v739, %v733
    %v755 = vmul.f32 %v739, %v734
    %v756 = vmul.f32 %v739, %v735
    %757 = vset.pattern.permute.xlu0 5
    %758 = vperm.xlu0 %757, %v627
    %v759 = vpop.permute.xlu0 %758
    %v761 = vmul.f32 %v759, %v720
    %v762 = vmul.f32 %v759, %v721
    %v763 = vmul.f32 %v759, %v722
    %v764 = vmul.f32 %v759, %v723
    %v765 = vmul.f32 %v759, %v724
    %v766 = vmul.f32 %v759, %v725
    %v767 = vmul.f32 %v759, %v726
    %v768 = vmul.f32 %v759, %v727
    %v769 = vmul.f32 %v759, %v728
    %v770 = vmul.f32 %v759, %v729
    %v771 = vmul.f32 %v759, %v730
    %v772 = vmul.f32 %v759, %v731
    %v773 = vmul.f32 %v759, %v732
    %v774 = vmul.f32 %v759, %v733
    %v775 = vmul.f32 %v759, %v734
    %v776 = vmul.f32 %v759, %v735
    %777 = vset.pattern.permute.xlu0 10
    %778 = vperm.xlu0 %777, %v627
    %v779 = vpop.permute.xlu0 %778
    %v781 = vmul.f32 %v779, %v720
    %v782 = vmul.f32 %v779, %v721
    %v783 = vmul.f32 %v779, %v722
    %v784 = vmul.f32 %v779, %v723
    %v785 = vmul.f32 %v779, %v724
    %v786 = vmul.f32 %v779, %v725
    %v787 = vmul.f32 %v779, %v726
    %v788 = vmul.f32 %v779, %v727
    %v789 = vmul.f32 %v779, %v728
    %v790 = vmul.f32 %v779, %v729
    %v791 = vmul.f32 %v779, %v730
    %v792 = vmul.f32 %v779, %v731
    %v793 = vmul.f32 %v779, %v732
    %v794 = vmul.f32 %v779, %v733
    %v795 = vmul.f32 %v779, %v734
    %v796 = vmul.f32 %v779, %v735
    %797 = vset.pattern.permute.xlu0 15
    %798 = vperm.xlu0 %797, %v627
    %v799 = vpop.permute.xlu0 %798
    %v801 = vmul.f32 %v799, %v720
    %v802 = vmul.f32 %v799, %v721
    %v803 = vmul.f32 %v799, %v722
    %v804 = vmul.f32 %v799, %v723
    %v805 = vmul.f32 %v799, %v724
    %v806 = vmul.f32 %v799, %v725
    %v807 = vmul.f32 %v799, %v726
    %v808 = vmul.f32 %v799, %v727
    %v809 = vmul.f32 %v799, %v728
    %v810 = vmul.f32 %v799, %v729
    %v811 = vmul.f32 %v799, %v730
    %v812 = vmul.f32 %v799, %v731
    %v813 = vmul.f32 %v799, %v732
    %v814 = vmul.f32 %v799, %v733
    %v815 = vmul.f32 %v799, %v734
    %v816 = vmul.f32 %v799, %v735
    %817 = vset.pattern.permute.xlu0 20
    %818 = vperm.xlu0 %817, %v627
    %v819 = vpop.permute.xlu0 %818
    %v821 = vmul.f32 %v819, %v720
    %v822 = vmul.f32 %v819, %v721
    %v823 = vmul.f32 %v819, %v722
    %v824 = vmul.f32 %v819, %v723
    %v825 = vmul.f32 %v819, %v724
    %v826 = vmul.f32 %v819, %v725
    %v827 = vmul.f32 %v819, %v726
    %v828 = vmul.f32 %v819, %v727
    %v829 = vmul.f32 %v819, %v728
    %v830 = vmul.f32 %v819, %v729
    %v831 = vmul.f32 %v819, %v730
    %v832 = vmul.f32 %v819, %v731
    %v833 = vmul.f32 %v819, %v732
    %v834 = vmul.f32 %v819, %v733
    %v835 = vmul.f32 %v819, %v734
    %v836 = vmul.f32 %v819, %v735
    %837 = vrot.lane.b32.xlu0 %v611, 1
    %v838 = vpop.permute.xlu0 %837
    %839 = vrot.lane.b32.xlu0 %v612, 1
    %v840 = vpop.permute.xlu0 %839
    %841 = vrot.lane.b32.xlu0 %v613, 1
    %v842 = vpop.permute.xlu0 %841
    %843 = vrot.lane.b32.xlu0 %v614, 1
    %v844 = vpop.permute.xlu0 %843
    %845 = vrot.lane.b32.xlu0 %v615, 1
    %v846 = vpop.permute.xlu0 %845
    %847 = vrot.lane.b32.xlu0 %v616, 1
    %v848 = vpop.permute.xlu0 %847
    %849 = vrot.lane.b32.xlu0 %v617, 1
    %v850 = vpop.permute.xlu0 %849
    %851 = vrot.lane.b32.xlu0 %v618, 1
    %v852 = vpop.permute.xlu0 %851
    %853 = vrot.lane.b32.xlu0 %v619, 1
    %v854 = vpop.permute.xlu0 %853
    %855 = vrot.lane.b32.xlu0 %v620, 1
    %v856 = vpop.permute.xlu0 %855
    %857 = vrot.lane.b32.xlu0 %v621, 1
    %v858 = vpop.permute.xlu0 %857
    %859 = vrot.lane.b32.xlu0 %v622, 1
    %v860 = vpop.permute.xlu0 %859
    %861 = vrot.lane.b32.xlu0 %v623, 1
    %v862 = vpop.permute.xlu0 %861
    %863 = vrot.lane.b32.xlu0 %v624, 1
    %v864 = vpop.permute.xlu0 %863
    %865 = vrot.lane.b32.xlu0 %v625, 1
    %v866 = vpop.permute.xlu0 %865
    %867 = vrot.lane.b32.xlu0 %v626, 1
    %v868 = vpop.permute.xlu0 %867
    %vm869 = vcmp.lt.s32.totalorder %v661, 1
    %v870 = vsel %vm869, %v866, %v868
    %v871 = vsel %vm869, %v864, %v866
    %v872 = vsel %vm869, %v862, %v864
    %v873 = vsel %vm869, %v860, %v862
    %v874 = vsel %vm869, %v858, %v860
    %v875 = vsel %vm869, %v856, %v858
    %v876 = vsel %vm869, %v854, %v856
    %v877 = vsel %vm869, %v852, %v854
    %v878 = vsel %vm869, %v850, %v852
    %v879 = vsel %vm869, %v848, %v850
    %v880 = vsel %vm869, %v846, %v848
    %v881 = vsel %vm869, %v844, %v846
    %v882 = vsel %vm869, %v842, %v844
    %v883 = vsel %vm869, %v840, %v842
    %v884 = vsel %vm869, %v838, %v840
    %v885 = vsel %vm869, %v868, %v838
    %s886 = scalar_lea.vmem [#allocation7], 1
    %v887 = vld [vmem:[%s886] ss:$8 sm:$0xf]
    %v888 = vld [vmem:[%s886] ss:$8 sm:$0xf0]
    %v889 = vor.u32 %v887, %v888
    %s890 = scalar_lea.vmem [#allocation7], 65
    %v891 = vld [vmem:[%s890] ss:$8 sm:$0xf]
    %v892 = vld [vmem:[%s890] ss:$8 sm:$0xf0]
    %v893 = vor.u32 %v891, %v892
    %v896 = vperm.slane %v889, 0
    %v897 = vperm.slane %v889, 1
    %v898 = vperm.slane %v889, 2
    %v899 = vperm.slane %v889, 3
    %v900 = vperm.slane %v889, 4
    %v901 = vperm.slane %v889, 5
    %v902 = vperm.slane %v889, 6
    %v903 = vperm.slane %v889, 7
    %v904 = vperm.slane %v893, 0
    %v905 = vperm.slane %v893, 1
    %v906 = vperm.slane %v893, 2
    %v907 = vperm.slane %v893, 3
    %v908 = vperm.slane %v893, 4
    %v909 = vperm.slane %v893, 5
    %v910 = vperm.slane %v893, 6
    %v911 = vperm.slane %v893, 7
    %v928 = vmul.f32 %v896, %v885
    %v929 = vmul.f32 %v897, %v884
    %v930 = vmul.f32 %v898, %v883
    %v931 = vmul.f32 %v899, %v882
    %v932 = vmul.f32 %v900, %v881
    %v933 = vmul.f32 %v901, %v880
    %v934 = vmul.f32 %v902, %v879
    %v935 = vmul.f32 %v903, %v878
    %v936 = vmul.f32 %v904, %v877
    %v937 = vmul.f32 %v905, %v876
    %v938 = vmul.f32 %v906, %v875
    %v939 = vmul.f32 %v907, %v874
    %v940 = vmul.f32 %v908, %v873
    %v941 = vmul.f32 %v909, %v872
    %v942 = vmul.f32 %v910, %v871
    %v943 = vmul.f32 %v911, %v870
    %944 = vset.pattern.permute.xlu0 1
    %945 = vperm.xlu0 %944, %v627
    %v946 = vpop.permute.xlu0 %945
    %v948 = vmul.f32 %v946, %v928
    %v949 = vmul.f32 %v946, %v929
    %v950 = vmul.f32 %v946, %v930
    %v951 = vmul.f32 %v946, %v931
    %v952 = vmul.f32 %v946, %v932
    %v953 = vmul.f32 %v946, %v933
    %v954 = vmul.f32 %v946, %v934
    %v955 = vmul.f32 %v946, %v935
    %v956 = vmul.f32 %v946, %v936
    %v957 = vmul.f32 %v946, %v937
    %v958 = vmul.f32 %v946, %v938
    %v959 = vmul.f32 %v946, %v939
    %v960 = vmul.f32 %v946, %v940
    %v961 = vmul.f32 %v946, %v941
    %v962 = vmul.f32 %v946, %v942
    %v963 = vmul.f32 %v946, %v943
    %v964 = vadd.f32 %v741, %v948
    %v965 = vadd.f32 %v742, %v949
    %v966 = vadd.f32 %v743, %v950
    %v967 = vadd.f32 %v744, %v951
    %v968 = vadd.f32 %v745, %v952
    %v969 = vadd.f32 %v746, %v953
    %v970 = vadd.f32 %v747, %v954
    %v971 = vadd.f32 %v748, %v955
    %v972 = vadd.f32 %v749, %v956
    %v973 = vadd.f32 %v750, %v957
    %v974 = vadd.f32 %v751, %v958
    %v975 = vadd.f32 %v752, %v959
    %v976 = vadd.f32 %v753, %v960
    %v977 = vadd.f32 %v754, %v961
    %v978 = vadd.f32 %v755, %v962
    %v979 = vadd.f32 %v756, %v963
    %980 = vset.pattern.permute.xlu0 6
    %981 = vperm.xlu0 %980, %v627
    %v982 = vpop.permute.xlu0 %981
    %v984 = vmul.f32 %v982, %v928
    %v985 = vmul.f32 %v982, %v929
    %v986 = vmul.f32 %v982, %v930
    %v987 = vmul.f32 %v982, %v931
    %v988 = vmul.f32 %v982, %v932
    %v989 = vmul.f32 %v982, %v933
    %v990 = vmul.f32 %v982, %v934
    %v991 = vmul.f32 %v982, %v935
    %v992 = vmul.f32 %v982, %v936
    %v993 = vmul.f32 %v982, %v937
    %v994 = vmul.f32 %v982, %v938
    %v995 = vmul.f32 %v982, %v939
    %v996 = vmul.f32 %v982, %v940
    %v997 = vmul.f32 %v982, %v941
    %v998 = vmul.f32 %v982, %v942
    %v999 = vmul.f32 %v982, %v943
    %v1000 = vadd.f32 %v761, %v984
    %v1001 = vadd.f32 %v762, %v985
    %v1002 = vadd.f32 %v763, %v986
    %v1003 = vadd.f32 %v764, %v987
    %v1004 = vadd.f32 %v765, %v988
    %v1005 = vadd.f32 %v766, %v989
    %v1006 = vadd.f32 %v767, %v990
    %v1007 = vadd.f32 %v768, %v991
    %v1008 = vadd.f32 %v769, %v992
    %v1009 = vadd.f32 %v770, %v993
    %v1010 = vadd.f32 %v771, %v994
    %v1011 = vadd.f32 %v772, %v995
    %v1012 = vadd.f32 %v773, %v996
    %v1013 = vadd.f32 %v774, %v997
    %v1014 = vadd.f32 %v775, %v998
    %v1015 = vadd.f32 %v776, %v999
    %1016 = vset.pattern.permute.xlu0 11
    %1017 = vperm.xlu0 %1016, %v627
    %v1018 = vpop.permute.xlu0 %1017
    %v1020 = vmul.f32 %v1018, %v928
    %v1021 = vmul.f32 %v1018, %v929
    %v1022 = vmul.f32 %v1018, %v930
    %v1023 = vmul.f32 %v1018, %v931
    %v1024 = vmul.f32 %v1018, %v932
    %v1025 = vmul.f32 %v1018, %v933
    %v1026 = vmul.f32 %v1018, %v934
    %v1027 = vmul.f32 %v1018, %v935
    %v1028 = vmul.f32 %v1018, %v936
    %v1029 = vmul.f32 %v1018, %v937
    %v1030 = vmul.f32 %v1018, %v938
    %v1031 = vmul.f32 %v1018, %v939
    %v1032 = vmul.f32 %v1018, %v940
    %v1033 = vmul.f32 %v1018, %v941
    %v1034 = vmul.f32 %v1018, %v942
    %v1035 = vmul.f32 %v1018, %v943
    %v1036 = vadd.f32 %v781, %v1020
    %v1037 = vadd.f32 %v782, %v1021
    %v1038 = vadd.f32 %v783, %v1022
    %v1039 = vadd.f32 %v784, %v1023
    %v1040 = vadd.f32 %v785, %v1024
    %v1041 = vadd.f32 %v786, %v1025
    %v1042 = vadd.f32 %v787, %v1026
    %v1043 = vadd.f32 %v788, %v1027
    %v1044 = vadd.f32 %v789, %v1028
    %v1045 = vadd.f32 %v790, %v1029
    %v1046 = vadd.f32 %v791, %v1030
    %v1047 = vadd.f32 %v792, %v1031
    %v1048 = vadd.f32 %v793, %v1032
    %v1049 = vadd.f32 %v794, %v1033
    %v1050 = vadd.f32 %v795, %v1034
    %v1051 = vadd.f32 %v796, %v1035
    %1052 = vset.pattern.permute.xlu0 16
    %1053 = vperm.xlu0 %1052, %v627
    %v1054 = vpop.permute.xlu0 %1053
    %v1056 = vmul.f32 %v1054, %v928
    %v1057 = vmul.f32 %v1054, %v929
    %v1058 = vmul.f32 %v1054, %v930
    %v1059 = vmul.f32 %v1054, %v931
    %v1060 = vmul.f32 %v1054, %v932
    %v1061 = vmul.f32 %v1054, %v933
    %v1062 = vmul.f32 %v1054, %v934
    %v1063 = vmul.f32 %v1054, %v935
    %v1064 = vmul.f32 %v1054, %v936
    %v1065 = vmul.f32 %v1054, %v937
    %v1066 = vmul.f32 %v1054, %v938
    %v1067 = vmul.f32 %v1054, %v939
    %v1068 = vmul.f32 %v1054, %v940
    %v1069 = vmul.f32 %v1054, %v941
    %v1070 = vmul.f32 %v1054, %v942
    %v1071 = vmul.f32 %v1054, %v943
    %v1072 = vadd.f32 %v801, %v1056
    %v1073 = vadd.f32 %v802, %v1057
    %v1074 = vadd.f32 %v803, %v1058
    %v1075 = vadd.f32 %v804, %v1059
    %v1076 = vadd.f32 %v805, %v1060
    %v1077 = vadd.f32 %v806, %v1061
    %v1078 = vadd.f32 %v807, %v1062
    %v1079 = vadd.f32 %v808, %v1063
    %v1080 = vadd.f32 %v809, %v1064
    %v1081 = vadd.f32 %v810, %v1065
    %v1082 = vadd.f32 %v811, %v1066
    %v1083 = vadd.f32 %v812, %v1067
    %v1084 = vadd.f32 %v813, %v1068
    %v1085 = vadd.f32 %v814, %v1069
    %v1086 = vadd.f32 %v815, %v1070
    %v1087 = vadd.f32 %v816, %v1071
    %1088 = vset.pattern.permute.xlu0 21
    %1089 = vperm.xlu0 %1088, %v627
    %v1090 = vpop.permute.xlu0 %1089
    %v1092 = vmul.f32 %v1090, %v928
    %v1093 = vmul.f32 %v1090, %v929
    %v1094 = vmul.f32 %v1090, %v930
    %v1095 = vmul.f32 %v1090, %v931
    %v1096 = vmul.f32 %v1090, %v932
    %v1097 = vmul.f32 %v1090, %v933
    %v1098 = vmul.f32 %v1090, %v934
    %v1099 = vmul.f32 %v1090, %v935
    %v1100 = vmul.f32 %v1090, %v936
    %v1101 = vmul.f32 %v1090, %v937
    %v1102 = vmul.f32 %v1090, %v938
    %v1103 = vmul.f32 %v1090, %v939
    %v1104 = vmul.f32 %v1090, %v940
    %v1105 = vmul.f32 %v1090, %v941
    %v1106 = vmul.f32 %v1090, %v942
    %v1107 = vmul.f32 %v1090, %v943
    %v1108 = vadd.f32 %v821, %v1092
    %v1109 = vadd.f32 %v822, %v1093
    %v1110 = vadd.f32 %v823, %v1094
    %v1111 = vadd.f32 %v824, %v1095
    %v1112 = vadd.f32 %v825, %v1096
    %v1113 = vadd.f32 %v826, %v1097
    %v1114 = vadd.f32 %v827, %v1098
    %v1115 = vadd.f32 %v828, %v1099
    %v1116 = vadd.f32 %v829, %v1100
    %v1117 = vadd.f32 %v830, %v1101
    %v1118 = vadd.f32 %v831, %v1102
    %v1119 = vadd.f32 %v832, %v1103
    %v1120 = vadd.f32 %v833, %v1104
    %v1121 = vadd.f32 %v834, %v1105
    %v1122 = vadd.f32 %v835, %v1106
    %v1123 = vadd.f32 %v836, %v1107
    %s1124 = scalar_lea.vmem [#allocation7], 2
    %v1125 = vld [vmem:[%s1124] ss:$8 sm:$0xf]
    %v1126 = vld [vmem:[%s1124] ss:$8 sm:$0xf0]
    %v1127 = vor.u32 %v1125, %v1126
    %s1128 = scalar_lea.vmem [#allocation7], 66
    %v1129 = vld [vmem:[%s1128] ss:$8 sm:$0xf]
    %v1130 = vld [vmem:[%s1128] ss:$8 sm:$0xf0]
    %v1131 = vor.u32 %v1129, %v1130
    %v1134 = vperm.slane %v1127, 0
    %v1135 = vperm.slane %v1127, 1
    %v1136 = vperm.slane %v1127, 2
    %v1137 = vperm.slane %v1127, 3
    %v1138 = vperm.slane %v1127, 4
    %v1139 = vperm.slane %v1127, 5
    %v1140 = vperm.slane %v1127, 6
    %v1141 = vperm.slane %v1127, 7
    %v1142 = vperm.slane %v1131, 0
    %v1143 = vperm.slane %v1131, 1
    %v1144 = vperm.slane %v1131, 2
    %v1145 = vperm.slane %v1131, 3
    %v1146 = vperm.slane %v1131, 4
    %v1147 = vperm.slane %v1131, 5
    %v1148 = vperm.slane %v1131, 6
    %v1149 = vperm.slane %v1131, 7
    %v1166 = vmul.f32 %v1134, %v611
    %v1167 = vmul.f32 %v1135, %v612
    %v1168 = vmul.f32 %v1136, %v613
    %v1169 = vmul.f32 %v1137, %v614
    %v1170 = vmul.f32 %v1138, %v615
    %v1171 = vmul.f32 %v1139, %v616
    %v1172 = vmul.f32 %v1140, %v617
    %v1173 = vmul.f32 %v1141, %v618
    %v1174 = vmul.f32 %v1142, %v619
    %v1175 = vmul.f32 %v1143, %v620
    %v1176 = vmul.f32 %v1144, %v621
    %v1177 = vmul.f32 %v1145, %v622
    %v1178 = vmul.f32 %v1146, %v623
    %v1179 = vmul.f32 %v1147, %v624
    %v1180 = vmul.f32 %v1148, %v625
    %v1181 = vmul.f32 %v1149, %v626
    %1182 = vset.pattern.permute.xlu0 2
    %1183 = vperm.xlu0 %1182, %v627
    %v1184 = vpop.permute.xlu0 %1183
    %v1186 = vmul.f32 %v1184, %v1166
    %v1187 = vmul.f32 %v1184, %v1167
    %v1188 = vmul.f32 %v1184, %v1168
    %v1189 = vmul.f32 %v1184, %v1169
    %v1190 = vmul.f32 %v1184, %v1170
    %v1191 = vmul.f32 %v1184, %v1171
    %v1192 = vmul.f32 %v1184, %v1172
    %v1193 = vmul.f32 %v1184, %v1173
    %v1194 = vmul.f32 %v1184, %v1174
    %v1195 = vmul.f32 %v1184, %v1175
    %v1196 = vmul.f32 %v1184, %v1176
    %v1197 = vmul.f32 %v1184, %v1177
    %v1198 = vmul.f32 %v1184, %v1178
    %v1199 = vmul.f32 %v1184, %v1179
    %v1200 = vmul.f32 %v1184, %v1180
    %v1201 = vmul.f32 %v1184, %v1181
    %v1202 = vadd.f32 %v964, %v1186
    %v1203 = vadd.f32 %v965, %v1187
    %v1204 = vadd.f32 %v966, %v1188
    %v1205 = vadd.f32 %v967, %v1189
    %v1206 = vadd.f32 %v968, %v1190
    %v1207 = vadd.f32 %v969, %v1191
    %v1208 = vadd.f32 %v970, %v1192
    %v1209 = vadd.f32 %v971, %v1193
    %v1210 = vadd.f32 %v972, %v1194
    %v1211 = vadd.f32 %v973, %v1195
    %v1212 = vadd.f32 %v974, %v1196
    %v1213 = vadd.f32 %v975, %v1197
    %v1214 = vadd.f32 %v976, %v1198
    %v1215 = vadd.f32 %v977, %v1199
    %v1216 = vadd.f32 %v978, %v1200
    %v1217 = vadd.f32 %v979, %v1201
    %1218 = vset.pattern.permute.xlu0 7
    %1219 = vperm.xlu0 %1218, %v627
    %v1220 = vpop.permute.xlu0 %1219
    %v1222 = vmul.f32 %v1220, %v1166
    %v1223 = vmul.f32 %v1220, %v1167
    %v1224 = vmul.f32 %v1220, %v1168
    %v1225 = vmul.f32 %v1220, %v1169
    %v1226 = vmul.f32 %v1220, %v1170
    %v1227 = vmul.f32 %v1220, %v1171
    %v1228 = vmul.f32 %v1220, %v1172
    %v1229 = vmul.f32 %v1220, %v1173
    %v1230 = vmul.f32 %v1220, %v1174
    %v1231 = vmul.f32 %v1220, %v1175
    %v1232 = vmul.f32 %v1220, %v1176
    %v1233 = vmul.f32 %v1220, %v1177
    %v1234 = vmul.f32 %v1220, %v1178
    %v1235 = vmul.f32 %v1220, %v1179
    %v1236 = vmul.f32 %v1220, %v1180
    %v1237 = vmul.f32 %v1220, %v1181
    %v1238 = vadd.f32 %v1000, %v1222
    %v1239 = vadd.f32 %v1001, %v1223
    %v1240 = vadd.f32 %v1002, %v1224
    %v1241 = vadd.f32 %v1003, %v1225
    %v1242 = vadd.f32 %v1004, %v1226
    %v1243 = vadd.f32 %v1005, %v1227
    %v1244 = vadd.f32 %v1006, %v1228
    %v1245 = vadd.f32 %v1007, %v1229
    %v1246 = vadd.f32 %v1008, %v1230
    %v1247 = vadd.f32 %v1009, %v1231
    %v1248 = vadd.f32 %v1010, %v1232
    %v1249 = vadd.f32 %v1011, %v1233
    %v1250 = vadd.f32 %v1012, %v1234
    %v1251 = vadd.f32 %v1013, %v1235
    %v1252 = vadd.f32 %v1014, %v1236
    %v1253 = vadd.f32 %v1015, %v1237
    %1254 = vset.pattern.permute.xlu0 12
    %1255 = vperm.xlu0 %1254, %v627
    %v1256 = vpop.permute.xlu0 %1255
    %v1258 = vmul.f32 %v1256, %v1166
    %v1259 = vmul.f32 %v1256, %v1167
    %v1260 = vmul.f32 %v1256, %v1168
    %v1261 = vmul.f32 %v1256, %v1169
    %v1262 = vmul.f32 %v1256, %v1170
    %v1263 = vmul.f32 %v1256, %v1171
    %v1264 = vmul.f32 %v1256, %v1172
    %v1265 = vmul.f32 %v1256, %v1173
    %v1266 = vmul.f32 %v1256, %v1174
    %v1267 = vmul.f32 %v1256, %v1175
    %v1268 = vmul.f32 %v1256, %v1176
    %v1269 = vmul.f32 %v1256, %v1177
    %v1270 = vmul.f32 %v1256, %v1178
    %v1271 = vmul.f32 %v1256, %v1179
    %v1272 = vmul.f32 %v1256, %v1180
    %v1273 = vmul.f32 %v1256, %v1181
    %v1274 = vadd.f32 %v1036, %v1258
    %v1275 = vadd.f32 %v1037, %v1259
    %v1276 = vadd.f32 %v1038, %v1260
    %v1277 = vadd.f32 %v1039, %v1261
    %v1278 = vadd.f32 %v1040, %v1262
    %v1279 = vadd.f32 %v1041, %v1263
    %v1280 = vadd.f32 %v1042, %v1264
    %v1281 = vadd.f32 %v1043, %v1265
    %v1282 = vadd.f32 %v1044, %v1266
    %v1283 = vadd.f32 %v1045, %v1267
    %v1284 = vadd.f32 %v1046, %v1268
    %v1285 = vadd.f32 %v1047, %v1269
    %v1286 = vadd.f32 %v1048, %v1270
    %v1287 = vadd.f32 %v1049, %v1271
    %v1288 = vadd.f32 %v1050, %v1272
    %v1289 = vadd.f32 %v1051, %v1273
    %1290 = vset.pattern.permute.xlu0 17
    %1291 = vperm.xlu0 %1290, %v627
    %v1292 = vpop.permute.xlu0 %1291
    %v1294 = vmul.f32 %v1292, %v1166
    %v1295 = vmul.f32 %v1292, %v1167
    %v1296 = vmul.f32 %v1292, %v1168
    %v1297 = vmul.f32 %v1292, %v1169
    %v1298 = vmul.f32 %v1292, %v1170
    %v1299 = vmul.f32 %v1292, %v1171
    %v1300 = vmul.f32 %v1292, %v1172
    %v1301 = vmul.f32 %v1292, %v1173
    %v1302 = vmul.f32 %v1292, %v1174
    %v1303 = vmul.f32 %v1292, %v1175
    %v1304 = vmul.f32 %v1292, %v1176
    %v1305 = vmul.f32 %v1292, %v1177
    %v1306 = vmul.f32 %v1292, %v1178
    %v1307 = vmul.f32 %v1292, %v1179
    %v1308 = vmul.f32 %v1292, %v1180
    %v1309 = vmul.f32 %v1292, %v1181
    %v1310 = vadd.f32 %v1072, %v1294
    %v1311 = vadd.f32 %v1073, %v1295
    %v1312 = vadd.f32 %v1074, %v1296
    %v1313 = vadd.f32 %v1075, %v1297
    %v1314 = vadd.f32 %v1076, %v1298
    %v1315 = vadd.f32 %v1077, %v1299
    %v1316 = vadd.f32 %v1078, %v1300
    %v1317 = vadd.f32 %v1079, %v1301
    %v1318 = vadd.f32 %v1080, %v1302
    %v1319 = vadd.f32 %v1081, %v1303
    %v1320 = vadd.f32 %v1082, %v1304
    %v1321 = vadd.f32 %v1083, %v1305
    %v1322 = vadd.f32 %v1084, %v1306
    %v1323 = vadd.f32 %v1085, %v1307
    %v1324 = vadd.f32 %v1086, %v1308
    %v1325 = vadd.f32 %v1087, %v1309
    %1326 = vset.pattern.permute.xlu0 22
    %1327 = vperm.xlu0 %1326, %v627
    %v1328 = vpop.permute.xlu0 %1327
    %v1330 = vmul.f32 %v1328, %v1166
    %v1331 = vmul.f32 %v1328, %v1167
    %v1332 = vmul.f32 %v1328, %v1168
    %v1333 = vmul.f32 %v1328, %v1169
    %v1334 = vmul.f32 %v1328, %v1170
    %v1335 = vmul.f32 %v1328, %v1171
    %v1336 = vmul.f32 %v1328, %v1172
    %v1337 = vmul.f32 %v1328, %v1173
    %v1338 = vmul.f32 %v1328, %v1174
    %v1339 = vmul.f32 %v1328, %v1175
    %v1340 = vmul.f32 %v1328, %v1176
    %v1341 = vmul.f32 %v1328, %v1177
    %v1342 = vmul.f32 %v1328, %v1178
    %v1343 = vmul.f32 %v1328, %v1179
    %v1344 = vmul.f32 %v1328, %v1180
    %v1345 = vmul.f32 %v1328, %v1181
    %v1346 = vadd.f32 %v1108, %v1330
    %v1347 = vadd.f32 %v1109, %v1331
    %v1348 = vadd.f32 %v1110, %v1332
    %v1349 = vadd.f32 %v1111, %v1333
    %v1350 = vadd.f32 %v1112, %v1334
    %v1351 = vadd.f32 %v1113, %v1335
    %v1352 = vadd.f32 %v1114, %v1336
    %v1353 = vadd.f32 %v1115, %v1337
    %v1354 = vadd.f32 %v1116, %v1338
    %v1355 = vadd.f32 %v1117, %v1339
    %v1356 = vadd.f32 %v1118, %v1340
    %v1357 = vadd.f32 %v1119, %v1341
    %v1358 = vadd.f32 %v1120, %v1342
    %v1359 = vadd.f32 %v1121, %v1343
    %v1360 = vadd.f32 %v1122, %v1344
    %v1361 = vadd.f32 %v1123, %v1345
    %1362 = vrot.lane.b32.xlu0 %v611, 127
    %v1363 = vpop.permute.xlu0 %1362
    %1364 = vrot.lane.b32.xlu0 %v612, 127
    %v1365 = vpop.permute.xlu0 %1364
    %1366 = vrot.lane.b32.xlu0 %v613, 127
    %v1367 = vpop.permute.xlu0 %1366
    %1368 = vrot.lane.b32.xlu0 %v614, 127
    %v1369 = vpop.permute.xlu0 %1368
    %1370 = vrot.lane.b32.xlu0 %v615, 127
    %v1371 = vpop.permute.xlu0 %1370
    %1372 = vrot.lane.b32.xlu0 %v616, 127
    %v1373 = vpop.permute.xlu0 %1372
    %1374 = vrot.lane.b32.xlu0 %v617, 127
    %v1375 = vpop.permute.xlu0 %1374
    %1376 = vrot.lane.b32.xlu0 %v618, 127
    %v1377 = vpop.permute.xlu0 %1376
    %1378 = vrot.lane.b32.xlu0 %v619, 127
    %v1379 = vpop.permute.xlu0 %1378
    %1380 = vrot.lane.b32.xlu0 %v620, 127
    %v1381 = vpop.permute.xlu0 %1380
    %1382 = vrot.lane.b32.xlu0 %v621, 127
    %v1383 = vpop.permute.xlu0 %1382
    %1384 = vrot.lane.b32.xlu0 %v622, 127
    %v1385 = vpop.permute.xlu0 %1384
    %1386 = vrot.lane.b32.xlu0 %v623, 127
    %v1387 = vpop.permute.xlu0 %1386
    %1388 = vrot.lane.b32.xlu0 %v624, 127
    %v1389 = vpop.permute.xlu0 %1388
    %1390 = vrot.lane.b32.xlu0 %v625, 127
    %v1391 = vpop.permute.xlu0 %1390
    %1392 = vrot.lane.b32.xlu0 %v626, 127
    %v1393 = vpop.permute.xlu0 %1392
    %vm1394 = vcmp.lt.s32.totalorder %v661, 127
    %v1395 = vsel %vm1394, %v1391, %v1393
    %v1396 = vsel %vm1394, %v1389, %v1391
    %v1397 = vsel %vm1394, %v1387, %v1389
    %v1398 = vsel %vm1394, %v1385, %v1387
    %v1399 = vsel %vm1394, %v1383, %v1385
    %v1400 = vsel %vm1394, %v1381, %v1383
    %v1401 = vsel %vm1394, %v1379, %v1381
    %v1402 = vsel %vm1394, %v1377, %v1379
    %v1403 = vsel %vm1394, %v1375, %v1377
    %v1404 = vsel %vm1394, %v1373, %v1375
    %v1405 = vsel %vm1394, %v1371, %v1373
    %v1406 = vsel %vm1394, %v1369, %v1371
    %v1407 = vsel %vm1394, %v1367, %v1369
    %v1408 = vsel %vm1394, %v1365, %v1367
    %v1409 = vsel %vm1394, %v1363, %v1365
    %v1410 = vsel %vm1394, %v1393, %v1363
    %s1411 = scalar_lea.vmem [#allocation7], 3
    %v1412 = vld [vmem:[%s1411] ss:$8 sm:$0xf]
    %v1413 = vld [vmem:[%s1411] ss:$8 sm:$0xf0]
    %v1414 = vor.u32 %v1412, %v1413
    %s1415 = scalar_lea.vmem [#allocation7], 67
    %v1416 = vld [vmem:[%s1415] ss:$8 sm:$0xf]
    %v1417 = vld [vmem:[%s1415] ss:$8 sm:$0xf0]
    %v1418 = vor.u32 %v1416, %v1417
    %v1421 = vperm.slane %v1414, 0
    %v1422 = vperm.slane %v1414, 1
    %v1423 = vperm.slane %v1414, 2
    %v1424 = vperm.slane %v1414, 3
    %v1425 = vperm.slane %v1414, 4
    %v1426 = vperm.slane %v1414, 5
    %v1427 = vperm.slane %v1414, 6
    %v1428 = vperm.slane %v1414, 7
    %v1429 = vperm.slane %v1418, 0
    %v1430 = vperm.slane %v1418, 1
    %v1431 = vperm.slane %v1418, 2
    %v1432 = vperm.slane %v1418, 3
    %v1433 = vperm.slane %v1418, 4
    %v1434 = vperm.slane %v1418, 5
    %v1435 = vperm.slane %v1418, 6
    %v1436 = vperm.slane %v1418, 7
    %v1453 = vmul.f32 %v1421, %v1409
    %v1454 = vmul.f32 %v1422, %v1408
    %v1455 = vmul.f32 %v1423, %v1407
    %v1456 = vmul.f32 %v1424, %v1406
    %v1457 = vmul.f32 %v1425, %v1405
    %v1458 = vmul.f32 %v1426, %v1404
    %v1459 = vmul.f32 %v1427, %v1403
    %v1460 = vmul.f32 %v1428, %v1402
    %v1461 = vmul.f32 %v1429, %v1401
    %v1462 = vmul.f32 %v1430, %v1400
    %v1463 = vmul.f32 %v1431, %v1399
    %v1464 = vmul.f32 %v1432, %v1398
    %v1465 = vmul.f32 %v1433, %v1397
    %v1466 = vmul.f32 %v1434, %v1396
    %v1467 = vmul.f32 %v1435, %v1395
    %v1468 = vmul.f32 %v1436, %v1410
    %1469 = vset.pattern.permute.xlu0 3
    %1470 = vperm.xlu0 %1469, %v627
    %v1471 = vpop.permute.xlu0 %1470
    %v1473 = vmul.f32 %v1471, %v1453
    %v1474 = vmul.f32 %v1471, %v1454
    %v1475 = vmul.f32 %v1471, %v1455
    %v1476 = vmul.f32 %v1471, %v1456
    %v1477 = vmul.f32 %v1471, %v1457
    %v1478 = vmul.f32 %v1471, %v1458
    %v1479 = vmul.f32 %v1471, %v1459
    %v1480 = vmul.f32 %v1471, %v1460
    %v1481 = vmul.f32 %v1471, %v1461
    %v1482 = vmul.f32 %v1471, %v1462
    %v1483 = vmul.f32 %v1471, %v1463
    %v1484 = vmul.f32 %v1471, %v1464
    %v1485 = vmul.f32 %v1471, %v1465
    %v1486 = vmul.f32 %v1471, %v1466
    %v1487 = vmul.f32 %v1471, %v1467
    %v1488 = vmul.f32 %v1471, %v1468
    %v1489 = vadd.f32 %v1202, %v1473
    %v1490 = vadd.f32 %v1203, %v1474
    %v1491 = vadd.f32 %v1204, %v1475
    %v1492 = vadd.f32 %v1205, %v1476
    %v1493 = vadd.f32 %v1206, %v1477
    %v1494 = vadd.f32 %v1207, %v1478
    %v1495 = vadd.f32 %v1208, %v1479
    %v1496 = vadd.f32 %v1209, %v1480
    %v1497 = vadd.f32 %v1210, %v1481
    %v1498 = vadd.f32 %v1211, %v1482
    %v1499 = vadd.f32 %v1212, %v1483
    %v1500 = vadd.f32 %v1213, %v1484
    %v1501 = vadd.f32 %v1214, %v1485
    %v1502 = vadd.f32 %v1215, %v1486
    %v1503 = vadd.f32 %v1216, %v1487
    %v1504 = vadd.f32 %v1217, %v1488
    %1505 = vset.pattern.permute.xlu0 8
    %1506 = vperm.xlu0 %1505, %v627
    %v1507 = vpop.permute.xlu0 %1506
    %v1509 = vmul.f32 %v1507, %v1453
    %v1510 = vmul.f32 %v1507, %v1454
    %v1511 = vmul.f32 %v1507, %v1455
    %v1512 = vmul.f32 %v1507, %v1456
    %v1513 = vmul.f32 %v1507, %v1457
    %v1514 = vmul.f32 %v1507, %v1458
    %v1515 = vmul.f32 %v1507, %v1459
    %v1516 = vmul.f32 %v1507, %v1460
    %v1517 = vmul.f32 %v1507, %v1461
    %v1518 = vmul.f32 %v1507, %v1462
    %v1519 = vmul.f32 %v1507, %v1463
    %v1520 = vmul.f32 %v1507, %v1464
    %v1521 = vmul.f32 %v1507, %v1465
    %v1522 = vmul.f32 %v1507, %v1466
    %v1523 = vmul.f32 %v1507, %v1467
    %v1524 = vmul.f32 %v1507, %v1468
    %v1525 = vadd.f32 %v1238, %v1509
    %v1526 = vadd.f32 %v1239, %v1510
    %v1527 = vadd.f32 %v1240, %v1511
    %v1528 = vadd.f32 %v1241, %v1512
    %v1529 = vadd.f32 %v1242, %v1513
    %v1530 = vadd.f32 %v1243, %v1514
    %v1531 = vadd.f32 %v1244, %v1515
    %v1532 = vadd.f32 %v1245, %v1516
    %v1533 = vadd.f32 %v1246, %v1517
    %v1534 = vadd.f32 %v1247, %v1518
    %v1535 = vadd.f32 %v1248, %v1519
    %v1536 = vadd.f32 %v1249, %v1520
    %v1537 = vadd.f32 %v1250, %v1521
    %v1538 = vadd.f32 %v1251, %v1522
    %v1539 = vadd.f32 %v1252, %v1523
    %v1540 = vadd.f32 %v1253, %v1524
    %1541 = vset.pattern.permute.xlu0 13
    %1542 = vperm.xlu0 %1541, %v627
    %v1543 = vpop.permute.xlu0 %1542
    %v1545 = vmul.f32 %v1543, %v1453
    %v1546 = vmul.f32 %v1543, %v1454
    %v1547 = vmul.f32 %v1543, %v1455
    %v1548 = vmul.f32 %v1543, %v1456
    %v1549 = vmul.f32 %v1543, %v1457
    %v1550 = vmul.f32 %v1543, %v1458
    %v1551 = vmul.f32 %v1543, %v1459
    %v1552 = vmul.f32 %v1543, %v1460
    %v1553 = vmul.f32 %v1543, %v1461
    %v1554 = vmul.f32 %v1543, %v1462
    %v1555 = vmul.f32 %v1543, %v1463
    %v1556 = vmul.f32 %v1543, %v1464
    %v1557 = vmul.f32 %v1543, %v1465
    %v1558 = vmul.f32 %v1543, %v1466
    %v1559 = vmul.f32 %v1543, %v1467
    %v1560 = vmul.f32 %v1543, %v1468
    %v1561 = vadd.f32 %v1274, %v1545
    %v1562 = vadd.f32 %v1275, %v1546
    %v1563 = vadd.f32 %v1276, %v1547
    %v1564 = vadd.f32 %v1277, %v1548
    %v1565 = vadd.f32 %v1278, %v1549
    %v1566 = vadd.f32 %v1279, %v1550
    %v1567 = vadd.f32 %v1280, %v1551
    %v1568 = vadd.f32 %v1281, %v1552
    %v1569 = vadd.f32 %v1282, %v1553
    %v1570 = vadd.f32 %v1283, %v1554
    %v1571 = vadd.f32 %v1284, %v1555
    %v1572 = vadd.f32 %v1285, %v1556
    %v1573 = vadd.f32 %v1286, %v1557
    %v1574 = vadd.f32 %v1287, %v1558
    %v1575 = vadd.f32 %v1288, %v1559
    %v1576 = vadd.f32 %v1289, %v1560
    %1577 = vset.pattern.permute.xlu0 18
    %1578 = vperm.xlu0 %1577, %v627
    %v1579 = vpop.permute.xlu0 %1578
    %v1581 = vmul.f32 %v1579, %v1453
    %v1582 = vmul.f32 %v1579, %v1454
    %v1583 = vmul.f32 %v1579, %v1455
    %v1584 = vmul.f32 %v1579, %v1456
    %v1585 = vmul.f32 %v1579, %v1457
    %v1586 = vmul.f32 %v1579, %v1458
    %v1587 = vmul.f32 %v1579, %v1459
    %v1588 = vmul.f32 %v1579, %v1460
    %v1589 = vmul.f32 %v1579, %v1461
    %v1590 = vmul.f32 %v1579, %v1462
    %v1591 = vmul.f32 %v1579, %v1463
    %v1592 = vmul.f32 %v1579, %v1464
    %v1593 = vmul.f32 %v1579, %v1465
    %v1594 = vmul.f32 %v1579, %v1466
    %v1595 = vmul.f32 %v1579, %v1467
    %v1596 = vmul.f32 %v1579, %v1468
    %v1597 = vadd.f32 %v1310, %v1581
    %v1598 = vadd.f32 %v1311, %v1582
    %v1599 = vadd.f32 %v1312, %v1583
    %v1600 = vadd.f32 %v1313, %v1584
    %v1601 = vadd.f32 %v1314, %v1585
    %v1602 = vadd.f32 %v1315, %v1586
    %v1603 = vadd.f32 %v1316, %v1587
    %v1604 = vadd.f32 %v1317, %v1588
    %v1605 = vadd.f32 %v1318, %v1589
    %v1606 = vadd.f32 %v1319, %v1590
    %v1607 = vadd.f32 %v1320, %v1591
    %v1608 = vadd.f32 %v1321, %v1592
    %v1609 = vadd.f32 %v1322, %v1593
    %v1610 = vadd.f32 %v1323, %v1594
    %v1611 = vadd.f32 %v1324, %v1595
    %v1612 = vadd.f32 %v1325, %v1596
    %1613 = vset.pattern.permute.xlu0 23
    %1614 = vperm.xlu0 %1613, %v627
    %v1615 = vpop.permute.xlu0 %1614
    %v1617 = vmul.f32 %v1615, %v1453
    %v1618 = vmul.f32 %v1615, %v1454
    %v1619 = vmul.f32 %v1615, %v1455
    %v1620 = vmul.f32 %v1615, %v1456
    %v1621 = vmul.f32 %v1615, %v1457
    %v1622 = vmul.f32 %v1615, %v1458
    %v1623 = vmul.f32 %v1615, %v1459
    %v1624 = vmul.f32 %v1615, %v1460
    %v1625 = vmul.f32 %v1615, %v1461
    %v1626 = vmul.f32 %v1615, %v1462
    %v1627 = vmul.f32 %v1615, %v1463
    %v1628 = vmul.f32 %v1615, %v1464
    %v1629 = vmul.f32 %v1615, %v1465
    %v1630 = vmul.f32 %v1615, %v1466
    %v1631 = vmul.f32 %v1615, %v1467
    %v1632 = vmul.f32 %v1615, %v1468
    %v1633 = vadd.f32 %v1346, %v1617
    %v1634 = vadd.f32 %v1347, %v1618
    %v1635 = vadd.f32 %v1348, %v1619
    %v1636 = vadd.f32 %v1349, %v1620
    %v1637 = vadd.f32 %v1350, %v1621
    %v1638 = vadd.f32 %v1351, %v1622
    %v1639 = vadd.f32 %v1352, %v1623
    %v1640 = vadd.f32 %v1353, %v1624
    %v1641 = vadd.f32 %v1354, %v1625
    %v1642 = vadd.f32 %v1355, %v1626
    %v1643 = vadd.f32 %v1356, %v1627
    %v1644 = vadd.f32 %v1357, %v1628
    %v1645 = vadd.f32 %v1358, %v1629
    %v1646 = vadd.f32 %v1359, %v1630
    %v1647 = vadd.f32 %v1360, %v1631
    %v1648 = vadd.f32 %v1361, %v1632
    %1649 = vrot.lane.b32.xlu0 %v611, 126
    %v1650 = vpop.permute.xlu0 %1649
    %1651 = vrot.lane.b32.xlu0 %v612, 126
    %v1652 = vpop.permute.xlu0 %1651
    %1653 = vrot.lane.b32.xlu0 %v613, 126
    %v1654 = vpop.permute.xlu0 %1653
    %1655 = vrot.lane.b32.xlu0 %v614, 126
    %v1656 = vpop.permute.xlu0 %1655
    %1657 = vrot.lane.b32.xlu0 %v615, 126
    %v1658 = vpop.permute.xlu0 %1657
    %1659 = vrot.lane.b32.xlu0 %v616, 126
    %v1660 = vpop.permute.xlu0 %1659
    %1661 = vrot.lane.b32.xlu0 %v617, 126
    %v1662 = vpop.permute.xlu0 %1661
    %1663 = vrot.lane.b32.xlu0 %v618, 126
    %v1664 = vpop.permute.xlu0 %1663
    %1665 = vrot.lane.b32.xlu0 %v619, 126
    %v1666 = vpop.permute.xlu0 %1665
    %1667 = vrot.lane.b32.xlu0 %v620, 126
    %v1668 = vpop.permute.xlu0 %1667
    %1669 = vrot.lane.b32.xlu0 %v621, 126
    %v1670 = vpop.permute.xlu0 %1669
    %1671 = vrot.lane.b32.xlu0 %v622, 126
    %v1672 = vpop.permute.xlu0 %1671
    %1673 = vrot.lane.b32.xlu0 %v623, 126
    %v1674 = vpop.permute.xlu0 %1673
    %1675 = vrot.lane.b32.xlu0 %v624, 126
    %v1676 = vpop.permute.xlu0 %1675
    %1677 = vrot.lane.b32.xlu0 %v625, 126
    %v1678 = vpop.permute.xlu0 %1677
    %1679 = vrot.lane.b32.xlu0 %v626, 126
    %v1680 = vpop.permute.xlu0 %1679
    %vm1681 = vcmp.lt.s32.totalorder %v661, 126
    %v1682 = vsel %vm1681, %v1678, %v1680
    %v1683 = vsel %vm1681, %v1676, %v1678
    %v1684 = vsel %vm1681, %v1674, %v1676
    %v1685 = vsel %vm1681, %v1672, %v1674
    %v1686 = vsel %vm1681, %v1670, %v1672
    %v1687 = vsel %vm1681, %v1668, %v1670
    %v1688 = vsel %vm1681, %v1666, %v1668
    %v1689 = vsel %vm1681, %v1664, %v1666
    %v1690 = vsel %vm1681, %v1662, %v1664
    %v1691 = vsel %vm1681, %v1660, %v1662
    %v1692 = vsel %vm1681, %v1658, %v1660
    %v1693 = vsel %vm1681, %v1656, %v1658
    %v1694 = vsel %vm1681, %v1654, %v1656
    %v1695 = vsel %vm1681, %v1652, %v1654
    %v1696 = vsel %vm1681, %v1650, %v1652
    %v1697 = vsel %vm1681, %v1680, %v1650
    %s1698 = scalar_lea.vmem [#allocation7], 4
    %v1699 = vld [vmem:[%s1698] ss:$8 sm:$0xf]
    %v1700 = vld [vmem:[%s1698] ss:$8 sm:$0xf0]
    %v1701 = vor.u32 %v1699, %v1700
    %s1702 = scalar_lea.vmem [#allocation7], 68
    %v1703 = vld [vmem:[%s1702] ss:$8 sm:$0xf]
    %v1704 = vld [vmem:[%s1702] ss:$8 sm:$0xf0]
    %v1705 = vor.u32 %v1703, %v1704
    %v1708 = vperm.slane %v1701, 0
    %v1709 = vperm.slane %v1701, 1
    %v1710 = vperm.slane %v1701, 2
    %v1711 = vperm.slane %v1701, 3
    %v1712 = vperm.slane %v1701, 4
    %v1713 = vperm.slane %v1701, 5
    %v1714 = vperm.slane %v1701, 6
    %v1715 = vperm.slane %v1701, 7
    %v1716 = vperm.slane %v1705, 0
    %v1717 = vperm.slane %v1705, 1
    %v1718 = vperm.slane %v1705, 2
    %v1719 = vperm.slane %v1705, 3
    %v1720 = vperm.slane %v1705, 4
    %v1721 = vperm.slane %v1705, 5
    %v1722 = vperm.slane %v1705, 6
    %v1723 = vperm.slane %v1705, 7
    %v1740 = vmul.f32 %v1708, %v1696
    %v1741 = vmul.f32 %v1709, %v1695
    %v1742 = vmul.f32 %v1710, %v1694
    %v1743 = vmul.f32 %v1711, %v1693
    %v1744 = vmul.f32 %v1712, %v1692
    %v1745 = vmul.f32 %v1713, %v1691
    %v1746 = vmul.f32 %v1714, %v1690
    %v1747 = vmul.f32 %v1715, %v1689
    %v1748 = vmul.f32 %v1716, %v1688
    %v1749 = vmul.f32 %v1717, %v1687
    %v1750 = vmul.f32 %v1718, %v1686
    %v1751 = vmul.f32 %v1719, %v1685
    %v1752 = vmul.f32 %v1720, %v1684
    %v1753 = vmul.f32 %v1721, %v1683
    %v1754 = vmul.f32 %v1722, %v1682
    %v1755 = vmul.f32 %v1723, %v1697
    %1756 = vset.pattern.permute.xlu0 4
    %1757 = vperm.xlu0 %1756, %v627
    %v1758 = vpop.permute.xlu0 %1757
    %v1760 = vmul.f32 %v1758, %v1740
    %v1761 = vmul.f32 %v1758, %v1741
    %v1762 = vmul.f32 %v1758, %v1742
    %v1763 = vmul.f32 %v1758, %v1743
    %v1764 = vmul.f32 %v1758, %v1744
    %v1765 = vmul.f32 %v1758, %v1745
    %v1766 = vmul.f32 %v1758, %v1746
    %v1767 = vmul.f32 %v1758, %v1747
    %v1768 = vmul.f32 %v1758, %v1748
    %v1769 = vmul.f32 %v1758, %v1749
    %v1770 = vmul.f32 %v1758, %v1750
    %v1771 = vmul.f32 %v1758, %v1751
    %v1772 = vmul.f32 %v1758, %v1752
    %v1773 = vmul.f32 %v1758, %v1753
    %v1774 = vmul.f32 %v1758, %v1754
    %v1775 = vmul.f32 %v1758, %v1755
    %v1776 = vadd.f32 %v1489, %v1760
    %v1777 = vadd.f32 %v1490, %v1761
    %v1778 = vadd.f32 %v1491, %v1762
    %v1779 = vadd.f32 %v1492, %v1763
    %v1780 = vadd.f32 %v1493, %v1764
    %v1781 = vadd.f32 %v1494, %v1765
    %v1782 = vadd.f32 %v1495, %v1766
    %v1783 = vadd.f32 %v1496, %v1767
    %v1784 = vadd.f32 %v1497, %v1768
    %v1785 = vadd.f32 %v1498, %v1769
    %v1786 = vadd.f32 %v1499, %v1770
    %v1787 = vadd.f32 %v1500, %v1771
    %v1788 = vadd.f32 %v1501, %v1772
    %v1789 = vadd.f32 %v1502, %v1773
    %v1790 = vadd.f32 %v1503, %v1774
    %v1791 = vadd.f32 %v1504, %v1775
    %1792 = vset.pattern.permute.xlu0 9
    %1793 = vperm.xlu0 %1792, %v627
    %v1794 = vpop.permute.xlu0 %1793
    %v1796 = vmul.f32 %v1794, %v1740
    %v1797 = vmul.f32 %v1794, %v1741
    %v1798 = vmul.f32 %v1794, %v1742
    %v1799 = vmul.f32 %v1794, %v1743
    %v1800 = vmul.f32 %v1794, %v1744
    %v1801 = vmul.f32 %v1794, %v1745
    %v1802 = vmul.f32 %v1794, %v1746
    %v1803 = vmul.f32 %v1794, %v1747
    %v1804 = vmul.f32 %v1794, %v1748
    %v1805 = vmul.f32 %v1794, %v1749
    %v1806 = vmul.f32 %v1794, %v1750
    %v1807 = vmul.f32 %v1794, %v1751
    %v1808 = vmul.f32 %v1794, %v1752
    %v1809 = vmul.f32 %v1794, %v1753
    %v1810 = vmul.f32 %v1794, %v1754
    %v1811 = vmul.f32 %v1794, %v1755
    %v1812 = vadd.f32 %v1525, %v1796
    %v1813 = vadd.f32 %v1526, %v1797
    %v1814 = vadd.f32 %v1527, %v1798
    %v1815 = vadd.f32 %v1528, %v1799
    %v1816 = vadd.f32 %v1529, %v1800
    %v1817 = vadd.f32 %v1530, %v1801
    %v1818 = vadd.f32 %v1531, %v1802
    %v1819 = vadd.f32 %v1532, %v1803
    %v1820 = vadd.f32 %v1533, %v1804
    %v1821 = vadd.f32 %v1534, %v1805
    %v1822 = vadd.f32 %v1535, %v1806
    %v1823 = vadd.f32 %v1536, %v1807
    %v1824 = vadd.f32 %v1537, %v1808
    %v1825 = vadd.f32 %v1538, %v1809
    %v1826 = vadd.f32 %v1539, %v1810
    %v1827 = vadd.f32 %v1540, %v1811
    %1828 = vset.pattern.permute.xlu0 14
    %1829 = vperm.xlu0 %1828, %v627
    %v1830 = vpop.permute.xlu0 %1829
    %v1832 = vmul.f32 %v1830, %v1740
    %v1833 = vmul.f32 %v1830, %v1741
    %v1834 = vmul.f32 %v1830, %v1742
    %v1835 = vmul.f32 %v1830, %v1743
    %v1836 = vmul.f32 %v1830, %v1744
    %v1837 = vmul.f32 %v1830, %v1745
    %v1838 = vmul.f32 %v1830, %v1746
    %v1839 = vmul.f32 %v1830, %v1747
    %v1840 = vmul.f32 %v1830, %v1748
    %v1841 = vmul.f32 %v1830, %v1749
    %v1842 = vmul.f32 %v1830, %v1750
    %v1843 = vmul.f32 %v1830, %v1751
    %v1844 = vmul.f32 %v1830, %v1752
    %v1845 = vmul.f32 %v1830, %v1753
    %v1846 = vmul.f32 %v1830, %v1754
    %v1847 = vmul.f32 %v1830, %v1755
    %v1848 = vadd.f32 %v1561, %v1832
    %v1849 = vadd.f32 %v1562, %v1833
    %v1850 = vadd.f32 %v1563, %v1834
    %v1851 = vadd.f32 %v1564, %v1835
    %v1852 = vadd.f32 %v1565, %v1836
    %v1853 = vadd.f32 %v1566, %v1837
    %v1854 = vadd.f32 %v1567, %v1838
    %v1855 = vadd.f32 %v1568, %v1839
    %v1856 = vadd.f32 %v1569, %v1840
    %v1857 = vadd.f32 %v1570, %v1841
    %v1858 = vadd.f32 %v1571, %v1842
    %v1859 = vadd.f32 %v1572, %v1843
    %v1860 = vadd.f32 %v1573, %v1844
    %v1861 = vadd.f32 %v1574, %v1845
    %v1862 = vadd.f32 %v1575, %v1846
    %v1863 = vadd.f32 %v1576, %v1847
    %1864 = vset.pattern.permute.xlu0 19
    %1865 = vperm.xlu0 %1864, %v627
    %v1866 = vpop.permute.xlu0 %1865
    %v1868 = vmul.f32 %v1866, %v1740
    %v1869 = vmul.f32 %v1866, %v1741
    %v1870 = vmul.f32 %v1866, %v1742
    %v1871 = vmul.f32 %v1866, %v1743
    %v1872 = vmul.f32 %v1866, %v1744
    %v1873 = vmul.f32 %v1866, %v1745
    %v1874 = vmul.f32 %v1866, %v1746
    %v1875 = vmul.f32 %v1866, %v1747
    %v1876 = vmul.f32 %v1866, %v1748
    %v1877 = vmul.f32 %v1866, %v1749
    %v1878 = vmul.f32 %v1866, %v1750
    %v1879 = vmul.f32 %v1866, %v1751
    %v1880 = vmul.f32 %v1866, %v1752
    %v1881 = vmul.f32 %v1866, %v1753
    %v1882 = vmul.f32 %v1866, %v1754
    %v1883 = vmul.f32 %v1866, %v1755
    %v1884 = vadd.f32 %v1597, %v1868
    %v1885 = vadd.f32 %v1598, %v1869
    %v1886 = vadd.f32 %v1599, %v1870
    %v1887 = vadd.f32 %v1600, %v1871
    %v1888 = vadd.f32 %v1601, %v1872
    %v1889 = vadd.f32 %v1602, %v1873
    %v1890 = vadd.f32 %v1603, %v1874
    %v1891 = vadd.f32 %v1604, %v1875
    %v1892 = vadd.f32 %v1605, %v1876
    %v1893 = vadd.f32 %v1606, %v1877
    %v1894 = vadd.f32 %v1607, %v1878
    %v1895 = vadd.f32 %v1608, %v1879
    %v1896 = vadd.f32 %v1609, %v1880
    %v1897 = vadd.f32 %v1610, %v1881
    %v1898 = vadd.f32 %v1611, %v1882
    %v1899 = vadd.f32 %v1612, %v1883
    %1900 = vset.pattern.permute.xlu0 24
    %1901 = vperm.xlu0 %1900, %v627
    %v1902 = vpop.permute.xlu0 %1901
    %v1904 = vmul.f32 %v1902, %v1740
    %v1905 = vmul.f32 %v1902, %v1741
    %v1906 = vmul.f32 %v1902, %v1742
    %v1907 = vmul.f32 %v1902, %v1743
    %v1908 = vmul.f32 %v1902, %v1744
    %v1909 = vmul.f32 %v1902, %v1745
    %v1910 = vmul.f32 %v1902, %v1746
    %v1911 = vmul.f32 %v1902, %v1747
    %v1912 = vmul.f32 %v1902, %v1748
    %v1913 = vmul.f32 %v1902, %v1749
    %v1914 = vmul.f32 %v1902, %v1750
    %v1915 = vmul.f32 %v1902, %v1751
    %v1916 = vmul.f32 %v1902, %v1752
    %v1917 = vmul.f32 %v1902, %v1753
    %v1918 = vmul.f32 %v1902, %v1754
    %v1919 = vmul.f32 %v1902, %v1755
    %v1920 = vadd.f32 %v1633, %v1904
    %v1921 = vadd.f32 %v1634, %v1905
    %v1922 = vadd.f32 %v1635, %v1906
    %v1923 = vadd.f32 %v1636, %v1907
    %v1924 = vadd.f32 %v1637, %v1908
    %v1925 = vadd.f32 %v1638, %v1909
    %v1926 = vadd.f32 %v1639, %v1910
    %v1927 = vadd.f32 %v1640, %v1911
    %v1928 = vadd.f32 %v1641, %v1912
    %v1929 = vadd.f32 %v1642, %v1913
    %v1930 = vadd.f32 %v1643, %v1914
    %v1931 = vadd.f32 %v1644, %v1915
    %v1932 = vadd.f32 %v1645, %v1916
    %v1933 = vadd.f32 %v1646, %v1917
    %v1934 = vadd.f32 %v1647, %v1918
    %v1935 = vadd.f32 %v1648, %v1919
    %1936 = vrot.lane.b32.xlu0 %v1776, 32
    %v1937 = vpop.permute.xlu0 %1936
    %1938 = vrot.lane.b32.xlu0 %v1777, 32
    %v1939 = vpop.permute.xlu0 %1938
    %1940 = vrot.lane.b32.xlu0 %v1778, 32
    %v1941 = vpop.permute.xlu0 %1940
    %1942 = vrot.lane.b32.xlu0 %v1779, 32
    %v1943 = vpop.permute.xlu0 %1942
    %1944 = vrot.lane.b32.xlu0 %v1780, 32
    %v1945 = vpop.permute.xlu0 %1944
    %1946 = vrot.lane.b32.xlu0 %v1781, 32
    %v1947 = vpop.permute.xlu0 %1946
    %1948 = vrot.lane.b32.xlu0 %v1782, 32
    %v1949 = vpop.permute.xlu0 %1948
    %1950 = vrot.lane.b32.xlu0 %v1783, 32
    %v1951 = vpop.permute.xlu0 %1950
    %1952 = vrot.lane.b32.xlu0 %v1784, 32
    %v1953 = vpop.permute.xlu0 %1952
    %1954 = vrot.lane.b32.xlu0 %v1785, 32
    %v1955 = vpop.permute.xlu0 %1954
    %1956 = vrot.lane.b32.xlu0 %v1786, 32
    %v1957 = vpop.permute.xlu0 %1956
    %1958 = vrot.lane.b32.xlu0 %v1787, 32
    %v1959 = vpop.permute.xlu0 %1958
    %1960 = vrot.lane.b32.xlu0 %v1788, 32
    %v1961 = vpop.permute.xlu0 %1960
    %1962 = vrot.lane.b32.xlu0 %v1789, 32
    %v1963 = vpop.permute.xlu0 %1962
    %1964 = vrot.lane.b32.xlu0 %v1790, 32
    %v1965 = vpop.permute.xlu0 %1964
    %1966 = vrot.lane.b32.xlu0 %v1791, 32
    %v1967 = vpop.permute.xlu0 %1966
    %vm1968 = vcmp.lt.s32.totalorder %v661, 32
    %v1969 = vsel %vm1968, %v1965, %v1967
    %v1970 = vsel %vm1968, %v1963, %v1965
    %v1971 = vsel %vm1968, %v1961, %v1963
    %v1972 = vsel %vm1968, %v1959, %v1961
    %v1973 = vsel %vm1968, %v1957, %v1959
    %v1974 = vsel %vm1968, %v1955, %v1957
    %v1975 = vsel %vm1968, %v1953, %v1955
    %v1976 = vsel %vm1968, %v1951, %v1953
    %v1977 = vsel %vm1968, %v1949, %v1951
    %v1978 = vsel %vm1968, %v1947, %v1949
    %v1979 = vsel %vm1968, %v1945, %v1947
    %v1980 = vsel %vm1968, %v1943, %v1945
    %v1981 = vsel %vm1968, %v1941, %v1943
    %v1982 = vsel %vm1968, %v1939, %v1941
    %v1983 = vsel %vm1968, %v1937, %v1939
    %v1984 = vsel %vm1968, %v1967, %v1937
    %v1985 = vld [vmem:[#allocation5] ss:$8 sm:$0xf]
    %v1986 = vld [vmem:[#allocation5] ss:$8 sm:$0xf0]
    %v1987 = vor.u32 %v1985, %v1986
    %s1988 = scalar_lea.vmem [#allocation5], 64
    %v1989 = vld [vmem:[%s1988] ss:$8 sm:$0xf]
    %v1990 = vld [vmem:[%s1988] ss:$8 sm:$0xf0]
    %v1991 = vor.u32 %v1989, %v1990
    %v1994 = vperm.slane %v1987, 0
    %v1995 = vperm.slane %v1987, 1
    %v1996 = vperm.slane %v1987, 2
    %v1997 = vperm.slane %v1987, 3
    %v1998 = vperm.slane %v1987, 4
    %v1999 = vperm.slane %v1987, 5
    %v2000 = vperm.slane %v1987, 6
    %v2001 = vperm.slane %v1987, 7
    %v2002 = vperm.slane %v1991, 0
    %v2003 = vperm.slane %v1991, 1
    %v2004 = vperm.slane %v1991, 2
    %v2005 = vperm.slane %v1991, 3
    %v2006 = vperm.slane %v1991, 4
    %v2007 = vperm.slane %v1991, 5
    %v2008 = vperm.slane %v1991, 6
    %v2009 = vperm.slane %v1991, 7
    %v2026 = vmul.f32 %v1994, %v1984
    %v2027 = vmul.f32 %v1995, %v1983
    %v2028 = vmul.f32 %v1996, %v1982
    %v2029 = vmul.f32 %v1997, %v1981
    %v2030 = vmul.f32 %v1998, %v1980
    %v2031 = vmul.f32 %v1999, %v1979
    %v2032 = vmul.f32 %v2000, %v1978
    %v2033 = vmul.f32 %v2001, %v1977
    %v2034 = vmul.f32 %v2002, %v1976
    %v2035 = vmul.f32 %v2003, %v1975
    %v2036 = vmul.f32 %v2004, %v1974
    %v2037 = vmul.f32 %v2005, %v1973
    %v2038 = vmul.f32 %v2006, %v1972
    %v2039 = vmul.f32 %v2007, %v1971
    %v2040 = vmul.f32 %v2008, %v1970
    %v2041 = vmul.f32 %v2009, %v1969
    %2042 = vrot.lane.b32.xlu0 %v1812, 16
    %v2043 = vpop.permute.xlu0 %2042
    %2044 = vrot.lane.b32.xlu0 %v1813, 16
    %v2045 = vpop.permute.xlu0 %2044
    %2046 = vrot.lane.b32.xlu0 %v1814, 16
    %v2047 = vpop.permute.xlu0 %2046
    %2048 = vrot.lane.b32.xlu0 %v1815, 16
    %v2049 = vpop.permute.xlu0 %2048
    %2050 = vrot.lane.b32.xlu0 %v1816, 16
    %v2051 = vpop.permute.xlu0 %2050
    %2052 = vrot.lane.b32.xlu0 %v1817, 16
    %v2053 = vpop.permute.xlu0 %2052
    %2054 = vrot.lane.b32.xlu0 %v1818, 16
    %v2055 = vpop.permute.xlu0 %2054
    %2056 = vrot.lane.b32.xlu0 %v1819, 16
    %v2057 = vpop.permute.xlu0 %2056
    %2058 = vrot.lane.b32.xlu0 %v1820, 16
    %v2059 = vpop.permute.xlu0 %2058
    %2060 = vrot.lane.b32.xlu0 %v1821, 16
    %v2061 = vpop.permute.xlu0 %2060
    %2062 = vrot.lane.b32.xlu0 %v1822, 16
    %v2063 = vpop.permute.xlu0 %2062
    %2064 = vrot.lane.b32.xlu0 %v1823, 16
    %v2065 = vpop.permute.xlu0 %2064
    %2066 = vrot.lane.b32.xlu0 %v1824, 16
    %v2067 = vpop.permute.xlu0 %2066
    %2068 = vrot.lane.b32.xlu0 %v1825, 16
    %v2069 = vpop.permute.xlu0 %2068
    %2070 = vrot.lane.b32.xlu0 %v1826, 16
    %v2071 = vpop.permute.xlu0 %2070
    %2072 = vrot.lane.b32.xlu0 %v1827, 16
    %v2073 = vpop.permute.xlu0 %2072
    %vm2074 = vcmp.lt.s32.totalorder %v661, 16
    %v2075 = vsel %vm2074, %v2071, %v2073
    %v2076 = vsel %vm2074, %v2069, %v2071
    %v2077 = vsel %vm2074, %v2067, %v2069
    %v2078 = vsel %vm2074, %v2065, %v2067
    %v2079 = vsel %vm2074, %v2063, %v2065
    %v2080 = vsel %vm2074, %v2061, %v2063
    %v2081 = vsel %vm2074, %v2059, %v2061
    %v2082 = vsel %vm2074, %v2057, %v2059
    %v2083 = vsel %vm2074, %v2055, %v2057
    %v2084 = vsel %vm2074, %v2053, %v2055
    %v2085 = vsel %vm2074, %v2051, %v2053
    %v2086 = vsel %vm2074, %v2049, %v2051
    %v2087 = vsel %vm2074, %v2047, %v2049
    %v2088 = vsel %vm2074, %v2045, %v2047
    %v2089 = vsel %vm2074, %v2043, %v2045
    %v2090 = vsel %vm2074, %v2073, %v2043
    %s2091 = scalar_lea.vmem [#allocation5], 1
    %v2092 = vld [vmem:[%s2091] ss:$8 sm:$0xf]
    %v2093 = vld [vmem:[%s2091] ss:$8 sm:$0xf0]
    %v2094 = vor.u32 %v2092, %v2093
    %s2095 = scalar_lea.vmem [#allocation5], 65
    %v2096 = vld [vmem:[%s2095] ss:$8 sm:$0xf]
    %v2097 = vld [vmem:[%s2095] ss:$8 sm:$0xf0]
    %v2098 = vor.u32 %v2096, %v2097
    %v2101 = vperm.slane %v2094, 0
    %v2102 = vperm.slane %v2094, 1
    %v2103 = vperm.slane %v2094, 2
    %v2104 = vperm.slane %v2094, 3
    %v2105 = vperm.slane %v2094, 4
    %v2106 = vperm.slane %v2094, 5
    %v2107 = vperm.slane %v2094, 6
    %v2108 = vperm.slane %v2094, 7
    %v2109 = vperm.slane %v2098, 0
    %v2110 = vperm.slane %v2098, 1
    %v2111 = vperm.slane %v2098, 2
    %v2112 = vperm.slane %v2098, 3
    %v2113 = vperm.slane %v2098, 4
    %v2114 = vperm.slane %v2098, 5
    %v2115 = vperm.slane %v2098, 6
    %v2116 = vperm.slane %v2098, 7
    %v2133 = vmul.f32 %v2101, %v2090
    %v2134 = vmul.f32 %v2102, %v2089
    %v2135 = vmul.f32 %v2103, %v2088
    %v2136 = vmul.f32 %v2104, %v2087
    %v2137 = vmul.f32 %v2105, %v2086
    %v2138 = vmul.f32 %v2106, %v2085
    %v2139 = vmul.f32 %v2107, %v2084
    %v2140 = vmul.f32 %v2108, %v2083
    %v2141 = vmul.f32 %v2109, %v2082
    %v2142 = vmul.f32 %v2110, %v2081
    %v2143 = vmul.f32 %v2111, %v2080
    %v2144 = vmul.f32 %v2112, %v2079
    %v2145 = vmul.f32 %v2113, %v2078
    %v2146 = vmul.f32 %v2114, %v2077
    %v2147 = vmul.f32 %v2115, %v2076
    %v2148 = vmul.f32 %v2116, %v2075
    %v2149 = vadd.f32 %v2026, %v2133
    %v2150 = vadd.f32 %v2027, %v2134
    %v2151 = vadd.f32 %v2028, %v2135
    %v2152 = vadd.f32 %v2029, %v2136
    %v2153 = vadd.f32 %v2030, %v2137
    %v2154 = vadd.f32 %v2031, %v2138
    %v2155 = vadd.f32 %v2032, %v2139
    %v2156 = vadd.f32 %v2033, %v2140
    %v2157 = vadd.f32 %v2034, %v2141
    %v2158 = vadd.f32 %v2035, %v2142
    %v2159 = vadd.f32 %v2036, %v2143
    %v2160 = vadd.f32 %v2037, %v2144
    %v2161 = vadd.f32 %v2038, %v2145
    %v2162 = vadd.f32 %v2039, %v2146
    %v2163 = vadd.f32 %v2040, %v2147
    %v2164 = vadd.f32 %v2041, %v2148
    %s2165 = scalar_lea.vmem [#allocation5], 2
    %v2166 = vld [vmem:[%s2165] ss:$8 sm:$0xf]
    %v2167 = vld [vmem:[%s2165] ss:$8 sm:$0xf0]
    %v2168 = vor.u32 %v2166, %v2167
    %s2169 = scalar_lea.vmem [#allocation5], 66
    %v2170 = vld [vmem:[%s2169] ss:$8 sm:$0xf]
    %v2171 = vld [vmem:[%s2169] ss:$8 sm:$0xf0]
    %v2172 = vor.u32 %v2170, %v2171
    %v2175 = vperm.slane %v2168, 0
    %v2176 = vperm.slane %v2168, 1
    %v2177 = vperm.slane %v2168, 2
    %v2178 = vperm.slane %v2168, 3
    %v2179 = vperm.slane %v2168, 4
    %v2180 = vperm.slane %v2168, 5
    %v2181 = vperm.slane %v2168, 6
    %v2182 = vperm.slane %v2168, 7
    %v2183 = vperm.slane %v2172, 0
    %v2184 = vperm.slane %v2172, 1
    %v2185 = vperm.slane %v2172, 2
    %v2186 = vperm.slane %v2172, 3
    %v2187 = vperm.slane %v2172, 4
    %v2188 = vperm.slane %v2172, 5
    %v2189 = vperm.slane %v2172, 6
    %v2190 = vperm.slane %v2172, 7
    %v2207 = vmul.f32 %v2175, %v1848
    %v2208 = vmul.f32 %v2176, %v1849
    %v2209 = vmul.f32 %v2177, %v1850
    %v2210 = vmul.f32 %v2178, %v1851
    %v2211 = vmul.f32 %v2179, %v1852
    %v2212 = vmul.f32 %v2180, %v1853
    %v2213 = vmul.f32 %v2181, %v1854
    %v2214 = vmul.f32 %v2182, %v1855
    %v2215 = vmul.f32 %v2183, %v1856
    %v2216 = vmul.f32 %v2184, %v1857
    %v2217 = vmul.f32 %v2185, %v1858
    %v2218 = vmul.f32 %v2186, %v1859
    %v2219 = vmul.f32 %v2187, %v1860
    %v2220 = vmul.f32 %v2188, %v1861
    %v2221 = vmul.f32 %v2189, %v1862
    %v2222 = vmul.f32 %v2190, %v1863
    %v2223 = vadd.f32 %v2149, %v2207
    %v2224 = vadd.f32 %v2150, %v2208
    %v2225 = vadd.f32 %v2151, %v2209
    %v2226 = vadd.f32 %v2152, %v2210
    %v2227 = vadd.f32 %v2153, %v2211
    %v2228 = vadd.f32 %v2154, %v2212
    %v2229 = vadd.f32 %v2155, %v2213
    %v2230 = vadd.f32 %v2156, %v2214
    %v2231 = vadd.f32 %v2157, %v2215
    %v2232 = vadd.f32 %v2158, %v2216
    %v2233 = vadd.f32 %v2159, %v2217
    %v2234 = vadd.f32 %v2160, %v2218
    %v2235 = vadd.f32 %v2161, %v2219
    %v2236 = vadd.f32 %v2162, %v2220
    %v2237 = vadd.f32 %v2163, %v2221
    %v2238 = vadd.f32 %v2164, %v2222
    %2239 = vrot.lane.b32.xlu0 %v1884, 112
    %v2240 = vpop.permute.xlu0 %2239
    %2241 = vrot.lane.b32.xlu0 %v1885, 112
    %v2242 = vpop.permute.xlu0 %2241
    %2243 = vrot.lane.b32.xlu0 %v1886, 112
    %v2244 = vpop.permute.xlu0 %2243
    %2245 = vrot.lane.b32.xlu0 %v1887, 112
    %v2246 = vpop.permute.xlu0 %2245
    %2247 = vrot.lane.b32.xlu0 %v1888, 112
    %v2248 = vpop.permute.xlu0 %2247
    %2249 = vrot.lane.b32.xlu0 %v1889, 112
    %v2250 = vpop.permute.xlu0 %2249
    %2251 = vrot.lane.b32.xlu0 %v1890, 112
    %v2252 = vpop.permute.xlu0 %2251
    %2253 = vrot.lane.b32.xlu0 %v1891, 112
    %v2254 = vpop.permute.xlu0 %2253
    %2255 = vrot.lane.b32.xlu0 %v1892, 112
    %v2256 = vpop.permute.xlu0 %2255
    %2257 = vrot.lane.b32.xlu0 %v1893, 112
    %v2258 = vpop.permute.xlu0 %2257
    %2259 = vrot.lane.b32.xlu0 %v1894, 112
    %v2260 = vpop.permute.xlu0 %2259
    %2261 = vrot.lane.b32.xlu0 %v1895, 112
    %v2262 = vpop.permute.xlu0 %2261
    %2263 = vrot.lane.b32.xlu0 %v1896, 112
    %v2264 = vpop.permute.xlu0 %2263
    %2265 = vrot.lane.b32.xlu0 %v1897, 112
    %v2266 = vpop.permute.xlu0 %2265
    %2267 = vrot.lane.b32.xlu0 %v1898, 112
    %v2268 = vpop.permute.xlu0 %2267
    %2269 = vrot.lane.b32.xlu0 %v1899, 112
    %v2270 = vpop.permute.xlu0 %2269
    %vm2271 = vcmp.lt.s32.totalorder %v661, 112
    %v2272 = vsel %vm2271, %v2268, %v2270
    %v2273 = vsel %vm2271, %v2266, %v2268
    %v2274 = vsel %vm2271, %v2264, %v2266
    %v2275 = vsel %vm2271, %v2262, %v2264
    %v2276 = vsel %vm2271, %v2260, %v2262
    %v2277 = vsel %vm2271, %v2258, %v2260
    %v2278 = vsel %vm2271, %v2256, %v2258
    %v2279 = vsel %vm2271, %v2254, %v2256
    %v2280 = vsel %vm2271, %v2252, %v2254
    %v2281 = vsel %vm2271, %v2250, %v2252
    %v2282 = vsel %vm2271, %v2248, %v2250
    %v2283 = vsel %vm2271, %v2246, %v2248
    %v2284 = vsel %vm2271, %v2244, %v2246
    %v2285 = vsel %vm2271, %v2242, %v2244
    %v2286 = vsel %vm2271, %v2240, %v2242
    %v2287 = vsel %vm2271, %v2270, %v2240
    %s2288 = scalar_lea.vmem [#allocation5], 3
    %v2289 = vld [vmem:[%s2288] ss:$8 sm:$0xf]
    %v2290 = vld [vmem:[%s2288] ss:$8 sm:$0xf0]
    %v2291 = vor.u32 %v2289, %v2290
    %s2292 = scalar_lea.vmem [#allocation5], 67
    %v2293 = vld [vmem:[%s2292] ss:$8 sm:$0xf]
    %v2294 = vld [vmem:[%s2292] ss:$8 sm:$0xf0]
    %v2295 = vor.u32 %v2293, %v2294
    %v2298 = vperm.slane %v2291, 0
    %v2299 = vperm.slane %v2291, 1
    %v2300 = vperm.slane %v2291, 2
    %v2301 = vperm.slane %v2291, 3
    %v2302 = vperm.slane %v2291, 4
    %v2303 = vperm.slane %v2291, 5
    %v2304 = vperm.slane %v2291, 6
    %v2305 = vperm.slane %v2291, 7
    %v2306 = vperm.slane %v2295, 0
    %v2307 = vperm.slane %v2295, 1
    %v2308 = vperm.slane %v2295, 2
    %v2309 = vperm.slane %v2295, 3
    %v2310 = vperm.slane %v2295, 4
    %v2311 = vperm.slane %v2295, 5
    %v2312 = vperm.slane %v2295, 6
    %v2313 = vperm.slane %v2295, 7
    %v2330 = vmul.f32 %v2298, %v2286
    %v2331 = vmul.f32 %v2299, %v2285
    %v2332 = vmul.f32 %v2300, %v2284
    %v2333 = vmul.f32 %v2301, %v2283
    %v2334 = vmul.f32 %v2302, %v2282
    %v2335 = vmul.f32 %v2303, %v2281
    %v2336 = vmul.f32 %v2304, %v2280
    %v2337 = vmul.f32 %v2305, %v2279
    %v2338 = vmul.f32 %v2306, %v2278
    %v2339 = vmul.f32 %v2307, %v2277
    %v2340 = vmul.f32 %v2308, %v2276
    %v2341 = vmul.f32 %v2309, %v2275
    %v2342 = vmul.f32 %v2310, %v2274
    %v2343 = vmul.f32 %v2311, %v2273
    %v2344 = vmul.f32 %v2312, %v2272
    %v2345 = vmul.f32 %v2313, %v2287
    %v2346 = vadd.f32 %v2223, %v2330
    %v2347 = vadd.f32 %v2224, %v2331
    %v2348 = vadd.f32 %v2225, %v2332
    %v2349 = vadd.f32 %v2226, %v2333
    %v2350 = vadd.f32 %v2227, %v2334
    %v2351 = vadd.f32 %v2228, %v2335
    %v2352 = vadd.f32 %v2229, %v2336
    %v2353 = vadd.f32 %v2230, %v2337
    %v2354 = vadd.f32 %v2231, %v2338
    %v2355 = vadd.f32 %v2232, %v2339
    %v2356 = vadd.f32 %v2233, %v2340
    %v2357 = vadd.f32 %v2234, %v2341
    %v2358 = vadd.f32 %v2235, %v2342
    %v2359 = vadd.f32 %v2236, %v2343
    %v2360 = vadd.f32 %v2237, %v2344
    %v2361 = vadd.f32 %v2238, %v2345
    %2362 = vrot.lane.b32.xlu0 %v1920, 96
    %v2363 = vpop.permute.xlu0 %2362
    %2364 = vrot.lane.b32.xlu0 %v1921, 96
    %v2365 = vpop.permute.xlu0 %2364
    %2366 = vrot.lane.b32.xlu0 %v1922, 96
    %v2367 = vpop.permute.xlu0 %2366
    %2368 = vrot.lane.b32.xlu0 %v1923, 96
    %v2369 = vpop.permute.xlu0 %2368
    %2370 = vrot.lane.b32.xlu0 %v1924, 96
    %v2371 = vpop.permute.xlu0 %2370
    %2372 = vrot.lane.b32.xlu0 %v1925, 96
    %v2373 = vpop.permute.xlu0 %2372
    %2374 = vrot.lane.b32.xlu0 %v1926, 96
    %v2375 = vpop.permute.xlu0 %2374
    %2376 = vrot.lane.b32.xlu0 %v1927, 96
    %v2377 = vpop.permute.xlu0 %2376
    %2378 = vrot.lane.b32.xlu0 %v1928, 96
    %v2379 = vpop.permute.xlu0 %2378
    %2380 = vrot.lane.b32.xlu0 %v1929, 96
    %v2381 = vpop.permute.xlu0 %2380
    %2382 = vrot.lane.b32.xlu0 %v1930, 96
    %v2383 = vpop.permute.xlu0 %2382
    %2384 = vrot.lane.b32.xlu0 %v1931, 96
    %v2385 = vpop.permute.xlu0 %2384
    %2386 = vrot.lane.b32.xlu0 %v1932, 96
    %v2387 = vpop.permute.xlu0 %2386
    %2388 = vrot.lane.b32.xlu0 %v1933, 96
    %v2389 = vpop.permute.xlu0 %2388
    %2390 = vrot.lane.b32.xlu0 %v1934, 96
    %v2391 = vpop.permute.xlu0 %2390
    %2392 = vrot.lane.b32.xlu0 %v1935, 96
    %v2393 = vpop.permute.xlu0 %2392
    %vm2394 = vcmp.lt.s32.totalorder %v661, 96
    %v2395 = vsel %vm2394, %v2391, %v2393
    %v2396 = vsel %vm2394, %v2389, %v2391
    %v2397 = vsel %vm2394, %v2387, %v2389
    %v2398 = vsel %vm2394, %v2385, %v2387
    %v2399 = vsel %vm2394, %v2383, %v2385
    %v2400 = vsel %vm2394, %v2381, %v2383
    %v2401 = vsel %vm2394, %v2379, %v2381
    %v2402 = vsel %vm2394, %v2377, %v2379
    %v2403 = vsel %vm2394, %v2375, %v2377
    %v2404 = vsel %vm2394, %v2373, %v2375
    %v2405 = vsel %vm2394, %v2371, %v2373
    %v2406 = vsel %vm2394, %v2369, %v2371
    %v2407 = vsel %vm2394, %v2367, %v2369
    %v2408 = vsel %vm2394, %v2365, %v2367
    %v2409 = vsel %vm2394, %v2363, %v2365
    %v2410 = vsel %vm2394, %v2393, %v2363
    %s2411 = scalar_lea.vmem [#allocation5], 4
    %v2412 = vld [vmem:[%s2411] ss:$8 sm:$0xf]
    %v2413 = vld [vmem:[%s2411] ss:$8 sm:$0xf0]
    %v2414 = vor.u32 %v2412, %v2413
    %s2415 = scalar_lea.vmem [#allocation5], 68
    %v2416 = vld [vmem:[%s2415] ss:$8 sm:$0xf]
    %v2417 = vld [vmem:[%s2415] ss:$8 sm:$0xf0]
    %v2418 = vor.u32 %v2416, %v2417
    %v2421 = vperm.slane %v2414, 0
    %v2422 = vperm.slane %v2414, 1
    %v2423 = vperm.slane %v2414, 2
    %v2424 = vperm.slane %v2414, 3
    %v2425 = vperm.slane %v2414, 4
    %v2426 = vperm.slane %v2414, 5
    %v2427 = vperm.slane %v2414, 6
    %v2428 = vperm.slane %v2414, 7
    %v2429 = vperm.slane %v2418, 0
    %v2430 = vperm.slane %v2418, 1
    %v2431 = vperm.slane %v2418, 2
    %v2432 = vperm.slane %v2418, 3
    %v2433 = vperm.slane %v2418, 4
    %v2434 = vperm.slane %v2418, 5
    %v2435 = vperm.slane %v2418, 6
    %v2436 = vperm.slane %v2418, 7
    %v2453 = vmul.f32 %v2421, %v2409
    %v2454 = vmul.f32 %v2422, %v2408
    %v2455 = vmul.f32 %v2423, %v2407
    %v2456 = vmul.f32 %v2424, %v2406
    %v2457 = vmul.f32 %v2425, %v2405
    %v2458 = vmul.f32 %v2426, %v2404
    %v2459 = vmul.f32 %v2427, %v2403
    %v2460 = vmul.f32 %v2428, %v2402
    %v2461 = vmul.f32 %v2429, %v2401
    %v2462 = vmul.f32 %v2430, %v2400
    %v2463 = vmul.f32 %v2431, %v2399
    %v2464 = vmul.f32 %v2432, %v2398
    %v2465 = vmul.f32 %v2433, %v2397
    %v2466 = vmul.f32 %v2434, %v2396
    %v2467 = vmul.f32 %v2435, %v2395
    %v2468 = vmul.f32 %v2436, %v2410
    %v2469 = vadd.f32 %v2346, %v2453
    %v2470 = vadd.f32 %v2347, %v2454
    %v2471 = vadd.f32 %v2348, %v2455
    %v2472 = vadd.f32 %v2349, %v2456
    %v2473 = vadd.f32 %v2350, %v2457
    %v2474 = vadd.f32 %v2351, %v2458
    %v2475 = vadd.f32 %v2352, %v2459
    %v2476 = vadd.f32 %v2353, %v2460
    %v2477 = vadd.f32 %v2354, %v2461
    %v2478 = vadd.f32 %v2355, %v2462
    %v2479 = vadd.f32 %v2356, %v2463
    %v2480 = vadd.f32 %v2357, %v2464
    %v2481 = vadd.f32 %v2358, %v2465
    %v2482 = vadd.f32 %v2359, %v2466
    %v2483 = vadd.f32 %v2360, %v2467
    %v2484 = vadd.f32 %v2361, %v2468
    %v2485 = vld [vmem:[%s11] sm:$0xff]
    %2487 = vset.pattern.permute.xlu0 0
    %2488 = vperm.xlu0 %2487, %v2485
    %v2489 = vpop.permute.xlu0 %2488
    %v2491 = vadd.f32 %v2469, %v2489
    %v2492 = vadd.f32 %v2470, %v2489
    %v2493 = vadd.f32 %v2471, %v2489
    %v2494 = vadd.f32 %v2472, %v2489
    %v2495 = vadd.f32 %v2473, %v2489
    %v2496 = vadd.f32 %v2474, %v2489
    %v2497 = vadd.f32 %v2475, %v2489
    %v2498 = vadd.f32 %v2476, %v2489
    %v2499 = vadd.f32 %v2477, %v2489
    %v2500 = vadd.f32 %v2478, %v2489
    %v2501 = vadd.f32 %v2479, %v2489
    %v2502 = vadd.f32 %v2480, %v2489
    %v2503 = vadd.f32 %v2481, %v2489
    %v2504 = vadd.f32 %v2482, %v2489
    %v2505 = vadd.f32 %v2483, %v2489
    %v2506 = vadd.f32 %v2484, %v2489
    %v2507 = vld [vmem:[%s12] sm:$0xff]
    %2508 = vrot.lane.b32.xlu0 %v2491, 9
    %v2509 = vpop.permute.xlu0 %2508
    %2510 = vrot.lane.b32.xlu0 %v2492, 9
    %v2511 = vpop.permute.xlu0 %2510
    %2512 = vrot.lane.b32.xlu0 %v2493, 9
    %v2513 = vpop.permute.xlu0 %2512
    %2514 = vrot.lane.b32.xlu0 %v2494, 9
    %v2515 = vpop.permute.xlu0 %2514
    %2516 = vrot.lane.b32.xlu0 %v2495, 9
    %v2517 = vpop.permute.xlu0 %2516
    %2518 = vrot.lane.b32.xlu0 %v2496, 9
    %v2519 = vpop.permute.xlu0 %2518
    %2520 = vrot.lane.b32.xlu0 %v2497, 9
    %v2521 = vpop.permute.xlu0 %2520
    %2522 = vrot.lane.b32.xlu0 %v2498, 9
    %v2523 = vpop.permute.xlu0 %2522
    %2524 = vrot.lane.b32.xlu0 %v2499, 9
    %v2525 = vpop.permute.xlu0 %2524
    %2526 = vrot.lane.b32.xlu0 %v2500, 9
    %v2527 = vpop.permute.xlu0 %2526
    %2528 = vrot.lane.b32.xlu0 %v2501, 9
    %v2529 = vpop.permute.xlu0 %2528
    %2530 = vrot.lane.b32.xlu0 %v2502, 9
    %v2531 = vpop.permute.xlu0 %2530
    %2532 = vrot.lane.b32.xlu0 %v2503, 9
    %v2533 = vpop.permute.xlu0 %2532
    %2534 = vrot.lane.b32.xlu0 %v2504, 9
    %v2535 = vpop.permute.xlu0 %2534
    %2536 = vrot.lane.b32.xlu0 %v2505, 9
    %v2537 = vpop.permute.xlu0 %2536
    %2538 = vrot.lane.b32.xlu0 %v2506, 9
    %v2539 = vpop.permute.xlu0 %2538
    %vm2540 = vcmp.lt.s32.totalorder %v661, 9
    %v2541 = vsel %vm2540, %v2537, %v2539
    %v2542 = vsel %vm2540, %v2535, %v2537
    %v2543 = vsel %vm2540, %v2533, %v2535
    %v2544 = vsel %vm2540, %v2531, %v2533
    %v2545 = vsel %vm2540, %v2529, %v2531
    %v2546 = vsel %vm2540, %v2527, %v2529
    %v2547 = vsel %vm2540, %v2525, %v2527
    %v2548 = vsel %vm2540, %v2523, %v2525
    %v2549 = vsel %vm2540, %v2521, %v2523
    %v2550 = vsel %vm2540, %v2519, %v2521
    %v2551 = vsel %vm2540, %v2517, %v2519
    %v2552 = vsel %vm2540, %v2515, %v2517
    %v2553 = vsel %vm2540, %v2513, %v2515
    %v2554 = vsel %vm2540, %v2511, %v2513
    %v2555 = vsel %vm2540, %v2509, %v2511
    %v2556 = vsel %vm2540, %v2539, %v2509
    %v2557 = vld [vmem:[#allocation10] ss:$8 sm:$0xf]
    %v2558 = vld [vmem:[#allocation10] ss:$8 sm:$0xf0]
    %v2559 = vor.u32 %v2557, %v2558
    %s2560 = scalar_lea.vmem [#allocation10], 64
    %v2561 = vld [vmem:[%s2560] ss:$8 sm:$0xf]
    %v2562 = vld [vmem:[%s2560] ss:$8 sm:$0xf0]
    %v2563 = vor.u32 %v2561, %v2562
    %v2566 = vperm.slane %v2559, 0
    %v2567 = vperm.slane %v2559, 1
    %v2568 = vperm.slane %v2559, 2
    %v2569 = vperm.slane %v2559, 3
    %v2570 = vperm.slane %v2559, 4
    %v2571 = vperm.slane %v2559, 5
    %v2572 = vperm.slane %v2559, 6
    %v2573 = vperm.slane %v2559, 7
    %v2574 = vperm.slane %v2563, 0
    %v2575 = vperm.slane %v2563, 1
    %v2576 = vperm.slane %v2563, 2
    %v2577 = vperm.slane %v2563, 3
    %v2578 = vperm.slane %v2563, 4
    %v2579 = vperm.slane %v2563, 5
    %v2580 = vperm.slane %v2563, 6
    %v2581 = vperm.slane %v2563, 7
    %v2598 = vmul.f32 %v2566, %v2556
    %v2599 = vmul.f32 %v2567, %v2555
    %v2600 = vmul.f32 %v2568, %v2554
    %v2601 = vmul.f32 %v2569, %v2553
    %v2602 = vmul.f32 %v2570, %v2552
    %v2603 = vmul.f32 %v2571, %v2551
    %v2604 = vmul.f32 %v2572, %v2550
    %v2605 = vmul.f32 %v2573, %v2549
    %v2606 = vmul.f32 %v2574, %v2548
    %v2607 = vmul.f32 %v2575, %v2547
    %v2608 = vmul.f32 %v2576, %v2546
    %v2609 = vmul.f32 %v2577, %v2545
    %v2610 = vmul.f32 %v2578, %v2544
    %v2611 = vmul.f32 %v2579, %v2543
    %v2612 = vmul.f32 %v2580, %v2542
    %v2613 = vmul.f32 %v2581, %v2541
    %2615 = vset.pattern.permute.xlu0 0
    %2616 = vperm.xlu0 %2615, %v2507
    %v2617 = vpop.permute.xlu0 %2616
    %v2619 = vmul.f32 %v2617, %v2598
    %v2620 = vmul.f32 %v2617, %v2599
    %v2621 = vmul.f32 %v2617, %v2600
    %v2622 = vmul.f32 %v2617, %v2601
    %v2623 = vmul.f32 %v2617, %v2602
    %v2624 = vmul.f32 %v2617, %v2603
    %v2625 = vmul.f32 %v2617, %v2604
    %v2626 = vmul.f32 %v2617, %v2605
    %v2627 = vmul.f32 %v2617, %v2606
    %v2628 = vmul.f32 %v2617, %v2607
    %v2629 = vmul.f32 %v2617, %v2608
    %v2630 = vmul.f32 %v2617, %v2609
    %v2631 = vmul.f32 %v2617, %v2610
    %v2632 = vmul.f32 %v2617, %v2611
    %v2633 = vmul.f32 %v2617, %v2612
    %v2634 = vmul.f32 %v2617, %v2613
    %2635 = vset.pattern.permute.xlu0 7
    %2636 = vperm.xlu0 %2635, %v2507
    %v2637 = vpop.permute.xlu0 %2636
    %v2639 = vmul.f32 %v2637, %v2598
    %v2640 = vmul.f32 %v2637, %v2599
    %v2641 = vmul.f32 %v2637, %v2600
    %v2642 = vmul.f32 %v2637, %v2601
    %v2643 = vmul.f32 %v2637, %v2602
    %v2644 = vmul.f32 %v2637, %v2603
    %v2645 = vmul.f32 %v2637, %v2604
    %v2646 = vmul.f32 %v2637, %v2605
    %v2647 = vmul.f32 %v2637, %v2606
    %v2648 = vmul.f32 %v2637, %v2607
    %v2649 = vmul.f32 %v2637, %v2608
    %v2650 = vmul.f32 %v2637, %v2609
    %v2651 = vmul.f32 %v2637, %v2610
    %v2652 = vmul.f32 %v2637, %v2611
    %v2653 = vmul.f32 %v2637, %v2612
    %v2654 = vmul.f32 %v2637, %v2613
    %2655 = vset.pattern.permute.xlu0 14
    %2656 = vperm.xlu0 %2655, %v2507
    %v2657 = vpop.permute.xlu0 %2656
    %v2659 = vmul.f32 %v2657, %v2598
    %v2660 = vmul.f32 %v2657, %v2599
    %v2661 = vmul.f32 %v2657, %v2600
    %v2662 = vmul.f32 %v2657, %v2601
    %v2663 = vmul.f32 %v2657, %v2602
    %v2664 = vmul.f32 %v2657, %v2603
    %v2665 = vmul.f32 %v2657, %v2604
    %v2666 = vmul.f32 %v2657, %v2605
    %v2667 = vmul.f32 %v2657, %v2606
    %v2668 = vmul.f32 %v2657, %v2607
    %v2669 = vmul.f32 %v2657, %v2608
    %v2670 = vmul.f32 %v2657, %v2609
    %v2671 = vmul.f32 %v2657, %v2610
    %v2672 = vmul.f32 %v2657, %v2611
    %v2673 = vmul.f32 %v2657, %v2612
    %v2674 = vmul.f32 %v2657, %v2613
    %2675 = vset.pattern.permute.xlu0 21
    %2676 = vperm.xlu0 %2675, %v2507
    %v2677 = vpop.permute.xlu0 %2676
    %v2679 = vmul.f32 %v2677, %v2598
    %v2680 = vmul.f32 %v2677, %v2599
    %v2681 = vmul.f32 %v2677, %v2600
    %v2682 = vmul.f32 %v2677, %v2601
    %v2683 = vmul.f32 %v2677, %v2602
    %v2684 = vmul.f32 %v2677, %v2603
    %v2685 = vmul.f32 %v2677, %v2604
    %v2686 = vmul.f32 %v2677, %v2605
    %v2687 = vmul.f32 %v2677, %v2606
    %v2688 = vmul.f32 %v2677, %v2607
    %v2689 = vmul.f32 %v2677, %v2608
    %v2690 = vmul.f32 %v2677, %v2609
    %v2691 = vmul.f32 %v2677, %v2610
    %v2692 = vmul.f32 %v2677, %v2611
    %v2693 = vmul.f32 %v2677, %v2612
    %v2694 = vmul.f32 %v2677, %v2613
    %2695 = vset.pattern.permute.xlu0 28
    %2696 = vperm.xlu0 %2695, %v2507
    %v2697 = vpop.permute.xlu0 %2696
    %v2699 = vmul.f32 %v2697, %v2598
    %v2700 = vmul.f32 %v2697, %v2599
    %v2701 = vmul.f32 %v2697, %v2600
    %v2702 = vmul.f32 %v2697, %v2601
    %v2703 = vmul.f32 %v2697, %v2602
    %v2704 = vmul.f32 %v2697, %v2603
    %v2705 = vmul.f32 %v2697, %v2604
    %v2706 = vmul.f32 %v2697, %v2605
    %v2707 = vmul.f32 %v2697, %v2606
    %v2708 = vmul.f32 %v2697, %v2607
    %v2709 = vmul.f32 %v2697, %v2608
    %v2710 = vmul.f32 %v2697, %v2609
    %v2711 = vmul.f32 %v2697, %v2610
    %v2712 = vmul.f32 %v2697, %v2611
    %v2713 = vmul.f32 %v2697, %v2612
    %v2714 = vmul.f32 %v2697, %v2613
    %2715 = vset.pattern.permute.xlu0 35
    %2716 = vperm.xlu0 %2715, %v2507
    %v2717 = vpop.permute.xlu0 %2716
    %v2719 = vmul.f32 %v2717, %v2598
    %v2720 = vmul.f32 %v2717, %v2599
    %v2721 = vmul.f32 %v2717, %v2600
    %v2722 = vmul.f32 %v2717, %v2601
    %v2723 = vmul.f32 %v2717, %v2602
    %v2724 = vmul.f32 %v2717, %v2603
    %v2725 = vmul.f32 %v2717, %v2604
    %v2726 = vmul.f32 %v2717, %v2605
    %v2727 = vmul.f32 %v2717, %v2606
    %v2728 = vmul.f32 %v2717, %v2607
    %v2729 = vmul.f32 %v2717, %v2608
    %v2730 = vmul.f32 %v2717, %v2609
    %v2731 = vmul.f32 %v2717, %v2610
    %v2732 = vmul.f32 %v2717, %v2611
    %v2733 = vmul.f32 %v2717, %v2612
    %v2734 = vmul.f32 %v2717, %v2613
    %2735 = vset.pattern.permute.xlu0 42
    %2736 = vperm.xlu0 %2735, %v2507
    %v2737 = vpop.permute.xlu0 %2736
    %v2739 = vmul.f32 %v2737, %v2598
    %v2740 = vmul.f32 %v2737, %v2599
    %v2741 = vmul.f32 %v2737, %v2600
    %v2742 = vmul.f32 %v2737, %v2601
    %v2743 = vmul.f32 %v2737, %v2602
    %v2744 = vmul.f32 %v2737, %v2603
    %v2745 = vmul.f32 %v2737, %v2604
    %v2746 = vmul.f32 %v2737, %v2605
    %v2747 = vmul.f32 %v2737, %v2606
    %v2748 = vmul.f32 %v2737, %v2607
    %v2749 = vmul.f32 %v2737, %v2608
    %v2750 = vmul.f32 %v2737, %v2609
    %v2751 = vmul.f32 %v2737, %v2610
    %v2752 = vmul.f32 %v2737, %v2611
    %v2753 = vmul.f32 %v2737, %v2612
    %v2754 = vmul.f32 %v2737, %v2613
    %2755 = vrot.lane.b32.xlu0 %v2491, 6
    %v2756 = vpop.permute.xlu0 %2755
    %2757 = vrot.lane.b32.xlu0 %v2492, 6
    %v2758 = vpop.permute.xlu0 %2757
    %2759 = vrot.lane.b32.xlu0 %v2493, 6
    %v2760 = vpop.permute.xlu0 %2759
    %2761 = vrot.lane.b32.xlu0 %v2494, 6
    %v2762 = vpop.permute.xlu0 %2761
    %2763 = vrot.lane.b32.xlu0 %v2495, 6
    %v2764 = vpop.permute.xlu0 %2763
    %2765 = vrot.lane.b32.xlu0 %v2496, 6
    %v2766 = vpop.permute.xlu0 %2765
    %2767 = vrot.lane.b32.xlu0 %v2497, 6
    %v2768 = vpop.permute.xlu0 %2767
    %2769 = vrot.lane.b32.xlu0 %v2498, 6
    %v2770 = vpop.permute.xlu0 %2769
    %2771 = vrot.lane.b32.xlu0 %v2499, 6
    %v2772 = vpop.permute.xlu0 %2771
    %2773 = vrot.lane.b32.xlu0 %v2500, 6
    %v2774 = vpop.permute.xlu0 %2773
    %2775 = vrot.lane.b32.xlu0 %v2501, 6
    %v2776 = vpop.permute.xlu0 %2775
    %2777 = vrot.lane.b32.xlu0 %v2502, 6
    %v2778 = vpop.permute.xlu0 %2777
    %2779 = vrot.lane.b32.xlu0 %v2503, 6
    %v2780 = vpop.permute.xlu0 %2779
    %2781 = vrot.lane.b32.xlu0 %v2504, 6
    %v2782 = vpop.permute.xlu0 %2781
    %2783 = vrot.lane.b32.xlu0 %v2505, 6
    %v2784 = vpop.permute.xlu0 %2783
    %2785 = vrot.lane.b32.xlu0 %v2506, 6
    %v2786 = vpop.permute.xlu0 %2785
    %vm2787 = vcmp.lt.s32.totalorder %v661, 6
    %v2788 = vsel %vm2787, %v2784, %v2786
    %v2789 = vsel %vm2787, %v2782, %v2784
    %v2790 = vsel %vm2787, %v2780, %v2782
    %v2791 = vsel %vm2787, %v2778, %v2780
    %v2792 = vsel %vm2787, %v2776, %v2778
    %v2793 = vsel %vm2787, %v2774, %v2776
    %v2794 = vsel %vm2787, %v2772, %v2774
    %v2795 = vsel %vm2787, %v2770, %v2772
    %v2796 = vsel %vm2787, %v2768, %v2770
    %v2797 = vsel %vm2787, %v2766, %v2768
    %v2798 = vsel %vm2787, %v2764, %v2766
    %v2799 = vsel %vm2787, %v2762, %v2764
    %v2800 = vsel %vm2787, %v2760, %v2762
    %v2801 = vsel %vm2787, %v2758, %v2760
    %v2802 = vsel %vm2787, %v2756, %v2758
    %v2803 = vsel %vm2787, %v2786, %v2756
    %s2804 = scalar_lea.vmem [#allocation10], 1
    %v2805 = vld [vmem:[%s2804] ss:$8 sm:$0xf]
    %v2806 = vld [vmem:[%s2804] ss:$8 sm:$0xf0]
    %v2807 = vor.u32 %v2805, %v2806
    %s2808 = scalar_lea.vmem [#allocation10], 65
    %v2809 = vld [vmem:[%s2808] ss:$8 sm:$0xf]
    %v2810 = vld [vmem:[%s2808] ss:$8 sm:$0xf0]
    %v2811 = vor.u32 %v2809, %v2810
    %v2814 = vperm.slane %v2807, 0
    %v2815 = vperm.slane %v2807, 1
    %v2816 = vperm.slane %v2807, 2
    %v2817 = vperm.slane %v2807, 3
    %v2818 = vperm.slane %v2807, 4
    %v2819 = vperm.slane %v2807, 5
    %v2820 = vperm.slane %v2807, 6
    %v2821 = vperm.slane %v2807, 7
    %v2822 = vperm.slane %v2811, 0
    %v2823 = vperm.slane %v2811, 1
    %v2824 = vperm.slane %v2811, 2
    %v2825 = vperm.slane %v2811, 3
    %v2826 = vperm.slane %v2811, 4
    %v2827 = vperm.slane %v2811, 5
    %v2828 = vperm.slane %v2811, 6
    %v2829 = vperm.slane %v2811, 7
    %v2846 = vmul.f32 %v2814, %v2803
    %v2847 = vmul.f32 %v2815, %v2802
    %v2848 = vmul.f32 %v2816, %v2801
    %v2849 = vmul.f32 %v2817, %v2800
    %v2850 = vmul.f32 %v2818, %v2799
    %v2851 = vmul.f32 %v2819, %v2798
    %v2852 = vmul.f32 %v2820, %v2797
    %v2853 = vmul.f32 %v2821, %v2796
    %v2854 = vmul.f32 %v2822, %v2795
    %v2855 = vmul.f32 %v2823, %v2794
    %v2856 = vmul.f32 %v2824, %v2793
    %v2857 = vmul.f32 %v2825, %v2792
    %v2858 = vmul.f32 %v2826, %v2791
    %v2859 = vmul.f32 %v2827, %v2790
    %v2860 = vmul.f32 %v2828, %v2789
    %v2861 = vmul.f32 %v2829, %v2788
    %2862 = vset.pattern.permute.xlu0 1
    %2863 = vperm.xlu0 %2862, %v2507
    %v2864 = vpop.permute.xlu0 %2863
    %v2866 = vmul.f32 %v2864, %v2846
    %v2867 = vmul.f32 %v2864, %v2847
    %v2868 = vmul.f32 %v2864, %v2848
    %v2869 = vmul.f32 %v2864, %v2849
    %v2870 = vmul.f32 %v2864, %v2850
    %v2871 = vmul.f32 %v2864, %v2851
    %v2872 = vmul.f32 %v2864, %v2852
    %v2873 = vmul.f32 %v2864, %v2853
    %v2874 = vmul.f32 %v2864, %v2854
    %v2875 = vmul.f32 %v2864, %v2855
    %v2876 = vmul.f32 %v2864, %v2856
    %v2877 = vmul.f32 %v2864, %v2857
    %v2878 = vmul.f32 %v2864, %v2858
    %v2879 = vmul.f32 %v2864, %v2859
    %v2880 = vmul.f32 %v2864, %v2860
    %v2881 = vmul.f32 %v2864, %v2861
    %v2882 = vadd.f32 %v2619, %v2866
    %v2883 = vadd.f32 %v2620, %v2867
    %v2884 = vadd.f32 %v2621, %v2868
    %v2885 = vadd.f32 %v2622, %v2869
    %v2886 = vadd.f32 %v2623, %v2870
    %v2887 = vadd.f32 %v2624, %v2871
    %v2888 = vadd.f32 %v2625, %v2872
    %v2889 = vadd.f32 %v2626, %v2873
    %v2890 = vadd.f32 %v2627, %v2874
    %v2891 = vadd.f32 %v2628, %v2875
    %v2892 = vadd.f32 %v2629, %v2876
    %v2893 = vadd.f32 %v2630, %v2877
    %v2894 = vadd.f32 %v2631, %v2878
    %v2895 = vadd.f32 %v2632, %v2879
    %v2896 = vadd.f32 %v2633, %v2880
    %v2897 = vadd.f32 %v2634, %v2881
    %2898 = vset.pattern.permute.xlu0 8
    %2899 = vperm.xlu0 %2898, %v2507
    %v2900 = vpop.permute.xlu0 %2899
    %v2902 = vmul.f32 %v2900, %v2846
    %v2903 = vmul.f32 %v2900, %v2847
    %v2904 = vmul.f32 %v2900, %v2848
    %v2905 = vmul.f32 %v2900, %v2849
    %v2906 = vmul.f32 %v2900, %v2850
    %v2907 = vmul.f32 %v2900, %v2851
    %v2908 = vmul.f32 %v2900, %v2852
    %v2909 = vmul.f32 %v2900, %v2853
    %v2910 = vmul.f32 %v2900, %v2854
    %v2911 = vmul.f32 %v2900, %v2855
    %v2912 = vmul.f32 %v2900, %v2856
    %v2913 = vmul.f32 %v2900, %v2857
    %v2914 = vmul.f32 %v2900, %v2858
    %v2915 = vmul.f32 %v2900, %v2859
    %v2916 = vmul.f32 %v2900, %v2860
    %v2917 = vmul.f32 %v2900, %v2861
    %v2918 = vadd.f32 %v2639, %v2902
    %v2919 = vadd.f32 %v2640, %v2903
    %v2920 = vadd.f32 %v2641, %v2904
    %v2921 = vadd.f32 %v2642, %v2905
    %v2922 = vadd.f32 %v2643, %v2906
    %v2923 = vadd.f32 %v2644, %v2907
    %v2924 = vadd.f32 %v2645, %v2908
    %v2925 = vadd.f32 %v2646, %v2909
    %v2926 = vadd.f32 %v2647, %v2910
    %v2927 = vadd.f32 %v2648, %v2911
    %v2928 = vadd.f32 %v2649, %v2912
    %v2929 = vadd.f32 %v2650, %v2913
    %v2930 = vadd.f32 %v2651, %v2914
    %v2931 = vadd.f32 %v2652, %v2915
    %v2932 = vadd.f32 %v2653, %v2916
    %v2933 = vadd.f32 %v2654, %v2917
    %2934 = vset.pattern.permute.xlu0 15
    %2935 = vperm.xlu0 %2934, %v2507
    %v2936 = vpop.permute.xlu0 %2935
    %v2938 = vmul.f32 %v2936, %v2846
    %v2939 = vmul.f32 %v2936, %v2847
    %v2940 = vmul.f32 %v2936, %v2848
    %v2941 = vmul.f32 %v2936, %v2849
    %v2942 = vmul.f32 %v2936, %v2850
    %v2943 = vmul.f32 %v2936, %v2851
    %v2944 = vmul.f32 %v2936, %v2852
    %v2945 = vmul.f32 %v2936, %v2853
    %v2946 = vmul.f32 %v2936, %v2854
    %v2947 = vmul.f32 %v2936, %v2855
    %v2948 = vmul.f32 %v2936, %v2856
    %v2949 = vmul.f32 %v2936, %v2857
    %v2950 = vmul.f32 %v2936, %v2858
    %v2951 = vmul.f32 %v2936, %v2859
    %v2952 = vmul.f32 %v2936, %v2860
    %v2953 = vmul.f32 %v2936, %v2861
    %v2954 = vadd.f32 %v2659, %v2938
    %v2955 = vadd.f32 %v2660, %v2939
    %v2956 = vadd.f32 %v2661, %v2940
    %v2957 = vadd.f32 %v2662, %v2941
    %v2958 = vadd.f32 %v2663, %v2942
    %v2959 = vadd.f32 %v2664, %v2943
    %v2960 = vadd.f32 %v2665, %v2944
    %v2961 = vadd.f32 %v2666, %v2945
    %v2962 = vadd.f32 %v2667, %v2946
    %v2963 = vadd.f32 %v2668, %v2947
    %v2964 = vadd.f32 %v2669, %v2948
    %v2965 = vadd.f32 %v2670, %v2949
    %v2966 = vadd.f32 %v2671, %v2950
    %v2967 = vadd.f32 %v2672, %v2951
    %v2968 = vadd.f32 %v2673, %v2952
    %v2969 = vadd.f32 %v2674, %v2953
    %2970 = vset.pattern.permute.xlu0 22
    %2971 = vperm.xlu0 %2970, %v2507
    %v2972 = vpop.permute.xlu0 %2971
    %v2974 = vmul.f32 %v2972, %v2846
    %v2975 = vmul.f32 %v2972, %v2847
    %v2976 = vmul.f32 %v2972, %v2848
    %v2977 = vmul.f32 %v2972, %v2849
    %v2978 = vmul.f32 %v2972, %v2850
    %v2979 = vmul.f32 %v2972, %v2851
    %v2980 = vmul.f32 %v2972, %v2852
    %v2981 = vmul.f32 %v2972, %v2853
    %v2982 = vmul.f32 %v2972, %v2854
    %v2983 = vmul.f32 %v2972, %v2855
    %v2984 = vmul.f32 %v2972, %v2856
    %v2985 = vmul.f32 %v2972, %v2857
    %v2986 = vmul.f32 %v2972, %v2858
    %v2987 = vmul.f32 %v2972, %v2859
    %v2988 = vmul.f32 %v2972, %v2860
    %v2989 = vmul.f32 %v2972, %v2861
    %v2990 = vadd.f32 %v2679, %v2974
    %v2991 = vadd.f32 %v2680, %v2975
    %v2992 = vadd.f32 %v2681, %v2976
    %v2993 = vadd.f32 %v2682, %v2977
    %v2994 = vadd.f32 %v2683, %v2978
    %v2995 = vadd.f32 %v2684, %v2979
    %v2996 = vadd.f32 %v2685, %v2980
    %v2997 = vadd.f32 %v2686, %v2981
    %v2998 = vadd.f32 %v2687, %v2982
    %v2999 = vadd.f32 %v2688, %v2983
    %v3000 = vadd.f32 %v2689, %v2984
    %v3001 = vadd.f32 %v2690, %v2985
    %v3002 = vadd.f32 %v2691, %v2986
    %v3003 = vadd.f32 %v2692, %v2987
    %v3004 = vadd.f32 %v2693, %v2988
    %v3005 = vadd.f32 %v2694, %v2989
    %3006 = vset.pattern.permute.xlu0 29
    %3007 = vperm.xlu0 %3006, %v2507
    %v3008 = vpop.permute.xlu0 %3007
    %v3010 = vmul.f32 %v3008, %v2846
    %v3011 = vmul.f32 %v3008, %v2847
    %v3012 = vmul.f32 %v3008, %v2848
    %v3013 = vmul.f32 %v3008, %v2849
    %v3014 = vmul.f32 %v3008, %v2850
    %v3015 = vmul.f32 %v3008, %v2851
    %v3016 = vmul.f32 %v3008, %v2852
    %v3017 = vmul.f32 %v3008, %v2853
    %v3018 = vmul.f32 %v3008, %v2854
    %v3019 = vmul.f32 %v3008, %v2855
    %v3020 = vmul.f32 %v3008, %v2856
    %v3021 = vmul.f32 %v3008, %v2857
    %v3022 = vmul.f32 %v3008, %v2858
    %v3023 = vmul.f32 %v3008, %v2859
    %v3024 = vmul.f32 %v3008, %v2860
    %v3025 = vmul.f32 %v3008, %v2861
    %v3026 = vadd.f32 %v2699, %v3010
    %v3027 = vadd.f32 %v2700, %v3011
    %v3028 = vadd.f32 %v2701, %v3012
    %v3029 = vadd.f32 %v2702, %v3013
    %v3030 = vadd.f32 %v2703, %v3014
    %v3031 = vadd.f32 %v2704, %v3015
    %v3032 = vadd.f32 %v2705, %v3016
    %v3033 = vadd.f32 %v2706, %v3017
    %v3034 = vadd.f32 %v2707, %v3018
    %v3035 = vadd.f32 %v2708, %v3019
    %v3036 = vadd.f32 %v2709, %v3020
    %v3037 = vadd.f32 %v2710, %v3021
    %v3038 = vadd.f32 %v2711, %v3022
    %v3039 = vadd.f32 %v2712, %v3023
    %v3040 = vadd.f32 %v2713, %v3024
    %v3041 = vadd.f32 %v2714, %v3025
    %3042 = vset.pattern.permute.xlu0 36
    %3043 = vperm.xlu0 %3042, %v2507
    %v3044 = vpop.permute.xlu0 %3043
    %v3046 = vmul.f32 %v3044, %v2846
    %v3047 = vmul.f32 %v3044, %v2847
    %v3048 = vmul.f32 %v3044, %v2848
    %v3049 = vmul.f32 %v3044, %v2849
    %v3050 = vmul.f32 %v3044, %v2850
    %v3051 = vmul.f32 %v3044, %v2851
    %v3052 = vmul.f32 %v3044, %v2852
    %v3053 = vmul.f32 %v3044, %v2853
    %v3054 = vmul.f32 %v3044, %v2854
    %v3055 = vmul.f32 %v3044, %v2855
    %v3056 = vmul.f32 %v3044, %v2856
    %v3057 = vmul.f32 %v3044, %v2857
    %v3058 = vmul.f32 %v3044, %v2858
    %v3059 = vmul.f32 %v3044, %v2859
    %v3060 = vmul.f32 %v3044, %v2860
    %v3061 = vmul.f32 %v3044, %v2861
    %v3062 = vadd.f32 %v2719, %v3046
    %v3063 = vadd.f32 %v2720, %v3047
    %v3064 = vadd.f32 %v2721, %v3048
    %v3065 = vadd.f32 %v2722, %v3049
    %v3066 = vadd.f32 %v2723, %v3050
    %v3067 = vadd.f32 %v2724, %v3051
    %v3068 = vadd.f32 %v2725, %v3052
    %v3069 = vadd.f32 %v2726, %v3053
    %v3070 = vadd.f32 %v2727, %v3054
    %v3071 = vadd.f32 %v2728, %v3055
    %v3072 = vadd.f32 %v2729, %v3056
    %v3073 = vadd.f32 %v2730, %v3057
    %v3074 = vadd.f32 %v2731, %v3058
    %v3075 = vadd.f32 %v2732, %v3059
    %v3076 = vadd.f32 %v2733, %v3060
    %v3077 = vadd.f32 %v2734, %v3061
    %3078 = vset.pattern.permute.xlu0 43
    %3079 = vperm.xlu0 %3078, %v2507
    %v3080 = vpop.permute.xlu0 %3079
    %v3082 = vmul.f32 %v3080, %v2846
    %v3083 = vmul.f32 %v3080, %v2847
    %v3084 = vmul.f32 %v3080, %v2848
    %v3085 = vmul.f32 %v3080, %v2849
    %v3086 = vmul.f32 %v3080, %v2850
    %v3087 = vmul.f32 %v3080, %v2851
    %v3088 = vmul.f32 %v3080, %v2852
    %v3089 = vmul.f32 %v3080, %v2853
    %v3090 = vmul.f32 %v3080, %v2854
    %v3091 = vmul.f32 %v3080, %v2855
    %v3092 = vmul.f32 %v3080, %v2856
    %v3093 = vmul.f32 %v3080, %v2857
    %v3094 = vmul.f32 %v3080, %v2858
    %v3095 = vmul.f32 %v3080, %v2859
    %v3096 = vmul.f32 %v3080, %v2860
    %v3097 = vmul.f32 %v3080, %v2861
    %v3098 = vadd.f32 %v2739, %v3082
    %v3099 = vadd.f32 %v2740, %v3083
    %v3100 = vadd.f32 %v2741, %v3084
    %v3101 = vadd.f32 %v2742, %v3085
    %v3102 = vadd.f32 %v2743, %v3086
    %v3103 = vadd.f32 %v2744, %v3087
    %v3104 = vadd.f32 %v2745, %v3088
    %v3105 = vadd.f32 %v2746, %v3089
    %v3106 = vadd.f32 %v2747, %v3090
    %v3107 = vadd.f32 %v2748, %v3091
    %v3108 = vadd.f32 %v2749, %v3092
    %v3109 = vadd.f32 %v2750, %v3093
    %v3110 = vadd.f32 %v2751, %v3094
    %v3111 = vadd.f32 %v2752, %v3095
    %v3112 = vadd.f32 %v2753, %v3096
    %v3113 = vadd.f32 %v2754, %v3097
    %3114 = vrot.lane.b32.xlu0 %v2491, 3
    %v3115 = vpop.permute.xlu0 %3114
    %3116 = vrot.lane.b32.xlu0 %v2492, 3
    %v3117 = vpop.permute.xlu0 %3116
    %3118 = vrot.lane.b32.xlu0 %v2493, 3
    %v3119 = vpop.permute.xlu0 %3118
    %3120 = vrot.lane.b32.xlu0 %v2494, 3
    %v3121 = vpop.permute.xlu0 %3120
    %3122 = vrot.lane.b32.xlu0 %v2495, 3
    %v3123 = vpop.permute.xlu0 %3122
    %3124 = vrot.lane.b32.xlu0 %v2496, 3
    %v3125 = vpop.permute.xlu0 %3124
    %3126 = vrot.lane.b32.xlu0 %v2497, 3
    %v3127 = vpop.permute.xlu0 %3126
    %3128 = vrot.lane.b32.xlu0 %v2498, 3
    %v3129 = vpop.permute.xlu0 %3128
    %3130 = vrot.lane.b32.xlu0 %v2499, 3
    %v3131 = vpop.permute.xlu0 %3130
    %3132 = vrot.lane.b32.xlu0 %v2500, 3
    %v3133 = vpop.permute.xlu0 %3132
    %3134 = vrot.lane.b32.xlu0 %v2501, 3
    %v3135 = vpop.permute.xlu0 %3134
    %3136 = vrot.lane.b32.xlu0 %v2502, 3
    %v3137 = vpop.permute.xlu0 %3136
    %3138 = vrot.lane.b32.xlu0 %v2503, 3
    %v3139 = vpop.permute.xlu0 %3138
    %3140 = vrot.lane.b32.xlu0 %v2504, 3
    %v3141 = vpop.permute.xlu0 %3140
    %3142 = vrot.lane.b32.xlu0 %v2505, 3
    %v3143 = vpop.permute.xlu0 %3142
    %3144 = vrot.lane.b32.xlu0 %v2506, 3
    %v3145 = vpop.permute.xlu0 %3144
    %vm3146 = vcmp.lt.s32.totalorder %v661, 3
    %v3147 = vsel %vm3146, %v3143, %v3145
    %v3148 = vsel %vm3146, %v3141, %v3143
    %v3149 = vsel %vm3146, %v3139, %v3141
    %v3150 = vsel %vm3146, %v3137, %v3139
    %v3151 = vsel %vm3146, %v3135, %v3137
    %v3152 = vsel %vm3146, %v3133, %v3135
    %v3153 = vsel %vm3146, %v3131, %v3133
    %v3154 = vsel %vm3146, %v3129, %v3131
    %v3155 = vsel %vm3146, %v3127, %v3129
    %v3156 = vsel %vm3146, %v3125, %v3127
    %v3157 = vsel %vm3146, %v3123, %v3125
    %v3158 = vsel %vm3146, %v3121, %v3123
    %v3159 = vsel %vm3146, %v3119, %v3121
    %v3160 = vsel %vm3146, %v3117, %v3119
    %v3161 = vsel %vm3146, %v3115, %v3117
    %v3162 = vsel %vm3146, %v3145, %v3115
    %s3163 = scalar_lea.vmem [#allocation10], 2
    %v3164 = vld [vmem:[%s3163] ss:$8 sm:$0xf]
    %v3165 = vld [vmem:[%s3163] ss:$8 sm:$0xf0]
    %v3166 = vor.u32 %v3164, %v3165
    %s3167 = scalar_lea.vmem [#allocation10], 66
    %v3168 = vld [vmem:[%s3167] ss:$8 sm:$0xf]
    %v3169 = vld [vmem:[%s3167] ss:$8 sm:$0xf0]
    %v3170 = vor.u32 %v3168, %v3169
    %v3173 = vperm.slane %v3166, 0
    %v3174 = vperm.slane %v3166, 1
    %v3175 = vperm.slane %v3166, 2
    %v3176 = vperm.slane %v3166, 3
    %v3177 = vperm.slane %v3166, 4
    %v3178 = vperm.slane %v3166, 5
    %v3179 = vperm.slane %v3166, 6
    %v3180 = vperm.slane %v3166, 7
    %v3181 = vperm.slane %v3170, 0
    %v3182 = vperm.slane %v3170, 1
    %v3183 = vperm.slane %v3170, 2
    %v3184 = vperm.slane %v3170, 3
    %v3185 = vperm.slane %v3170, 4
    %v3186 = vperm.slane %v3170, 5
    %v3187 = vperm.slane %v3170, 6
    %v3188 = vperm.slane %v3170, 7
    %v3205 = vmul.f32 %v3173, %v3162
    %v3206 = vmul.f32 %v3174, %v3161
    %v3207 = vmul.f32 %v3175, %v3160
    %v3208 = vmul.f32 %v3176, %v3159
    %v3209 = vmul.f32 %v3177, %v3158
    %v3210 = vmul.f32 %v3178, %v3157
    %v3211 = vmul.f32 %v3179, %v3156
    %v3212 = vmul.f32 %v3180, %v3155
    %v3213 = vmul.f32 %v3181, %v3154
    %v3214 = vmul.f32 %v3182, %v3153
    %v3215 = vmul.f32 %v3183, %v3152
    %v3216 = vmul.f32 %v3184, %v3151
    %v3217 = vmul.f32 %v3185, %v3150
    %v3218 = vmul.f32 %v3186, %v3149
    %v3219 = vmul.f32 %v3187, %v3148
    %v3220 = vmul.f32 %v3188, %v3147
    %3221 = vset.pattern.permute.xlu0 2
    %3222 = vperm.xlu0 %3221, %v2507
    %v3223 = vpop.permute.xlu0 %3222
    %v3225 = vmul.f32 %v3223, %v3205
    %v3226 = vmul.f32 %v3223, %v3206
    %v3227 = vmul.f32 %v3223, %v3207
    %v3228 = vmul.f32 %v3223, %v3208
    %v3229 = vmul.f32 %v3223, %v3209
    %v3230 = vmul.f32 %v3223, %v3210
    %v3231 = vmul.f32 %v3223, %v3211
    %v3232 = vmul.f32 %v3223, %v3212
    %v3233 = vmul.f32 %v3223, %v3213
    %v3234 = vmul.f32 %v3223, %v3214
    %v3235 = vmul.f32 %v3223, %v3215
    %v3236 = vmul.f32 %v3223, %v3216
    %v3237 = vmul.f32 %v3223, %v3217
    %v3238 = vmul.f32 %v3223, %v3218
    %v3239 = vmul.f32 %v3223, %v3219
    %v3240 = vmul.f32 %v3223, %v3220
    %v3241 = vadd.f32 %v2882, %v3225
    %v3242 = vadd.f32 %v2883, %v3226
    %v3243 = vadd.f32 %v2884, %v3227
    %v3244 = vadd.f32 %v2885, %v3228
    %v3245 = vadd.f32 %v2886, %v3229
    %v3246 = vadd.f32 %v2887, %v3230
    %v3247 = vadd.f32 %v2888, %v3231
    %v3248 = vadd.f32 %v2889, %v3232
    %v3249 = vadd.f32 %v2890, %v3233
    %v3250 = vadd.f32 %v2891, %v3234
    %v3251 = vadd.f32 %v2892, %v3235
    %v3252 = vadd.f32 %v2893, %v3236
    %v3253 = vadd.f32 %v2894, %v3237
    %v3254 = vadd.f32 %v2895, %v3238
    %v3255 = vadd.f32 %v2896, %v3239
    %v3256 = vadd.f32 %v2897, %v3240
    %3257 = vset.pattern.permute.xlu0 9
    %3258 = vperm.xlu0 %3257, %v2507
    %v3259 = vpop.permute.xlu0 %3258
    %v3261 = vmul.f32 %v3259, %v3205
    %v3262 = vmul.f32 %v3259, %v3206
    %v3263 = vmul.f32 %v3259, %v3207
    %v3264 = vmul.f32 %v3259, %v3208
    %v3265 = vmul.f32 %v3259, %v3209
    %v3266 = vmul.f32 %v3259, %v3210
    %v3267 = vmul.f32 %v3259, %v3211
    %v3268 = vmul.f32 %v3259, %v3212
    %v3269 = vmul.f32 %v3259, %v3213
    %v3270 = vmul.f32 %v3259, %v3214
    %v3271 = vmul.f32 %v3259, %v3215
    %v3272 = vmul.f32 %v3259, %v3216
    %v3273 = vmul.f32 %v3259, %v3217
    %v3274 = vmul.f32 %v3259, %v3218
    %v3275 = vmul.f32 %v3259, %v3219
    %v3276 = vmul.f32 %v3259, %v3220
    %v3277 = vadd.f32 %v2918, %v3261
    %v3278 = vadd.f32 %v2919, %v3262
    %v3279 = vadd.f32 %v2920, %v3263
    %v3280 = vadd.f32 %v2921, %v3264
    %v3281 = vadd.f32 %v2922, %v3265
    %v3282 = vadd.f32 %v2923, %v3266
    %v3283 = vadd.f32 %v2924, %v3267
    %v3284 = vadd.f32 %v2925, %v3268
    %v3285 = vadd.f32 %v2926, %v3269
    %v3286 = vadd.f32 %v2927, %v3270
    %v3287 = vadd.f32 %v2928, %v3271
    %v3288 = vadd.f32 %v2929, %v3272
    %v3289 = vadd.f32 %v2930, %v3273
    %v3290 = vadd.f32 %v2931, %v3274
    %v3291 = vadd.f32 %v2932, %v3275
    %v3292 = vadd.f32 %v2933, %v3276
    %3293 = vset.pattern.permute.xlu0 16
    %3294 = vperm.xlu0 %3293, %v2507
    %v3295 = vpop.permute.xlu0 %3294
    %v3297 = vmul.f32 %v3295, %v3205
    %v3298 = vmul.f32 %v3295, %v3206
    %v3299 = vmul.f32 %v3295, %v3207
    %v3300 = vmul.f32 %v3295, %v3208
    %v3301 = vmul.f32 %v3295, %v3209
    %v3302 = vmul.f32 %v3295, %v3210
    %v3303 = vmul.f32 %v3295, %v3211
    %v3304 = vmul.f32 %v3295, %v3212
    %v3305 = vmul.f32 %v3295, %v3213
    %v3306 = vmul.f32 %v3295, %v3214
    %v3307 = vmul.f32 %v3295, %v3215
    %v3308 = vmul.f32 %v3295, %v3216
    %v3309 = vmul.f32 %v3295, %v3217
    %v3310 = vmul.f32 %v3295, %v3218
    %v3311 = vmul.f32 %v3295, %v3219
    %v3312 = vmul.f32 %v3295, %v3220
    %v3313 = vadd.f32 %v2954, %v3297
    %v3314 = vadd.f32 %v2955, %v3298
    %v3315 = vadd.f32 %v2956, %v3299
    %v3316 = vadd.f32 %v2957, %v3300
    %v3317 = vadd.f32 %v2958, %v3301
    %v3318 = vadd.f32 %v2959, %v3302
    %v3319 = vadd.f32 %v2960, %v3303
    %v3320 = vadd.f32 %v2961, %v3304
    %v3321 = vadd.f32 %v2962, %v3305
    %v3322 = vadd.f32 %v2963, %v3306
    %v3323 = vadd.f32 %v2964, %v3307
    %v3324 = vadd.f32 %v2965, %v3308
    %v3325 = vadd.f32 %v2966, %v3309
    %v3326 = vadd.f32 %v2967, %v3310
    %v3327 = vadd.f32 %v2968, %v3311
    %v3328 = vadd.f32 %v2969, %v3312
    %3329 = vset.pattern.permute.xlu0 23
    %3330 = vperm.xlu0 %3329, %v2507
    %v3331 = vpop.permute.xlu0 %3330
    %v3333 = vmul.f32 %v3331, %v3205
    %v3334 = vmul.f32 %v3331, %v3206
    %v3335 = vmul.f32 %v3331, %v3207
    %v3336 = vmul.f32 %v3331, %v3208
    %v3337 = vmul.f32 %v3331, %v3209
    %v3338 = vmul.f32 %v3331, %v3210
    %v3339 = vmul.f32 %v3331, %v3211
    %v3340 = vmul.f32 %v3331, %v3212
    %v3341 = vmul.f32 %v3331, %v3213
    %v3342 = vmul.f32 %v3331, %v3214
    %v3343 = vmul.f32 %v3331, %v3215
    %v3344 = vmul.f32 %v3331, %v3216
    %v3345 = vmul.f32 %v3331, %v3217
    %v3346 = vmul.f32 %v3331, %v3218
    %v3347 = vmul.f32 %v3331, %v3219
    %v3348 = vmul.f32 %v3331, %v3220
    %v3349 = vadd.f32 %v2990, %v3333
    %v3350 = vadd.f32 %v2991, %v3334
    %v3351 = vadd.f32 %v2992, %v3335
    %v3352 = vadd.f32 %v2993, %v3336
    %v3353 = vadd.f32 %v2994, %v3337
    %v3354 = vadd.f32 %v2995, %v3338
    %v3355 = vadd.f32 %v2996, %v3339
    %v3356 = vadd.f32 %v2997, %v3340
    %v3357 = vadd.f32 %v2998, %v3341
    %v3358 = vadd.f32 %v2999, %v3342
    %v3359 = vadd.f32 %v3000, %v3343
    %v3360 = vadd.f32 %v3001, %v3344
    %v3361 = vadd.f32 %v3002, %v3345
    %v3362 = vadd.f32 %v3003, %v3346
    %v3363 = vadd.f32 %v3004, %v3347
    %v3364 = vadd.f32 %v3005, %v3348
    %3365 = vset.pattern.permute.xlu0 30
    %3366 = vperm.xlu0 %3365, %v2507
    %v3367 = vpop.permute.xlu0 %3366
    %v3369 = vmul.f32 %v3367, %v3205
    %v3370 = vmul.f32 %v3367, %v3206
    %v3371 = vmul.f32 %v3367, %v3207
    %v3372 = vmul.f32 %v3367, %v3208
    %v3373 = vmul.f32 %v3367, %v3209
    %v3374 = vmul.f32 %v3367, %v3210
    %v3375 = vmul.f32 %v3367, %v3211
    %v3376 = vmul.f32 %v3367, %v3212
    %v3377 = vmul.f32 %v3367, %v3213
    %v3378 = vmul.f32 %v3367, %v3214
    %v3379 = vmul.f32 %v3367, %v3215
    %v3380 = vmul.f32 %v3367, %v3216
    %v3381 = vmul.f32 %v3367, %v3217
    %v3382 = vmul.f32 %v3367, %v3218
    %v3383 = vmul.f32 %v3367, %v3219
    %v3384 = vmul.f32 %v3367, %v3220
    %v3385 = vadd.f32 %v3026, %v3369
    %v3386 = vadd.f32 %v3027, %v3370
    %v3387 = vadd.f32 %v3028, %v3371
    %v3388 = vadd.f32 %v3029, %v3372
    %v3389 = vadd.f32 %v3030, %v3373
    %v3390 = vadd.f32 %v3031, %v3374
    %v3391 = vadd.f32 %v3032, %v3375
    %v3392 = vadd.f32 %v3033, %v3376
    %v3393 = vadd.f32 %v3034, %v3377
    %v3394 = vadd.f32 %v3035, %v3378
    %v3395 = vadd.f32 %v3036, %v3379
    %v3396 = vadd.f32 %v3037, %v3380
    %v3397 = vadd.f32 %v3038, %v3381
    %v3398 = vadd.f32 %v3039, %v3382
    %v3399 = vadd.f32 %v3040, %v3383
    %v3400 = vadd.f32 %v3041, %v3384
    %3401 = vset.pattern.permute.xlu0 37
    %3402 = vperm.xlu0 %3401, %v2507
    %v3403 = vpop.permute.xlu0 %3402
    %v3405 = vmul.f32 %v3403, %v3205
    %v3406 = vmul.f32 %v3403, %v3206
    %v3407 = vmul.f32 %v3403, %v3207
    %v3408 = vmul.f32 %v3403, %v3208
    %v3409 = vmul.f32 %v3403, %v3209
    %v3410 = vmul.f32 %v3403, %v3210
    %v3411 = vmul.f32 %v3403, %v3211
    %v3412 = vmul.f32 %v3403, %v3212
    %v3413 = vmul.f32 %v3403, %v3213
    %v3414 = vmul.f32 %v3403, %v3214
    %v3415 = vmul.f32 %v3403, %v3215
    %v3416 = vmul.f32 %v3403, %v3216
    %v3417 = vmul.f32 %v3403, %v3217
    %v3418 = vmul.f32 %v3403, %v3218
    %v3419 = vmul.f32 %v3403, %v3219
    %v3420 = vmul.f32 %v3403, %v3220
    %v3421 = vadd.f32 %v3062, %v3405
    %v3422 = vadd.f32 %v3063, %v3406
    %v3423 = vadd.f32 %v3064, %v3407
    %v3424 = vadd.f32 %v3065, %v3408
    %v3425 = vadd.f32 %v3066, %v3409
    %v3426 = vadd.f32 %v3067, %v3410
    %v3427 = vadd.f32 %v3068, %v3411
    %v3428 = vadd.f32 %v3069, %v3412
    %v3429 = vadd.f32 %v3070, %v3413
    %v3430 = vadd.f32 %v3071, %v3414
    %v3431 = vadd.f32 %v3072, %v3415
    %v3432 = vadd.f32 %v3073, %v3416
    %v3433 = vadd.f32 %v3074, %v3417
    %v3434 = vadd.f32 %v3075, %v3418
    %v3435 = vadd.f32 %v3076, %v3419
    %v3436 = vadd.f32 %v3077, %v3420
    %3437 = vset.pattern.permute.xlu0 44
    %3438 = vperm.xlu0 %3437, %v2507
    %v3439 = vpop.permute.xlu0 %3438
    %v3441 = vmul.f32 %v3439, %v3205
    %v3442 = vmul.f32 %v3439, %v3206
    %v3443 = vmul.f32 %v3439, %v3207
    %v3444 = vmul.f32 %v3439, %v3208
    %v3445 = vmul.f32 %v3439, %v3209
    %v3446 = vmul.f32 %v3439, %v3210
    %v3447 = vmul.f32 %v3439, %v3211
    %v3448 = vmul.f32 %v3439, %v3212
    %v3449 = vmul.f32 %v3439, %v3213
    %v3450 = vmul.f32 %v3439, %v3214
    %v3451 = vmul.f32 %v3439, %v3215
    %v3452 = vmul.f32 %v3439, %v3216
    %v3453 = vmul.f32 %v3439, %v3217
    %v3454 = vmul.f32 %v3439, %v3218
    %v3455 = vmul.f32 %v3439, %v3219
    %v3456 = vmul.f32 %v3439, %v3220
    %v3457 = vadd.f32 %v3098, %v3441
    %v3458 = vadd.f32 %v3099, %v3442
    %v3459 = vadd.f32 %v3100, %v3443
    %v3460 = vadd.f32 %v3101, %v3444
    %v3461 = vadd.f32 %v3102, %v3445
    %v3462 = vadd.f32 %v3103, %v3446
    %v3463 = vadd.f32 %v3104, %v3447
    %v3464 = vadd.f32 %v3105, %v3448
    %v3465 = vadd.f32 %v3106, %v3449
    %v3466 = vadd.f32 %v3107, %v3450
    %v3467 = vadd.f32 %v3108, %v3451
    %v3468 = vadd.f32 %v3109, %v3452
    %v3469 = vadd.f32 %v3110, %v3453
    %v3470 = vadd.f32 %v3111, %v3454
    %v3471 = vadd.f32 %v3112, %v3455
    %v3472 = vadd.f32 %v3113, %v3456
    %s3473 = scalar_lea.vmem [#allocation10], 3
    %v3474 = vld [vmem:[%s3473] ss:$8 sm:$0xf]
    %v3475 = vld [vmem:[%s3473] ss:$8 sm:$0xf0]
    %v3476 = vor.u32 %v3474, %v3475
    %s3477 = scalar_lea.vmem [#allocation10], 67
    %v3478 = vld [vmem:[%s3477] ss:$8 sm:$0xf]
    %v3479 = vld [vmem:[%s3477] ss:$8 sm:$0xf0]
    %v3480 = vor.u32 %v3478, %v3479
    %v3483 = vperm.slane %v3476, 0
    %v3484 = vperm.slane %v3476, 1
    %v3485 = vperm.slane %v3476, 2
    %v3486 = vperm.slane %v3476, 3
    %v3487 = vperm.slane %v3476, 4
    %v3488 = vperm.slane %v3476, 5
    %v3489 = vperm.slane %v3476, 6
    %v3490 = vperm.slane %v3476, 7
    %v3491 = vperm.slane %v3480, 0
    %v3492 = vperm.slane %v3480, 1
    %v3493 = vperm.slane %v3480, 2
    %v3494 = vperm.slane %v3480, 3
    %v3495 = vperm.slane %v3480, 4
    %v3496 = vperm.slane %v3480, 5
    %v3497 = vperm.slane %v3480, 6
    %v3498 = vperm.slane %v3480, 7
    %v3515 = vmul.f32 %v3483, %v2491
    %v3516 = vmul.f32 %v3484, %v2492
    %v3517 = vmul.f32 %v3485, %v2493
    %v3518 = vmul.f32 %v3486, %v2494
    %v3519 = vmul.f32 %v3487, %v2495
    %v3520 = vmul.f32 %v3488, %v2496
    %v3521 = vmul.f32 %v3489, %v2497
    %v3522 = vmul.f32 %v3490, %v2498
    %v3523 = vmul.f32 %v3491, %v2499
    %v3524 = vmul.f32 %v3492, %v2500
    %v3525 = vmul.f32 %v3493, %v2501
    %v3526 = vmul.f32 %v3494, %v2502
    %v3527 = vmul.f32 %v3495, %v2503
    %v3528 = vmul.f32 %v3496, %v2504
    %v3529 = vmul.f32 %v3497, %v2505
    %v3530 = vmul.f32 %v3498, %v2506
    %3531 = vset.pattern.permute.xlu0 3
    %3532 = vperm.xlu0 %3531, %v2507
    %v3533 = vpop.permute.xlu0 %3532
    %v3535 = vmul.f32 %v3533, %v3515
    %v3536 = vmul.f32 %v3533, %v3516
    %v3537 = vmul.f32 %v3533, %v3517
    %v3538 = vmul.f32 %v3533, %v3518
    %v3539 = vmul.f32 %v3533, %v3519
    %v3540 = vmul.f32 %v3533, %v3520
    %v3541 = vmul.f32 %v3533, %v3521
    %v3542 = vmul.f32 %v3533, %v3522
    %v3543 = vmul.f32 %v3533, %v3523
    %v3544 = vmul.f32 %v3533, %v3524
    %v3545 = vmul.f32 %v3533, %v3525
    %v3546 = vmul.f32 %v3533, %v3526
    %v3547 = vmul.f32 %v3533, %v3527
    %v3548 = vmul.f32 %v3533, %v3528
    %v3549 = vmul.f32 %v3533, %v3529
    %v3550 = vmul.f32 %v3533, %v3530
    %v3551 = vadd.f32 %v3241, %v3535
    %v3552 = vadd.f32 %v3242, %v3536
    %v3553 = vadd.f32 %v3243, %v3537
    %v3554 = vadd.f32 %v3244, %v3538
    %v3555 = vadd.f32 %v3245, %v3539
    %v3556 = vadd.f32 %v3246, %v3540
    %v3557 = vadd.f32 %v3247, %v3541
    %v3558 = vadd.f32 %v3248, %v3542
    %v3559 = vadd.f32 %v3249, %v3543
    %v3560 = vadd.f32 %v3250, %v3544
    %v3561 = vadd.f32 %v3251, %v3545
    %v3562 = vadd.f32 %v3252, %v3546
    %v3563 = vadd.f32 %v3253, %v3547
    %v3564 = vadd.f32 %v3254, %v3548
    %v3565 = vadd.f32 %v3255, %v3549
    %v3566 = vadd.f32 %v3256, %v3550
    %3567 = vset.pattern.permute.xlu0 10
    %3568 = vperm.xlu0 %3567, %v2507
    %v3569 = vpop.permute.xlu0 %3568
    %v3571 = vmul.f32 %v3569, %v3515
    %v3572 = vmul.f32 %v3569, %v3516
    %v3573 = vmul.f32 %v3569, %v3517
    %v3574 = vmul.f32 %v3569, %v3518
    %v3575 = vmul.f32 %v3569, %v3519
    %v3576 = vmul.f32 %v3569, %v3520
    %v3577 = vmul.f32 %v3569, %v3521
    %v3578 = vmul.f32 %v3569, %v3522
    %v3579 = vmul.f32 %v3569, %v3523
    %v3580 = vmul.f32 %v3569, %v3524
    %v3581 = vmul.f32 %v3569, %v3525
    %v3582 = vmul.f32 %v3569, %v3526
    %v3583 = vmul.f32 %v3569, %v3527
    %v3584 = vmul.f32 %v3569, %v3528
    %v3585 = vmul.f32 %v3569, %v3529
    %v3586 = vmul.f32 %v3569, %v3530
    %v3587 = vadd.f32 %v3277, %v3571
    %v3588 = vadd.f32 %v3278, %v3572
    %v3589 = vadd.f32 %v3279, %v3573
    %v3590 = vadd.f32 %v3280, %v3574
    %v3591 = vadd.f32 %v3281, %v3575
    %v3592 = vadd.f32 %v3282, %v3576
    %v3593 = vadd.f32 %v3283, %v3577
    %v3594 = vadd.f32 %v3284, %v3578
    %v3595 = vadd.f32 %v3285, %v3579
    %v3596 = vadd.f32 %v3286, %v3580
    %v3597 = vadd.f32 %v3287, %v3581
    %v3598 = vadd.f32 %v3288, %v3582
    %v3599 = vadd.f32 %v3289, %v3583
    %v3600 = vadd.f32 %v3290, %v3584
    %v3601 = vadd.f32 %v3291, %v3585
    %v3602 = vadd.f32 %v3292, %v3586
    %3603 = vset.pattern.permute.xlu0 17
    %3604 = vperm.xlu0 %3603, %v2507
    %v3605 = vpop.permute.xlu0 %3604
    %v3607 = vmul.f32 %v3605, %v3515
    %v3608 = vmul.f32 %v3605, %v3516
    %v3609 = vmul.f32 %v3605, %v3517
    %v3610 = vmul.f32 %v3605, %v3518
    %v3611 = vmul.f32 %v3605, %v3519
    %v3612 = vmul.f32 %v3605, %v3520
    %v3613 = vmul.f32 %v3605, %v3521
    %v3614 = vmul.f32 %v3605, %v3522
    %v3615 = vmul.f32 %v3605, %v3523
    %v3616 = vmul.f32 %v3605, %v3524
    %v3617 = vmul.f32 %v3605, %v3525
    %v3618 = vmul.f32 %v3605, %v3526
    %v3619 = vmul.f32 %v3605, %v3527
    %v3620 = vmul.f32 %v3605, %v3528
    %v3621 = vmul.f32 %v3605, %v3529
    %v3622 = vmul.f32 %v3605, %v3530
    %v3623 = vadd.f32 %v3313, %v3607
    %v3624 = vadd.f32 %v3314, %v3608
    %v3625 = vadd.f32 %v3315, %v3609
    %v3626 = vadd.f32 %v3316, %v3610
    %v3627 = vadd.f32 %v3317, %v3611
    %v3628 = vadd.f32 %v3318, %v3612
    %v3629 = vadd.f32 %v3319, %v3613
    %v3630 = vadd.f32 %v3320, %v3614
    %v3631 = vadd.f32 %v3321, %v3615
    %v3632 = vadd.f32 %v3322, %v3616
    %v3633 = vadd.f32 %v3323, %v3617
    %v3634 = vadd.f32 %v3324, %v3618
    %v3635 = vadd.f32 %v3325, %v3619
    %v3636 = vadd.f32 %v3326, %v3620
    %v3637 = vadd.f32 %v3327, %v3621
    %v3638 = vadd.f32 %v3328, %v3622
    %3639 = vset.pattern.permute.xlu0 24
    %3640 = vperm.xlu0 %3639, %v2507
    %v3641 = vpop.permute.xlu0 %3640
    %v3643 = vmul.f32 %v3641, %v3515
    %v3644 = vmul.f32 %v3641, %v3516
    %v3645 = vmul.f32 %v3641, %v3517
    %v3646 = vmul.f32 %v3641, %v3518
    %v3647 = vmul.f32 %v3641, %v3519
    %v3648 = vmul.f32 %v3641, %v3520
    %v3649 = vmul.f32 %v3641, %v3521
    %v3650 = vmul.f32 %v3641, %v3522
    %v3651 = vmul.f32 %v3641, %v3523
    %v3652 = vmul.f32 %v3641, %v3524
    %v3653 = vmul.f32 %v3641, %v3525
    %v3654 = vmul.f32 %v3641, %v3526
    %v3655 = vmul.f32 %v3641, %v3527
    %v3656 = vmul.f32 %v3641, %v3528
    %v3657 = vmul.f32 %v3641, %v3529
    %v3658 = vmul.f32 %v3641, %v3530
    %v3659 = vadd.f32 %v3349, %v3643
    %v3660 = vadd.f32 %v3350, %v3644
    %v3661 = vadd.f32 %v3351, %v3645
    %v3662 = vadd.f32 %v3352, %v3646
    %v3663 = vadd.f32 %v3353, %v3647
    %v3664 = vadd.f32 %v3354, %v3648
    %v3665 = vadd.f32 %v3355, %v3649
    %v3666 = vadd.f32 %v3356, %v3650
    %v3667 = vadd.f32 %v3357, %v3651
    %v3668 = vadd.f32 %v3358, %v3652
    %v3669 = vadd.f32 %v3359, %v3653
    %v3670 = vadd.f32 %v3360, %v3654
    %v3671 = vadd.f32 %v3361, %v3655
    %v3672 = vadd.f32 %v3362, %v3656
    %v3673 = vadd.f32 %v3363, %v3657
    %v3674 = vadd.f32 %v3364, %v3658
    %3675 = vset.pattern.permute.xlu0 31
    %3676 = vperm.xlu0 %3675, %v2507
    %v3677 = vpop.permute.xlu0 %3676
    %v3679 = vmul.f32 %v3677, %v3515
    %v3680 = vmul.f32 %v3677, %v3516
    %v3681 = vmul.f32 %v3677, %v3517
    %v3682 = vmul.f32 %v3677, %v3518
    %v3683 = vmul.f32 %v3677, %v3519
    %v3684 = vmul.f32 %v3677, %v3520
    %v3685 = vmul.f32 %v3677, %v3521
    %v3686 = vmul.f32 %v3677, %v3522
    %v3687 = vmul.f32 %v3677, %v3523
    %v3688 = vmul.f32 %v3677, %v3524
    %v3689 = vmul.f32 %v3677, %v3525
    %v3690 = vmul.f32 %v3677, %v3526
    %v3691 = vmul.f32 %v3677, %v3527
    %v3692 = vmul.f32 %v3677, %v3528
    %v3693 = vmul.f32 %v3677, %v3529
    %v3694 = vmul.f32 %v3677, %v3530
    %v3695 = vadd.f32 %v3385, %v3679
    %v3696 = vadd.f32 %v3386, %v3680
    %v3697 = vadd.f32 %v3387, %v3681
    %v3698 = vadd.f32 %v3388, %v3682
    %v3699 = vadd.f32 %v3389, %v3683
    %v3700 = vadd.f32 %v3390, %v3684
    %v3701 = vadd.f32 %v3391, %v3685
    %v3702 = vadd.f32 %v3392, %v3686
    %v3703 = vadd.f32 %v3393, %v3687
    %v3704 = vadd.f32 %v3394, %v3688
    %v3705 = vadd.f32 %v3395, %v3689
    %v3706 = vadd.f32 %v3396, %v3690
    %v3707 = vadd.f32 %v3397, %v3691
    %v3708 = vadd.f32 %v3398, %v3692
    %v3709 = vadd.f32 %v3399, %v3693
    %v3710 = vadd.f32 %v3400, %v3694
    %3711 = vset.pattern.permute.xlu0 38
    %3712 = vperm.xlu0 %3711, %v2507
    %v3713 = vpop.permute.xlu0 %3712
    %v3715 = vmul.f32 %v3713, %v3515
    %v3716 = vmul.f32 %v3713, %v3516
    %v3717 = vmul.f32 %v3713, %v3517
    %v3718 = vmul.f32 %v3713, %v3518
    %v3719 = vmul.f32 %v3713, %v3519
    %v3720 = vmul.f32 %v3713, %v3520
    %v3721 = vmul.f32 %v3713, %v3521
    %v3722 = vmul.f32 %v3713, %v3522
    %v3723 = vmul.f32 %v3713, %v3523
    %v3724 = vmul.f32 %v3713, %v3524
    %v3725 = vmul.f32 %v3713, %v3525
    %v3726 = vmul.f32 %v3713, %v3526
    %v3727 = vmul.f32 %v3713, %v3527
    %v3728 = vmul.f32 %v3713, %v3528
    %v3729 = vmul.f32 %v3713, %v3529
    %v3730 = vmul.f32 %v3713, %v3530
    %v3731 = vadd.f32 %v3421, %v3715
    %v3732 = vadd.f32 %v3422, %v3716
    %v3733 = vadd.f32 %v3423, %v3717
    %v3734 = vadd.f32 %v3424, %v3718
    %v3735 = vadd.f32 %v3425, %v3719
    %v3736 = vadd.f32 %v3426, %v3720
    %v3737 = vadd.f32 %v3427, %v3721
    %v3738 = vadd.f32 %v3428, %v3722
    %v3739 = vadd.f32 %v3429, %v3723
    %v3740 = vadd.f32 %v3430, %v3724
    %v3741 = vadd.f32 %v3431, %v3725
    %v3742 = vadd.f32 %v3432, %v3726
    %v3743 = vadd.f32 %v3433, %v3727
    %v3744 = vadd.f32 %v3434, %v3728
    %v3745 = vadd.f32 %v3435, %v3729
    %v3746 = vadd.f32 %v3436, %v3730
    %3747 = vset.pattern.permute.xlu0 45
    %3748 = vperm.xlu0 %3747, %v2507
    %v3749 = vpop.permute.xlu0 %3748
    %v3751 = vmul.f32 %v3749, %v3515
    %v3752 = vmul.f32 %v3749, %v3516
    %v3753 = vmul.f32 %v3749, %v3517
    %v3754 = vmul.f32 %v3749, %v3518
    %v3755 = vmul.f32 %v3749, %v3519
    %v3756 = vmul.f32 %v3749, %v3520
    %v3757 = vmul.f32 %v3749, %v3521
    %v3758 = vmul.f32 %v3749, %v3522
    %v3759 = vmul.f32 %v3749, %v3523
    %v3760 = vmul.f32 %v3749, %v3524
    %v3761 = vmul.f32 %v3749, %v3525
    %v3762 = vmul.f32 %v3749, %v3526
    %v3763 = vmul.f32 %v3749, %v3527
    %v3764 = vmul.f32 %v3749, %v3528
    %v3765 = vmul.f32 %v3749, %v3529
    %v3766 = vmul.f32 %v3749, %v3530
    %v3767 = vadd.f32 %v3457, %v3751
    %v3768 = vadd.f32 %v3458, %v3752
    %v3769 = vadd.f32 %v3459, %v3753
    %v3770 = vadd.f32 %v3460, %v3754
    %v3771 = vadd.f32 %v3461, %v3755
    %v3772 = vadd.f32 %v3462, %v3756
    %v3773 = vadd.f32 %v3463, %v3757
    %v3774 = vadd.f32 %v3464, %v3758
    %v3775 = vadd.f32 %v3465, %v3759
    %v3776 = vadd.f32 %v3466, %v3760
    %v3777 = vadd.f32 %v3467, %v3761
    %v3778 = vadd.f32 %v3468, %v3762
    %v3779 = vadd.f32 %v3469, %v3763
    %v3780 = vadd.f32 %v3470, %v3764
    %v3781 = vadd.f32 %v3471, %v3765
    %v3782 = vadd.f32 %v3472, %v3766
    %3783 = vrot.lane.b32.xlu0 %v2491, 125
    %v3784 = vpop.permute.xlu0 %3783
    %3785 = vrot.lane.b32.xlu0 %v2492, 125
    %v3786 = vpop.permute.xlu0 %3785
    %3787 = vrot.lane.b32.xlu0 %v2493, 125
    %v3788 = vpop.permute.xlu0 %3787
    %3789 = vrot.lane.b32.xlu0 %v2494, 125
    %v3790 = vpop.permute.xlu0 %3789
    %3791 = vrot.lane.b32.xlu0 %v2495, 125
    %v3792 = vpop.permute.xlu0 %3791
    %3793 = vrot.lane.b32.xlu0 %v2496, 125
    %v3794 = vpop.permute.xlu0 %3793
    %3795 = vrot.lane.b32.xlu0 %v2497, 125
    %v3796 = vpop.permute.xlu0 %3795
    %3797 = vrot.lane.b32.xlu0 %v2498, 125
    %v3798 = vpop.permute.xlu0 %3797
    %3799 = vrot.lane.b32.xlu0 %v2499, 125
    %v3800 = vpop.permute.xlu0 %3799
    %3801 = vrot.lane.b32.xlu0 %v2500, 125
    %v3802 = vpop.permute.xlu0 %3801
    %3803 = vrot.lane.b32.xlu0 %v2501, 125
    %v3804 = vpop.permute.xlu0 %3803
    %3805 = vrot.lane.b32.xlu0 %v2502, 125
    %v3806 = vpop.permute.xlu0 %3805
    %3807 = vrot.lane.b32.xlu0 %v2503, 125
    %v3808 = vpop.permute.xlu0 %3807
    %3809 = vrot.lane.b32.xlu0 %v2504, 125
    %v3810 = vpop.permute.xlu0 %3809
    %3811 = vrot.lane.b32.xlu0 %v2505, 125
    %v3812 = vpop.permute.xlu0 %3811
    %3813 = vrot.lane.b32.xlu0 %v2506, 125
    %v3814 = vpop.permute.xlu0 %3813
    %vm3815 = vcmp.lt.s32.totalorder %v661, 125
    %v3816 = vsel %vm3815, %v3812, %v3814
    %v3817 = vsel %vm3815, %v3810, %v3812
    %v3818 = vsel %vm3815, %v3808, %v3810
    %v3819 = vsel %vm3815, %v3806, %v3808
    %v3820 = vsel %vm3815, %v3804, %v3806
    %v3821 = vsel %vm3815, %v3802, %v3804
    %v3822 = vsel %vm3815, %v3800, %v3802
    %v3823 = vsel %vm3815, %v3798, %v3800
    %v3824 = vsel %vm3815, %v3796, %v3798
    %v3825 = vsel %vm3815, %v3794, %v3796
    %v3826 = vsel %vm3815, %v3792, %v3794
    %v3827 = vsel %vm3815, %v3790, %v3792
    %v3828 = vsel %vm3815, %v3788, %v3790
    %v3829 = vsel %vm3815, %v3786, %v3788
    %v3830 = vsel %vm3815, %v3784, %v3786
    %v3831 = vsel %vm3815, %v3814, %v3784
    %s3832 = scalar_lea.vmem [#allocation10], 4
    %v3833 = vld [vmem:[%s3832] ss:$8 sm:$0xf]
    %v3834 = vld [vmem:[%s3832] ss:$8 sm:$0xf0]
    %v3835 = vor.u32 %v3833, %v3834
    %s3836 = scalar_lea.vmem [#allocation10], 68
    %v3837 = vld [vmem:[%s3836] ss:$8 sm:$0xf]
    %v3838 = vld [vmem:[%s3836] ss:$8 sm:$0xf0]
    %v3839 = vor.u32 %v3837, %v3838
    %v3842 = vperm.slane %v3835, 0
    %v3843 = vperm.slane %v3835, 1
    %v3844 = vperm.slane %v3835, 2
    %v3845 = vperm.slane %v3835, 3
    %v3846 = vperm.slane %v3835, 4
    %v3847 = vperm.slane %v3835, 5
    %v3848 = vperm.slane %v3835, 6
    %v3849 = vperm.slane %v3835, 7
    %v3850 = vperm.slane %v3839, 0
    %v3851 = vperm.slane %v3839, 1
    %v3852 = vperm.slane %v3839, 2
    %v3853 = vperm.slane %v3839, 3
    %v3854 = vperm.slane %v3839, 4
    %v3855 = vperm.slane %v3839, 5
    %v3856 = vperm.slane %v3839, 6
    %v3857 = vperm.slane %v3839, 7
    %v3874 = vmul.f32 %v3842, %v3830
    %v3875 = vmul.f32 %v3843, %v3829
    %v3876 = vmul.f32 %v3844, %v3828
    %v3877 = vmul.f32 %v3845, %v3827
    %v3878 = vmul.f32 %v3846, %v3826
    %v3879 = vmul.f32 %v3847, %v3825
    %v3880 = vmul.f32 %v3848, %v3824
    %v3881 = vmul.f32 %v3849, %v3823
    %v3882 = vmul.f32 %v3850, %v3822
    %v3883 = vmul.f32 %v3851, %v3821
    %v3884 = vmul.f32 %v3852, %v3820
    %v3885 = vmul.f32 %v3853, %v3819
    %v3886 = vmul.f32 %v3854, %v3818
    %v3887 = vmul.f32 %v3855, %v3817
    %v3888 = vmul.f32 %v3856, %v3816
    %v3889 = vmul.f32 %v3857, %v3831
    %3890 = vset.pattern.permute.xlu0 4
    %3891 = vperm.xlu0 %3890, %v2507
    %v3892 = vpop.permute.xlu0 %3891
    %v3894 = vmul.f32 %v3892, %v3874
    %v3895 = vmul.f32 %v3892, %v3875
    %v3896 = vmul.f32 %v3892, %v3876
    %v3897 = vmul.f32 %v3892, %v3877
    %v3898 = vmul.f32 %v3892, %v3878
    %v3899 = vmul.f32 %v3892, %v3879
    %v3900 = vmul.f32 %v3892, %v3880
    %v3901 = vmul.f32 %v3892, %v3881
    %v3902 = vmul.f32 %v3892, %v3882
    %v3903 = vmul.f32 %v3892, %v3883
    %v3904 = vmul.f32 %v3892, %v3884
    %v3905 = vmul.f32 %v3892, %v3885
    %v3906 = vmul.f32 %v3892, %v3886
    %v3907 = vmul.f32 %v3892, %v3887
    %v3908 = vmul.f32 %v3892, %v3888
    %v3909 = vmul.f32 %v3892, %v3889
    %v3910 = vadd.f32 %v3551, %v3894
    %v3911 = vadd.f32 %v3552, %v3895
    %v3912 = vadd.f32 %v3553, %v3896
    %v3913 = vadd.f32 %v3554, %v3897
    %v3914 = vadd.f32 %v3555, %v3898
    %v3915 = vadd.f32 %v3556, %v3899
    %v3916 = vadd.f32 %v3557, %v3900
    %v3917 = vadd.f32 %v3558, %v3901
    %v3918 = vadd.f32 %v3559, %v3902
    %v3919 = vadd.f32 %v3560, %v3903
    %v3920 = vadd.f32 %v3561, %v3904
    %v3921 = vadd.f32 %v3562, %v3905
    %v3922 = vadd.f32 %v3563, %v3906
    %v3923 = vadd.f32 %v3564, %v3907
    %v3924 = vadd.f32 %v3565, %v3908
    %v3925 = vadd.f32 %v3566, %v3909
    %3926 = vset.pattern.permute.xlu0 11
    %3927 = vperm.xlu0 %3926, %v2507
    %v3928 = vpop.permute.xlu0 %3927
    %v3930 = vmul.f32 %v3928, %v3874
    %v3931 = vmul.f32 %v3928, %v3875
    %v3932 = vmul.f32 %v3928, %v3876
    %v3933 = vmul.f32 %v3928, %v3877
    %v3934 = vmul.f32 %v3928, %v3878
    %v3935 = vmul.f32 %v3928, %v3879
    %v3936 = vmul.f32 %v3928, %v3880
    %v3937 = vmul.f32 %v3928, %v3881
    %v3938 = vmul.f32 %v3928, %v3882
    %v3939 = vmul.f32 %v3928, %v3883
    %v3940 = vmul.f32 %v3928, %v3884
    %v3941 = vmul.f32 %v3928, %v3885
    %v3942 = vmul.f32 %v3928, %v3886
    %v3943 = vmul.f32 %v3928, %v3887
    %v3944 = vmul.f32 %v3928, %v3888
    %v3945 = vmul.f32 %v3928, %v3889
    %v3946 = vadd.f32 %v3587, %v3930
    %v3947 = vadd.f32 %v3588, %v3931
    %v3948 = vadd.f32 %v3589, %v3932
    %v3949 = vadd.f32 %v3590, %v3933
    %v3950 = vadd.f32 %v3591, %v3934
    %v3951 = vadd.f32 %v3592, %v3935
    %v3952 = vadd.f32 %v3593, %v3936
    %v3953 = vadd.f32 %v3594, %v3937
    %v3954 = vadd.f32 %v3595, %v3938
    %v3955 = vadd.f32 %v3596, %v3939
    %v3956 = vadd.f32 %v3597, %v3940
    %v3957 = vadd.f32 %v3598, %v3941
    %v3958 = vadd.f32 %v3599, %v3942
    %v3959 = vadd.f32 %v3600, %v3943
    %v3960 = vadd.f32 %v3601, %v3944
    %v3961 = vadd.f32 %v3602, %v3945
    %3962 = vset.pattern.permute.xlu0 18
    %3963 = vperm.xlu0 %3962, %v2507
    %v3964 = vpop.permute.xlu0 %3963
    %v3966 = vmul.f32 %v3964, %v3874
    %v3967 = vmul.f32 %v3964, %v3875
    %v3968 = vmul.f32 %v3964, %v3876
    %v3969 = vmul.f32 %v3964, %v3877
    %v3970 = vmul.f32 %v3964, %v3878
    %v3971 = vmul.f32 %v3964, %v3879
    %v3972 = vmul.f32 %v3964, %v3880
    %v3973 = vmul.f32 %v3964, %v3881
    %v3974 = vmul.f32 %v3964, %v3882
    %v3975 = vmul.f32 %v3964, %v3883
    %v3976 = vmul.f32 %v3964, %v3884
    %v3977 = vmul.f32 %v3964, %v3885
    %v3978 = vmul.f32 %v3964, %v3886
    %v3979 = vmul.f32 %v3964, %v3887
    %v3980 = vmul.f32 %v3964, %v3888
    %v3981 = vmul.f32 %v3964, %v3889
    %v3982 = vadd.f32 %v3623, %v3966
    %v3983 = vadd.f32 %v3624, %v3967
    %v3984 = vadd.f32 %v3625, %v3968
    %v3985 = vadd.f32 %v3626, %v3969
    %v3986 = vadd.f32 %v3627, %v3970
    %v3987 = vadd.f32 %v3628, %v3971
    %v3988 = vadd.f32 %v3629, %v3972
    %v3989 = vadd.f32 %v3630, %v3973
    %v3990 = vadd.f32 %v3631, %v3974
    %v3991 = vadd.f32 %v3632, %v3975
    %v3992 = vadd.f32 %v3633, %v3976
    %v3993 = vadd.f32 %v3634, %v3977
    %v3994 = vadd.f32 %v3635, %v3978
    %v3995 = vadd.f32 %v3636, %v3979
    %v3996 = vadd.f32 %v3637, %v3980
    %v3997 = vadd.f32 %v3638, %v3981
    %3998 = vset.pattern.permute.xlu0 25
    %3999 = vperm.xlu0 %3998, %v2507
    %v4000 = vpop.permute.xlu0 %3999
    %v4002 = vmul.f32 %v4000, %v3874
    %v4003 = vmul.f32 %v4000, %v3875
    %v4004 = vmul.f32 %v4000, %v3876
    %v4005 = vmul.f32 %v4000, %v3877
    %v4006 = vmul.f32 %v4000, %v3878
    %v4007 = vmul.f32 %v4000, %v3879
    %v4008 = vmul.f32 %v4000, %v3880
    %v4009 = vmul.f32 %v4000, %v3881
    %v4010 = vmul.f32 %v4000, %v3882
    %v4011 = vmul.f32 %v4000, %v3883
    %v4012 = vmul.f32 %v4000, %v3884
    %v4013 = vmul.f32 %v4000, %v3885
    %v4014 = vmul.f32 %v4000, %v3886
    %v4015 = vmul.f32 %v4000, %v3887
    %v4016 = vmul.f32 %v4000, %v3888
    %v4017 = vmul.f32 %v4000, %v3889
    %v4018 = vadd.f32 %v3659, %v4002
    %v4019 = vadd.f32 %v3660, %v4003
    %v4020 = vadd.f32 %v3661, %v4004
    %v4021 = vadd.f32 %v3662, %v4005
    %v4022 = vadd.f32 %v3663, %v4006
    %v4023 = vadd.f32 %v3664, %v4007
    %v4024 = vadd.f32 %v3665, %v4008
    %v4025 = vadd.f32 %v3666, %v4009
    %v4026 = vadd.f32 %v3667, %v4010
    %v4027 = vadd.f32 %v3668, %v4011
    %v4028 = vadd.f32 %v3669, %v4012
    %v4029 = vadd.f32 %v3670, %v4013
    %v4030 = vadd.f32 %v3671, %v4014
    %v4031 = vadd.f32 %v3672, %v4015
    %v4032 = vadd.f32 %v3673, %v4016
    %v4033 = vadd.f32 %v3674, %v4017
    %4034 = vset.pattern.permute.xlu0 32
    %4035 = vperm.xlu0 %4034, %v2507
    %v4036 = vpop.permute.xlu0 %4035
    %v4038 = vmul.f32 %v4036, %v3874
    %v4039 = vmul.f32 %v4036, %v3875
    %v4040 = vmul.f32 %v4036, %v3876
    %v4041 = vmul.f32 %v4036, %v3877
    %v4042 = vmul.f32 %v4036, %v3878
    %v4043 = vmul.f32 %v4036, %v3879
    %v4044 = vmul.f32 %v4036, %v3880
    %v4045 = vmul.f32 %v4036, %v3881
    %v4046 = vmul.f32 %v4036, %v3882
    %v4047 = vmul.f32 %v4036, %v3883
    %v4048 = vmul.f32 %v4036, %v3884
    %v4049 = vmul.f32 %v4036, %v3885
    %v4050 = vmul.f32 %v4036, %v3886
    %v4051 = vmul.f32 %v4036, %v3887
    %v4052 = vmul.f32 %v4036, %v3888
    %v4053 = vmul.f32 %v4036, %v3889
    %v4054 = vadd.f32 %v3695, %v4038
    %v4055 = vadd.f32 %v3696, %v4039
    %v4056 = vadd.f32 %v3697, %v4040
    %v4057 = vadd.f32 %v3698, %v4041
    %v4058 = vadd.f32 %v3699, %v4042
    %v4059 = vadd.f32 %v3700, %v4043
    %v4060 = vadd.f32 %v3701, %v4044
    %v4061 = vadd.f32 %v3702, %v4045
    %v4062 = vadd.f32 %v3703, %v4046
    %v4063 = vadd.f32 %v3704, %v4047
    %v4064 = vadd.f32 %v3705, %v4048
    %v4065 = vadd.f32 %v3706, %v4049
    %v4066 = vadd.f32 %v3707, %v4050
    %v4067 = vadd.f32 %v3708, %v4051
    %v4068 = vadd.f32 %v3709, %v4052
    %v4069 = vadd.f32 %v3710, %v4053
    %4070 = vset.pattern.permute.xlu0 39
    %4071 = vperm.xlu0 %4070, %v2507
    %v4072 = vpop.permute.xlu0 %4071
    %v4074 = vmul.f32 %v4072, %v3874
    %v4075 = vmul.f32 %v4072, %v3875
    %v4076 = vmul.f32 %v4072, %v3876
    %v4077 = vmul.f32 %v4072, %v3877
    %v4078 = vmul.f32 %v4072, %v3878
    %v4079 = vmul.f32 %v4072, %v3879
    %v4080 = vmul.f32 %v4072, %v3880
    %v4081 = vmul.f32 %v4072, %v3881
    %v4082 = vmul.f32 %v4072, %v3882
    %v4083 = vmul.f32 %v4072, %v3883
    %v4084 = vmul.f32 %v4072, %v3884
    %v4085 = vmul.f32 %v4072, %v3885
    %v4086 = vmul.f32 %v4072, %v3886
    %v4087 = vmul.f32 %v4072, %v3887
    %v4088 = vmul.f32 %v4072, %v3888
    %v4089 = vmul.f32 %v4072, %v3889
    %v4090 = vadd.f32 %v3731, %v4074
    %v4091 = vadd.f32 %v3732, %v4075
    %v4092 = vadd.f32 %v3733, %v4076
    %v4093 = vadd.f32 %v3734, %v4077
    %v4094 = vadd.f32 %v3735, %v4078
    %v4095 = vadd.f32 %v3736, %v4079
    %v4096 = vadd.f32 %v3737, %v4080
    %v4097 = vadd.f32 %v3738, %v4081
    %v4098 = vadd.f32 %v3739, %v4082
    %v4099 = vadd.f32 %v3740, %v4083
    %v4100 = vadd.f32 %v3741, %v4084
    %v4101 = vadd.f32 %v3742, %v4085
    %v4102 = vadd.f32 %v3743, %v4086
    %v4103 = vadd.f32 %v3744, %v4087
    %v4104 = vadd.f32 %v3745, %v4088
    %v4105 = vadd.f32 %v3746, %v4089
    %4106 = vset.pattern.permute.xlu0 46
    %4107 = vperm.xlu0 %4106, %v2507
    %v4108 = vpop.permute.xlu0 %4107
    %v4110 = vmul.f32 %v4108, %v3874
    %v4111 = vmul.f32 %v4108, %v3875
    %v4112 = vmul.f32 %v4108, %v3876
    %v4113 = vmul.f32 %v4108, %v3877
    %v4114 = vmul.f32 %v4108, %v3878
    %v4115 = vmul.f32 %v4108, %v3879
    %v4116 = vmul.f32 %v4108, %v3880
    %v4117 = vmul.f32 %v4108, %v3881
    %v4118 = vmul.f32 %v4108, %v3882
    %v4119 = vmul.f32 %v4108, %v3883
    %v4120 = vmul.f32 %v4108, %v3884
    %v4121 = vmul.f32 %v4108, %v3885
    %v4122 = vmul.f32 %v4108, %v3886
    %v4123 = vmul.f32 %v4108, %v3887
    %v4124 = vmul.f32 %v4108, %v3888
    %v4125 = vmul.f32 %v4108, %v3889
    %v4126 = vadd.f32 %v3767, %v4110
    %v4127 = vadd.f32 %v3768, %v4111
    %v4128 = vadd.f32 %v3769, %v4112
    %v4129 = vadd.f32 %v3770, %v4113
    %v4130 = vadd.f32 %v3771, %v4114
    %v4131 = vadd.f32 %v3772, %v4115
    %v4132 = vadd.f32 %v3773, %v4116
    %v4133 = vadd.f32 %v3774, %v4117
    %v4134 = vadd.f32 %v3775, %v4118
    %v4135 = vadd.f32 %v3776, %v4119
    %v4136 = vadd.f32 %v3777, %v4120
    %v4137 = vadd.f32 %v3778, %v4121
    %v4138 = vadd.f32 %v3779, %v4122
    %v4139 = vadd.f32 %v3780, %v4123
    %v4140 = vadd.f32 %v3781, %v4124
    %v4141 = vadd.f32 %v3782, %v4125
    %4142 = vrot.lane.b32.xlu0 %v2491, 122
    %v4143 = vpop.permute.xlu0 %4142
    %4144 = vrot.lane.b32.xlu0 %v2492, 122
    %v4145 = vpop.permute.xlu0 %4144
    %4146 = vrot.lane.b32.xlu0 %v2493, 122
    %v4147 = vpop.permute.xlu0 %4146
    %4148 = vrot.lane.b32.xlu0 %v2494, 122
    %v4149 = vpop.permute.xlu0 %4148
    %4150 = vrot.lane.b32.xlu0 %v2495, 122
    %v4151 = vpop.permute.xlu0 %4150
    %4152 = vrot.lane.b32.xlu0 %v2496, 122
    %v4153 = vpop.permute.xlu0 %4152
    %4154 = vrot.lane.b32.xlu0 %v2497, 122
    %v4155 = vpop.permute.xlu0 %4154
    %4156 = vrot.lane.b32.xlu0 %v2498, 122
    %v4157 = vpop.permute.xlu0 %4156
    %4158 = vrot.lane.b32.xlu0 %v2499, 122
    %v4159 = vpop.permute.xlu0 %4158
    %4160 = vrot.lane.b32.xlu0 %v2500, 122
    %v4161 = vpop.permute.xlu0 %4160
    %4162 = vrot.lane.b32.xlu0 %v2501, 122
    %v4163 = vpop.permute.xlu0 %4162
    %4164 = vrot.lane.b32.xlu0 %v2502, 122
    %v4165 = vpop.permute.xlu0 %4164
    %4166 = vrot.lane.b32.xlu0 %v2503, 122
    %v4167 = vpop.permute.xlu0 %4166
    %4168 = vrot.lane.b32.xlu0 %v2504, 122
    %v4169 = vpop.permute.xlu0 %4168
    %4170 = vrot.lane.b32.xlu0 %v2505, 122
    %v4171 = vpop.permute.xlu0 %4170
    %4172 = vrot.lane.b32.xlu0 %v2506, 122
    %v4173 = vpop.permute.xlu0 %4172
    %vm4174 = vcmp.lt.s32.totalorder %v661, 122
    %v4175 = vsel %vm4174, %v4171, %v4173
    %v4176 = vsel %vm4174, %v4169, %v4171
    %v4177 = vsel %vm4174, %v4167, %v4169
    %v4178 = vsel %vm4174, %v4165, %v4167
    %v4179 = vsel %vm4174, %v4163, %v4165
    %v4180 = vsel %vm4174, %v4161, %v4163
    %v4181 = vsel %vm4174, %v4159, %v4161
    %v4182 = vsel %vm4174, %v4157, %v4159
    %v4183 = vsel %vm4174, %v4155, %v4157
    %v4184 = vsel %vm4174, %v4153, %v4155
    %v4185 = vsel %vm4174, %v4151, %v4153
    %v4186 = vsel %vm4174, %v4149, %v4151
    %v4187 = vsel %vm4174, %v4147, %v4149
    %v4188 = vsel %vm4174, %v4145, %v4147
    %v4189 = vsel %vm4174, %v4143, %v4145
    %v4190 = vsel %vm4174, %v4173, %v4143
    %s4191 = scalar_lea.vmem [#allocation10], 5
    %v4192 = vld [vmem:[%s4191] ss:$8 sm:$0xf]
    %v4193 = vld [vmem:[%s4191] ss:$8 sm:$0xf0]
    %v4194 = vor.u32 %v4192, %v4193
    %s4195 = scalar_lea.vmem [#allocation10], 69
    %v4196 = vld [vmem:[%s4195] ss:$8 sm:$0xf]
    %v4197 = vld [vmem:[%s4195] ss:$8 sm:$0xf0]
    %v4198 = vor.u32 %v4196, %v4197
    %v4201 = vperm.slane %v4194, 0
    %v4202 = vperm.slane %v4194, 1
    %v4203 = vperm.slane %v4194, 2
    %v4204 = vperm.slane %v4194, 3
    %v4205 = vperm.slane %v4194, 4
    %v4206 = vperm.slane %v4194, 5
    %v4207 = vperm.slane %v4194, 6
    %v4208 = vperm.slane %v4194, 7
    %v4209 = vperm.slane %v4198, 0
    %v4210 = vperm.slane %v4198, 1
    %v4211 = vperm.slane %v4198, 2
    %v4212 = vperm.slane %v4198, 3
    %v4213 = vperm.slane %v4198, 4
    %v4214 = vperm.slane %v4198, 5
    %v4215 = vperm.slane %v4198, 6
    %v4216 = vperm.slane %v4198, 7
    %v4233 = vmul.f32 %v4201, %v4189
    %v4234 = vmul.f32 %v4202, %v4188
    %v4235 = vmul.f32 %v4203, %v4187
    %v4236 = vmul.f32 %v4204, %v4186
    %v4237 = vmul.f32 %v4205, %v4185
    %v4238 = vmul.f32 %v4206, %v4184
    %v4239 = vmul.f32 %v4207, %v4183
    %v4240 = vmul.f32 %v4208, %v4182
    %v4241 = vmul.f32 %v4209, %v4181
    %v4242 = vmul.f32 %v4210, %v4180
    %v4243 = vmul.f32 %v4211, %v4179
    %v4244 = vmul.f32 %v4212, %v4178
    %v4245 = vmul.f32 %v4213, %v4177
    %v4246 = vmul.f32 %v4214, %v4176
    %v4247 = vmul.f32 %v4215, %v4175
    %v4248 = vmul.f32 %v4216, %v4190
    %4249 = vset.pattern.permute.xlu0 5
    %4250 = vperm.xlu0 %4249, %v2507
    %v4251 = vpop.permute.xlu0 %4250
    %v4253 = vmul.f32 %v4251, %v4233
    %v4254 = vmul.f32 %v4251, %v4234
    %v4255 = vmul.f32 %v4251, %v4235
    %v4256 = vmul.f32 %v4251, %v4236
    %v4257 = vmul.f32 %v4251, %v4237
    %v4258 = vmul.f32 %v4251, %v4238
    %v4259 = vmul.f32 %v4251, %v4239
    %v4260 = vmul.f32 %v4251, %v4240
    %v4261 = vmul.f32 %v4251, %v4241
    %v4262 = vmul.f32 %v4251, %v4242
    %v4263 = vmul.f32 %v4251, %v4243
    %v4264 = vmul.f32 %v4251, %v4244
    %v4265 = vmul.f32 %v4251, %v4245
    %v4266 = vmul.f32 %v4251, %v4246
    %v4267 = vmul.f32 %v4251, %v4247
    %v4268 = vmul.f32 %v4251, %v4248
    %v4269 = vadd.f32 %v3910, %v4253
    %v4270 = vadd.f32 %v3911, %v4254
    %v4271 = vadd.f32 %v3912, %v4255
    %v4272 = vadd.f32 %v3913, %v4256
    %v4273 = vadd.f32 %v3914, %v4257
    %v4274 = vadd.f32 %v3915, %v4258
    %v4275 = vadd.f32 %v3916, %v4259
    %v4276 = vadd.f32 %v3917, %v4260
    %v4277 = vadd.f32 %v3918, %v4261
    %v4278 = vadd.f32 %v3919, %v4262
    %v4279 = vadd.f32 %v3920, %v4263
    %v4280 = vadd.f32 %v3921, %v4264
    %v4281 = vadd.f32 %v3922, %v4265
    %v4282 = vadd.f32 %v3923, %v4266
    %v4283 = vadd.f32 %v3924, %v4267
    %v4284 = vadd.f32 %v3925, %v4268
    %4285 = vset.pattern.permute.xlu0 12
    %4286 = vperm.xlu0 %4285, %v2507
    %v4287 = vpop.permute.xlu0 %4286
    %v4289 = vmul.f32 %v4287, %v4233
    %v4290 = vmul.f32 %v4287, %v4234
    %v4291 = vmul.f32 %v4287, %v4235
    %v4292 = vmul.f32 %v4287, %v4236
    %v4293 = vmul.f32 %v4287, %v4237
    %v4294 = vmul.f32 %v4287, %v4238
    %v4295 = vmul.f32 %v4287, %v4239
    %v4296 = vmul.f32 %v4287, %v4240
    %v4297 = vmul.f32 %v4287, %v4241
    %v4298 = vmul.f32 %v4287, %v4242
    %v4299 = vmul.f32 %v4287, %v4243
    %v4300 = vmul.f32 %v4287, %v4244
    %v4301 = vmul.f32 %v4287, %v4245
    %v4302 = vmul.f32 %v4287, %v4246
    %v4303 = vmul.f32 %v4287, %v4247
    %v4304 = vmul.f32 %v4287, %v4248
    %v4305 = vadd.f32 %v3946, %v4289
    %v4306 = vadd.f32 %v3947, %v4290
    %v4307 = vadd.f32 %v3948, %v4291
    %v4308 = vadd.f32 %v3949, %v4292
    %v4309 = vadd.f32 %v3950, %v4293
    %v4310 = vadd.f32 %v3951, %v4294
    %v4311 = vadd.f32 %v3952, %v4295
    %v4312 = vadd.f32 %v3953, %v4296
    %v4313 = vadd.f32 %v3954, %v4297
    %v4314 = vadd.f32 %v3955, %v4298
    %v4315 = vadd.f32 %v3956, %v4299
    %v4316 = vadd.f32 %v3957, %v4300
    %v4317 = vadd.f32 %v3958, %v4301
    %v4318 = vadd.f32 %v3959, %v4302
    %v4319 = vadd.f32 %v3960, %v4303
    %v4320 = vadd.f32 %v3961, %v4304
    %4321 = vset.pattern.permute.xlu0 19
    %4322 = vperm.xlu0 %4321, %v2507
    %v4323 = vpop.permute.xlu0 %4322
    %v4325 = vmul.f32 %v4323, %v4233
    %v4326 = vmul.f32 %v4323, %v4234
    %v4327 = vmul.f32 %v4323, %v4235
    %v4328 = vmul.f32 %v4323, %v4236
    %v4329 = vmul.f32 %v4323, %v4237
    %v4330 = vmul.f32 %v4323, %v4238
    %v4331 = vmul.f32 %v4323, %v4239
    %v4332 = vmul.f32 %v4323, %v4240
    %v4333 = vmul.f32 %v4323, %v4241
    %v4334 = vmul.f32 %v4323, %v4242
    %v4335 = vmul.f32 %v4323, %v4243
    %v4336 = vmul.f32 %v4323, %v4244
    %v4337 = vmul.f32 %v4323, %v4245
    %v4338 = vmul.f32 %v4323, %v4246
    %v4339 = vmul.f32 %v4323, %v4247
    %v4340 = vmul.f32 %v4323, %v4248
    %v4341 = vadd.f32 %v3982, %v4325
    %v4342 = vadd.f32 %v3983, %v4326
    %v4343 = vadd.f32 %v3984, %v4327
    %v4344 = vadd.f32 %v3985, %v4328
    %v4345 = vadd.f32 %v3986, %v4329
    %v4346 = vadd.f32 %v3987, %v4330
    %v4347 = vadd.f32 %v3988, %v4331
    %v4348 = vadd.f32 %v3989, %v4332
    %v4349 = vadd.f32 %v3990, %v4333
    %v4350 = vadd.f32 %v3991, %v4334
    %v4351 = vadd.f32 %v3992, %v4335
    %v4352 = vadd.f32 %v3993, %v4336
    %v4353 = vadd.f32 %v3994, %v4337
    %v4354 = vadd.f32 %v3995, %v4338
    %v4355 = vadd.f32 %v3996, %v4339
    %v4356 = vadd.f32 %v3997, %v4340
    %4357 = vset.pattern.permute.xlu0 26
    %4358 = vperm.xlu0 %4357, %v2507
    %v4359 = vpop.permute.xlu0 %4358
    %v4361 = vmul.f32 %v4359, %v4233
    %v4362 = vmul.f32 %v4359, %v4234
    %v4363 = vmul.f32 %v4359, %v4235
    %v4364 = vmul.f32 %v4359, %v4236
    %v4365 = vmul.f32 %v4359, %v4237
    %v4366 = vmul.f32 %v4359, %v4238
    %v4367 = vmul.f32 %v4359, %v4239
    %v4368 = vmul.f32 %v4359, %v4240
    %v4369 = vmul.f32 %v4359, %v4241
    %v4370 = vmul.f32 %v4359, %v4242
    %v4371 = vmul.f32 %v4359, %v4243
    %v4372 = vmul.f32 %v4359, %v4244
    %v4373 = vmul.f32 %v4359, %v4245
    %v4374 = vmul.f32 %v4359, %v4246
    %v4375 = vmul.f32 %v4359, %v4247
    %v4376 = vmul.f32 %v4359, %v4248
    %v4377 = vadd.f32 %v4018, %v4361
    %v4378 = vadd.f32 %v4019, %v4362
    %v4379 = vadd.f32 %v4020, %v4363
    %v4380 = vadd.f32 %v4021, %v4364
    %v4381 = vadd.f32 %v4022, %v4365
    %v4382 = vadd.f32 %v4023, %v4366
    %v4383 = vadd.f32 %v4024, %v4367
    %v4384 = vadd.f32 %v4025, %v4368
    %v4385 = vadd.f32 %v4026, %v4369
    %v4386 = vadd.f32 %v4027, %v4370
    %v4387 = vadd.f32 %v4028, %v4371
    %v4388 = vadd.f32 %v4029, %v4372
    %v4389 = vadd.f32 %v4030, %v4373
    %v4390 = vadd.f32 %v4031, %v4374
    %v4391 = vadd.f32 %v4032, %v4375
    %v4392 = vadd.f32 %v4033, %v4376
    %4393 = vset.pattern.permute.xlu0 33
    %4394 = vperm.xlu0 %4393, %v2507
    %v4395 = vpop.permute.xlu0 %4394
    %v4397 = vmul.f32 %v4395, %v4233
    %v4398 = vmul.f32 %v4395, %v4234
    %v4399 = vmul.f32 %v4395, %v4235
    %v4400 = vmul.f32 %v4395, %v4236
    %v4401 = vmul.f32 %v4395, %v4237
    %v4402 = vmul.f32 %v4395, %v4238
    %v4403 = vmul.f32 %v4395, %v4239
    %v4404 = vmul.f32 %v4395, %v4240
    %v4405 = vmul.f32 %v4395, %v4241
    %v4406 = vmul.f32 %v4395, %v4242
    %v4407 = vmul.f32 %v4395, %v4243
    %v4408 = vmul.f32 %v4395, %v4244
    %v4409 = vmul.f32 %v4395, %v4245
    %v4410 = vmul.f32 %v4395, %v4246
    %v4411 = vmul.f32 %v4395, %v4247
    %v4412 = vmul.f32 %v4395, %v4248
    %v4413 = vadd.f32 %v4054, %v4397
    %v4414 = vadd.f32 %v4055, %v4398
    %v4415 = vadd.f32 %v4056, %v4399
    %v4416 = vadd.f32 %v4057, %v4400
    %v4417 = vadd.f32 %v4058, %v4401
    %v4418 = vadd.f32 %v4059, %v4402
    %v4419 = vadd.f32 %v4060, %v4403
    %v4420 = vadd.f32 %v4061, %v4404
    %v4421 = vadd.f32 %v4062, %v4405
    %v4422 = vadd.f32 %v4063, %v4406
    %v4423 = vadd.f32 %v4064, %v4407
    %v4424 = vadd.f32 %v4065, %v4408
    %v4425 = vadd.f32 %v4066, %v4409
    %v4426 = vadd.f32 %v4067, %v4410
    %v4427 = vadd.f32 %v4068, %v4411
    %v4428 = vadd.f32 %v4069, %v4412
    %4429 = vset.pattern.permute.xlu0 40
    %4430 = vperm.xlu0 %4429, %v2507
    %v4431 = vpop.permute.xlu0 %4430
    %v4433 = vmul.f32 %v4431, %v4233
    %v4434 = vmul.f32 %v4431, %v4234
    %v4435 = vmul.f32 %v4431, %v4235
    %v4436 = vmul.f32 %v4431, %v4236
    %v4437 = vmul.f32 %v4431, %v4237
    %v4438 = vmul.f32 %v4431, %v4238
    %v4439 = vmul.f32 %v4431, %v4239
    %v4440 = vmul.f32 %v4431, %v4240
    %v4441 = vmul.f32 %v4431, %v4241
    %v4442 = vmul.f32 %v4431, %v4242
    %v4443 = vmul.f32 %v4431, %v4243
    %v4444 = vmul.f32 %v4431, %v4244
    %v4445 = vmul.f32 %v4431, %v4245
    %v4446 = vmul.f32 %v4431, %v4246
    %v4447 = vmul.f32 %v4431, %v4247
    %v4448 = vmul.f32 %v4431, %v4248
    %v4449 = vadd.f32 %v4090, %v4433
    %v4450 = vadd.f32 %v4091, %v4434
    %v4451 = vadd.f32 %v4092, %v4435
    %v4452 = vadd.f32 %v4093, %v4436
    %v4453 = vadd.f32 %v4094, %v4437
    %v4454 = vadd.f32 %v4095, %v4438
    %v4455 = vadd.f32 %v4096, %v4439
    %v4456 = vadd.f32 %v4097, %v4440
    %v4457 = vadd.f32 %v4098, %v4441
    %v4458 = vadd.f32 %v4099, %v4442
    %v4459 = vadd.f32 %v4100, %v4443
    %v4460 = vadd.f32 %v4101, %v4444
    %v4461 = vadd.f32 %v4102, %v4445
    %v4462 = vadd.f32 %v4103, %v4446
    %v4463 = vadd.f32 %v4104, %v4447
    %v4464 = vadd.f32 %v4105, %v4448
    %4465 = vset.pattern.permute.xlu0 47
    %4466 = vperm.xlu0 %4465, %v2507
    %v4467 = vpop.permute.xlu0 %4466
    %v4469 = vmul.f32 %v4467, %v4233
    %v4470 = vmul.f32 %v4467, %v4234
    %v4471 = vmul.f32 %v4467, %v4235
    %v4472 = vmul.f32 %v4467, %v4236
    %v4473 = vmul.f32 %v4467, %v4237
    %v4474 = vmul.f32 %v4467, %v4238
    %v4475 = vmul.f32 %v4467, %v4239
    %v4476 = vmul.f32 %v4467, %v4240
    %v4477 = vmul.f32 %v4467, %v4241
    %v4478 = vmul.f32 %v4467, %v4242
    %v4479 = vmul.f32 %v4467, %v4243
    %v4480 = vmul.f32 %v4467, %v4244
    %v4481 = vmul.f32 %v4467, %v4245
    %v4482 = vmul.f32 %v4467, %v4246
    %v4483 = vmul.f32 %v4467, %v4247
    %v4484 = vmul.f32 %v4467, %v4248
    %v4485 = vadd.f32 %v4126, %v4469
    %v4486 = vadd.f32 %v4127, %v4470
    %v4487 = vadd.f32 %v4128, %v4471
    %v4488 = vadd.f32 %v4129, %v4472
    %v4489 = vadd.f32 %v4130, %v4473
    %v4490 = vadd.f32 %v4131, %v4474
    %v4491 = vadd.f32 %v4132, %v4475
    %v4492 = vadd.f32 %v4133, %v4476
    %v4493 = vadd.f32 %v4134, %v4477
    %v4494 = vadd.f32 %v4135, %v4478
    %v4495 = vadd.f32 %v4136, %v4479
    %v4496 = vadd.f32 %v4137, %v4480
    %v4497 = vadd.f32 %v4138, %v4481
    %v4498 = vadd.f32 %v4139, %v4482
    %v4499 = vadd.f32 %v4140, %v4483
    %v4500 = vadd.f32 %v4141, %v4484
    %4501 = vrot.lane.b32.xlu0 %v2491, 119
    %v4502 = vpop.permute.xlu0 %4501
    %4503 = vrot.lane.b32.xlu0 %v2492, 119
    %v4504 = vpop.permute.xlu0 %4503
    %4505 = vrot.lane.b32.xlu0 %v2493, 119
    %v4506 = vpop.permute.xlu0 %4505
    %4507 = vrot.lane.b32.xlu0 %v2494, 119
    %v4508 = vpop.permute.xlu0 %4507
    %4509 = vrot.lane.b32.xlu0 %v2495, 119
    %v4510 = vpop.permute.xlu0 %4509
    %4511 = vrot.lane.b32.xlu0 %v2496, 119
    %v4512 = vpop.permute.xlu0 %4511
    %4513 = vrot.lane.b32.xlu0 %v2497, 119
    %v4514 = vpop.permute.xlu0 %4513
    %4515 = vrot.lane.b32.xlu0 %v2498, 119
    %v4516 = vpop.permute.xlu0 %4515
    %4517 = vrot.lane.b32.xlu0 %v2499, 119
    %v4518 = vpop.permute.xlu0 %4517
    %4519 = vrot.lane.b32.xlu0 %v2500, 119
    %v4520 = vpop.permute.xlu0 %4519
    %4521 = vrot.lane.b32.xlu0 %v2501, 119
    %v4522 = vpop.permute.xlu0 %4521
    %4523 = vrot.lane.b32.xlu0 %v2502, 119
    %v4524 = vpop.permute.xlu0 %4523
    %4525 = vrot.lane.b32.xlu0 %v2503, 119
    %v4526 = vpop.permute.xlu0 %4525
    %4527 = vrot.lane.b32.xlu0 %v2504, 119
    %v4528 = vpop.permute.xlu0 %4527
    %4529 = vrot.lane.b32.xlu0 %v2505, 119
    %v4530 = vpop.permute.xlu0 %4529
    %4531 = vrot.lane.b32.xlu0 %v2506, 119
    %v4532 = vpop.permute.xlu0 %4531
    %vm4533 = vcmp.lt.s32.totalorder %v661, 119
    %v4534 = vsel %vm4533, %v4530, %v4532
    %v4535 = vsel %vm4533, %v4528, %v4530
    %v4536 = vsel %vm4533, %v4526, %v4528
    %v4537 = vsel %vm4533, %v4524, %v4526
    %v4538 = vsel %vm4533, %v4522, %v4524
    %v4539 = vsel %vm4533, %v4520, %v4522
    %v4540 = vsel %vm4533, %v4518, %v4520
    %v4541 = vsel %vm4533, %v4516, %v4518
    %v4542 = vsel %vm4533, %v4514, %v4516
    %v4543 = vsel %vm4533, %v4512, %v4514
    %v4544 = vsel %vm4533, %v4510, %v4512
    %v4545 = vsel %vm4533, %v4508, %v4510
    %v4546 = vsel %vm4533, %v4506, %v4508
    %v4547 = vsel %vm4533, %v4504, %v4506
    %v4548 = vsel %vm4533, %v4502, %v4504
    %v4549 = vsel %vm4533, %v4532, %v4502
    %s4550 = scalar_lea.vmem [#allocation10], 6
    %v4551 = vld [vmem:[%s4550] ss:$8 sm:$0xf]
    %v4552 = vld [vmem:[%s4550] ss:$8 sm:$0xf0]
    %v4553 = vor.u32 %v4551, %v4552
    %s4554 = scalar_lea.vmem [#allocation10], 70
    %v4555 = vld [vmem:[%s4554] ss:$8 sm:$0xf]
    %v4556 = vld [vmem:[%s4554] ss:$8 sm:$0xf0]
    %v4557 = vor.u32 %v4555, %v4556
    %v4560 = vperm.slane %v4553, 0
    %v4561 = vperm.slane %v4553, 1
    %v4562 = vperm.slane %v4553, 2
    %v4563 = vperm.slane %v4553, 3
    %v4564 = vperm.slane %v4553, 4
    %v4565 = vperm.slane %v4553, 5
    %v4566 = vperm.slane %v4553, 6
    %v4567 = vperm.slane %v4553, 7
    %v4568 = vperm.slane %v4557, 0
    %v4569 = vperm.slane %v4557, 1
    %v4570 = vperm.slane %v4557, 2
    %v4571 = vperm.slane %v4557, 3
    %v4572 = vperm.slane %v4557, 4
    %v4573 = vperm.slane %v4557, 5
    %v4574 = vperm.slane %v4557, 6
    %v4575 = vperm.slane %v4557, 7
    %v4592 = vmul.f32 %v4560, %v4548
    %v4593 = vmul.f32 %v4561, %v4547
    %v4594 = vmul.f32 %v4562, %v4546
    %v4595 = vmul.f32 %v4563, %v4545
    %v4596 = vmul.f32 %v4564, %v4544
    %v4597 = vmul.f32 %v4565, %v4543
    %v4598 = vmul.f32 %v4566, %v4542
    %v4599 = vmul.f32 %v4567, %v4541
    %v4600 = vmul.f32 %v4568, %v4540
    %v4601 = vmul.f32 %v4569, %v4539
    %v4602 = vmul.f32 %v4570, %v4538
    %v4603 = vmul.f32 %v4571, %v4537
    %v4604 = vmul.f32 %v4572, %v4536
    %v4605 = vmul.f32 %v4573, %v4535
    %v4606 = vmul.f32 %v4574, %v4534
    %v4607 = vmul.f32 %v4575, %v4549
    %4608 = vset.pattern.permute.xlu0 6
    %4609 = vperm.xlu0 %4608, %v2507
    %v4610 = vpop.permute.xlu0 %4609
    %v4612 = vmul.f32 %v4610, %v4592
    %v4613 = vmul.f32 %v4610, %v4593
    %v4614 = vmul.f32 %v4610, %v4594
    %v4615 = vmul.f32 %v4610, %v4595
    %v4616 = vmul.f32 %v4610, %v4596
    %v4617 = vmul.f32 %v4610, %v4597
    %v4618 = vmul.f32 %v4610, %v4598
    %v4619 = vmul.f32 %v4610, %v4599
    %v4620 = vmul.f32 %v4610, %v4600
    %v4621 = vmul.f32 %v4610, %v4601
    %v4622 = vmul.f32 %v4610, %v4602
    %v4623 = vmul.f32 %v4610, %v4603
    %v4624 = vmul.f32 %v4610, %v4604
    %v4625 = vmul.f32 %v4610, %v4605
    %v4626 = vmul.f32 %v4610, %v4606
    %v4627 = vmul.f32 %v4610, %v4607
    %v4628 = vadd.f32 %v4269, %v4612
    %v4629 = vadd.f32 %v4270, %v4613
    %v4630 = vadd.f32 %v4271, %v4614
    %v4631 = vadd.f32 %v4272, %v4615
    %v4632 = vadd.f32 %v4273, %v4616
    %v4633 = vadd.f32 %v4274, %v4617
    %v4634 = vadd.f32 %v4275, %v4618
    %v4635 = vadd.f32 %v4276, %v4619
    %v4636 = vadd.f32 %v4277, %v4620
    %v4637 = vadd.f32 %v4278, %v4621
    %v4638 = vadd.f32 %v4279, %v4622
    %v4639 = vadd.f32 %v4280, %v4623
    %v4640 = vadd.f32 %v4281, %v4624
    %v4641 = vadd.f32 %v4282, %v4625
    %v4642 = vadd.f32 %v4283, %v4626
    %v4643 = vadd.f32 %v4284, %v4627
    %4644 = vset.pattern.permute.xlu0 13
    %4645 = vperm.xlu0 %4644, %v2507
    %v4646 = vpop.permute.xlu0 %4645
    %v4648 = vmul.f32 %v4646, %v4592
    %v4649 = vmul.f32 %v4646, %v4593
    %v4650 = vmul.f32 %v4646, %v4594
    %v4651 = vmul.f32 %v4646, %v4595
    %v4652 = vmul.f32 %v4646, %v4596
    %v4653 = vmul.f32 %v4646, %v4597
    %v4654 = vmul.f32 %v4646, %v4598
    %v4655 = vmul.f32 %v4646, %v4599
    %v4656 = vmul.f32 %v4646, %v4600
    %v4657 = vmul.f32 %v4646, %v4601
    %v4658 = vmul.f32 %v4646, %v4602
    %v4659 = vmul.f32 %v4646, %v4603
    %v4660 = vmul.f32 %v4646, %v4604
    %v4661 = vmul.f32 %v4646, %v4605
    %v4662 = vmul.f32 %v4646, %v4606
    %v4663 = vmul.f32 %v4646, %v4607
    %v4664 = vadd.f32 %v4305, %v4648
    %v4665 = vadd.f32 %v4306, %v4649
    %v4666 = vadd.f32 %v4307, %v4650
    %v4667 = vadd.f32 %v4308, %v4651
    %v4668 = vadd.f32 %v4309, %v4652
    %v4669 = vadd.f32 %v4310, %v4653
    %v4670 = vadd.f32 %v4311, %v4654
    %v4671 = vadd.f32 %v4312, %v4655
    %v4672 = vadd.f32 %v4313, %v4656
    %v4673 = vadd.f32 %v4314, %v4657
    %v4674 = vadd.f32 %v4315, %v4658
    %v4675 = vadd.f32 %v4316, %v4659
    %v4676 = vadd.f32 %v4317, %v4660
    %v4677 = vadd.f32 %v4318, %v4661
    %v4678 = vadd.f32 %v4319, %v4662
    %v4679 = vadd.f32 %v4320, %v4663
    %4680 = vset.pattern.permute.xlu0 20
    %4681 = vperm.xlu0 %4680, %v2507
    %v4682 = vpop.permute.xlu0 %4681
    %v4684 = vmul.f32 %v4682, %v4592
    %v4685 = vmul.f32 %v4682, %v4593
    %v4686 = vmul.f32 %v4682, %v4594
    %v4687 = vmul.f32 %v4682, %v4595
    %v4688 = vmul.f32 %v4682, %v4596
    %v4689 = vmul.f32 %v4682, %v4597
    %v4690 = vmul.f32 %v4682, %v4598
    %v4691 = vmul.f32 %v4682, %v4599
    %v4692 = vmul.f32 %v4682, %v4600
    %v4693 = vmul.f32 %v4682, %v4601
    %v4694 = vmul.f32 %v4682, %v4602
    %v4695 = vmul.f32 %v4682, %v4603
    %v4696 = vmul.f32 %v4682, %v4604
    %v4697 = vmul.f32 %v4682, %v4605
    %v4698 = vmul.f32 %v4682, %v4606
    %v4699 = vmul.f32 %v4682, %v4607
    %v4700 = vadd.f32 %v4341, %v4684
    %v4701 = vadd.f32 %v4342, %v4685
    %v4702 = vadd.f32 %v4343, %v4686
    %v4703 = vadd.f32 %v4344, %v4687
    %v4704 = vadd.f32 %v4345, %v4688
    %v4705 = vadd.f32 %v4346, %v4689
    %v4706 = vadd.f32 %v4347, %v4690
    %v4707 = vadd.f32 %v4348, %v4691
    %v4708 = vadd.f32 %v4349, %v4692
    %v4709 = vadd.f32 %v4350, %v4693
    %v4710 = vadd.f32 %v4351, %v4694
    %v4711 = vadd.f32 %v4352, %v4695
    %v4712 = vadd.f32 %v4353, %v4696
    %v4713 = vadd.f32 %v4354, %v4697
    %v4714 = vadd.f32 %v4355, %v4698
    %v4715 = vadd.f32 %v4356, %v4699
    %4716 = vset.pattern.permute.xlu0 27
    %4717 = vperm.xlu0 %4716, %v2507
    %v4718 = vpop.permute.xlu0 %4717
    %v4720 = vmul.f32 %v4718, %v4592
    %v4721 = vmul.f32 %v4718, %v4593
    %v4722 = vmul.f32 %v4718, %v4594
    %v4723 = vmul.f32 %v4718, %v4595
    %v4724 = vmul.f32 %v4718, %v4596
    %v4725 = vmul.f32 %v4718, %v4597
    %v4726 = vmul.f32 %v4718, %v4598
    %v4727 = vmul.f32 %v4718, %v4599
    %v4728 = vmul.f32 %v4718, %v4600
    %v4729 = vmul.f32 %v4718, %v4601
    %v4730 = vmul.f32 %v4718, %v4602
    %v4731 = vmul.f32 %v4718, %v4603
    %v4732 = vmul.f32 %v4718, %v4604
    %v4733 = vmul.f32 %v4718, %v4605
    %v4734 = vmul.f32 %v4718, %v4606
    %v4735 = vmul.f32 %v4718, %v4607
    %v4736 = vadd.f32 %v4377, %v4720
    %v4737 = vadd.f32 %v4378, %v4721
    %v4738 = vadd.f32 %v4379, %v4722
    %v4739 = vadd.f32 %v4380, %v4723
    %v4740 = vadd.f32 %v4381, %v4724
    %v4741 = vadd.f32 %v4382, %v4725
    %v4742 = vadd.f32 %v4383, %v4726
    %v4743 = vadd.f32 %v4384, %v4727
    %v4744 = vadd.f32 %v4385, %v4728
    %v4745 = vadd.f32 %v4386, %v4729
    %v4746 = vadd.f32 %v4387, %v4730
    %v4747 = vadd.f32 %v4388, %v4731
    %v4748 = vadd.f32 %v4389, %v4732
    %v4749 = vadd.f32 %v4390, %v4733
    %v4750 = vadd.f32 %v4391, %v4734
    %v4751 = vadd.f32 %v4392, %v4735
    %4752 = vset.pattern.permute.xlu0 34
    %4753 = vperm.xlu0 %4752, %v2507
    %v4754 = vpop.permute.xlu0 %4753
    %v4756 = vmul.f32 %v4754, %v4592
    %v4757 = vmul.f32 %v4754, %v4593
    %v4758 = vmul.f32 %v4754, %v4594
    %v4759 = vmul.f32 %v4754, %v4595
    %v4760 = vmul.f32 %v4754, %v4596
    %v4761 = vmul.f32 %v4754, %v4597
    %v4762 = vmul.f32 %v4754, %v4598
    %v4763 = vmul.f32 %v4754, %v4599
    %v4764 = vmul.f32 %v4754, %v4600
    %v4765 = vmul.f32 %v4754, %v4601
    %v4766 = vmul.f32 %v4754, %v4602
    %v4767 = vmul.f32 %v4754, %v4603
    %v4768 = vmul.f32 %v4754, %v4604
    %v4769 = vmul.f32 %v4754, %v4605
    %v4770 = vmul.f32 %v4754, %v4606
    %v4771 = vmul.f32 %v4754, %v4607
    %v4772 = vadd.f32 %v4413, %v4756
    %v4773 = vadd.f32 %v4414, %v4757
    %v4774 = vadd.f32 %v4415, %v4758
    %v4775 = vadd.f32 %v4416, %v4759
    %v4776 = vadd.f32 %v4417, %v4760
    %v4777 = vadd.f32 %v4418, %v4761
    %v4778 = vadd.f32 %v4419, %v4762
    %v4779 = vadd.f32 %v4420, %v4763
    %v4780 = vadd.f32 %v4421, %v4764
    %v4781 = vadd.f32 %v4422, %v4765
    %v4782 = vadd.f32 %v4423, %v4766
    %v4783 = vadd.f32 %v4424, %v4767
    %v4784 = vadd.f32 %v4425, %v4768
    %v4785 = vadd.f32 %v4426, %v4769
    %v4786 = vadd.f32 %v4427, %v4770
    %v4787 = vadd.f32 %v4428, %v4771
    %4788 = vset.pattern.permute.xlu0 41
    %4789 = vperm.xlu0 %4788, %v2507
    %v4790 = vpop.permute.xlu0 %4789
    %v4792 = vmul.f32 %v4790, %v4592
    %v4793 = vmul.f32 %v4790, %v4593
    %v4794 = vmul.f32 %v4790, %v4594
    %v4795 = vmul.f32 %v4790, %v4595
    %v4796 = vmul.f32 %v4790, %v4596
    %v4797 = vmul.f32 %v4790, %v4597
    %v4798 = vmul.f32 %v4790, %v4598
    %v4799 = vmul.f32 %v4790, %v4599
    %v4800 = vmul.f32 %v4790, %v4600
    %v4801 = vmul.f32 %v4790, %v4601
    %v4802 = vmul.f32 %v4790, %v4602
    %v4803 = vmul.f32 %v4790, %v4603
    %v4804 = vmul.f32 %v4790, %v4604
    %v4805 = vmul.f32 %v4790, %v4605
    %v4806 = vmul.f32 %v4790, %v4606
    %v4807 = vmul.f32 %v4790, %v4607
    %v4808 = vadd.f32 %v4449, %v4792
    %v4809 = vadd.f32 %v4450, %v4793
    %v4810 = vadd.f32 %v4451, %v4794
    %v4811 = vadd.f32 %v4452, %v4795
    %v4812 = vadd.f32 %v4453, %v4796
    %v4813 = vadd.f32 %v4454, %v4797
    %v4814 = vadd.f32 %v4455, %v4798
    %v4815 = vadd.f32 %v4456, %v4799
    %v4816 = vadd.f32 %v4457, %v4800
    %v4817 = vadd.f32 %v4458, %v4801
    %v4818 = vadd.f32 %v4459, %v4802
    %v4819 = vadd.f32 %v4460, %v4803
    %v4820 = vadd.f32 %v4461, %v4804
    %v4821 = vadd.f32 %v4462, %v4805
    %v4822 = vadd.f32 %v4463, %v4806
    %v4823 = vadd.f32 %v4464, %v4807
    %4824 = vset.pattern.permute.xlu0 48
    %4825 = vperm.xlu0 %4824, %v2507
    %v4826 = vpop.permute.xlu0 %4825
    %v4828 = vmul.f32 %v4826, %v4592
    %v4829 = vmul.f32 %v4826, %v4593
    %v4830 = vmul.f32 %v4826, %v4594
    %v4831 = vmul.f32 %v4826, %v4595
    %v4832 = vmul.f32 %v4826, %v4596
    %v4833 = vmul.f32 %v4826, %v4597
    %v4834 = vmul.f32 %v4826, %v4598
    %v4835 = vmul.f32 %v4826, %v4599
    %v4836 = vmul.f32 %v4826, %v4600
    %v4837 = vmul.f32 %v4826, %v4601
    %v4838 = vmul.f32 %v4826, %v4602
    %v4839 = vmul.f32 %v4826, %v4603
    %v4840 = vmul.f32 %v4826, %v4604
    %v4841 = vmul.f32 %v4826, %v4605
    %v4842 = vmul.f32 %v4826, %v4606
    %v4843 = vmul.f32 %v4826, %v4607
    %v4844 = vadd.f32 %v4485, %v4828
    %v4845 = vadd.f32 %v4486, %v4829
    %v4846 = vadd.f32 %v4487, %v4830
    %v4847 = vadd.f32 %v4488, %v4831
    %v4848 = vadd.f32 %v4489, %v4832
    %v4849 = vadd.f32 %v4490, %v4833
    %v4850 = vadd.f32 %v4491, %v4834
    %v4851 = vadd.f32 %v4492, %v4835
    %v4852 = vadd.f32 %v4493, %v4836
    %v4853 = vadd.f32 %v4494, %v4837
    %v4854 = vadd.f32 %v4495, %v4838
    %v4855 = vadd.f32 %v4496, %v4839
    %v4856 = vadd.f32 %v4497, %v4840
    %v4857 = vadd.f32 %v4498, %v4841
    %v4858 = vadd.f32 %v4499, %v4842
    %v4859 = vadd.f32 %v4500, %v4843
    %4860 = vrot.lane.b32.xlu0 %v4628, 16
    %v4861 = vpop.permute.xlu0 %4860
    %4862 = vrot.lane.b32.xlu0 %v4629, 16
    %v4863 = vpop.permute.xlu0 %4862
    %4864 = vrot.lane.b32.xlu0 %v4630, 16
    %v4865 = vpop.permute.xlu0 %4864
    %4866 = vrot.lane.b32.xlu0 %v4631, 16
    %v4867 = vpop.permute.xlu0 %4866
    %4868 = vrot.lane.b32.xlu0 %v4632, 16
    %v4869 = vpop.permute.xlu0 %4868
    %4870 = vrot.lane.b32.xlu0 %v4633, 16
    %v4871 = vpop.permute.xlu0 %4870
    %4872 = vrot.lane.b32.xlu0 %v4634, 16
    %v4873 = vpop.permute.xlu0 %4872
    %4874 = vrot.lane.b32.xlu0 %v4635, 16
    %v4875 = vpop.permute.xlu0 %4874
    %4876 = vrot.lane.b32.xlu0 %v4636, 16
    %v4877 = vpop.permute.xlu0 %4876
    %4878 = vrot.lane.b32.xlu0 %v4637, 16
    %v4879 = vpop.permute.xlu0 %4878
    %4880 = vrot.lane.b32.xlu0 %v4638, 16
    %v4881 = vpop.permute.xlu0 %4880
    %4882 = vrot.lane.b32.xlu0 %v4639, 16
    %v4883 = vpop.permute.xlu0 %4882
    %4884 = vrot.lane.b32.xlu0 %v4640, 16
    %v4885 = vpop.permute.xlu0 %4884
    %4886 = vrot.lane.b32.xlu0 %v4641, 16
    %v4887 = vpop.permute.xlu0 %4886
    %4888 = vrot.lane.b32.xlu0 %v4642, 16
    %v4889 = vpop.permute.xlu0 %4888
    %4890 = vrot.lane.b32.xlu0 %v4643, 16
    %v4891 = vpop.permute.xlu0 %4890
    %v4892 = vsel %vm2074, %v4889, %v4891
    %v4893 = vsel %vm2074, %v4887, %v4889
    %v4894 = vsel %vm2074, %v4885, %v4887
    %v4895 = vsel %vm2074, %v4883, %v4885
    %v4896 = vsel %vm2074, %v4881, %v4883
    %v4897 = vsel %vm2074, %v4879, %v4881
    %v4898 = vsel %vm2074, %v4877, %v4879
    %v4899 = vsel %vm2074, %v4875, %v4877
    %v4900 = vsel %vm2074, %v4873, %v4875
    %v4901 = vsel %vm2074, %v4871, %v4873
    %v4902 = vsel %vm2074, %v4869, %v4871
    %v4903 = vsel %vm2074, %v4867, %v4869
    %v4904 = vsel %vm2074, %v4865, %v4867
    %v4905 = vsel %vm2074, %v4863, %v4865
    %v4906 = vsel %vm2074, %v4861, %v4863
    %v4907 = vsel %vm2074, %v4891, %v4861
    %v4908 = vld [vmem:[#allocation8] ss:$8 sm:$0xf]
    %v4909 = vld [vmem:[#allocation8] ss:$8 sm:$0xf0]
    %v4910 = vor.u32 %v4908, %v4909
    %s4911 = scalar_lea.vmem [#allocation8], 64
    %v4912 = vld [vmem:[%s4911] ss:$8 sm:$0xf]
    %v4913 = vld [vmem:[%s4911] ss:$8 sm:$0xf0]
    %v4914 = vor.u32 %v4912, %v4913
    %v4917 = vperm.slane %v4910, 0
    %v4918 = vperm.slane %v4910, 1
    %v4919 = vperm.slane %v4910, 2
    %v4920 = vperm.slane %v4910, 3
    %v4921 = vperm.slane %v4910, 4
    %v4922 = vperm.slane %v4910, 5
    %v4923 = vperm.slane %v4910, 6
    %v4924 = vperm.slane %v4910, 7
    %v4925 = vperm.slane %v4914, 0
    %v4926 = vperm.slane %v4914, 1
    %v4927 = vperm.slane %v4914, 2
    %v4928 = vperm.slane %v4914, 3
    %v4929 = vperm.slane %v4914, 4
    %v4930 = vperm.slane %v4914, 5
    %v4931 = vperm.slane %v4914, 6
    %v4932 = vperm.slane %v4914, 7
    %v4949 = vmul.f32 %v4917, %v4892
    %v4950 = vmul.f32 %v4918, %v4907
    %v4951 = vmul.f32 %v4919, %v4906
    %v4952 = vmul.f32 %v4920, %v4905
    %v4953 = vmul.f32 %v4921, %v4904
    %v4954 = vmul.f32 %v4922, %v4903
    %v4955 = vmul.f32 %v4923, %v4902
    %v4956 = vmul.f32 %v4924, %v4901
    %v4957 = vmul.f32 %v4925, %v4900
    %v4958 = vmul.f32 %v4926, %v4899
    %v4959 = vmul.f32 %v4927, %v4898
    %v4960 = vmul.f32 %v4928, %v4897
    %v4961 = vmul.f32 %v4929, %v4896
    %v4962 = vmul.f32 %v4930, %v4895
    %v4963 = vmul.f32 %v4931, %v4894
    %v4964 = vmul.f32 %v4932, %v4893
    %4965 = vrot.lane.b32.xlu0 %v4664, 96
    %v4966 = vpop.permute.xlu0 %4965
    %4967 = vrot.lane.b32.xlu0 %v4665, 96
    %v4968 = vpop.permute.xlu0 %4967
    %4969 = vrot.lane.b32.xlu0 %v4666, 96
    %v4970 = vpop.permute.xlu0 %4969
    %4971 = vrot.lane.b32.xlu0 %v4667, 96
    %v4972 = vpop.permute.xlu0 %4971
    %4973 = vrot.lane.b32.xlu0 %v4668, 96
    %v4974 = vpop.permute.xlu0 %4973
    %4975 = vrot.lane.b32.xlu0 %v4669, 96
    %v4976 = vpop.permute.xlu0 %4975
    %4977 = vrot.lane.b32.xlu0 %v4670, 96
    %v4978 = vpop.permute.xlu0 %4977
    %4979 = vrot.lane.b32.xlu0 %v4671, 96
    %v4980 = vpop.permute.xlu0 %4979
    %4981 = vrot.lane.b32.xlu0 %v4672, 96
    %v4982 = vpop.permute.xlu0 %4981
    %4983 = vrot.lane.b32.xlu0 %v4673, 96
    %v4984 = vpop.permute.xlu0 %4983
    %4985 = vrot.lane.b32.xlu0 %v4674, 96
    %v4986 = vpop.permute.xlu0 %4985
    %4987 = vrot.lane.b32.xlu0 %v4675, 96
    %v4988 = vpop.permute.xlu0 %4987
    %4989 = vrot.lane.b32.xlu0 %v4676, 96
    %v4990 = vpop.permute.xlu0 %4989
    %4991 = vrot.lane.b32.xlu0 %v4677, 96
    %v4992 = vpop.permute.xlu0 %4991
    %4993 = vrot.lane.b32.xlu0 %v4678, 96
    %v4994 = vpop.permute.xlu0 %4993
    %4995 = vrot.lane.b32.xlu0 %v4679, 96
    %v4996 = vpop.permute.xlu0 %4995
    %v4997 = vsel %vm2394, %v4994, %v4996
    %v4998 = vsel %vm2394, %v4992, %v4994
    %v4999 = vsel %vm2394, %v4990, %v4992
    %v5000 = vsel %vm2394, %v4988, %v4990
    %v5001 = vsel %vm2394, %v4986, %v4988
    %v5002 = vsel %vm2394, %v4984, %v4986
    %v5003 = vsel %vm2394, %v4982, %v4984
    %v5004 = vsel %vm2394, %v4980, %v4982
    %v5005 = vsel %vm2394, %v4978, %v4980
    %v5006 = vsel %vm2394, %v4976, %v4978
    %v5007 = vsel %vm2394, %v4974, %v4976
    %v5008 = vsel %vm2394, %v4972, %v4974
    %v5009 = vsel %vm2394, %v4970, %v4972
    %v5010 = vsel %vm2394, %v4968, %v4970
    %v5011 = vsel %vm2394, %v4966, %v4968
    %v5012 = vsel %vm2394, %v4996, %v4966
    %s5013 = scalar_lea.vmem [#allocation8], 1
    %v5014 = vld [vmem:[%s5013] ss:$8 sm:$0xf]
    %v5015 = vld [vmem:[%s5013] ss:$8 sm:$0xf0]
    %v5016 = vor.u32 %v5014, %v5015
    %s5017 = scalar_lea.vmem [#allocation8], 65
    %v5018 = vld [vmem:[%s5017] ss:$8 sm:$0xf]
    %v5019 = vld [vmem:[%s5017] ss:$8 sm:$0xf0]
    %v5020 = vor.u32 %v5018, %v5019
    %v5023 = vperm.slane %v5016, 0
    %v5024 = vperm.slane %v5016, 1
    %v5025 = vperm.slane %v5016, 2
    %v5026 = vperm.slane %v5016, 3
    %v5027 = vperm.slane %v5016, 4
    %v5028 = vperm.slane %v5016, 5
    %v5029 = vperm.slane %v5016, 6
    %v5030 = vperm.slane %v5016, 7
    %v5031 = vperm.slane %v5020, 0
    %v5032 = vperm.slane %v5020, 1
    %v5033 = vperm.slane %v5020, 2
    %v5034 = vperm.slane %v5020, 3
    %v5035 = vperm.slane %v5020, 4
    %v5036 = vperm.slane %v5020, 5
    %v5037 = vperm.slane %v5020, 6
    %v5038 = vperm.slane %v5020, 7
    %v5055 = vmul.f32 %v5023, %v5012
    %v5056 = vmul.f32 %v5024, %v5011
    %v5057 = vmul.f32 %v5025, %v5010
    %v5058 = vmul.f32 %v5026, %v5009
    %v5059 = vmul.f32 %v5027, %v5008
    %v5060 = vmul.f32 %v5028, %v5007
    %v5061 = vmul.f32 %v5029, %v5006
    %v5062 = vmul.f32 %v5030, %v5005
    %v5063 = vmul.f32 %v5031, %v5004
    %v5064 = vmul.f32 %v5032, %v5003
    %v5065 = vmul.f32 %v5033, %v5002
    %v5066 = vmul.f32 %v5034, %v5001
    %v5067 = vmul.f32 %v5035, %v5000
    %v5068 = vmul.f32 %v5036, %v4999
    %v5069 = vmul.f32 %v5037, %v4998
    %v5070 = vmul.f32 %v5038, %v4997
    %v5071 = vadd.f32 %v4949, %v5055
    %v5072 = vadd.f32 %v4950, %v5056
    %v5073 = vadd.f32 %v4951, %v5057
    %v5074 = vadd.f32 %v4952, %v5058
    %v5075 = vadd.f32 %v4953, %v5059
    %v5076 = vadd.f32 %v4954, %v5060
    %v5077 = vadd.f32 %v4955, %v5061
    %v5078 = vadd.f32 %v4956, %v5062
    %v5079 = vadd.f32 %v4957, %v5063
    %v5080 = vadd.f32 %v4958, %v5064
    %v5081 = vadd.f32 %v4959, %v5065
    %v5082 = vadd.f32 %v4960, %v5066
    %v5083 = vadd.f32 %v4961, %v5067
    %v5084 = vadd.f32 %v4962, %v5068
    %v5085 = vadd.f32 %v4963, %v5069
    %v5086 = vadd.f32 %v4964, %v5070
    %5087 = vrot.lane.b32.xlu0 %v4700, 48
    %v5088 = vpop.permute.xlu0 %5087
    %5089 = vrot.lane.b32.xlu0 %v4701, 48
    %v5090 = vpop.permute.xlu0 %5089
    %5091 = vrot.lane.b32.xlu0 %v4702, 48
    %v5092 = vpop.permute.xlu0 %5091
    %5093 = vrot.lane.b32.xlu0 %v4703, 48
    %v5094 = vpop.permute.xlu0 %5093
    %5095 = vrot.lane.b32.xlu0 %v4704, 48
    %v5096 = vpop.permute.xlu0 %5095
    %5097 = vrot.lane.b32.xlu0 %v4705, 48
    %v5098 = vpop.permute.xlu0 %5097
    %5099 = vrot.lane.b32.xlu0 %v4706, 48
    %v5100 = vpop.permute.xlu0 %5099
    %5101 = vrot.lane.b32.xlu0 %v4707, 48
    %v5102 = vpop.permute.xlu0 %5101
    %5103 = vrot.lane.b32.xlu0 %v4708, 48
    %v5104 = vpop.permute.xlu0 %5103
    %5105 = vrot.lane.b32.xlu0 %v4709, 48
    %v5106 = vpop.permute.xlu0 %5105
    %5107 = vrot.lane.b32.xlu0 %v4710, 48
    %v5108 = vpop.permute.xlu0 %5107
    %5109 = vrot.lane.b32.xlu0 %v4711, 48
    %v5110 = vpop.permute.xlu0 %5109
    %5111 = vrot.lane.b32.xlu0 %v4712, 48
    %v5112 = vpop.permute.xlu0 %5111
    %5113 = vrot.lane.b32.xlu0 %v4713, 48
    %v5114 = vpop.permute.xlu0 %5113
    %5115 = vrot.lane.b32.xlu0 %v4714, 48
    %v5116 = vpop.permute.xlu0 %5115
    %5117 = vrot.lane.b32.xlu0 %v4715, 48
    %v5118 = vpop.permute.xlu0 %5117
    %vm5119 = vcmp.lt.s32.totalorder %v661, 48
    %v5120 = vsel %vm5119, %v5116, %v5118
    %v5121 = vsel %vm5119, %v5114, %v5116
    %v5122 = vsel %vm5119, %v5112, %v5114
    %v5123 = vsel %vm5119, %v5110, %v5112
    %v5124 = vsel %vm5119, %v5108, %v5110
    %v5125 = vsel %vm5119, %v5106, %v5108
    %v5126 = vsel %vm5119, %v5104, %v5106
    %v5127 = vsel %vm5119, %v5102, %v5104
    %v5128 = vsel %vm5119, %v5100, %v5102
    %v5129 = vsel %vm5119, %v5098, %v5100
    %v5130 = vsel %vm5119, %v5096, %v5098
    %v5131 = vsel %vm5119, %v5094, %v5096
    %v5132 = vsel %vm5119, %v5092, %v5094
    %v5133 = vsel %vm5119, %v5090, %v5092
    %v5134 = vsel %vm5119, %v5088, %v5090
    %v5135 = vsel %vm5119, %v5118, %v5088
    %s5136 = scalar_lea.vmem [#allocation8], 2
    %v5137 = vld [vmem:[%s5136] ss:$8 sm:$0xf]
    %v5138 = vld [vmem:[%s5136] ss:$8 sm:$0xf0]
    %v5139 = vor.u32 %v5137, %v5138
    %s5140 = scalar_lea.vmem [#allocation8], 66
    %v5141 = vld [vmem:[%s5140] ss:$8 sm:$0xf]
    %v5142 = vld [vmem:[%s5140] ss:$8 sm:$0xf0]
    %v5143 = vor.u32 %v5141, %v5142
    %v5146 = vperm.slane %v5139, 0
    %v5147 = vperm.slane %v5139, 1
    %v5148 = vperm.slane %v5139, 2
    %v5149 = vperm.slane %v5139, 3
    %v5150 = vperm.slane %v5139, 4
    %v5151 = vperm.slane %v5139, 5
    %v5152 = vperm.slane %v5139, 6
    %v5153 = vperm.slane %v5139, 7
    %v5154 = vperm.slane %v5143, 0
    %v5155 = vperm.slane %v5143, 1
    %v5156 = vperm.slane %v5143, 2
    %v5157 = vperm.slane %v5143, 3
    %v5158 = vperm.slane %v5143, 4
    %v5159 = vperm.slane %v5143, 5
    %v5160 = vperm.slane %v5143, 6
    %v5161 = vperm.slane %v5143, 7
    %v5178 = vmul.f32 %v5146, %v5135
    %v5179 = vmul.f32 %v5147, %v5134
    %v5180 = vmul.f32 %v5148, %v5133
    %v5181 = vmul.f32 %v5149, %v5132
    %v5182 = vmul.f32 %v5150, %v5131
    %v5183 = vmul.f32 %v5151, %v5130
    %v5184 = vmul.f32 %v5152, %v5129
    %v5185 = vmul.f32 %v5153, %v5128
    %v5186 = vmul.f32 %v5154, %v5127
    %v5187 = vmul.f32 %v5155, %v5126
    %v5188 = vmul.f32 %v5156, %v5125
    %v5189 = vmul.f32 %v5157, %v5124
    %v5190 = vmul.f32 %v5158, %v5123
    %v5191 = vmul.f32 %v5159, %v5122
    %v5192 = vmul.f32 %v5160, %v5121
    %v5193 = vmul.f32 %v5161, %v5120
    %v5194 = vadd.f32 %v5071, %v5178
    %v5195 = vadd.f32 %v5072, %v5179
    %v5196 = vadd.f32 %v5073, %v5180
    %v5197 = vadd.f32 %v5074, %v5181
    %v5198 = vadd.f32 %v5075, %v5182
    %v5199 = vadd.f32 %v5076, %v5183
    %v5200 = vadd.f32 %v5077, %v5184
    %v5201 = vadd.f32 %v5078, %v5185
    %v5202 = vadd.f32 %v5079, %v5186
    %v5203 = vadd.f32 %v5080, %v5187
    %v5204 = vadd.f32 %v5081, %v5188
    %v5205 = vadd.f32 %v5082, %v5189
    %v5206 = vadd.f32 %v5083, %v5190
    %v5207 = vadd.f32 %v5084, %v5191
    %v5208 = vadd.f32 %v5085, %v5192
    %v5209 = vadd.f32 %v5086, %v5193
    %s5210 = scalar_lea.vmem [#allocation8], 3
    %v5211 = vld [vmem:[%s5210] ss:$8 sm:$0xf]
    %v5212 = vld [vmem:[%s5210] ss:$8 sm:$0xf0]
    %v5213 = vor.u32 %v5211, %v5212
    %s5214 = scalar_lea.vmem [#allocation8], 67
    %v5215 = vld [vmem:[%s5214] ss:$8 sm:$0xf]
    %v5216 = vld [vmem:[%s5214] ss:$8 sm:$0xf0]
    %v5217 = vor.u32 %v5215, %v5216
    %v5220 = vperm.slane %v5213, 0
    %v5221 = vperm.slane %v5213, 1
    %v5222 = vperm.slane %v5213, 2
    %v5223 = vperm.slane %v5213, 3
    %v5224 = vperm.slane %v5213, 4
    %v5225 = vperm.slane %v5213, 5
    %v5226 = vperm.slane %v5213, 6
    %v5227 = vperm.slane %v5213, 7
    %v5228 = vperm.slane %v5217, 0
    %v5229 = vperm.slane %v5217, 1
    %v5230 = vperm.slane %v5217, 2
    %v5231 = vperm.slane %v5217, 3
    %v5232 = vperm.slane %v5217, 4
    %v5233 = vperm.slane %v5217, 5
    %v5234 = vperm.slane %v5217, 6
    %v5235 = vperm.slane %v5217, 7
    %v5252 = vmul.f32 %v5220, %v4736
    %v5253 = vmul.f32 %v5221, %v4737
    %v5254 = vmul.f32 %v5222, %v4738
    %v5255 = vmul.f32 %v5223, %v4739
    %v5256 = vmul.f32 %v5224, %v4740
    %v5257 = vmul.f32 %v5225, %v4741
    %v5258 = vmul.f32 %v5226, %v4742
    %v5259 = vmul.f32 %v5227, %v4743
    %v5260 = vmul.f32 %v5228, %v4744
    %v5261 = vmul.f32 %v5229, %v4745
    %v5262 = vmul.f32 %v5230, %v4746
    %v5263 = vmul.f32 %v5231, %v4747
    %v5264 = vmul.f32 %v5232, %v4748
    %v5265 = vmul.f32 %v5233, %v4749
    %v5266 = vmul.f32 %v5234, %v4750
    %v5267 = vmul.f32 %v5235, %v4751
    %v5268 = vadd.f32 %v5194, %v5252
    %v5269 = vadd.f32 %v5195, %v5253
    %v5270 = vadd.f32 %v5196, %v5254
    %v5271 = vadd.f32 %v5197, %v5255
    %v5272 = vadd.f32 %v5198, %v5256
    %v5273 = vadd.f32 %v5199, %v5257
    %v5274 = vadd.f32 %v5200, %v5258
    %v5275 = vadd.f32 %v5201, %v5259
    %v5276 = vadd.f32 %v5202, %v5260
    %v5277 = vadd.f32 %v5203, %v5261
    %v5278 = vadd.f32 %v5204, %v5262
    %v5279 = vadd.f32 %v5205, %v5263
    %v5280 = vadd.f32 %v5206, %v5264
    %v5281 = vadd.f32 %v5207, %v5265
    %v5282 = vadd.f32 %v5208, %v5266
    %v5283 = vadd.f32 %v5209, %v5267
    %5284 = vrot.lane.b32.xlu0 %v4772, 80
    %v5285 = vpop.permute.xlu0 %5284
    %5286 = vrot.lane.b32.xlu0 %v4773, 80
    %v5287 = vpop.permute.xlu0 %5286
    %5288 = vrot.lane.b32.xlu0 %v4774, 80
    %v5289 = vpop.permute.xlu0 %5288
    %5290 = vrot.lane.b32.xlu0 %v4775, 80
    %v5291 = vpop.permute.xlu0 %5290
    %5292 = vrot.lane.b32.xlu0 %v4776, 80
    %v5293 = vpop.permute.xlu0 %5292
    %5294 = vrot.lane.b32.xlu0 %v4777, 80
    %v5295 = vpop.permute.xlu0 %5294
    %5296 = vrot.lane.b32.xlu0 %v4778, 80
    %v5297 = vpop.permute.xlu0 %5296
    %5298 = vrot.lane.b32.xlu0 %v4779, 80
    %v5299 = vpop.permute.xlu0 %5298
    %5300 = vrot.lane.b32.xlu0 %v4780, 80
    %v5301 = vpop.permute.xlu0 %5300
    %5302 = vrot.lane.b32.xlu0 %v4781, 80
    %v5303 = vpop.permute.xlu0 %5302
    %5304 = vrot.lane.b32.xlu0 %v4782, 80
    %v5305 = vpop.permute.xlu0 %5304
    %5306 = vrot.lane.b32.xlu0 %v4783, 80
    %v5307 = vpop.permute.xlu0 %5306
    %5308 = vrot.lane.b32.xlu0 %v4784, 80
    %v5309 = vpop.permute.xlu0 %5308
    %5310 = vrot.lane.b32.xlu0 %v4785, 80
    %v5311 = vpop.permute.xlu0 %5310
    %5312 = vrot.lane.b32.xlu0 %v4786, 80
    %v5313 = vpop.permute.xlu0 %5312
    %5314 = vrot.lane.b32.xlu0 %v4787, 80
    %v5315 = vpop.permute.xlu0 %5314
    %vm5316 = vcmp.lt.s32.totalorder %v661, 80
    %v5317 = vsel %vm5316, %v5313, %v5315
    %v5318 = vsel %vm5316, %v5311, %v5313
    %v5319 = vsel %vm5316, %v5309, %v5311
    %v5320 = vsel %vm5316, %v5307, %v5309
    %v5321 = vsel %vm5316, %v5305, %v5307
    %v5322 = vsel %vm5316, %v5303, %v5305
    %v5323 = vsel %vm5316, %v5301, %v5303
    %v5324 = vsel %vm5316, %v5299, %v5301
    %v5325 = vsel %vm5316, %v5297, %v5299
    %v5326 = vsel %vm5316, %v5295, %v5297
    %v5327 = vsel %vm5316, %v5293, %v5295
    %v5328 = vsel %vm5316, %v5291, %v5293
    %v5329 = vsel %vm5316, %v5289, %v5291
    %v5330 = vsel %vm5316, %v5287, %v5289
    %v5331 = vsel %vm5316, %v5285, %v5287
    %v5332 = vsel %vm5316, %v5315, %v5285
    %s5333 = scalar_lea.vmem [#allocation8], 4
    %v5334 = vld [vmem:[%s5333] ss:$8 sm:$0xf]
    %v5335 = vld [vmem:[%s5333] ss:$8 sm:$0xf0]
    %v5336 = vor.u32 %v5334, %v5335
    %s5337 = scalar_lea.vmem [#allocation8], 68
    %v5338 = vld [vmem:[%s5337] ss:$8 sm:$0xf]
    %v5339 = vld [vmem:[%s5337] ss:$8 sm:$0xf0]
    %v5340 = vor.u32 %v5338, %v5339
    %v5343 = vperm.slane %v5336, 0
    %v5344 = vperm.slane %v5336, 1
    %v5345 = vperm.slane %v5336, 2
    %v5346 = vperm.slane %v5336, 3
    %v5347 = vperm.slane %v5336, 4
    %v5348 = vperm.slane %v5336, 5
    %v5349 = vperm.slane %v5336, 6
    %v5350 = vperm.slane %v5336, 7
    %v5351 = vperm.slane %v5340, 0
    %v5352 = vperm.slane %v5340, 1
    %v5353 = vperm.slane %v5340, 2
    %v5354 = vperm.slane %v5340, 3
    %v5355 = vperm.slane %v5340, 4
    %v5356 = vperm.slane %v5340, 5
    %v5357 = vperm.slane %v5340, 6
    %v5358 = vperm.slane %v5340, 7
    %v5375 = vmul.f32 %v5343, %v5331
    %v5376 = vmul.f32 %v5344, %v5330
    %v5377 = vmul.f32 %v5345, %v5329
    %v5378 = vmul.f32 %v5346, %v5328
    %v5379 = vmul.f32 %v5347, %v5327
    %v5380 = vmul.f32 %v5348, %v5326
    %v5381 = vmul.f32 %v5349, %v5325
    %v5382 = vmul.f32 %v5350, %v5324
    %v5383 = vmul.f32 %v5351, %v5323
    %v5384 = vmul.f32 %v5352, %v5322
    %v5385 = vmul.f32 %v5353, %v5321
    %v5386 = vmul.f32 %v5354, %v5320
    %v5387 = vmul.f32 %v5355, %v5319
    %v5388 = vmul.f32 %v5356, %v5318
    %v5389 = vmul.f32 %v5357, %v5317
    %v5390 = vmul.f32 %v5358, %v5332
    %v5391 = vadd.f32 %v5268, %v5375
    %v5392 = vadd.f32 %v5269, %v5376
    %v5393 = vadd.f32 %v5270, %v5377
    %v5394 = vadd.f32 %v5271, %v5378
    %v5395 = vadd.f32 %v5272, %v5379
    %v5396 = vadd.f32 %v5273, %v5380
    %v5397 = vadd.f32 %v5274, %v5381
    %v5398 = vadd.f32 %v5275, %v5382
    %v5399 = vadd.f32 %v5276, %v5383
    %v5400 = vadd.f32 %v5277, %v5384
    %v5401 = vadd.f32 %v5278, %v5385
    %v5402 = vadd.f32 %v5279, %v5386
    %v5403 = vadd.f32 %v5280, %v5387
    %v5404 = vadd.f32 %v5281, %v5388
    %v5405 = vadd.f32 %v5282, %v5389
    %v5406 = vadd.f32 %v5283, %v5390
    %5407 = vrot.lane.b32.xlu0 %v4808, 32
    %v5408 = vpop.permute.xlu0 %5407
    %5409 = vrot.lane.b32.xlu0 %v4809, 32
    %v5410 = vpop.permute.xlu0 %5409
    %5411 = vrot.lane.b32.xlu0 %v4810, 32
    %v5412 = vpop.permute.xlu0 %5411
    %5413 = vrot.lane.b32.xlu0 %v4811, 32
    %v5414 = vpop.permute.xlu0 %5413
    %5415 = vrot.lane.b32.xlu0 %v4812, 32
    %v5416 = vpop.permute.xlu0 %5415
    %5417 = vrot.lane.b32.xlu0 %v4813, 32
    %v5418 = vpop.permute.xlu0 %5417
    %5419 = vrot.lane.b32.xlu0 %v4814, 32
    %v5420 = vpop.permute.xlu0 %5419
    %5421 = vrot.lane.b32.xlu0 %v4815, 32
    %v5422 = vpop.permute.xlu0 %5421
    %5423 = vrot.lane.b32.xlu0 %v4816, 32
    %v5424 = vpop.permute.xlu0 %5423
    %5425 = vrot.lane.b32.xlu0 %v4817, 32
    %v5426 = vpop.permute.xlu0 %5425
    %5427 = vrot.lane.b32.xlu0 %v4818, 32
    %v5428 = vpop.permute.xlu0 %5427
    %5429 = vrot.lane.b32.xlu0 %v4819, 32
    %v5430 = vpop.permute.xlu0 %5429
    %5431 = vrot.lane.b32.xlu0 %v4820, 32
    %v5432 = vpop.permute.xlu0 %5431
    %5433 = vrot.lane.b32.xlu0 %v4821, 32
    %v5434 = vpop.permute.xlu0 %5433
    %5435 = vrot.lane.b32.xlu0 %v4822, 32
    %v5436 = vpop.permute.xlu0 %5435
    %5437 = vrot.lane.b32.xlu0 %v4823, 32
    %v5438 = vpop.permute.xlu0 %5437
    %v5439 = vsel %vm1968, %v5436, %v5438
    %v5440 = vsel %vm1968, %v5434, %v5436
    %v5441 = vsel %vm1968, %v5432, %v5434
    %v5442 = vsel %vm1968, %v5430, %v5432
    %v5443 = vsel %vm1968, %v5428, %v5430
    %v5444 = vsel %vm1968, %v5426, %v5428
    %v5445 = vsel %vm1968, %v5424, %v5426
    %v5446 = vsel %vm1968, %v5422, %v5424
    %v5447 = vsel %vm1968, %v5420, %v5422
    %v5448 = vsel %vm1968, %v5418, %v5420
    %v5449 = vsel %vm1968, %v5416, %v5418
    %v5450 = vsel %vm1968, %v5414, %v5416
    %v5451 = vsel %vm1968, %v5412, %v5414
    %v5452 = vsel %vm1968, %v5410, %v5412
    %v5453 = vsel %vm1968, %v5408, %v5410
    %v5454 = vsel %vm1968, %v5438, %v5408
    %s5455 = scalar_lea.vmem [#allocation8], 5
    %v5456 = vld [vmem:[%s5455] ss:$8 sm:$0xf]
    %v5457 = vld [vmem:[%s5455] ss:$8 sm:$0xf0]
    %v5458 = vor.u32 %v5456, %v5457
    %s5459 = scalar_lea.vmem [#allocation8], 69
    %v5460 = vld [vmem:[%s5459] ss:$8 sm:$0xf]
    %v5461 = vld [vmem:[%s5459] ss:$8 sm:$0xf0]
    %v5462 = vor.u32 %v5460, %v5461
    %v5465 = vperm.slane %v5458, 0
    %v5466 = vperm.slane %v5458, 1
    %v5467 = vperm.slane %v5458, 2
    %v5468 = vperm.slane %v5458, 3
    %v5469 = vperm.slane %v5458, 4
    %v5470 = vperm.slane %v5458, 5
    %v5471 = vperm.slane %v5458, 6
    %v5472 = vperm.slane %v5458, 7
    %v5473 = vperm.slane %v5462, 0
    %v5474 = vperm.slane %v5462, 1
    %v5475 = vperm.slane %v5462, 2
    %v5476 = vperm.slane %v5462, 3
    %v5477 = vperm.slane %v5462, 4
    %v5478 = vperm.slane %v5462, 5
    %v5479 = vperm.slane %v5462, 6
    %v5480 = vperm.slane %v5462, 7
    %v5497 = vmul.f32 %v5465, %v5453
    %v5498 = vmul.f32 %v5466, %v5452
    %v5499 = vmul.f32 %v5467, %v5451
    %v5500 = vmul.f32 %v5468, %v5450
    %v5501 = vmul.f32 %v5469, %v5449
    %v5502 = vmul.f32 %v5470, %v5448
    %v5503 = vmul.f32 %v5471, %v5447
    %v5504 = vmul.f32 %v5472, %v5446
    %v5505 = vmul.f32 %v5473, %v5445
    %v5506 = vmul.f32 %v5474, %v5444
    %v5507 = vmul.f32 %v5475, %v5443
    %v5508 = vmul.f32 %v5476, %v5442
    %v5509 = vmul.f32 %v5477, %v5441
    %v5510 = vmul.f32 %v5478, %v5440
    %v5511 = vmul.f32 %v5479, %v5439
    %v5512 = vmul.f32 %v5480, %v5454
    %v5513 = vadd.f32 %v5391, %v5497
    %v5514 = vadd.f32 %v5392, %v5498
    %v5515 = vadd.f32 %v5393, %v5499
    %v5516 = vadd.f32 %v5394, %v5500
    %v5517 = vadd.f32 %v5395, %v5501
    %v5518 = vadd.f32 %v5396, %v5502
    %v5519 = vadd.f32 %v5397, %v5503
    %v5520 = vadd.f32 %v5398, %v5504
    %v5521 = vadd.f32 %v5399, %v5505
    %v5522 = vadd.f32 %v5400, %v5506
    %v5523 = vadd.f32 %v5401, %v5507
    %v5524 = vadd.f32 %v5402, %v5508
    %v5525 = vadd.f32 %v5403, %v5509
    %v5526 = vadd.f32 %v5404, %v5510
    %v5527 = vadd.f32 %v5405, %v5511
    %v5528 = vadd.f32 %v5406, %v5512
    %5529 = vrot.lane.b32.xlu0 %v4844, 112
    %v5530 = vpop.permute.xlu0 %5529
    %5531 = vrot.lane.b32.xlu0 %v4845, 112
    %v5532 = vpop.permute.xlu0 %5531
    %5533 = vrot.lane.b32.xlu0 %v4846, 112
    %v5534 = vpop.permute.xlu0 %5533
    %5535 = vrot.lane.b32.xlu0 %v4847, 112
    %v5536 = vpop.permute.xlu0 %5535
    %5537 = vrot.lane.b32.xlu0 %v4848, 112
    %v5538 = vpop.permute.xlu0 %5537
    %5539 = vrot.lane.b32.xlu0 %v4849, 112
    %v5540 = vpop.permute.xlu0 %5539
    %5541 = vrot.lane.b32.xlu0 %v4850, 112
    %v5542 = vpop.permute.xlu0 %5541
    %5543 = vrot.lane.b32.xlu0 %v4851, 112
    %v5544 = vpop.permute.xlu0 %5543
    %5545 = vrot.lane.b32.xlu0 %v4852, 112
    %v5546 = vpop.permute.xlu0 %5545
    %5547 = vrot.lane.b32.xlu0 %v4853, 112
    %v5548 = vpop.permute.xlu0 %5547
    %5549 = vrot.lane.b32.xlu0 %v4854, 112
    %v5550 = vpop.permute.xlu0 %5549
    %5551 = vrot.lane.b32.xlu0 %v4855, 112
    %v5552 = vpop.permute.xlu0 %5551
    %5553 = vrot.lane.b32.xlu0 %v4856, 112
    %v5554 = vpop.permute.xlu0 %5553
    %5555 = vrot.lane.b32.xlu0 %v4857, 112
    %v5556 = vpop.permute.xlu0 %5555
    %5557 = vrot.lane.b32.xlu0 %v4858, 112
    %v5558 = vpop.permute.xlu0 %5557
    %5559 = vrot.lane.b32.xlu0 %v4859, 112
    %v5560 = vpop.permute.xlu0 %5559
    %v5561 = vsel %vm2271, %v5558, %v5560
    %v5562 = vsel %vm2271, %v5556, %v5558
    %v5563 = vsel %vm2271, %v5554, %v5556
    %v5564 = vsel %vm2271, %v5552, %v5554
    %v5565 = vsel %vm2271, %v5550, %v5552
    %v5566 = vsel %vm2271, %v5548, %v5550
    %v5567 = vsel %vm2271, %v5546, %v5548
    %v5568 = vsel %vm2271, %v5544, %v5546
    %v5569 = vsel %vm2271, %v5542, %v5544
    %v5570 = vsel %vm2271, %v5540, %v5542
    %v5571 = vsel %vm2271, %v5538, %v5540
    %v5572 = vsel %vm2271, %v5536, %v5538
    %v5573 = vsel %vm2271, %v5534, %v5536
    %v5574 = vsel %vm2271, %v5532, %v5534
    %v5575 = vsel %vm2271, %v5530, %v5532
    %v5576 = vsel %vm2271, %v5560, %v5530
    %s5577 = scalar_lea.vmem [#allocation8], 6
    %v5578 = vld [vmem:[%s5577] ss:$8 sm:$0xf]
    %v5579 = vld [vmem:[%s5577] ss:$8 sm:$0xf0]
    %v5580 = vor.u32 %v5578, %v5579
    %s5581 = scalar_lea.vmem [#allocation8], 70
    %v5582 = vld [vmem:[%s5581] ss:$8 sm:$0xf]
    %v5583 = vld [vmem:[%s5581] ss:$8 sm:$0xf0]
    %v5584 = vor.u32 %v5582, %v5583
    %v5587 = vperm.slane %v5580, 0
    %v5588 = vperm.slane %v5580, 1
    %v5589 = vperm.slane %v5580, 2
    %v5590 = vperm.slane %v5580, 3
    %v5591 = vperm.slane %v5580, 4
    %v5592 = vperm.slane %v5580, 5
    %v5593 = vperm.slane %v5580, 6
    %v5594 = vperm.slane %v5580, 7
    %v5595 = vperm.slane %v5584, 0
    %v5596 = vperm.slane %v5584, 1
    %v5597 = vperm.slane %v5584, 2
    %v5598 = vperm.slane %v5584, 3
    %v5599 = vperm.slane %v5584, 4
    %v5600 = vperm.slane %v5584, 5
    %v5601 = vperm.slane %v5584, 6
    %v5602 = vperm.slane %v5584, 7
    %v5619 = vmul.f32 %v5587, %v5574
    %v5620 = vmul.f32 %v5588, %v5573
    %v5621 = vmul.f32 %v5589, %v5572
    %v5622 = vmul.f32 %v5590, %v5571
    %v5623 = vmul.f32 %v5591, %v5570
    %v5624 = vmul.f32 %v5592, %v5569
    %v5625 = vmul.f32 %v5593, %v5568
    %v5626 = vmul.f32 %v5594, %v5567
    %v5627 = vmul.f32 %v5595, %v5566
    %v5628 = vmul.f32 %v5596, %v5565
    %v5629 = vmul.f32 %v5597, %v5564
    %v5630 = vmul.f32 %v5598, %v5563
    %v5631 = vmul.f32 %v5599, %v5562
    %v5632 = vmul.f32 %v5600, %v5561
    %v5633 = vmul.f32 %v5601, %v5576
    %v5634 = vmul.f32 %v5602, %v5575
    %v5635 = vadd.f32 %v5513, %v5619
    %v5636 = vadd.f32 %v5514, %v5620
    %v5637 = vadd.f32 %v5515, %v5621
    %v5638 = vadd.f32 %v5516, %v5622
    %v5639 = vadd.f32 %v5517, %v5623
    %v5640 = vadd.f32 %v5518, %v5624
    %v5641 = vadd.f32 %v5519, %v5625
    %v5642 = vadd.f32 %v5520, %v5626
    %v5643 = vadd.f32 %v5521, %v5627
    %v5644 = vadd.f32 %v5522, %v5628
    %v5645 = vadd.f32 %v5523, %v5629
    %v5646 = vadd.f32 %v5524, %v5630
    %v5647 = vadd.f32 %v5525, %v5631
    %v5648 = vadd.f32 %v5526, %v5632
    %v5649 = vadd.f32 %v5527, %v5633
    %v5650 = vadd.f32 %v5528, %v5634
    %v5651 = vld [vmem:[%s13] sm:$0xff]
    %5653 = vset.pattern.permute.xlu0 0
    %5654 = vperm.xlu0 %5653, %v5651
    %v5655 = vpop.permute.xlu0 %5654
    %v5657 = vadd.f32 %v5635, %v5655
    %v5658 = vadd.f32 %v5636, %v5655
    %v5659 = vadd.f32 %v5637, %v5655
    %v5660 = vadd.f32 %v5638, %v5655
    %v5661 = vadd.f32 %v5639, %v5655
    %v5662 = vadd.f32 %v5640, %v5655
    %v5663 = vadd.f32 %v5641, %v5655
    %v5664 = vadd.f32 %v5642, %v5655
    %v5665 = vadd.f32 %v5643, %v5655
    %v5666 = vadd.f32 %v5644, %v5655
    %v5667 = vadd.f32 %v5645, %v5655
    %v5668 = vadd.f32 %v5646, %v5655
    %v5669 = vadd.f32 %v5647, %v5655
    %v5670 = vadd.f32 %v5648, %v5655
    %v5671 = vadd.f32 %v5649, %v5655
    %v5672 = vadd.f32 %v5650, %v5655
    %v5673 = vld [vmem:[%s14] sm:$0xf]
    %v5674 = vpack.c.bf16 %v5657, %v5657
    %v5675 = vpack.c.bf16 %v5658, %v5658
    %v5676 = vpack.c.bf16 %v5659, %v5659
    %v5677 = vpack.c.bf16 %v5660, %v5660
    %v5678 = vpack.c.bf16 %v5661, %v5661
    %v5679 = vpack.c.bf16 %v5662, %v5662
    %v5680 = vpack.c.bf16 %v5663, %v5663
    %v5681 = vpack.c.bf16 %v5664, %v5664
    %v5682 = vpack.c.bf16 %v5665, %v5665
    %v5683 = vpack.c.bf16 %v5666, %v5666
    %v5684 = vpack.c.bf16 %v5667, %v5667
    %v5685 = vpack.c.bf16 %v5668, %v5668
    %v5686 = vpack.c.bf16 %v5669, %v5669
    %v5687 = vpack.c.bf16 %v5670, %v5670
    %v5688 = vpack.c.bf16 %v5671, %v5671
    %v5689 = vpack.c.bf16 %v5672, %v5672
    %v5690 = vld [vmem:[%s15] sm:$0xff]
    %5692 = vset.pattern.permute.xlu0 0
    %5693 = vperm.xlu0 %5692, %v5690
    %v5694 = vpop.permute.xlu0 %5693
    %v5697 = vsel %vm222, %v5673, 0
    %v5700 = vsel %vm226, %v5674, 0
    %v5703 = vsel %vm226, %v5675, 0
    %v5706 = vsel %vm226, %v5676, 0
    %v5709 = vsel %vm226, %v5677, 0
    %v5712 = vsel %vm226, %v5678, 0
    %v5715 = vsel %vm226, %v5679, 0
    %v5718 = vsel %vm226, %v5680, 0
    %v5721 = vsel %vm226, %v5681, 0
    %v5724 = vsel %vm226, %v5682, 0
    %v5727 = vsel %vm226, %v5683, 0
    %v5730 = vsel %vm226, %v5684, 0
    %v5733 = vsel %vm226, %v5685, 0
    %v5736 = vsel %vm226, %v5686, 0
    %v5739 = vsel %vm226, %v5687, 0
    %v5742 = vsel %vm226, %v5688, 0
    %v5745 = vsel %vm226, %v5689, 0
    %5747 = vmatpush.bf16.msra.mxu0 0
    %5748 = vmatpush.bf16.msra.mxu0 0
    %5749 = vmatpush.bf16.msra.mxu0 0
    %5750 = vmatpush.bf16.msra.mxu0 0
    %5751 = vmatpush.bf16.msra.mxu0 0
    %5752 = vmatpush.bf16.msra.mxu0 0
    %5753 = vmatpush.bf16.msra.mxu0 0
    %5754 = vmatpush.bf16.msra.mxu0 %v5700
    %5755 = vmatmul.bf16.gmra.mxu0 %v5697
    %v5756 = vpop.f32.mrf.mxu0
    %v5757 = vadd.f32 %v5694, %v5756
    %v5758 = vpop.f32.mrf.mxu0
    %5759 = vdwg.mxu0
    %5760 = vmatpush.bf16.msra.mxu0 0
    %5761 = vmatpush.bf16.msra.mxu0 0
    %5762 = vmatpush.bf16.msra.mxu0 0
    %5763 = vmatpush.bf16.msra.mxu0 0
    %5764 = vmatpush.bf16.msra.mxu0 0
    %5765 = vmatpush.bf16.msra.mxu0 0
    %5766 = vmatpush.bf16.msra.mxu0 0
    %5767 = vmatpush.bf16.msra.mxu0 %v5703
    %5768 = vmatmul.bf16.gmra.mxu0 %v5697
    %v5769 = vpop.f32.mrf.mxu0
    %v5770 = vadd.f32 %v5694, %v5769
    %v5771 = vpop.f32.mrf.mxu0
    %5772 = vdwg.mxu0
    %5773 = vmatpush.bf16.msra.mxu0 0
    %5774 = vmatpush.bf16.msra.mxu0 0
    %5775 = vmatpush.bf16.msra.mxu0 0
    %5776 = vmatpush.bf16.msra.mxu0 0
    %5777 = vmatpush.bf16.msra.mxu0 0
    %5778 = vmatpush.bf16.msra.mxu0 0
    %5779 = vmatpush.bf16.msra.mxu0 0
    %5780 = vmatpush.bf16.msra.mxu0 %v5706
    %5781 = vmatmul.bf16.gmra.mxu0 %v5697
    %v5782 = vpop.f32.mrf.mxu0
    %v5783 = vadd.f32 %v5694, %v5782
    %v5784 = vpop.f32.mrf.mxu0
    %5785 = vdwg.mxu0
    %5786 = vmatpush.bf16.msra.mxu0 0
    %5787 = vmatpush.bf16.msra.mxu0 0
    %5788 = vmatpush.bf16.msra.mxu0 0
    %5789 = vmatpush.bf16.msra.mxu0 0
    %5790 = vmatpush.bf16.msra.mxu0 0
    %5791 = vmatpush.bf16.msra.mxu0 0
    %5792 = vmatpush.bf16.msra.mxu0 0
    %5793 = vmatpush.bf16.msra.mxu0 %v5709
    %5794 = vmatmul.bf16.gmra.mxu0 %v5697
    %v5795 = vpop.f32.mrf.mxu0
    %v5796 = vadd.f32 %v5694, %v5795
    %v5797 = vpop.f32.mrf.mxu0
    %5798 = vdwg.mxu0
    %5799 = vmatpush.bf16.msra.mxu0 0
    %5800 = vmatpush.bf16.msra.mxu0 0
    %5801 = vmatpush.bf16.msra.mxu0 0
    %5802 = vmatpush.bf16.msra.mxu0 0
    %5803 = vmatpush.bf16.msra.mxu0 0
    %5804 = vmatpush.bf16.msra.mxu0 0
    %5805 = vmatpush.bf16.msra.mxu0 0
    %5806 = vmatpush.bf16.msra.mxu0 %v5712
    %5807 = vmatmul.bf16.gmra.mxu0 %v5697
    %v5808 = vpop.f32.mrf.mxu0
    %v5809 = vadd.f32 %v5694, %v5808
    %v5810 = vpop.f32.mrf.mxu0
    %5811 = vdwg.mxu0
    %5812 = vmatpush.bf16.msra.mxu0 0
    %5813 = vmatpush.bf16.msra.mxu0 0
    %5814 = vmatpush.bf16.msra.mxu0 0
    %5815 = vmatpush.bf16.msra.mxu0 0
    %5816 = vmatpush.bf16.msra.mxu0 0
    %5817 = vmatpush.bf16.msra.mxu0 0
    %5818 = vmatpush.bf16.msra.mxu0 0
    %5819 = vmatpush.bf16.msra.mxu0 %v5715
    %5820 = vmatmul.bf16.gmra.mxu0 %v5697
    %v5821 = vpop.f32.mrf.mxu0
    %v5822 = vadd.f32 %v5694, %v5821
    %v5823 = vpop.f32.mrf.mxu0
    %5824 = vdwg.mxu0
    %5825 = vmatpush.bf16.msra.mxu0 0
    %5826 = vmatpush.bf16.msra.mxu0 0
    %5827 = vmatpush.bf16.msra.mxu0 0
    %5828 = vmatpush.bf16.msra.mxu0 0
    %5829 = vmatpush.bf16.msra.mxu0 0
    %5830 = vmatpush.bf16.msra.mxu0 0
    %5831 = vmatpush.bf16.msra.mxu0 0
    %5832 = vmatpush.bf16.msra.mxu0 %v5718
    %5833 = vmatmul.bf16.gmra.mxu0 %v5697
    %v5834 = vpop.f32.mrf.mxu0
    %v5835 = vadd.f32 %v5694, %v5834
    %v5836 = vpop.f32.mrf.mxu0
    %5837 = vdwg.mxu0
    %5838 = vmatpush.bf16.msra.mxu0 0
    %5839 = vmatpush.bf16.msra.mxu0 0
    %5840 = vmatpush.bf16.msra.mxu0 0
    %5841 = vmatpush.bf16.msra.mxu0 0
    %5842 = vmatpush.bf16.msra.mxu0 0
    %5843 = vmatpush.bf16.msra.mxu0 0
    %5844 = vmatpush.bf16.msra.mxu0 0
    %5845 = vmatpush.bf16.msra.mxu0 %v5721
    %5846 = vmatmul.bf16.gmra.mxu0 %v5697
    %v5847 = vpop.f32.mrf.mxu0
    %v5848 = vadd.f32 %v5694, %v5847
    %v5849 = vpop.f32.mrf.mxu0
    %5850 = vdwg.mxu0
    %5851 = vmatpush.bf16.msra.mxu0 0
    %5852 = vmatpush.bf16.msra.mxu0 0
    %5853 = vmatpush.bf16.msra.mxu0 0
    %5854 = vmatpush.bf16.msra.mxu0 0
    %5855 = vmatpush.bf16.msra.mxu0 0
    %5856 = vmatpush.bf16.msra.mxu0 0
    %5857 = vmatpush.bf16.msra.mxu0 0
    %5858 = vmatpush.bf16.msra.mxu0 %v5724
    %5859 = vmatmul.bf16.gmra.mxu0 %v5697
    %v5860 = vpop.f32.mrf.mxu0
    %v5861 = vadd.f32 %v5694, %v5860
    %v5862 = vpop.f32.mrf.mxu0
    %5863 = vdwg.mxu0
    %5864 = vmatpush.bf16.msra.mxu0 0
    %5865 = vmatpush.bf16.msra.mxu0 0
    %5866 = vmatpush.bf16.msra.mxu0 0
    %5867 = vmatpush.bf16.msra.mxu0 0
    %5868 = vmatpush.bf16.msra.mxu0 0
    %5869 = vmatpush.bf16.msra.mxu0 0
    %5870 = vmatpush.bf16.msra.mxu0 0
    %5871 = vmatpush.bf16.msra.mxu0 %v5727
    %5872 = vmatmul.bf16.gmra.mxu0 %v5697
    %v5873 = vpop.f32.mrf.mxu0
    %v5874 = vadd.f32 %v5694, %v5873
    %v5875 = vpop.f32.mrf.mxu0
    %5876 = vdwg.mxu0
    %5877 = vmatpush.bf16.msra.mxu0 0
    %5878 = vmatpush.bf16.msra.mxu0 0
    %5879 = vmatpush.bf16.msra.mxu0 0
    %5880 = vmatpush.bf16.msra.mxu0 0
    %5881 = vmatpush.bf16.msra.mxu0 0
    %5882 = vmatpush.bf16.msra.mxu0 0
    %5883 = vmatpush.bf16.msra.mxu0 0
    %5884 = vmatpush.bf16.msra.mxu0 %v5730
    %5885 = vmatmul.bf16.gmra.mxu0 %v5697
    %v5886 = vpop.f32.mrf.mxu0
    %v5887 = vadd.f32 %v5694, %v5886
    %v5888 = vpop.f32.mrf.mxu0
    %5889 = vdwg.mxu0
    %5890 = vmatpush.bf16.msra.mxu0 0
    %5891 = vmatpush.bf16.msra.mxu0 0
    %5892 = vmatpush.bf16.msra.mxu0 0
    %5893 = vmatpush.bf16.msra.mxu0 0
    %5894 = vmatpush.bf16.msra.mxu0 0
    %5895 = vmatpush.bf16.msra.mxu0 0
    %5896 = vmatpush.bf16.msra.mxu0 0
    %5897 = vmatpush.bf16.msra.mxu0 %v5733
    %5898 = vmatmul.bf16.gmra.mxu0 %v5697
    %v5899 = vpop.f32.mrf.mxu0
    %v5900 = vadd.f32 %v5694, %v5899
    %v5901 = vpop.f32.mrf.mxu0
    %5902 = vdwg.mxu0
    %5903 = vmatpush.bf16.msra.mxu0 0
    %5904 = vmatpush.bf16.msra.mxu0 0
    %5905 = vmatpush.bf16.msra.mxu0 0
    %5906 = vmatpush.bf16.msra.mxu0 0
    %5907 = vmatpush.bf16.msra.mxu0 0
    %5908 = vmatpush.bf16.msra.mxu0 0
    %5909 = vmatpush.bf16.msra.mxu0 0
    %5910 = vmatpush.bf16.msra.mxu0 %v5736
    %5911 = vmatmul.bf16.gmra.mxu0 %v5697
    %v5912 = vpop.f32.mrf.mxu0
    %v5913 = vadd.f32 %v5694, %v5912
    %v5914 = vpop.f32.mrf.mxu0
    %5915 = vdwg.mxu0
    %5916 = vmatpush.bf16.msra.mxu0 0
    %5917 = vmatpush.bf16.msra.mxu0 0
    %5918 = vmatpush.bf16.msra.mxu0 0
    %5919 = vmatpush.bf16.msra.mxu0 0
    %5920 = vmatpush.bf16.msra.mxu0 0
    %5921 = vmatpush.bf16.msra.mxu0 0
    %5922 = vmatpush.bf16.msra.mxu0 0
    %5923 = vmatpush.bf16.msra.mxu0 %v5739
    %5924 = vmatmul.bf16.gmra.mxu0 %v5697
    %v5925 = vpop.f32.mrf.mxu0
    %v5926 = vadd.f32 %v5694, %v5925
    %v5927 = vpop.f32.mrf.mxu0
    %5928 = vdwg.mxu0
    %5929 = vmatpush.bf16.msra.mxu0 0
    %5930 = vmatpush.bf16.msra.mxu0 0
    %5931 = vmatpush.bf16.msra.mxu0 0
    %5932 = vmatpush.bf16.msra.mxu0 0
    %5933 = vmatpush.bf16.msra.mxu0 0
    %5934 = vmatpush.bf16.msra.mxu0 0
    %5935 = vmatpush.bf16.msra.mxu0 0
    %5936 = vmatpush.bf16.msra.mxu0 %v5742
    %5937 = vmatmul.bf16.gmra.mxu0 %v5697
    %v5938 = vpop.f32.mrf.mxu0
    %v5939 = vadd.f32 %v5694, %v5938
    %v5940 = vpop.f32.mrf.mxu0
    %5941 = vdwg.mxu0
    %5942 = vmatpush.bf16.msra.mxu0 0
    %5943 = vmatpush.bf16.msra.mxu0 0
    %5944 = vmatpush.bf16.msra.mxu0 0
    %5945 = vmatpush.bf16.msra.mxu0 0
    %5946 = vmatpush.bf16.msra.mxu0 0
    %5947 = vmatpush.bf16.msra.mxu0 0
    %5948 = vmatpush.bf16.msra.mxu0 0
    %5949 = vmatpush.bf16.msra.mxu0 %v5745
    %5950 = vmatmul.bf16.gmra.mxu0 %v5697
    %v5951 = vpop.f32.mrf.mxu0
    %v5952 = vadd.f32 %v5694, %v5951
    %v5953 = vpop.f32.mrf.mxu0
    %5954 = vdwg.mxu0
    %v5955 = vld [vmem:[%s1] sm:$0xff]
    %v5956 = vld [vmem:[%s1 + $0x8] sm:$0xff]
    %v5957 = vld [vmem:[%s1 + $0x10] sm:$0xff]
    %v5958 = vld [vmem:[%s1 + $0x18] sm:$0xff]
    %v5959 = vld [vmem:[%s1 + $0x20] sm:$0xff]
    %v5960 = vld [vmem:[%s1 + $0x28] sm:$0xff]
    %v5961 = vld [vmem:[%s1 + $0x30] sm:$0xff]
    %v5962 = vld [vmem:[%s1 + $0x38] sm:$0xff]
    %v5963 = vpack.c.bf16 %v611, %v611
    %v5964 = vpack.c.bf16 %v612, %v612
    %v5965 = vpack.c.bf16 %v613, %v613
    %v5966 = vpack.c.bf16 %v614, %v614
    %v5967 = vpack.c.bf16 %v615, %v615
    %v5968 = vpack.c.bf16 %v616, %v616
    %v5969 = vpack.c.bf16 %v617, %v617
    %v5970 = vpack.c.bf16 %v618, %v618
    %v5971 = vpack.c.bf16 %v619, %v619
    %v5972 = vpack.c.bf16 %v620, %v620
    %v5973 = vpack.c.bf16 %v621, %v621
    %v5974 = vpack.c.bf16 %v622, %v622
    %v5975 = vpack.c.bf16 %v623, %v623
    %v5976 = vpack.c.bf16 %v624, %v624
    %v5977 = vpack.c.bf16 %v625, %v625
    %v5978 = vpack.c.bf16 %v626, %v626
    %v5987 = vunpack.c.l.b16 %v5955
    %v5988 = vunpack.c.h.b16 %v5955
    %v5989 = vunpack.c.l.b16 %v5956
    %v5990 = vunpack.c.h.b16 %v5956
    %v5991 = vunpack.c.l.b16 %v5957
    %v5992 = vunpack.c.h.b16 %v5957
    %v5993 = vunpack.c.l.b16 %v5958
    %v5994 = vunpack.c.h.b16 %v5958
    %v5995 = vunpack.c.l.b16 %v5959
    %v5996 = vunpack.c.h.b16 %v5959
    %v5997 = vunpack.c.l.b16 %v5960
    %v5998 = vunpack.c.h.b16 %v5960
    %v5999 = vunpack.c.l.b16 %v5961
    %v6000 = vunpack.c.h.b16 %v5961
    %v6001 = vunpack.c.l.b16 %v5962
    %v6002 = vunpack.c.h.b16 %v5962
    %v6003 = vpack.c.b16 %v5987, %v5987
    %v6004 = vpack.c.b16 %v5988, %v5988
    %v6005 = vpack.c.b16 %v5989, %v5989
    %v6006 = vpack.c.b16 %v5990, %v5990
    %v6007 = vpack.c.b16 %v5991, %v5991
    %v6008 = vpack.c.b16 %v5992, %v5992
    %v6009 = vpack.c.b16 %v5993, %v5993
    %v6010 = vpack.c.b16 %v5994, %v5994
    %v6011 = vpack.c.b16 %v5995, %v5995
    %v6012 = vpack.c.b16 %v5996, %v5996
    %v6013 = vpack.c.b16 %v5997, %v5997
    %v6014 = vpack.c.b16 %v5998, %v5998
    %v6015 = vpack.c.b16 %v5999, %v5999
    %v6016 = vpack.c.b16 %v6000, %v6000
    %v6017 = vpack.c.b16 %v6001, %v6001
    %v6018 = vpack.c.b16 %v6002, %v6002
    %6035 = vmatpush.bf16.xpose.msra.mxu0 0
    %6036 = vmatpush.bf16.xpose.msra.mxu0 0
    %6037 = vmatpush.bf16.xpose.msra.mxu0 0
    %6038 = vmatpush.bf16.xpose.msra.mxu0 0
    %6039 = vmatpush.bf16.xpose.msra.mxu0 0
    %6040 = vmatpush.bf16.xpose.msra.mxu0 0
    %6041 = vmatpush.bf16.xpose.msra.mxu0 0
    %6042 = vmatpush.bf16.xpose.msra.mxu0 %v6003
    %6043 = vmatmul.bf16.gmra.mxu0 %v5963
    %v6044 = vpop.f32.mrf.mxu0
    %v6045 = vadd.f32 0.0, %v6044
    %v6046 = vpop.f32.mrf.mxu0
    %6047 = vdwg.mxu0
    %6048 = vmatpush.bf16.xpose.msra.mxu0 0
    %6049 = vmatpush.bf16.xpose.msra.mxu0 0
    %6050 = vmatpush.bf16.xpose.msra.mxu0 0
    %6051 = vmatpush.bf16.xpose.msra.mxu0 0
    %6052 = vmatpush.bf16.xpose.msra.mxu0 0
    %6053 = vmatpush.bf16.xpose.msra.mxu0 0
    %6054 = vmatpush.bf16.xpose.msra.mxu0 0
    %6055 = vmatpush.bf16.xpose.msra.mxu0 %v6004
    %6056 = vmatmul.bf16.gmra.mxu0 %v5964
    %v6057 = vpop.f32.mrf.mxu0
    %v6058 = vadd.f32 %v6045, %v6057
    %v6059 = vpop.f32.mrf.mxu0
    %6060 = vdwg.mxu0
    %6061 = vmatpush.bf16.xpose.msra.mxu0 0
    %6062 = vmatpush.bf16.xpose.msra.mxu0 0
    %6063 = vmatpush.bf16.xpose.msra.mxu0 0
    %6064 = vmatpush.bf16.xpose.msra.mxu0 0
    %6065 = vmatpush.bf16.xpose.msra.mxu0 0
    %6066 = vmatpush.bf16.xpose.msra.mxu0 0
    %6067 = vmatpush.bf16.xpose.msra.mxu0 0
    %6068 = vmatpush.bf16.xpose.msra.mxu0 %v6005
    %6069 = vmatmul.bf16.gmra.mxu0 %v5965
    %v6070 = vpop.f32.mrf.mxu0
    %v6071 = vadd.f32 %v6058, %v6070
    %v6072 = vpop.f32.mrf.mxu0
    %6073 = vdwg.mxu0
    %6074 = vmatpush.bf16.xpose.msra.mxu0 0
    %6075 = vmatpush.bf16.xpose.msra.mxu0 0
    %6076 = vmatpush.bf16.xpose.msra.mxu0 0
    %6077 = vmatpush.bf16.xpose.msra.mxu0 0
    %6078 = vmatpush.bf16.xpose.msra.mxu0 0
    %6079 = vmatpush.bf16.xpose.msra.mxu0 0
    %6080 = vmatpush.bf16.xpose.msra.mxu0 0
    %6081 = vmatpush.bf16.xpose.msra.mxu0 %v6006
    %6082 = vmatmul.bf16.gmra.mxu0 %v5966
    %v6083 = vpop.f32.mrf.mxu0
    %v6084 = vadd.f32 %v6071, %v6083
    %v6085 = vpop.f32.mrf.mxu0
    %6086 = vdwg.mxu0
    %6087 = vmatpush.bf16.xpose.msra.mxu0 0
    %6088 = vmatpush.bf16.xpose.msra.mxu0 0
    %6089 = vmatpush.bf16.xpose.msra.mxu0 0
    %6090 = vmatpush.bf16.xpose.msra.mxu0 0
    %6091 = vmatpush.bf16.xpose.msra.mxu0 0
    %6092 = vmatpush.bf16.xpose.msra.mxu0 0
    %6093 = vmatpush.bf16.xpose.msra.mxu0 0
    %6094 = vmatpush.bf16.xpose.msra.mxu0 %v6007
    %6095 = vmatmul.bf16.gmra.mxu0 %v5967
    %v6096 = vpop.f32.mrf.mxu0
    %v6097 = vadd.f32 %v6084, %v6096
    %v6098 = vpop.f32.mrf.mxu0
    %6099 = vdwg.mxu0
    %6100 = vmatpush.bf16.xpose.msra.mxu0 0
    %6101 = vmatpush.bf16.xpose.msra.mxu0 0
    %6102 = vmatpush.bf16.xpose.msra.mxu0 0
    %6103 = vmatpush.bf16.xpose.msra.mxu0 0
    %6104 = vmatpush.bf16.xpose.msra.mxu0 0
    %6105 = vmatpush.bf16.xpose.msra.mxu0 0
    %6106 = vmatpush.bf16.xpose.msra.mxu0 0
    %6107 = vmatpush.bf16.xpose.msra.mxu0 %v6008
    %6108 = vmatmul.bf16.gmra.mxu0 %v5968
    %v6109 = vpop.f32.mrf.mxu0
    %v6110 = vadd.f32 %v6097, %v6109
    %v6111 = vpop.f32.mrf.mxu0
    %6112 = vdwg.mxu0
    %6113 = vmatpush.bf16.xpose.msra.mxu0 0
    %6114 = vmatpush.bf16.xpose.msra.mxu0 0
    %6115 = vmatpush.bf16.xpose.msra.mxu0 0
    %6116 = vmatpush.bf16.xpose.msra.mxu0 0
    %6117 = vmatpush.bf16.xpose.msra.mxu0 0
    %6118 = vmatpush.bf16.xpose.msra.mxu0 0
    %6119 = vmatpush.bf16.xpose.msra.mxu0 0
    %6120 = vmatpush.bf16.xpose.msra.mxu0 %v6009
    %6121 = vmatmul.bf16.gmra.mxu0 %v5969
    %v6122 = vpop.f32.mrf.mxu0
    %v6123 = vadd.f32 %v6110, %v6122
    %v6124 = vpop.f32.mrf.mxu0
    %6125 = vdwg.mxu0
    %6126 = vmatpush.bf16.xpose.msra.mxu0 0
    %6127 = vmatpush.bf16.xpose.msra.mxu0 0
    %6128 = vmatpush.bf16.xpose.msra.mxu0 0
    %6129 = vmatpush.bf16.xpose.msra.mxu0 0
    %6130 = vmatpush.bf16.xpose.msra.mxu0 0
    %6131 = vmatpush.bf16.xpose.msra.mxu0 0
    %6132 = vmatpush.bf16.xpose.msra.mxu0 0
    %6133 = vmatpush.bf16.xpose.msra.mxu0 %v6010
    %6134 = vmatmul.bf16.gmra.mxu0 %v5970
    %v6135 = vpop.f32.mrf.mxu0
    %v6136 = vadd.f32 %v6123, %v6135
    %v6137 = vpop.f32.mrf.mxu0
    %6138 = vdwg.mxu0
    %6139 = vmatpush.bf16.xpose.msra.mxu0 0
    %6140 = vmatpush.bf16.xpose.msra.mxu0 0
    %6141 = vmatpush.bf16.xpose.msra.mxu0 0
    %6142 = vmatpush.bf16.xpose.msra.mxu0 0
    %6143 = vmatpush.bf16.xpose.msra.mxu0 0
    %6144 = vmatpush.bf16.xpose.msra.mxu0 0
    %6145 = vmatpush.bf16.xpose.msra.mxu0 0
    %6146 = vmatpush.bf16.xpose.msra.mxu0 %v6011
    %6147 = vmatmul.bf16.gmra.mxu0 %v5971
    %v6148 = vpop.f32.mrf.mxu0
    %v6149 = vadd.f32 %v6136, %v6148
    %v6150 = vpop.f32.mrf.mxu0
    %6151 = vdwg.mxu0
    %6152 = vmatpush.bf16.xpose.msra.mxu0 0
    %6153 = vmatpush.bf16.xpose.msra.mxu0 0
    %6154 = vmatpush.bf16.xpose.msra.mxu0 0
    %6155 = vmatpush.bf16.xpose.msra.mxu0 0
    %6156 = vmatpush.bf16.xpose.msra.mxu0 0
    %6157 = vmatpush.bf16.xpose.msra.mxu0 0
    %6158 = vmatpush.bf16.xpose.msra.mxu0 0
    %6159 = vmatpush.bf16.xpose.msra.mxu0 %v6012
    %6160 = vmatmul.bf16.gmra.mxu0 %v5972
    %v6161 = vpop.f32.mrf.mxu0
    %v6162 = vadd.f32 %v6149, %v6161
    %v6163 = vpop.f32.mrf.mxu0
    %6164 = vdwg.mxu0
    %6165 = vmatpush.bf16.xpose.msra.mxu0 0
    %6166 = vmatpush.bf16.xpose.msra.mxu0 0
    %6167 = vmatpush.bf16.xpose.msra.mxu0 0
    %6168 = vmatpush.bf16.xpose.msra.mxu0 0
    %6169 = vmatpush.bf16.xpose.msra.mxu0 0
    %6170 = vmatpush.bf16.xpose.msra.mxu0 0
    %6171 = vmatpush.bf16.xpose.msra.mxu0 0
    %6172 = vmatpush.bf16.xpose.msra.mxu0 %v6013
    %6173 = vmatmul.bf16.gmra.mxu0 %v5973
    %v6174 = vpop.f32.mrf.mxu0
    %v6175 = vadd.f32 %v6162, %v6174
    %v6176 = vpop.f32.mrf.mxu0
    %6177 = vdwg.mxu0
    %6178 = vmatpush.bf16.xpose.msra.mxu0 0
    %6179 = vmatpush.bf16.xpose.msra.mxu0 0
    %6180 = vmatpush.bf16.xpose.msra.mxu0 0
    %6181 = vmatpush.bf16.xpose.msra.mxu0 0
    %6182 = vmatpush.bf16.xpose.msra.mxu0 0
    %6183 = vmatpush.bf16.xpose.msra.mxu0 0
    %6184 = vmatpush.bf16.xpose.msra.mxu0 0
    %6185 = vmatpush.bf16.xpose.msra.mxu0 %v6014
    %6186 = vmatmul.bf16.gmra.mxu0 %v5974
    %v6187 = vpop.f32.mrf.mxu0
    %v6188 = vadd.f32 %v6175, %v6187
    %v6189 = vpop.f32.mrf.mxu0
    %6190 = vdwg.mxu0
    %6191 = vmatpush.bf16.xpose.msra.mxu0 0
    %6192 = vmatpush.bf16.xpose.msra.mxu0 0
    %6193 = vmatpush.bf16.xpose.msra.mxu0 0
    %6194 = vmatpush.bf16.xpose.msra.mxu0 0
    %6195 = vmatpush.bf16.xpose.msra.mxu0 0
    %6196 = vmatpush.bf16.xpose.msra.mxu0 0
    %6197 = vmatpush.bf16.xpose.msra.mxu0 0
    %6198 = vmatpush.bf16.xpose.msra.mxu0 %v6015
    %6199 = vmatmul.bf16.gmra.mxu0 %v5975
    %v6200 = vpop.f32.mrf.mxu0
    %v6201 = vadd.f32 %v6188, %v6200
    %v6202 = vpop.f32.mrf.mxu0
    %6203 = vdwg.mxu0
    %6204 = vmatpush.bf16.xpose.msra.mxu0 0
    %6205 = vmatpush.bf16.xpose.msra.mxu0 0
    %6206 = vmatpush.bf16.xpose.msra.mxu0 0
    %6207 = vmatpush.bf16.xpose.msra.mxu0 0
    %6208 = vmatpush.bf16.xpose.msra.mxu0 0
    %6209 = vmatpush.bf16.xpose.msra.mxu0 0
    %6210 = vmatpush.bf16.xpose.msra.mxu0 0
    %6211 = vmatpush.bf16.xpose.msra.mxu0 %v6016
    %6212 = vmatmul.bf16.gmra.mxu0 %v5976
    %v6213 = vpop.f32.mrf.mxu0
    %v6214 = vadd.f32 %v6201, %v6213
    %v6215 = vpop.f32.mrf.mxu0
    %6216 = vdwg.mxu0
    %6217 = vmatpush.bf16.xpose.msra.mxu0 0
    %6218 = vmatpush.bf16.xpose.msra.mxu0 0
    %6219 = vmatpush.bf16.xpose.msra.mxu0 0
    %6220 = vmatpush.bf16.xpose.msra.mxu0 0
    %6221 = vmatpush.bf16.xpose.msra.mxu0 0
    %6222 = vmatpush.bf16.xpose.msra.mxu0 0
    %6223 = vmatpush.bf16.xpose.msra.mxu0 0
    %6224 = vmatpush.bf16.xpose.msra.mxu0 %v6017
    %6225 = vmatmul.bf16.gmra.mxu0 %v5977
    %v6226 = vpop.f32.mrf.mxu0
    %v6227 = vadd.f32 %v6214, %v6226
    %v6228 = vpop.f32.mrf.mxu0
    %6229 = vdwg.mxu0
    %6230 = vmatpush.bf16.xpose.msra.mxu0 0
    %6231 = vmatpush.bf16.xpose.msra.mxu0 0
    %6232 = vmatpush.bf16.xpose.msra.mxu0 0
    %6233 = vmatpush.bf16.xpose.msra.mxu0 0
    %6234 = vmatpush.bf16.xpose.msra.mxu0 0
    %6235 = vmatpush.bf16.xpose.msra.mxu0 0
    %6236 = vmatpush.bf16.xpose.msra.mxu0 0
    %6237 = vmatpush.bf16.xpose.msra.mxu0 %v6018
    %6238 = vmatmul.bf16.gmra.mxu0 %v5978
    %v6239 = vpop.f32.mrf.mxu0
    %v6240 = vadd.f32 %v6227, %v6239
    %v6241 = vpop.f32.mrf.mxu0
    %6242 = vdwg.mxu0
    %v6243 = vmul.f32 %v6240, 0.00390625
    %v6244 = vld [vmem:[%s16] sm:$0xff]
    %v6246 = vsel %vm222, %v6244, 0
    %6248 = vmatpush.msra.mxu0 0.0
    %6249 = vmatpush.msra.mxu0 0.0
    %6250 = vmatpush.msra.mxu0 0.0
    %6251 = vmatpush.msra.mxu0 0.0
    %6252 = vmatpush.msra.mxu0 0.0
    %6253 = vmatpush.msra.mxu0 0.0
    %6254 = vmatpush.msra.mxu0 0.0
    %6255 = vmatpush.msra.mxu0 0.0
    %6256 = vmatpush.msra.mxu0 0.0
    %6257 = vmatpush.msra.mxu0 0.0
    %6258 = vmatpush.msra.mxu0 0.0
    %6259 = vmatpush.msra.mxu0 0.0
    %6260 = vmatpush.msra.mxu0 0.0
    %6261 = vmatpush.msra.mxu0 0.0
    %6262 = vmatpush.msra.mxu0 0.0
    %6263 = vmatpush.msra.mxu0 %v6243
    %6264 = vmatmul.f32.gmra.mxu0 %v6246
    %v6265 = vpop.f32.mrf.mxu0
    %v6266 = vadd.f32 0.0, %v6265
    %6267 = vdwg.mxu0
    %v6268 = vmax.f32 %v6266, 0.0
    %v6269 = vld [vmem:[%s17] sm:$0xff]
    %v6271 = vsel %vm222, %v6269, 0
    %6273 = vmatpush.msra.mxu0 0.0
    %6274 = vmatpush.msra.mxu0 0.0
    %6275 = vmatpush.msra.mxu0 0.0
    %6276 = vmatpush.msra.mxu0 0.0
    %6277 = vmatpush.msra.mxu0 0.0
    %6278 = vmatpush.msra.mxu0 0.0
    %6279 = vmatpush.msra.mxu0 0.0
    %6280 = vmatpush.msra.mxu0 0.0
    %6281 = vmatpush.msra.mxu0 0.0
    %6282 = vmatpush.msra.mxu0 0.0
    %6283 = vmatpush.msra.mxu0 0.0
    %6284 = vmatpush.msra.mxu0 0.0
    %6285 = vmatpush.msra.mxu0 0.0
    %6286 = vmatpush.msra.mxu0 0.0
    %6287 = vmatpush.msra.mxu0 0.0
    %6288 = vmatpush.msra.mxu0 %v6268
    %6289 = vmatmul.f32.gmra.mxu0 %v6271
    %v6290 = vpop.f32.mrf.mxu0
    %v6291 = vadd.f32 0.0, %v6290
    %6292 = vdwg.mxu0
    %v6293 = vmax.f32 %v6291, -30.0
    %v6294 = vmin.f32 %v6293, 30.0
    %v6295 = vsub.f32 0.0, %v6294
    %v6296 = vmul.f32 %v6295, 1.442695
    %v6297 = vpow.pop %v6296
    %v6298 = vadd.f32 %v6297, 1.0
    %v6299 = vrcp.pop %v6298
    %v6300 = vpack.c.bf16 %v6299, %v6299
    %v6302 = vsel %vm222, %v6300, 0
    %v6305 = vsel %vm226, %v6003, 0
    %v6308 = vsel %vm226, %v6004, 0
    %v6311 = vsel %vm226, %v6005, 0
    %v6314 = vsel %vm226, %v6006, 0
    %v6317 = vsel %vm226, %v6007, 0
    %v6320 = vsel %vm226, %v6008, 0
    %v6323 = vsel %vm226, %v6009, 0
    %v6326 = vsel %vm226, %v6010, 0
    %v6329 = vsel %vm226, %v6011, 0
    %v6332 = vsel %vm226, %v6012, 0
    %v6335 = vsel %vm226, %v6013, 0
    %v6338 = vsel %vm226, %v6014, 0
    %v6341 = vsel %vm226, %v6015, 0
    %v6344 = vsel %vm226, %v6016, 0
    %v6347 = vsel %vm226, %v6017, 0
    %v6350 = vsel %vm226, %v6018, 0
    %6352 = vmatpush.bf16.msra.mxu0 0
    %6353 = vmatpush.bf16.msra.mxu0 0
    %6354 = vmatpush.bf16.msra.mxu0 0
    %6355 = vmatpush.bf16.msra.mxu0 0
    %6356 = vmatpush.bf16.msra.mxu0 0
    %6357 = vmatpush.bf16.msra.mxu0 0
    %6358 = vmatpush.bf16.msra.mxu0 0
    %6359 = vmatpush.bf16.msra.mxu0 %v6305
    %6360 = vmatmul.bf16.gmra.mxu0 %v6302
    %v6361 = vpop.f32.mrf.mxu0
    %v6362 = vadd.f32 0.0, %v6361
    %v6363 = vpop.f32.mrf.mxu0
    %6364 = vdwg.mxu0
    %6365 = vmatpush.bf16.msra.mxu0 0
    %6366 = vmatpush.bf16.msra.mxu0 0
    %6367 = vmatpush.bf16.msra.mxu0 0
    %6368 = vmatpush.bf16.msra.mxu0 0
    %6369 = vmatpush.bf16.msra.mxu0 0
    %6370 = vmatpush.bf16.msra.mxu0 0
    %6371 = vmatpush.bf16.msra.mxu0 0
    %6372 = vmatpush.bf16.msra.mxu0 %v6308
    %6373 = vmatmul.bf16.gmra.mxu0 %v6302
    %v6374 = vpop.f32.mrf.mxu0
    %v6375 = vadd.f32 0.0, %v6374
    %v6376 = vpop.f32.mrf.mxu0
    %6377 = vdwg.mxu0
    %6378 = vmatpush.bf16.msra.mxu0 0
    %6379 = vmatpush.bf16.msra.mxu0 0
    %6380 = vmatpush.bf16.msra.mxu0 0
    %6381 = vmatpush.bf16.msra.mxu0 0
    %6382 = vmatpush.bf16.msra.mxu0 0
    %6383 = vmatpush.bf16.msra.mxu0 0
    %6384 = vmatpush.bf16.msra.mxu0 0
    %6385 = vmatpush.bf16.msra.mxu0 %v6311
    %6386 = vmatmul.bf16.gmra.mxu0 %v6302
    %v6387 = vpop.f32.mrf.mxu0
    %v6388 = vadd.f32 0.0, %v6387
    %v6389 = vpop.f32.mrf.mxu0
    %6390 = vdwg.mxu0
    %6391 = vmatpush.bf16.msra.mxu0 0
    %6392 = vmatpush.bf16.msra.mxu0 0
    %6393 = vmatpush.bf16.msra.mxu0 0
    %6394 = vmatpush.bf16.msra.mxu0 0
    %6395 = vmatpush.bf16.msra.mxu0 0
    %6396 = vmatpush.bf16.msra.mxu0 0
    %6397 = vmatpush.bf16.msra.mxu0 0
    %6398 = vmatpush.bf16.msra.mxu0 %v6314
    %6399 = vmatmul.bf16.gmra.mxu0 %v6302
    %v6400 = vpop.f32.mrf.mxu0
    %v6401 = vadd.f32 0.0, %v6400
    %v6402 = vpop.f32.mrf.mxu0
    %6403 = vdwg.mxu0
    %6404 = vmatpush.bf16.msra.mxu0 0
    %6405 = vmatpush.bf16.msra.mxu0 0
    %6406 = vmatpush.bf16.msra.mxu0 0
    %6407 = vmatpush.bf16.msra.mxu0 0
    %6408 = vmatpush.bf16.msra.mxu0 0
    %6409 = vmatpush.bf16.msra.mxu0 0
    %6410 = vmatpush.bf16.msra.mxu0 0
    %6411 = vmatpush.bf16.msra.mxu0 %v6317
    %6412 = vmatmul.bf16.gmra.mxu0 %v6302
    %v6413 = vpop.f32.mrf.mxu0
    %v6414 = vadd.f32 0.0, %v6413
    %v6415 = vpop.f32.mrf.mxu0
    %6416 = vdwg.mxu0
    %6417 = vmatpush.bf16.msra.mxu0 0
    %6418 = vmatpush.bf16.msra.mxu0 0
    %6419 = vmatpush.bf16.msra.mxu0 0
    %6420 = vmatpush.bf16.msra.mxu0 0
    %6421 = vmatpush.bf16.msra.mxu0 0
    %6422 = vmatpush.bf16.msra.mxu0 0
    %6423 = vmatpush.bf16.msra.mxu0 0
    %6424 = vmatpush.bf16.msra.mxu0 %v6320
    %6425 = vmatmul.bf16.gmra.mxu0 %v6302
    %v6426 = vpop.f32.mrf.mxu0
    %v6427 = vadd.f32 0.0, %v6426
    %v6428 = vpop.f32.mrf.mxu0
    %6429 = vdwg.mxu0
    %6430 = vmatpush.bf16.msra.mxu0 0
    %6431 = vmatpush.bf16.msra.mxu0 0
    %6432 = vmatpush.bf16.msra.mxu0 0
    %6433 = vmatpush.bf16.msra.mxu0 0
    %6434 = vmatpush.bf16.msra.mxu0 0
    %6435 = vmatpush.bf16.msra.mxu0 0
    %6436 = vmatpush.bf16.msra.mxu0 0
    %6437 = vmatpush.bf16.msra.mxu0 %v6323
    %6438 = vmatmul.bf16.gmra.mxu0 %v6302
    %v6439 = vpop.f32.mrf.mxu0
    %v6440 = vadd.f32 0.0, %v6439
    %v6441 = vpop.f32.mrf.mxu0
    %6442 = vdwg.mxu0
    %6443 = vmatpush.bf16.msra.mxu0 0
    %6444 = vmatpush.bf16.msra.mxu0 0
    %6445 = vmatpush.bf16.msra.mxu0 0
    %6446 = vmatpush.bf16.msra.mxu0 0
    %6447 = vmatpush.bf16.msra.mxu0 0
    %6448 = vmatpush.bf16.msra.mxu0 0
    %6449 = vmatpush.bf16.msra.mxu0 0
    %6450 = vmatpush.bf16.msra.mxu0 %v6326
    %6451 = vmatmul.bf16.gmra.mxu0 %v6302
    %v6452 = vpop.f32.mrf.mxu0
    %v6453 = vadd.f32 0.0, %v6452
    %v6454 = vpop.f32.mrf.mxu0
    %6455 = vdwg.mxu0
    %6456 = vmatpush.bf16.msra.mxu0 0
    %6457 = vmatpush.bf16.msra.mxu0 0
    %6458 = vmatpush.bf16.msra.mxu0 0
    %6459 = vmatpush.bf16.msra.mxu0 0
    %6460 = vmatpush.bf16.msra.mxu0 0
    %6461 = vmatpush.bf16.msra.mxu0 0
    %6462 = vmatpush.bf16.msra.mxu0 0
    %6463 = vmatpush.bf16.msra.mxu0 %v6329
    %6464 = vmatmul.bf16.gmra.mxu0 %v6302
    %v6465 = vpop.f32.mrf.mxu0
    %v6466 = vadd.f32 0.0, %v6465
    %v6467 = vpop.f32.mrf.mxu0
    %6468 = vdwg.mxu0
    %6469 = vmatpush.bf16.msra.mxu0 0
    %6470 = vmatpush.bf16.msra.mxu0 0
    %6471 = vmatpush.bf16.msra.mxu0 0
    %6472 = vmatpush.bf16.msra.mxu0 0
    %6473 = vmatpush.bf16.msra.mxu0 0
    %6474 = vmatpush.bf16.msra.mxu0 0
    %6475 = vmatpush.bf16.msra.mxu0 0
    %6476 = vmatpush.bf16.msra.mxu0 %v6332
    %6477 = vmatmul.bf16.gmra.mxu0 %v6302
    %v6478 = vpop.f32.mrf.mxu0
    %v6479 = vadd.f32 0.0, %v6478
    %v6480 = vpop.f32.mrf.mxu0
    %6481 = vdwg.mxu0
    %6482 = vmatpush.bf16.msra.mxu0 0
    %6483 = vmatpush.bf16.msra.mxu0 0
    %6484 = vmatpush.bf16.msra.mxu0 0
    %6485 = vmatpush.bf16.msra.mxu0 0
    %6486 = vmatpush.bf16.msra.mxu0 0
    %6487 = vmatpush.bf16.msra.mxu0 0
    %6488 = vmatpush.bf16.msra.mxu0 0
    %6489 = vmatpush.bf16.msra.mxu0 %v6335
    %6490 = vmatmul.bf16.gmra.mxu0 %v6302
    %v6491 = vpop.f32.mrf.mxu0
    %v6492 = vadd.f32 0.0, %v6491
    %v6493 = vpop.f32.mrf.mxu0
    %6494 = vdwg.mxu0
    %6495 = vmatpush.bf16.msra.mxu0 0
    %6496 = vmatpush.bf16.msra.mxu0 0
    %6497 = vmatpush.bf16.msra.mxu0 0
    %6498 = vmatpush.bf16.msra.mxu0 0
    %6499 = vmatpush.bf16.msra.mxu0 0
    %6500 = vmatpush.bf16.msra.mxu0 0
    %6501 = vmatpush.bf16.msra.mxu0 0
    %6502 = vmatpush.bf16.msra.mxu0 %v6338
    %6503 = vmatmul.bf16.gmra.mxu0 %v6302
    %v6504 = vpop.f32.mrf.mxu0
    %v6505 = vadd.f32 0.0, %v6504
    %v6506 = vpop.f32.mrf.mxu0
    %6507 = vdwg.mxu0
    %6508 = vmatpush.bf16.msra.mxu0 0
    %6509 = vmatpush.bf16.msra.mxu0 0
    %6510 = vmatpush.bf16.msra.mxu0 0
    %6511 = vmatpush.bf16.msra.mxu0 0
    %6512 = vmatpush.bf16.msra.mxu0 0
    %6513 = vmatpush.bf16.msra.mxu0 0
    %6514 = vmatpush.bf16.msra.mxu0 0
    %6515 = vmatpush.bf16.msra.mxu0 %v6341
    %6516 = vmatmul.bf16.gmra.mxu0 %v6302
    %v6517 = vpop.f32.mrf.mxu0
    %v6518 = vadd.f32 0.0, %v6517
    %v6519 = vpop.f32.mrf.mxu0
    %6520 = vdwg.mxu0
    %6521 = vmatpush.bf16.msra.mxu0 0
    %6522 = vmatpush.bf16.msra.mxu0 0
    %6523 = vmatpush.bf16.msra.mxu0 0
    %6524 = vmatpush.bf16.msra.mxu0 0
    %6525 = vmatpush.bf16.msra.mxu0 0
    %6526 = vmatpush.bf16.msra.mxu0 0
    %6527 = vmatpush.bf16.msra.mxu0 0
    %6528 = vmatpush.bf16.msra.mxu0 %v6344
    %6529 = vmatmul.bf16.gmra.mxu0 %v6302
    %v6530 = vpop.f32.mrf.mxu0
    %v6531 = vadd.f32 0.0, %v6530
    %v6532 = vpop.f32.mrf.mxu0
    %6533 = vdwg.mxu0
    %6534 = vmatpush.bf16.msra.mxu0 0
    %6535 = vmatpush.bf16.msra.mxu0 0
    %6536 = vmatpush.bf16.msra.mxu0 0
    %6537 = vmatpush.bf16.msra.mxu0 0
    %6538 = vmatpush.bf16.msra.mxu0 0
    %6539 = vmatpush.bf16.msra.mxu0 0
    %6540 = vmatpush.bf16.msra.mxu0 0
    %6541 = vmatpush.bf16.msra.mxu0 %v6347
    %6542 = vmatmul.bf16.gmra.mxu0 %v6302
    %v6543 = vpop.f32.mrf.mxu0
    %v6544 = vadd.f32 0.0, %v6543
    %v6545 = vpop.f32.mrf.mxu0
    %6546 = vdwg.mxu0
    %6547 = vmatpush.bf16.msra.mxu0 0
    %6548 = vmatpush.bf16.msra.mxu0 0
    %6549 = vmatpush.bf16.msra.mxu0 0
    %6550 = vmatpush.bf16.msra.mxu0 0
    %6551 = vmatpush.bf16.msra.mxu0 0
    %6552 = vmatpush.bf16.msra.mxu0 0
    %6553 = vmatpush.bf16.msra.mxu0 0
    %6554 = vmatpush.bf16.msra.mxu0 %v6350
    %6555 = vmatmul.bf16.gmra.mxu0 %v6302
    %v6556 = vpop.f32.mrf.mxu0
    %v6557 = vadd.f32 0.0, %v6556
    %v6558 = vpop.f32.mrf.mxu0
    %6559 = vdwg.mxu0
    %v6560 = vmul.f32 %v6362, %v5757
    %v6561 = vmul.f32 %v6375, %v5770
    %v6562 = vmul.f32 %v6388, %v5783
    %v6563 = vmul.f32 %v6401, %v5796
    %v6564 = vmul.f32 %v6414, %v5809
    %v6565 = vmul.f32 %v6427, %v5822
    %v6566 = vmul.f32 %v6440, %v5835
    %v6567 = vmul.f32 %v6453, %v5848
    %v6568 = vmul.f32 %v6466, %v5861
    %v6569 = vmul.f32 %v6479, %v5874
    %v6570 = vmul.f32 %v6492, %v5887
    %v6571 = vmul.f32 %v6505, %v5900
    %v6572 = vmul.f32 %v6518, %v5913
    %v6573 = vmul.f32 %v6531, %v5926
    %v6574 = vmul.f32 %v6544, %v5939
    %v6575 = vmul.f32 %v6557, %v5952
    %v6576 = vmul.f32 %v6560, %v611
    %v6577 = vmul.f32 %v6561, %v612
    %v6578 = vmul.f32 %v6562, %v613
    %v6579 = vmul.f32 %v6563, %v614
    %v6580 = vmul.f32 %v6564, %v615
    %v6581 = vmul.f32 %v6565, %v616
    %v6582 = vmul.f32 %v6566, %v617
    %v6583 = vmul.f32 %v6567, %v618
    %v6584 = vmul.f32 %v6568, %v619
    %v6585 = vmul.f32 %v6569, %v620
    %v6586 = vmul.f32 %v6570, %v621
    %v6587 = vmul.f32 %v6571, %v622
    %v6588 = vmul.f32 %v6572, %v623
    %v6589 = vmul.f32 %v6573, %v624
    %v6590 = vmul.f32 %v6574, %v625
    %v6591 = vmul.f32 %v6575, %v626
    %v6592 = vld [vmem:[%s19] sm:$0xff]
    %6594 = vset.pattern.permute.xlu0 0
    %6595 = vperm.xlu0 %6594, %v6592
    %v6596 = vpop.permute.xlu0 %6595
    %v6598 = vmul.f32 %v6596, %v183
    %v6599 = vmul.f32 %v6596, %v184
    %v6600 = vmul.f32 %v6596, %v185
    %v6601 = vmul.f32 %v6596, %v186
    %v6602 = vmul.f32 %v6596, %v187
    %v6603 = vmul.f32 %v6596, %v188
    %v6604 = vmul.f32 %v6596, %v189
    %v6605 = vmul.f32 %v6596, %v190
    %v6606 = vmul.f32 %v6596, %v191
    %v6607 = vmul.f32 %v6596, %v192
    %v6608 = vmul.f32 %v6596, %v193
    %v6609 = vmul.f32 %v6596, %v194
    %v6610 = vmul.f32 %v6596, %v195
    %v6611 = vmul.f32 %v6596, %v196
    %v6612 = vmul.f32 %v6596, %v197
    %v6613 = vmul.f32 %v6596, %v198
    %v6614 = vld [vmem:[%s18] sm:$0xf]
    %v6615 = vpack.c.bf16 %v6576, %v6576
    %v6616 = vpack.c.bf16 %v6577, %v6577
    %v6617 = vpack.c.bf16 %v6578, %v6578
    %v6618 = vpack.c.bf16 %v6579, %v6579
    %v6619 = vpack.c.bf16 %v6580, %v6580
    %v6620 = vpack.c.bf16 %v6581, %v6581
    %v6621 = vpack.c.bf16 %v6582, %v6582
    %v6622 = vpack.c.bf16 %v6583, %v6583
    %v6623 = vpack.c.bf16 %v6584, %v6584
    %v6624 = vpack.c.bf16 %v6585, %v6585
    %v6625 = vpack.c.bf16 %v6586, %v6586
    %v6626 = vpack.c.bf16 %v6587, %v6587
    %v6627 = vpack.c.bf16 %v6588, %v6588
    %v6628 = vpack.c.bf16 %v6589, %v6589
    %v6629 = vpack.c.bf16 %v6590, %v6590
    %v6630 = vpack.c.bf16 %v6591, %v6591
    %v6632 = vsel %vm222, %v6614, 0
    %v6635 = vsel %vm226, %v6615, 0
    %v6638 = vsel %vm226, %v6616, 0
    %v6641 = vsel %vm226, %v6617, 0
    %v6644 = vsel %vm226, %v6618, 0
    %v6647 = vsel %vm226, %v6619, 0
    %v6650 = vsel %vm226, %v6620, 0
    %v6653 = vsel %vm226, %v6621, 0
    %v6656 = vsel %vm226, %v6622, 0
    %v6659 = vsel %vm226, %v6623, 0
    %v6662 = vsel %vm226, %v6624, 0
    %v6665 = vsel %vm226, %v6625, 0
    %v6668 = vsel %vm226, %v6626, 0
    %v6671 = vsel %vm226, %v6627, 0
    %v6674 = vsel %vm226, %v6628, 0
    %v6677 = vsel %vm226, %v6629, 0
    %v6680 = vsel %vm226, %v6630, 0
    %6682 = vmatpush.bf16.msra.mxu0 0
    %6683 = vmatpush.bf16.msra.mxu0 0
    %6684 = vmatpush.bf16.msra.mxu0 0
    %6685 = vmatpush.bf16.msra.mxu0 0
    %6686 = vmatpush.bf16.msra.mxu0 0
    %6687 = vmatpush.bf16.msra.mxu0 0
    %6688 = vmatpush.bf16.msra.mxu0 0
    %6689 = vmatpush.bf16.msra.mxu0 %v6635
    %6690 = vmatmul.bf16.gmra.mxu0 %v6632
    %v6691 = vpop.f32.mrf.mxu0
    %v6692 = vadd.f32 0.0, %v6691
    %v6693 = vpop.f32.mrf.mxu0
    %6694 = vdwg.mxu0
    %6695 = vmatpush.bf16.msra.mxu0 0
    %6696 = vmatpush.bf16.msra.mxu0 0
    %6697 = vmatpush.bf16.msra.mxu0 0
    %6698 = vmatpush.bf16.msra.mxu0 0
    %6699 = vmatpush.bf16.msra.mxu0 0
    %6700 = vmatpush.bf16.msra.mxu0 0
    %6701 = vmatpush.bf16.msra.mxu0 0
    %6702 = vmatpush.bf16.msra.mxu0 %v6638
    %6703 = vmatmul.bf16.gmra.mxu0 %v6632
    %v6704 = vpop.f32.mrf.mxu0
    %v6705 = vadd.f32 0.0, %v6704
    %v6706 = vpop.f32.mrf.mxu0
    %6707 = vdwg.mxu0
    %6708 = vmatpush.bf16.msra.mxu0 0
    %6709 = vmatpush.bf16.msra.mxu0 0
    %6710 = vmatpush.bf16.msra.mxu0 0
    %6711 = vmatpush.bf16.msra.mxu0 0
    %6712 = vmatpush.bf16.msra.mxu0 0
    %6713 = vmatpush.bf16.msra.mxu0 0
    %6714 = vmatpush.bf16.msra.mxu0 0
    %6715 = vmatpush.bf16.msra.mxu0 %v6641
    %6716 = vmatmul.bf16.gmra.mxu0 %v6632
    %v6717 = vpop.f32.mrf.mxu0
    %v6718 = vadd.f32 0.0, %v6717
    %v6719 = vpop.f32.mrf.mxu0
    %6720 = vdwg.mxu0
    %6721 = vmatpush.bf16.msra.mxu0 0
    %6722 = vmatpush.bf16.msra.mxu0 0
    %6723 = vmatpush.bf16.msra.mxu0 0
    %6724 = vmatpush.bf16.msra.mxu0 0
    %6725 = vmatpush.bf16.msra.mxu0 0
    %6726 = vmatpush.bf16.msra.mxu0 0
    %6727 = vmatpush.bf16.msra.mxu0 0
    %6728 = vmatpush.bf16.msra.mxu0 %v6644
    %6729 = vmatmul.bf16.gmra.mxu0 %v6632
    %v6730 = vpop.f32.mrf.mxu0
    %v6731 = vadd.f32 0.0, %v6730
    %v6732 = vpop.f32.mrf.mxu0
    %6733 = vdwg.mxu0
    %6734 = vmatpush.bf16.msra.mxu0 0
    %6735 = vmatpush.bf16.msra.mxu0 0
    %6736 = vmatpush.bf16.msra.mxu0 0
    %6737 = vmatpush.bf16.msra.mxu0 0
    %6738 = vmatpush.bf16.msra.mxu0 0
    %6739 = vmatpush.bf16.msra.mxu0 0
    %6740 = vmatpush.bf16.msra.mxu0 0
    %6741 = vmatpush.bf16.msra.mxu0 %v6647
    %6742 = vmatmul.bf16.gmra.mxu0 %v6632
    %v6743 = vpop.f32.mrf.mxu0
    %v6744 = vadd.f32 0.0, %v6743
    %v6745 = vpop.f32.mrf.mxu0
    %6746 = vdwg.mxu0
    %6747 = vmatpush.bf16.msra.mxu0 0
    %6748 = vmatpush.bf16.msra.mxu0 0
    %6749 = vmatpush.bf16.msra.mxu0 0
    %6750 = vmatpush.bf16.msra.mxu0 0
    %6751 = vmatpush.bf16.msra.mxu0 0
    %6752 = vmatpush.bf16.msra.mxu0 0
    %6753 = vmatpush.bf16.msra.mxu0 0
    %6754 = vmatpush.bf16.msra.mxu0 %v6650
    %6755 = vmatmul.bf16.gmra.mxu0 %v6632
    %v6756 = vpop.f32.mrf.mxu0
    %v6757 = vadd.f32 0.0, %v6756
    %v6758 = vpop.f32.mrf.mxu0
    %6759 = vdwg.mxu0
    %6760 = vmatpush.bf16.msra.mxu0 0
    %6761 = vmatpush.bf16.msra.mxu0 0
    %6762 = vmatpush.bf16.msra.mxu0 0
    %6763 = vmatpush.bf16.msra.mxu0 0
    %6764 = vmatpush.bf16.msra.mxu0 0
    %6765 = vmatpush.bf16.msra.mxu0 0
    %6766 = vmatpush.bf16.msra.mxu0 0
    %6767 = vmatpush.bf16.msra.mxu0 %v6653
    %6768 = vmatmul.bf16.gmra.mxu0 %v6632
    %v6769 = vpop.f32.mrf.mxu0
    %v6770 = vadd.f32 0.0, %v6769
    %v6771 = vpop.f32.mrf.mxu0
    %6772 = vdwg.mxu0
    %6773 = vmatpush.bf16.msra.mxu0 0
    %6774 = vmatpush.bf16.msra.mxu0 0
    %6775 = vmatpush.bf16.msra.mxu0 0
    %6776 = vmatpush.bf16.msra.mxu0 0
    %6777 = vmatpush.bf16.msra.mxu0 0
    %6778 = vmatpush.bf16.msra.mxu0 0
    %6779 = vmatpush.bf16.msra.mxu0 0
    %6780 = vmatpush.bf16.msra.mxu0 %v6656
    %6781 = vmatmul.bf16.gmra.mxu0 %v6632
    %v6782 = vpop.f32.mrf.mxu0
    %v6783 = vadd.f32 0.0, %v6782
    %v6784 = vpop.f32.mrf.mxu0
    %6785 = vdwg.mxu0
    %6786 = vmatpush.bf16.msra.mxu0 0
    %6787 = vmatpush.bf16.msra.mxu0 0
    %6788 = vmatpush.bf16.msra.mxu0 0
    %6789 = vmatpush.bf16.msra.mxu0 0
    %6790 = vmatpush.bf16.msra.mxu0 0
    %6791 = vmatpush.bf16.msra.mxu0 0
    %6792 = vmatpush.bf16.msra.mxu0 0
    %6793 = vmatpush.bf16.msra.mxu0 %v6659
    %6794 = vmatmul.bf16.gmra.mxu0 %v6632
    %v6795 = vpop.f32.mrf.mxu0
    %v6796 = vadd.f32 0.0, %v6795
    %v6797 = vpop.f32.mrf.mxu0
    %6798 = vdwg.mxu0
    %6799 = vmatpush.bf16.msra.mxu0 0
    %6800 = vmatpush.bf16.msra.mxu0 0
    %6801 = vmatpush.bf16.msra.mxu0 0
    %6802 = vmatpush.bf16.msra.mxu0 0
    %6803 = vmatpush.bf16.msra.mxu0 0
    %6804 = vmatpush.bf16.msra.mxu0 0
    %6805 = vmatpush.bf16.msra.mxu0 0
    %6806 = vmatpush.bf16.msra.mxu0 %v6662
    %6807 = vmatmul.bf16.gmra.mxu0 %v6632
    %v6808 = vpop.f32.mrf.mxu0
    %v6809 = vadd.f32 0.0, %v6808
    %v6810 = vpop.f32.mrf.mxu0
    %6811 = vdwg.mxu0
    %6812 = vmatpush.bf16.msra.mxu0 0
    %6813 = vmatpush.bf16.msra.mxu0 0
    %6814 = vmatpush.bf16.msra.mxu0 0
    %6815 = vmatpush.bf16.msra.mxu0 0
    %6816 = vmatpush.bf16.msra.mxu0 0
    %6817 = vmatpush.bf16.msra.mxu0 0
    %6818 = vmatpush.bf16.msra.mxu0 0
    %6819 = vmatpush.bf16.msra.mxu0 %v6665
    %6820 = vmatmul.bf16.gmra.mxu0 %v6632
    %v6821 = vpop.f32.mrf.mxu0
    %v6822 = vadd.f32 0.0, %v6821
    %v6823 = vpop.f32.mrf.mxu0
    %6824 = vdwg.mxu0
    %6825 = vmatpush.bf16.msra.mxu0 0
    %6826 = vmatpush.bf16.msra.mxu0 0
    %6827 = vmatpush.bf16.msra.mxu0 0
    %6828 = vmatpush.bf16.msra.mxu0 0
    %6829 = vmatpush.bf16.msra.mxu0 0
    %6830 = vmatpush.bf16.msra.mxu0 0
    %6831 = vmatpush.bf16.msra.mxu0 0
    %6832 = vmatpush.bf16.msra.mxu0 %v6668
    %6833 = vmatmul.bf16.gmra.mxu0 %v6632
    %v6834 = vpop.f32.mrf.mxu0
    %v6835 = vadd.f32 0.0, %v6834
    %v6836 = vpop.f32.mrf.mxu0
    %6837 = vdwg.mxu0
    %6838 = vmatpush.bf16.msra.mxu0 0
    %6839 = vmatpush.bf16.msra.mxu0 0
    %6840 = vmatpush.bf16.msra.mxu0 0
    %6841 = vmatpush.bf16.msra.mxu0 0
    %6842 = vmatpush.bf16.msra.mxu0 0
    %6843 = vmatpush.bf16.msra.mxu0 0
    %6844 = vmatpush.bf16.msra.mxu0 0
    %6845 = vmatpush.bf16.msra.mxu0 %v6671
    %6846 = vmatmul.bf16.gmra.mxu0 %v6632
    %v6847 = vpop.f32.mrf.mxu0
    %v6848 = vadd.f32 0.0, %v6847
    %v6849 = vpop.f32.mrf.mxu0
    %6850 = vdwg.mxu0
    %6851 = vmatpush.bf16.msra.mxu0 0
    %6852 = vmatpush.bf16.msra.mxu0 0
    %6853 = vmatpush.bf16.msra.mxu0 0
    %6854 = vmatpush.bf16.msra.mxu0 0
    %6855 = vmatpush.bf16.msra.mxu0 0
    %6856 = vmatpush.bf16.msra.mxu0 0
    %6857 = vmatpush.bf16.msra.mxu0 0
    %6858 = vmatpush.bf16.msra.mxu0 %v6674
    %6859 = vmatmul.bf16.gmra.mxu0 %v6632
    %v6860 = vpop.f32.mrf.mxu0
    %v6861 = vadd.f32 0.0, %v6860
    %v6862 = vpop.f32.mrf.mxu0
    %6863 = vdwg.mxu0
    %6864 = vmatpush.bf16.msra.mxu0 0
    %6865 = vmatpush.bf16.msra.mxu0 0
    %6866 = vmatpush.bf16.msra.mxu0 0
    %6867 = vmatpush.bf16.msra.mxu0 0
    %6868 = vmatpush.bf16.msra.mxu0 0
    %6869 = vmatpush.bf16.msra.mxu0 0
    %6870 = vmatpush.bf16.msra.mxu0 0
    %6871 = vmatpush.bf16.msra.mxu0 %v6677
    %6872 = vmatmul.bf16.gmra.mxu0 %v6632
    %v6873 = vpop.f32.mrf.mxu0
    %v6874 = vadd.f32 0.0, %v6873
    %v6875 = vpop.f32.mrf.mxu0
    %6876 = vdwg.mxu0
    %6877 = vmatpush.bf16.msra.mxu0 0
    %6878 = vmatpush.bf16.msra.mxu0 0
    %6879 = vmatpush.bf16.msra.mxu0 0
    %6880 = vmatpush.bf16.msra.mxu0 0
    %6881 = vmatpush.bf16.msra.mxu0 0
    %6882 = vmatpush.bf16.msra.mxu0 0
    %6883 = vmatpush.bf16.msra.mxu0 0
    %6884 = vmatpush.bf16.msra.mxu0 %v6680
    %6885 = vmatmul.bf16.gmra.mxu0 %v6632
    %v6886 = vpop.f32.mrf.mxu0
    %v6887 = vadd.f32 0.0, %v6886
    %v6888 = vpop.f32.mrf.mxu0
    %6889 = vdwg.mxu0
    %v6890 = vadd.f32 %v6598, %v6692
    %v6891 = vadd.f32 %v6599, %v6705
    %v6892 = vadd.f32 %v6600, %v6718
    %v6893 = vadd.f32 %v6601, %v6731
    %v6894 = vadd.f32 %v6602, %v6744
    %v6895 = vadd.f32 %v6603, %v6757
    %v6896 = vadd.f32 %v6604, %v6770
    %v6897 = vadd.f32 %v6605, %v6783
    %v6898 = vadd.f32 %v6606, %v6796
    %v6899 = vadd.f32 %v6607, %v6809
    %v6900 = vadd.f32 %v6608, %v6822
    %v6901 = vadd.f32 %v6609, %v6835
    %v6902 = vadd.f32 %v6610, %v6848
    %v6903 = vadd.f32 %v6611, %v6861
    %v6904 = vadd.f32 %v6612, %v6874
    %v6905 = vadd.f32 %v6613, %v6887
    %v6906 = vld [vmem:[%s20] sm:$0xff]
    %6908 = vset.pattern.permute.xlu0 0
    %6909 = vperm.xlu0 %6908, %v6906
    %v6910 = vpop.permute.xlu0 %6909
    %v6912 = vadd.f32 %v6890, %v6910
    %v6913 = vadd.f32 %v6891, %v6910
    %v6914 = vadd.f32 %v6892, %v6910
    %v6915 = vadd.f32 %v6893, %v6910
    %v6916 = vadd.f32 %v6894, %v6910
    %v6917 = vadd.f32 %v6895, %v6910
    %v6918 = vadd.f32 %v6896, %v6910
    %v6919 = vadd.f32 %v6897, %v6910
    %v6920 = vadd.f32 %v6898, %v6910
    %v6921 = vadd.f32 %v6899, %v6910
    %v6922 = vadd.f32 %v6900, %v6910
    %v6923 = vadd.f32 %v6901, %v6910
    %v6924 = vadd.f32 %v6902, %v6910
    %v6925 = vadd.f32 %v6903, %v6910
    %v6926 = vadd.f32 %v6904, %v6910
    %v6927 = vadd.f32 %v6905, %v6910
    %v6928 = vld [vmem:[%s21] sm:$0xf]
    %v6929 = vld [vmem:[%s21 + $0x4] sm:$0xf]
    %v6930 = vld [vmem:[%s21 + $0x8] sm:$0xf]
    %v6931 = vld [vmem:[%s21 + $0xc] sm:$0xf]
    %v6932 = vpack.c.bf16 %v6912, %v6912
    %v6933 = vpack.c.bf16 %v6913, %v6913
    %v6934 = vpack.c.bf16 %v6914, %v6914
    %v6935 = vpack.c.bf16 %v6915, %v6915
    %v6936 = vpack.c.bf16 %v6916, %v6916
    %v6937 = vpack.c.bf16 %v6917, %v6917
    %v6938 = vpack.c.bf16 %v6918, %v6918
    %v6939 = vpack.c.bf16 %v6919, %v6919
    %v6940 = vpack.c.bf16 %v6920, %v6920
    %v6941 = vpack.c.bf16 %v6921, %v6921
    %v6942 = vpack.c.bf16 %v6922, %v6922
    %v6943 = vpack.c.bf16 %v6923, %v6923
    %v6944 = vpack.c.bf16 %v6924, %v6924
    %v6945 = vpack.c.bf16 %v6925, %v6925
    %v6946 = vpack.c.bf16 %v6926, %v6926
    %v6947 = vpack.c.bf16 %v6927, %v6927
    %v6948 = vld [vmem:[%s22] sm:$0xff]
    %v6949 = vld [vmem:[%s22 + $0x8] sm:$0xff]
    %v6950 = vld [vmem:[%s22 + $0x10] sm:$0xff]
    %v6951 = vld [vmem:[%s22 + $0x18] sm:$0xff]
    %6953 = vset.pattern.permute.xlu0 0
    %6954 = vperm.xlu0 %6953, %v6948
    %v6955 = vpop.permute.xlu0 %6954
    %6958 = vset.pattern.permute.xlu0 0
    %6959 = vperm.xlu0 %6958, %v6949
    %v6960 = vpop.permute.xlu0 %6959
    %6963 = vset.pattern.permute.xlu0 0
    %6964 = vperm.xlu0 %6963, %v6950
    %v6965 = vpop.permute.xlu0 %6964
    %6968 = vset.pattern.permute.xlu0 0
    %6969 = vperm.xlu0 %6968, %v6951
    %v6970 = vpop.permute.xlu0 %6969
    %v6976 = vunpack.c.l.b16 %v6928
    %v6977 = vunpack.c.l.b16 %v6929
    %v6978 = vunpack.c.l.b16 %v6930
    %v6979 = vunpack.c.l.b16 %v6931
    %v6980 = vpack.c.b16 %v6977, %v6976
    %v6981 = vpack.c.b16 %v6979, %v6978
    %v6983 = vsel %vm222, %v6980, 0
    %v6986 = vsel %vm222, %v6981, 0
    %v6989 = vsel %vm226, %v6932, 0
    %v6992 = vsel %vm226, %v6933, 0
    %v6995 = vsel %vm226, %v6934, 0
    %v6998 = vsel %vm226, %v6935, 0
    %v7001 = vsel %vm226, %v6936, 0
    %v7004 = vsel %vm226, %v6937, 0
    %v7007 = vsel %vm226, %v6938, 0
    %v7010 = vsel %vm226, %v6939, 0
    %v7013 = vsel %vm226, %v6940, 0
    %v7016 = vsel %vm226, %v6941, 0
    %v7019 = vsel %vm226, %v6942, 0
    %v7022 = vsel %vm226, %v6943, 0
    %v7025 = vsel %vm226, %v6944, 0
    %v7028 = vsel %vm226, %v6945, 0
    %v7031 = vsel %vm226, %v6946, 0
    %v7034 = vsel %vm226, %v6947, 0
    %7036 = vmatpush.bf16.msra.mxu0 0
    %7037 = vmatpush.bf16.msra.mxu0 0
    %7038 = vmatpush.bf16.msra.mxu0 0
    %7039 = vmatpush.bf16.msra.mxu0 0
    %7040 = vmatpush.bf16.msra.mxu0 0
    %7041 = vmatpush.bf16.msra.mxu0 0
    %7042 = vmatpush.bf16.msra.mxu0 0
    %7043 = vmatpush.bf16.msra.mxu0 %v6989
    %7044 = vmatmul.bf16.gmra.mxu0 %v6983
    %v7045 = vpop.f32.mrf.mxu0
    %v7046 = vadd.f32 %v6955, %v7045
    %v7047 = vpop.f32.mrf.mxu0
    %v7048 = vadd.f32 %v6960, %v7047
    %7049 = vmatmul.bf16.gmra.mxu0 %v6986
    %v7050 = vpop.f32.mrf.mxu0
    %v7051 = vadd.f32 %v6965, %v7050
    %v7052 = vpop.f32.mrf.mxu0
    %v7053 = vadd.f32 %v6970, %v7052
    %7054 = vdwg.mxu0
    %7055 = vmatpush.bf16.msra.mxu0 0
    %7056 = vmatpush.bf16.msra.mxu0 0
    %7057 = vmatpush.bf16.msra.mxu0 0
    %7058 = vmatpush.bf16.msra.mxu0 0
    %7059 = vmatpush.bf16.msra.mxu0 0
    %7060 = vmatpush.bf16.msra.mxu0 0
    %7061 = vmatpush.bf16.msra.mxu0 0
    %7062 = vmatpush.bf16.msra.mxu0 %v6992
    %7063 = vmatmul.bf16.gmra.mxu0 %v6983
    %v7064 = vpop.f32.mrf.mxu0
    %v7065 = vadd.f32 %v6955, %v7064
    %v7066 = vpop.f32.mrf.mxu0
    %v7067 = vadd.f32 %v6960, %v7066
    %7068 = vmatmul.bf16.gmra.mxu0 %v6986
    %v7069 = vpop.f32.mrf.mxu0
    %v7070 = vadd.f32 %v6965, %v7069
    %v7071 = vpop.f32.mrf.mxu0
    %v7072 = vadd.f32 %v6970, %v7071
    %7073 = vdwg.mxu0
    %7074 = vmatpush.bf16.msra.mxu0 0
    %7075 = vmatpush.bf16.msra.mxu0 0
    %7076 = vmatpush.bf16.msra.mxu0 0
    %7077 = vmatpush.bf16.msra.mxu0 0
    %7078 = vmatpush.bf16.msra.mxu0 0
    %7079 = vmatpush.bf16.msra.mxu0 0
    %7080 = vmatpush.bf16.msra.mxu0 0
    %7081 = vmatpush.bf16.msra.mxu0 %v6995
    %7082 = vmatmul.bf16.gmra.mxu0 %v6983
    %v7083 = vpop.f32.mrf.mxu0
    %v7084 = vadd.f32 %v6955, %v7083
    %v7085 = vpop.f32.mrf.mxu0
    %v7086 = vadd.f32 %v6960, %v7085
    %7087 = vmatmul.bf16.gmra.mxu0 %v6986
    %v7088 = vpop.f32.mrf.mxu0
    %v7089 = vadd.f32 %v6965, %v7088
    %v7090 = vpop.f32.mrf.mxu0
    %v7091 = vadd.f32 %v6970, %v7090
    %7092 = vdwg.mxu0
    %7093 = vmatpush.bf16.msra.mxu0 0
    %7094 = vmatpush.bf16.msra.mxu0 0
    %7095 = vmatpush.bf16.msra.mxu0 0
    %7096 = vmatpush.bf16.msra.mxu0 0
    %7097 = vmatpush.bf16.msra.mxu0 0
    %7098 = vmatpush.bf16.msra.mxu0 0
    %7099 = vmatpush.bf16.msra.mxu0 0
    %7100 = vmatpush.bf16.msra.mxu0 %v6998
    %7101 = vmatmul.bf16.gmra.mxu0 %v6983
    %v7102 = vpop.f32.mrf.mxu0
    %v7103 = vadd.f32 %v6955, %v7102
    %v7104 = vpop.f32.mrf.mxu0
    %v7105 = vadd.f32 %v6960, %v7104
    %7106 = vmatmul.bf16.gmra.mxu0 %v6986
    %v7107 = vpop.f32.mrf.mxu0
    %v7108 = vadd.f32 %v6965, %v7107
    %v7109 = vpop.f32.mrf.mxu0
    %v7110 = vadd.f32 %v6970, %v7109
    %7111 = vdwg.mxu0
    %7112 = vmatpush.bf16.msra.mxu0 0
    %7113 = vmatpush.bf16.msra.mxu0 0
    %7114 = vmatpush.bf16.msra.mxu0 0
    %7115 = vmatpush.bf16.msra.mxu0 0
    %7116 = vmatpush.bf16.msra.mxu0 0
    %7117 = vmatpush.bf16.msra.mxu0 0
    %7118 = vmatpush.bf16.msra.mxu0 0
    %7119 = vmatpush.bf16.msra.mxu0 %v7001
    %7120 = vmatmul.bf16.gmra.mxu0 %v6983
    %v7121 = vpop.f32.mrf.mxu0
    %v7122 = vadd.f32 %v6955, %v7121
    %v7123 = vpop.f32.mrf.mxu0
    %v7124 = vadd.f32 %v6960, %v7123
    %7125 = vmatmul.bf16.gmra.mxu0 %v6986
    %v7126 = vpop.f32.mrf.mxu0
    %v7127 = vadd.f32 %v6965, %v7126
    %v7128 = vpop.f32.mrf.mxu0
    %v7129 = vadd.f32 %v6970, %v7128
    %7130 = vdwg.mxu0
    %7131 = vmatpush.bf16.msra.mxu0 0
    %7132 = vmatpush.bf16.msra.mxu0 0
    %7133 = vmatpush.bf16.msra.mxu0 0
    %7134 = vmatpush.bf16.msra.mxu0 0
    %7135 = vmatpush.bf16.msra.mxu0 0
    %7136 = vmatpush.bf16.msra.mxu0 0
    %7137 = vmatpush.bf16.msra.mxu0 0
    %7138 = vmatpush.bf16.msra.mxu0 %v7004
    %7139 = vmatmul.bf16.gmra.mxu0 %v6983
    %v7140 = vpop.f32.mrf.mxu0
    %v7141 = vadd.f32 %v6955, %v7140
    %v7142 = vpop.f32.mrf.mxu0
    %v7143 = vadd.f32 %v6960, %v7142
    %7144 = vmatmul.bf16.gmra.mxu0 %v6986
    %v7145 = vpop.f32.mrf.mxu0
    %v7146 = vadd.f32 %v6965, %v7145
    %v7147 = vpop.f32.mrf.mxu0
    %v7148 = vadd.f32 %v6970, %v7147
    %7149 = vdwg.mxu0
    %7150 = vmatpush.bf16.msra.mxu0 0
    %7151 = vmatpush.bf16.msra.mxu0 0
    %7152 = vmatpush.bf16.msra.mxu0 0
    %7153 = vmatpush.bf16.msra.mxu0 0
    %7154 = vmatpush.bf16.msra.mxu0 0
    %7155 = vmatpush.bf16.msra.mxu0 0
    %7156 = vmatpush.bf16.msra.mxu0 0
    %7157 = vmatpush.bf16.msra.mxu0 %v7007
    %7158 = vmatmul.bf16.gmra.mxu0 %v6983
    %v7159 = vpop.f32.mrf.mxu0
    %v7160 = vadd.f32 %v6955, %v7159
    %v7161 = vpop.f32.mrf.mxu0
    %v7162 = vadd.f32 %v6960, %v7161
    %7163 = vmatmul.bf16.gmra.mxu0 %v6986
    %v7164 = vpop.f32.mrf.mxu0
    %v7165 = vadd.f32 %v6965, %v7164
    %v7166 = vpop.f32.mrf.mxu0
    %v7167 = vadd.f32 %v6970, %v7166
    %7168 = vdwg.mxu0
    %7169 = vmatpush.bf16.msra.mxu0 0
    %7170 = vmatpush.bf16.msra.mxu0 0
    %7171 = vmatpush.bf16.msra.mxu0 0
    %7172 = vmatpush.bf16.msra.mxu0 0
    %7173 = vmatpush.bf16.msra.mxu0 0
    %7174 = vmatpush.bf16.msra.mxu0 0
    %7175 = vmatpush.bf16.msra.mxu0 0
    %7176 = vmatpush.bf16.msra.mxu0 %v7010
    %7177 = vmatmul.bf16.gmra.mxu0 %v6983
    %v7178 = vpop.f32.mrf.mxu0
    %v7179 = vadd.f32 %v6955, %v7178
    %v7180 = vpop.f32.mrf.mxu0
    %v7181 = vadd.f32 %v6960, %v7180
    %7182 = vmatmul.bf16.gmra.mxu0 %v6986
    %v7183 = vpop.f32.mrf.mxu0
    %v7184 = vadd.f32 %v6965, %v7183
    %v7185 = vpop.f32.mrf.mxu0
    %v7186 = vadd.f32 %v6970, %v7185
    %7187 = vdwg.mxu0
    %7188 = vmatpush.bf16.msra.mxu0 0
    %7189 = vmatpush.bf16.msra.mxu0 0
    %7190 = vmatpush.bf16.msra.mxu0 0
    %7191 = vmatpush.bf16.msra.mxu0 0
    %7192 = vmatpush.bf16.msra.mxu0 0
    %7193 = vmatpush.bf16.msra.mxu0 0
    %7194 = vmatpush.bf16.msra.mxu0 0
    %7195 = vmatpush.bf16.msra.mxu0 %v7013
    %7196 = vmatmul.bf16.gmra.mxu0 %v6983
    %v7197 = vpop.f32.mrf.mxu0
    %v7198 = vadd.f32 %v6955, %v7197
    %v7199 = vpop.f32.mrf.mxu0
    %v7200 = vadd.f32 %v6960, %v7199
    %7201 = vmatmul.bf16.gmra.mxu0 %v6986
    %v7202 = vpop.f32.mrf.mxu0
    %v7203 = vadd.f32 %v6965, %v7202
    %v7204 = vpop.f32.mrf.mxu0
    %v7205 = vadd.f32 %v6970, %v7204
    %7206 = vdwg.mxu0
    %7207 = vmatpush.bf16.msra.mxu0 0
    %7208 = vmatpush.bf16.msra.mxu0 0
    %7209 = vmatpush.bf16.msra.mxu0 0
    %7210 = vmatpush.bf16.msra.mxu0 0
    %7211 = vmatpush.bf16.msra.mxu0 0
    %7212 = vmatpush.bf16.msra.mxu0 0
    %7213 = vmatpush.bf16.msra.mxu0 0
    %7214 = vmatpush.bf16.msra.mxu0 %v7016
    %7215 = vmatmul.bf16.gmra.mxu0 %v6983
    %v7216 = vpop.f32.mrf.mxu0
    %v7217 = vadd.f32 %v6955, %v7216
    %v7218 = vpop.f32.mrf.mxu0
    %v7219 = vadd.f32 %v6960, %v7218
    %7220 = vmatmul.bf16.gmra.mxu0 %v6986
    %v7221 = vpop.f32.mrf.mxu0
    %v7222 = vadd.f32 %v6965, %v7221
    %v7223 = vpop.f32.mrf.mxu0
    %v7224 = vadd.f32 %v6970, %v7223
    %7225 = vdwg.mxu0
    %7226 = vmatpush.bf16.msra.mxu0 0
    %7227 = vmatpush.bf16.msra.mxu0 0
    %7228 = vmatpush.bf16.msra.mxu0 0
    %7229 = vmatpush.bf16.msra.mxu0 0
    %7230 = vmatpush.bf16.msra.mxu0 0
    %7231 = vmatpush.bf16.msra.mxu0 0
    %7232 = vmatpush.bf16.msra.mxu0 0
    %7233 = vmatpush.bf16.msra.mxu0 %v7019
    %7234 = vmatmul.bf16.gmra.mxu0 %v6983
    %v7235 = vpop.f32.mrf.mxu0
    %v7236 = vadd.f32 %v6955, %v7235
    %v7237 = vpop.f32.mrf.mxu0
    %v7238 = vadd.f32 %v6960, %v7237
    %7239 = vmatmul.bf16.gmra.mxu0 %v6986
    %v7240 = vpop.f32.mrf.mxu0
    %v7241 = vadd.f32 %v6965, %v7240
    %v7242 = vpop.f32.mrf.mxu0
    %v7243 = vadd.f32 %v6970, %v7242
    %7244 = vdwg.mxu0
    %7245 = vmatpush.bf16.msra.mxu0 0
    %7246 = vmatpush.bf16.msra.mxu0 0
    %7247 = vmatpush.bf16.msra.mxu0 0
    %7248 = vmatpush.bf16.msra.mxu0 0
    %7249 = vmatpush.bf16.msra.mxu0 0
    %7250 = vmatpush.bf16.msra.mxu0 0
    %7251 = vmatpush.bf16.msra.mxu0 0
    %7252 = vmatpush.bf16.msra.mxu0 %v7022
    %7253 = vmatmul.bf16.gmra.mxu0 %v6983
    %v7254 = vpop.f32.mrf.mxu0
    %v7255 = vadd.f32 %v6955, %v7254
    %v7256 = vpop.f32.mrf.mxu0
    %v7257 = vadd.f32 %v6960, %v7256
    %7258 = vmatmul.bf16.gmra.mxu0 %v6986
    %v7259 = vpop.f32.mrf.mxu0
    %v7260 = vadd.f32 %v6965, %v7259
    %v7261 = vpop.f32.mrf.mxu0
    %v7262 = vadd.f32 %v6970, %v7261
    %7263 = vdwg.mxu0
    %7264 = vmatpush.bf16.msra.mxu0 0
    %7265 = vmatpush.bf16.msra.mxu0 0
    %7266 = vmatpush.bf16.msra.mxu0 0
    %7267 = vmatpush.bf16.msra.mxu0 0
    %7268 = vmatpush.bf16.msra.mxu0 0
    %7269 = vmatpush.bf16.msra.mxu0 0
    %7270 = vmatpush.bf16.msra.mxu0 0
    %7271 = vmatpush.bf16.msra.mxu0 %v7025
    %7272 = vmatmul.bf16.gmra.mxu0 %v6983
    %v7273 = vpop.f32.mrf.mxu0
    %v7274 = vadd.f32 %v6955, %v7273
    %v7275 = vpop.f32.mrf.mxu0
    %v7276 = vadd.f32 %v6960, %v7275
    %7277 = vmatmul.bf16.gmra.mxu0 %v6986
    %v7278 = vpop.f32.mrf.mxu0
    %v7279 = vadd.f32 %v6965, %v7278
    %v7280 = vpop.f32.mrf.mxu0
    %v7281 = vadd.f32 %v6970, %v7280
    %7282 = vdwg.mxu0
    %7283 = vmatpush.bf16.msra.mxu0 0
    %7284 = vmatpush.bf16.msra.mxu0 0
    %7285 = vmatpush.bf16.msra.mxu0 0
    %7286 = vmatpush.bf16.msra.mxu0 0
    %7287 = vmatpush.bf16.msra.mxu0 0
    %7288 = vmatpush.bf16.msra.mxu0 0
    %7289 = vmatpush.bf16.msra.mxu0 0
    %7290 = vmatpush.bf16.msra.mxu0 %v7028
    %7291 = vmatmul.bf16.gmra.mxu0 %v6983
    %v7292 = vpop.f32.mrf.mxu0
    %v7293 = vadd.f32 %v6955, %v7292
    %v7294 = vpop.f32.mrf.mxu0
    %v7295 = vadd.f32 %v6960, %v7294
    %7296 = vmatmul.bf16.gmra.mxu0 %v6986
    %v7297 = vpop.f32.mrf.mxu0
    %v7298 = vadd.f32 %v6965, %v7297
    %v7299 = vpop.f32.mrf.mxu0
    %v7300 = vadd.f32 %v6970, %v7299
    %7301 = vdwg.mxu0
    %7302 = vmatpush.bf16.msra.mxu0 0
    %7303 = vmatpush.bf16.msra.mxu0 0
    %7304 = vmatpush.bf16.msra.mxu0 0
    %7305 = vmatpush.bf16.msra.mxu0 0
    %7306 = vmatpush.bf16.msra.mxu0 0
    %7307 = vmatpush.bf16.msra.mxu0 0
    %7308 = vmatpush.bf16.msra.mxu0 0
    %7309 = vmatpush.bf16.msra.mxu0 %v7031
    %7310 = vmatmul.bf16.gmra.mxu0 %v6983
    %v7311 = vpop.f32.mrf.mxu0
    %v7312 = vadd.f32 %v6955, %v7311
    %v7313 = vpop.f32.mrf.mxu0
    %v7314 = vadd.f32 %v6960, %v7313
    %7315 = vmatmul.bf16.gmra.mxu0 %v6986
    %v7316 = vpop.f32.mrf.mxu0
    %v7317 = vadd.f32 %v6965, %v7316
    %v7318 = vpop.f32.mrf.mxu0
    %v7319 = vadd.f32 %v6970, %v7318
    %7320 = vdwg.mxu0
    %7321 = vmatpush.bf16.msra.mxu0 0
    %7322 = vmatpush.bf16.msra.mxu0 0
    %7323 = vmatpush.bf16.msra.mxu0 0
    %7324 = vmatpush.bf16.msra.mxu0 0
    %7325 = vmatpush.bf16.msra.mxu0 0
    %7326 = vmatpush.bf16.msra.mxu0 0
    %7327 = vmatpush.bf16.msra.mxu0 0
    %7328 = vmatpush.bf16.msra.mxu0 %v7034
    %7329 = vmatmul.bf16.gmra.mxu0 %v6983
    %v7330 = vpop.f32.mrf.mxu0
    %v7331 = vadd.f32 %v6955, %v7330
    %v7332 = vpop.f32.mrf.mxu0
    %v7333 = vadd.f32 %v6960, %v7332
    %7334 = vmatmul.bf16.gmra.mxu0 %v6986
    %v7335 = vpop.f32.mrf.mxu0
    %v7336 = vadd.f32 %v6965, %v7335
    %v7337 = vpop.f32.mrf.mxu0
    %v7338 = vadd.f32 %v6970, %v7337
    %7339 = vdwg.mxu0
    %v7340 = vld [vmem:[%s23] sm:$0xff]
    %v7341 = vld [vmem:[%s23 + $0x8] sm:$0xff]
    %v7342 = vld [vmem:[%s23 + $0x10] sm:$0xff]
    %v7343 = vld [vmem:[%s23 + $0x18] sm:$0xff]
    %7344 = vrot.lane.b32.xlu0 %v7046, 1
    %v7345 = vpop.permute.xlu0 %7344
    %7346 = vrot.lane.b32.xlu0 %v7048, 1
    %v7347 = vpop.permute.xlu0 %7346
    %7348 = vrot.lane.b32.xlu0 %v7051, 1
    %v7349 = vpop.permute.xlu0 %7348
    %7350 = vrot.lane.b32.xlu0 %v7053, 1
    %v7351 = vpop.permute.xlu0 %7350
    %7352 = vrot.lane.b32.xlu0 %v7065, 1
    %v7353 = vpop.permute.xlu0 %7352
    %7354 = vrot.lane.b32.xlu0 %v7067, 1
    %v7355 = vpop.permute.xlu0 %7354
    %7356 = vrot.lane.b32.xlu0 %v7070, 1
    %v7357 = vpop.permute.xlu0 %7356
    %7358 = vrot.lane.b32.xlu0 %v7072, 1
    %v7359 = vpop.permute.xlu0 %7358
    %7360 = vrot.lane.b32.xlu0 %v7084, 1
    %v7361 = vpop.permute.xlu0 %7360
    %7362 = vrot.lane.b32.xlu0 %v7086, 1
    %v7363 = vpop.permute.xlu0 %7362
    %7364 = vrot.lane.b32.xlu0 %v7089, 1
    %v7365 = vpop.permute.xlu0 %7364
    %7366 = vrot.lane.b32.xlu0 %v7091, 1
    %v7367 = vpop.permute.xlu0 %7366
    %7368 = vrot.lane.b32.xlu0 %v7103, 1
    %v7369 = vpop.permute.xlu0 %7368
    %7370 = vrot.lane.b32.xlu0 %v7105, 1
    %v7371 = vpop.permute.xlu0 %7370
    %7372 = vrot.lane.b32.xlu0 %v7108, 1
    %v7373 = vpop.permute.xlu0 %7372
    %7374 = vrot.lane.b32.xlu0 %v7110, 1
    %v7375 = vpop.permute.xlu0 %7374
    %7376 = vrot.lane.b32.xlu0 %v7122, 1
    %v7377 = vpop.permute.xlu0 %7376
    %7378 = vrot.lane.b32.xlu0 %v7124, 1
    %v7379 = vpop.permute.xlu0 %7378
    %7380 = vrot.lane.b32.xlu0 %v7127, 1
    %v7381 = vpop.permute.xlu0 %7380
    %7382 = vrot.lane.b32.xlu0 %v7129, 1
    %v7383 = vpop.permute.xlu0 %7382
    %7384 = vrot.lane.b32.xlu0 %v7141, 1
    %v7385 = vpop.permute.xlu0 %7384
    %7386 = vrot.lane.b32.xlu0 %v7143, 1
    %v7387 = vpop.permute.xlu0 %7386
    %7388 = vrot.lane.b32.xlu0 %v7146, 1
    %v7389 = vpop.permute.xlu0 %7388
    %7390 = vrot.lane.b32.xlu0 %v7148, 1
    %v7391 = vpop.permute.xlu0 %7390
    %7392 = vrot.lane.b32.xlu0 %v7160, 1
    %v7393 = vpop.permute.xlu0 %7392
    %7394 = vrot.lane.b32.xlu0 %v7162, 1
    %v7395 = vpop.permute.xlu0 %7394
    %7396 = vrot.lane.b32.xlu0 %v7165, 1
    %v7397 = vpop.permute.xlu0 %7396
    %7398 = vrot.lane.b32.xlu0 %v7167, 1
    %v7399 = vpop.permute.xlu0 %7398
    %7400 = vrot.lane.b32.xlu0 %v7179, 1
    %v7401 = vpop.permute.xlu0 %7400
    %7402 = vrot.lane.b32.xlu0 %v7181, 1
    %v7403 = vpop.permute.xlu0 %7402
    %7404 = vrot.lane.b32.xlu0 %v7184, 1
    %v7405 = vpop.permute.xlu0 %7404
    %7406 = vrot.lane.b32.xlu0 %v7186, 1
    %v7407 = vpop.permute.xlu0 %7406
    %7408 = vrot.lane.b32.xlu0 %v7198, 1
    %v7409 = vpop.permute.xlu0 %7408
    %7410 = vrot.lane.b32.xlu0 %v7200, 1
    %v7411 = vpop.permute.xlu0 %7410
    %7412 = vrot.lane.b32.xlu0 %v7203, 1
    %v7413 = vpop.permute.xlu0 %7412
    %7414 = vrot.lane.b32.xlu0 %v7205, 1
    %v7415 = vpop.permute.xlu0 %7414
    %7416 = vrot.lane.b32.xlu0 %v7217, 1
    %v7417 = vpop.permute.xlu0 %7416
    %7418 = vrot.lane.b32.xlu0 %v7219, 1
    %v7419 = vpop.permute.xlu0 %7418
    %7420 = vrot.lane.b32.xlu0 %v7222, 1
    %v7421 = vpop.permute.xlu0 %7420
    %7422 = vrot.lane.b32.xlu0 %v7224, 1
    %v7423 = vpop.permute.xlu0 %7422
    %7424 = vrot.lane.b32.xlu0 %v7236, 1
    %v7425 = vpop.permute.xlu0 %7424
    %7426 = vrot.lane.b32.xlu0 %v7238, 1
    %v7427 = vpop.permute.xlu0 %7426
    %7428 = vrot.lane.b32.xlu0 %v7241, 1
    %v7429 = vpop.permute.xlu0 %7428
    %7430 = vrot.lane.b32.xlu0 %v7243, 1
    %v7431 = vpop.permute.xlu0 %7430
    %7432 = vrot.lane.b32.xlu0 %v7255, 1
    %v7433 = vpop.permute.xlu0 %7432
    %7434 = vrot.lane.b32.xlu0 %v7257, 1
    %v7435 = vpop.permute.xlu0 %7434
    %7436 = vrot.lane.b32.xlu0 %v7260, 1
    %v7437 = vpop.permute.xlu0 %7436
    %7438 = vrot.lane.b32.xlu0 %v7262, 1
    %v7439 = vpop.permute.xlu0 %7438
    %7440 = vrot.lane.b32.xlu0 %v7274, 1
    %v7441 = vpop.permute.xlu0 %7440
    %7442 = vrot.lane.b32.xlu0 %v7276, 1
    %v7443 = vpop.permute.xlu0 %7442
    %7444 = vrot.lane.b32.xlu0 %v7279, 1
    %v7445 = vpop.permute.xlu0 %7444
    %7446 = vrot.lane.b32.xlu0 %v7281, 1
    %v7447 = vpop.permute.xlu0 %7446
    %7448 = vrot.lane.b32.xlu0 %v7293, 1
    %v7449 = vpop.permute.xlu0 %7448
    %7450 = vrot.lane.b32.xlu0 %v7295, 1
    %v7451 = vpop.permute.xlu0 %7450
    %7452 = vrot.lane.b32.xlu0 %v7298, 1
    %v7453 = vpop.permute.xlu0 %7452
    %7454 = vrot.lane.b32.xlu0 %v7300, 1
    %v7455 = vpop.permute.xlu0 %7454
    %7456 = vrot.lane.b32.xlu0 %v7312, 1
    %v7457 = vpop.permute.xlu0 %7456
    %7458 = vrot.lane.b32.xlu0 %v7314, 1
    %v7459 = vpop.permute.xlu0 %7458
    %7460 = vrot.lane.b32.xlu0 %v7317, 1
    %v7461 = vpop.permute.xlu0 %7460
    %7462 = vrot.lane.b32.xlu0 %v7319, 1
    %v7463 = vpop.permute.xlu0 %7462
    %7464 = vrot.lane.b32.xlu0 %v7331, 1
    %v7465 = vpop.permute.xlu0 %7464
    %7466 = vrot.lane.b32.xlu0 %v7333, 1
    %v7467 = vpop.permute.xlu0 %7466
    %7468 = vrot.lane.b32.xlu0 %v7336, 1
    %v7469 = vpop.permute.xlu0 %7468
    %7470 = vrot.lane.b32.xlu0 %v7338, 1
    %v7471 = vpop.permute.xlu0 %7470
    %v7472 = vsel %vm869, %v7457, %v7465
    %v7473 = vsel %vm869, %v7459, %v7467
    %v7474 = vsel %vm869, %v7461, %v7469
    %v7475 = vsel %vm869, %v7463, %v7471
    %v7476 = vsel %vm869, %v7449, %v7457
    %v7477 = vsel %vm869, %v7451, %v7459
    %v7478 = vsel %vm869, %v7453, %v7461
    %v7479 = vsel %vm869, %v7455, %v7463
    %v7480 = vsel %vm869, %v7441, %v7449
    %v7481 = vsel %vm869, %v7443, %v7451
    %v7482 = vsel %vm869, %v7445, %v7453
    %v7483 = vsel %vm869, %v7447, %v7455
    %v7484 = vsel %vm869, %v7433, %v7441
    %v7485 = vsel %vm869, %v7435, %v7443
    %v7486 = vsel %vm869, %v7437, %v7445
    %v7487 = vsel %vm869, %v7439, %v7447
    %v7488 = vsel %vm869, %v7425, %v7433
    %v7489 = vsel %vm869, %v7427, %v7435
    %v7490 = vsel %vm869, %v7429, %v7437
    %v7491 = vsel %vm869, %v7431, %v7439
    %v7492 = vsel %vm869, %v7417, %v7425
    %v7493 = vsel %vm869, %v7419, %v7427
    %v7494 = vsel %vm869, %v7421, %v7429
    %v7495 = vsel %vm869, %v7423, %v7431
    %v7496 = vsel %vm869, %v7409, %v7417
    %v7497 = vsel %vm869, %v7411, %v7419
    %v7498 = vsel %vm869, %v7413, %v7421
    %v7499 = vsel %vm869, %v7415, %v7423
    %v7500 = vsel %vm869, %v7401, %v7409
    %v7501 = vsel %vm869, %v7403, %v7411
    %v7502 = vsel %vm869, %v7405, %v7413
    %v7503 = vsel %vm869, %v7407, %v7415
    %v7504 = vsel %vm869, %v7393, %v7401
    %v7505 = vsel %vm869, %v7395, %v7403
    %v7506 = vsel %vm869, %v7397, %v7405
    %v7507 = vsel %vm869, %v7399, %v7407
    %v7508 = vsel %vm869, %v7385, %v7393
    %v7509 = vsel %vm869, %v7387, %v7395
    %v7510 = vsel %vm869, %v7389, %v7397
    %v7511 = vsel %vm869, %v7391, %v7399
    %v7512 = vsel %vm869, %v7377, %v7385
    %v7513 = vsel %vm869, %v7379, %v7387
    %v7514 = vsel %vm869, %v7381, %v7389
    %v7515 = vsel %vm869, %v7383, %v7391
    %v7516 = vsel %vm869, %v7369, %v7377
    %v7517 = vsel %vm869, %v7371, %v7379
    %v7518 = vsel %vm869, %v7373, %v7381
    %v7519 = vsel %vm869, %v7375, %v7383
    %v7520 = vsel %vm869, %v7361, %v7369
    %v7521 = vsel %vm869, %v7363, %v7371
    %v7522 = vsel %vm869, %v7365, %v7373
    %v7523 = vsel %vm869, %v7367, %v7375
    %v7524 = vsel %vm869, %v7353, %v7361
    %v7525 = vsel %vm869, %v7355, %v7363
    %v7526 = vsel %vm869, %v7357, %v7365
    %v7527 = vsel %vm869, %v7359, %v7367
    %v7528 = vsel %vm869, %v7345, %v7353
    %v7529 = vsel %vm869, %v7347, %v7355
    %v7530 = vsel %vm869, %v7349, %v7357
    %v7531 = vsel %vm869, %v7351, %v7359
    %v7532 = vsel %vm869, %v7465, %v7345
    %v7533 = vsel %vm869, %v7467, %v7347
    %v7534 = vsel %vm869, %v7469, %v7349
    %v7535 = vsel %vm869, %v7471, %v7351
    %v7536 = vld [vmem:[#allocation13] ss:$4 sm:$0xff]
    %s7537 = scalar_lea.vmem [#allocation13], 32
    %v7538 = vld [vmem:[%s7537] ss:$4 sm:$0xff]
    %v7541 = vperm.slane %v7536, 0
    %v7542 = vperm.slane %v7536, 1
    %v7543 = vperm.slane %v7536, 2
    %v7544 = vperm.slane %v7536, 3
    %v7545 = vperm.slane %v7536, 4
    %v7546 = vperm.slane %v7536, 5
    %v7547 = vperm.slane %v7536, 6
    %v7548 = vperm.slane %v7536, 7
    %v7549 = vperm.slane %v7538, 0
    %v7550 = vperm.slane %v7538, 1
    %v7551 = vperm.slane %v7538, 2
    %v7552 = vperm.slane %v7538, 3
    %v7553 = vperm.slane %v7538, 4
    %v7554 = vperm.slane %v7538, 5
    %v7555 = vperm.slane %v7538, 6
    %v7556 = vperm.slane %v7538, 7
    %v7573 = vmul.f32 %v7541, %v7532
    %v7574 = vmul.f32 %v7542, %v7528
    %v7575 = vmul.f32 %v7543, %v7524
    %v7576 = vmul.f32 %v7544, %v7520
    %v7577 = vmul.f32 %v7545, %v7516
    %v7578 = vmul.f32 %v7546, %v7512
    %v7579 = vmul.f32 %v7547, %v7508
    %v7580 = vmul.f32 %v7548, %v7504
    %v7581 = vmul.f32 %v7549, %v7500
    %v7582 = vmul.f32 %v7550, %v7496
    %v7583 = vmul.f32 %v7551, %v7492
    %v7584 = vmul.f32 %v7552, %v7488
    %v7585 = vmul.f32 %v7553, %v7484
    %v7586 = vmul.f32 %v7554, %v7480
    %v7587 = vmul.f32 %v7555, %v7476
    %v7588 = vmul.f32 %v7556, %v7472
    %v7589 = vmul.f32 %v7541, %v7533
    %v7590 = vmul.f32 %v7542, %v7529
    %v7591 = vmul.f32 %v7543, %v7525
    %v7592 = vmul.f32 %v7544, %v7521
    %v7593 = vmul.f32 %v7545, %v7517
    %v7594 = vmul.f32 %v7546, %v7513
    %v7595 = vmul.f32 %v7547, %v7509
    %v7596 = vmul.f32 %v7548, %v7505
    %v7597 = vmul.f32 %v7549, %v7501
    %v7598 = vmul.f32 %v7550, %v7497
    %v7599 = vmul.f32 %v7551, %v7493
    %v7600 = vmul.f32 %v7552, %v7489
    %v7601 = vmul.f32 %v7553, %v7485
    %v7602 = vmul.f32 %v7554, %v7481
    %v7603 = vmul.f32 %v7555, %v7477
    %v7604 = vmul.f32 %v7556, %v7473
    %v7605 = vmul.f32 %v7541, %v7534
    %v7606 = vmul.f32 %v7542, %v7530
    %v7607 = vmul.f32 %v7543, %v7526
    %v7608 = vmul.f32 %v7544, %v7522
    %v7609 = vmul.f32 %v7545, %v7518
    %v7610 = vmul.f32 %v7546, %v7514
    %v7611 = vmul.f32 %v7547, %v7510
    %v7612 = vmul.f32 %v7548, %v7506
    %v7613 = vmul.f32 %v7549, %v7502
    %v7614 = vmul.f32 %v7550, %v7498
    %v7615 = vmul.f32 %v7551, %v7494
    %v7616 = vmul.f32 %v7552, %v7490
    %v7617 = vmul.f32 %v7553, %v7486
    %v7618 = vmul.f32 %v7554, %v7482
    %v7619 = vmul.f32 %v7555, %v7478
    %v7620 = vmul.f32 %v7556, %v7474
    %v7621 = vmul.f32 %v7541, %v7535
    %v7622 = vmul.f32 %v7542, %v7531
    %v7623 = vmul.f32 %v7543, %v7527
    %v7624 = vmul.f32 %v7544, %v7523
    %v7625 = vmul.f32 %v7545, %v7519
    %v7626 = vmul.f32 %v7546, %v7515
    %v7627 = vmul.f32 %v7547, %v7511
    %v7628 = vmul.f32 %v7548, %v7507
    %v7629 = vmul.f32 %v7549, %v7503
    %v7630 = vmul.f32 %v7550, %v7499
    %v7631 = vmul.f32 %v7551, %v7495
    %v7632 = vmul.f32 %v7552, %v7491
    %v7633 = vmul.f32 %v7553, %v7487
    %v7634 = vmul.f32 %v7554, %v7483
    %v7635 = vmul.f32 %v7555, %v7479
    %v7636 = vmul.f32 %v7556, %v7475
    %7638 = vset.pattern.permute.xlu0 0
    %7639 = vperm.xlu0 %7638, %v7340
    %v7640 = vpop.permute.xlu0 %7639
    %7643 = vset.pattern.permute.xlu0 0
    %7644 = vperm.xlu0 %7643, %v7341
    %v7645 = vpop.permute.xlu0 %7644
    %7648 = vset.pattern.permute.xlu0 0
    %7649 = vperm.xlu0 %7648, %v7342
    %v7650 = vpop.permute.xlu0 %7649
    %7653 = vset.pattern.permute.xlu0 0
    %7654 = vperm.xlu0 %7653, %v7343
    %v7655 = vpop.permute.xlu0 %7654
    %v7657 = vmul.f32 %v7640, %v7573
    %v7658 = vmul.f32 %v7640, %v7574
    %v7659 = vmul.f32 %v7640, %v7575
    %v7660 = vmul.f32 %v7640, %v7576
    %v7661 = vmul.f32 %v7640, %v7577
    %v7662 = vmul.f32 %v7640, %v7578
    %v7663 = vmul.f32 %v7640, %v7579
    %v7664 = vmul.f32 %v7640, %v7580
    %v7665 = vmul.f32 %v7640, %v7581
    %v7666 = vmul.f32 %v7640, %v7582
    %v7667 = vmul.f32 %v7640, %v7583
    %v7668 = vmul.f32 %v7640, %v7584
    %v7669 = vmul.f32 %v7640, %v7585
    %v7670 = vmul.f32 %v7640, %v7586
    %v7671 = vmul.f32 %v7640, %v7587
    %v7672 = vmul.f32 %v7640, %v7588
    %v7673 = vmul.f32 %v7645, %v7589
    %v7674 = vmul.f32 %v7645, %v7590
    %v7675 = vmul.f32 %v7645, %v7591
    %v7676 = vmul.f32 %v7645, %v7592
    %v7677 = vmul.f32 %v7645, %v7593
    %v7678 = vmul.f32 %v7645, %v7594
    %v7679 = vmul.f32 %v7645, %v7595
    %v7680 = vmul.f32 %v7645, %v7596
    %v7681 = vmul.f32 %v7645, %v7597
    %v7682 = vmul.f32 %v7645, %v7598
    %v7683 = vmul.f32 %v7645, %v7599
    %v7684 = vmul.f32 %v7645, %v7600
    %v7685 = vmul.f32 %v7645, %v7601
    %v7686 = vmul.f32 %v7645, %v7602
    %v7687 = vmul.f32 %v7645, %v7603
    %v7688 = vmul.f32 %v7645, %v7604
    %v7689 = vmul.f32 %v7650, %v7605
    %v7690 = vmul.f32 %v7650, %v7606
    %v7691 = vmul.f32 %v7650, %v7607
    %v7692 = vmul.f32 %v7650, %v7608
    %v7693 = vmul.f32 %v7650, %v7609
    %v7694 = vmul.f32 %v7650, %v7610
    %v7695 = vmul.f32 %v7650, %v7611
    %v7696 = vmul.f32 %v7650, %v7612
    %v7697 = vmul.f32 %v7650, %v7613
    %v7698 = vmul.f32 %v7650, %v7614
    %v7699 = vmul.f32 %v7650, %v7615
    %v7700 = vmul.f32 %v7650, %v7616
    %v7701 = vmul.f32 %v7650, %v7617
    %v7702 = vmul.f32 %v7650, %v7618
    %v7703 = vmul.f32 %v7650, %v7619
    %v7704 = vmul.f32 %v7650, %v7620
    %v7705 = vmul.f32 %v7655, %v7621
    %v7706 = vmul.f32 %v7655, %v7622
    %v7707 = vmul.f32 %v7655, %v7623
    %v7708 = vmul.f32 %v7655, %v7624
    %v7709 = vmul.f32 %v7655, %v7625
    %v7710 = vmul.f32 %v7655, %v7626
    %v7711 = vmul.f32 %v7655, %v7627
    %v7712 = vmul.f32 %v7655, %v7628
    %v7713 = vmul.f32 %v7655, %v7629
    %v7714 = vmul.f32 %v7655, %v7630
    %v7715 = vmul.f32 %v7655, %v7631
    %v7716 = vmul.f32 %v7655, %v7632
    %v7717 = vmul.f32 %v7655, %v7633
    %v7718 = vmul.f32 %v7655, %v7634
    %v7719 = vmul.f32 %v7655, %v7635
    %v7720 = vmul.f32 %v7655, %v7636
    %7721 = vset.pattern.permute.xlu0 3
    %7722 = vperm.xlu0 %7721, %v7340
    %v7723 = vpop.permute.xlu0 %7722
    %7725 = vset.pattern.permute.xlu0 3
    %7726 = vperm.xlu0 %7725, %v7341
    %v7727 = vpop.permute.xlu0 %7726
    %7729 = vset.pattern.permute.xlu0 3
    %7730 = vperm.xlu0 %7729, %v7342
    %v7731 = vpop.permute.xlu0 %7730
    %7733 = vset.pattern.permute.xlu0 3
    %7734 = vperm.xlu0 %7733, %v7343
    %v7735 = vpop.permute.xlu0 %7734
    %v7737 = vmul.f32 %v7723, %v7573
    %v7738 = vmul.f32 %v7723, %v7574
    %v7739 = vmul.f32 %v7723, %v7575
    %v7740 = vmul.f32 %v7723, %v7576
    %v7741 = vmul.f32 %v7723, %v7577
    %v7742 = vmul.f32 %v7723, %v7578
    %v7743 = vmul.f32 %v7723, %v7579
    %v7744 = vmul.f32 %v7723, %v7580
    %v7745 = vmul.f32 %v7723, %v7581
    %v7746 = vmul.f32 %v7723, %v7582
    %v7747 = vmul.f32 %v7723, %v7583
    %v7748 = vmul.f32 %v7723, %v7584
    %v7749 = vmul.f32 %v7723, %v7585
    %v7750 = vmul.f32 %v7723, %v7586
    %v7751 = vmul.f32 %v7723, %v7587
    %v7752 = vmul.f32 %v7723, %v7588
    %v7753 = vmul.f32 %v7727, %v7589
    %v7754 = vmul.f32 %v7727, %v7590
    %v7755 = vmul.f32 %v7727, %v7591
    %v7756 = vmul.f32 %v7727, %v7592
    %v7757 = vmul.f32 %v7727, %v7593
    %v7758 = vmul.f32 %v7727, %v7594
    %v7759 = vmul.f32 %v7727, %v7595
    %v7760 = vmul.f32 %v7727, %v7596
    %v7761 = vmul.f32 %v7727, %v7597
    %v7762 = vmul.f32 %v7727, %v7598
    %v7763 = vmul.f32 %v7727, %v7599
    %v7764 = vmul.f32 %v7727, %v7600
    %v7765 = vmul.f32 %v7727, %v7601
    %v7766 = vmul.f32 %v7727, %v7602
    %v7767 = vmul.f32 %v7727, %v7603
    %v7768 = vmul.f32 %v7727, %v7604
    %v7769 = vmul.f32 %v7731, %v7605
    %v7770 = vmul.f32 %v7731, %v7606
    %v7771 = vmul.f32 %v7731, %v7607
    %v7772 = vmul.f32 %v7731, %v7608
    %v7773 = vmul.f32 %v7731, %v7609
    %v7774 = vmul.f32 %v7731, %v7610
    %v7775 = vmul.f32 %v7731, %v7611
    %v7776 = vmul.f32 %v7731, %v7612
    %v7777 = vmul.f32 %v7731, %v7613
    %v7778 = vmul.f32 %v7731, %v7614
    %v7779 = vmul.f32 %v7731, %v7615
    %v7780 = vmul.f32 %v7731, %v7616
    %v7781 = vmul.f32 %v7731, %v7617
    %v7782 = vmul.f32 %v7731, %v7618
    %v7783 = vmul.f32 %v7731, %v7619
    %v7784 = vmul.f32 %v7731, %v7620
    %v7785 = vmul.f32 %v7735, %v7621
    %v7786 = vmul.f32 %v7735, %v7622
    %v7787 = vmul.f32 %v7735, %v7623
    %v7788 = vmul.f32 %v7735, %v7624
    %v7789 = vmul.f32 %v7735, %v7625
    %v7790 = vmul.f32 %v7735, %v7626
    %v7791 = vmul.f32 %v7735, %v7627
    %v7792 = vmul.f32 %v7735, %v7628
    %v7793 = vmul.f32 %v7735, %v7629
    %v7794 = vmul.f32 %v7735, %v7630
    %v7795 = vmul.f32 %v7735, %v7631
    %v7796 = vmul.f32 %v7735, %v7632
    %v7797 = vmul.f32 %v7735, %v7633
    %v7798 = vmul.f32 %v7735, %v7634
    %v7799 = vmul.f32 %v7735, %v7635
    %v7800 = vmul.f32 %v7735, %v7636
    %7801 = vset.pattern.permute.xlu0 6
    %7802 = vperm.xlu0 %7801, %v7340
    %v7803 = vpop.permute.xlu0 %7802
    %7805 = vset.pattern.permute.xlu0 6
    %7806 = vperm.xlu0 %7805, %v7341
    %v7807 = vpop.permute.xlu0 %7806
    %7809 = vset.pattern.permute.xlu0 6
    %7810 = vperm.xlu0 %7809, %v7342
    %v7811 = vpop.permute.xlu0 %7810
    %7813 = vset.pattern.permute.xlu0 6
    %7814 = vperm.xlu0 %7813, %v7343
    %v7815 = vpop.permute.xlu0 %7814
    %v7817 = vmul.f32 %v7803, %v7573
    %v7818 = vmul.f32 %v7803, %v7574
    %v7819 = vmul.f32 %v7803, %v7575
    %v7820 = vmul.f32 %v7803, %v7576
    %v7821 = vmul.f32 %v7803, %v7577
    %v7822 = vmul.f32 %v7803, %v7578
    %v7823 = vmul.f32 %v7803, %v7579
    %v7824 = vmul.f32 %v7803, %v7580
    %v7825 = vmul.f32 %v7803, %v7581
    %v7826 = vmul.f32 %v7803, %v7582
    %v7827 = vmul.f32 %v7803, %v7583
    %v7828 = vmul.f32 %v7803, %v7584
    %v7829 = vmul.f32 %v7803, %v7585
    %v7830 = vmul.f32 %v7803, %v7586
    %v7831 = vmul.f32 %v7803, %v7587
    %v7832 = vmul.f32 %v7803, %v7588
    %v7833 = vmul.f32 %v7807, %v7589
    %v7834 = vmul.f32 %v7807, %v7590
    %v7835 = vmul.f32 %v7807, %v7591
    %v7836 = vmul.f32 %v7807, %v7592
    %v7837 = vmul.f32 %v7807, %v7593
    %v7838 = vmul.f32 %v7807, %v7594
    %v7839 = vmul.f32 %v7807, %v7595
    %v7840 = vmul.f32 %v7807, %v7596
    %v7841 = vmul.f32 %v7807, %v7597
    %v7842 = vmul.f32 %v7807, %v7598
    %v7843 = vmul.f32 %v7807, %v7599
    %v7844 = vmul.f32 %v7807, %v7600
    %v7845 = vmul.f32 %v7807, %v7601
    %v7846 = vmul.f32 %v7807, %v7602
    %v7847 = vmul.f32 %v7807, %v7603
    %v7848 = vmul.f32 %v7807, %v7604
    %v7849 = vmul.f32 %v7811, %v7605
    %v7850 = vmul.f32 %v7811, %v7606
    %v7851 = vmul.f32 %v7811, %v7607
    %v7852 = vmul.f32 %v7811, %v7608
    %v7853 = vmul.f32 %v7811, %v7609
    %v7854 = vmul.f32 %v7811, %v7610
    %v7855 = vmul.f32 %v7811, %v7611
    %v7856 = vmul.f32 %v7811, %v7612
    %v7857 = vmul.f32 %v7811, %v7613
    %v7858 = vmul.f32 %v7811, %v7614
    %v7859 = vmul.f32 %v7811, %v7615
    %v7860 = vmul.f32 %v7811, %v7616
    %v7861 = vmul.f32 %v7811, %v7617
    %v7862 = vmul.f32 %v7811, %v7618
    %v7863 = vmul.f32 %v7811, %v7619
    %v7864 = vmul.f32 %v7811, %v7620
    %v7865 = vmul.f32 %v7815, %v7621
    %v7866 = vmul.f32 %v7815, %v7622
    %v7867 = vmul.f32 %v7815, %v7623
    %v7868 = vmul.f32 %v7815, %v7624
    %v7869 = vmul.f32 %v7815, %v7625
    %v7870 = vmul.f32 %v7815, %v7626
    %v7871 = vmul.f32 %v7815, %v7627
    %v7872 = vmul.f32 %v7815, %v7628
    %v7873 = vmul.f32 %v7815, %v7629
    %v7874 = vmul.f32 %v7815, %v7630
    %v7875 = vmul.f32 %v7815, %v7631
    %v7876 = vmul.f32 %v7815, %v7632
    %v7877 = vmul.f32 %v7815, %v7633
    %v7878 = vmul.f32 %v7815, %v7634
    %v7879 = vmul.f32 %v7815, %v7635
    %v7880 = vmul.f32 %v7815, %v7636
    %s7881 = scalar_lea.vmem [#allocation13], 1
    %v7882 = vld [vmem:[%s7881] ss:$4 sm:$0xff]
    %s7883 = scalar_lea.vmem [#allocation13], 33
    %v7884 = vld [vmem:[%s7883] ss:$4 sm:$0xff]
    %v7887 = vperm.slane %v7882, 0
    %v7888 = vperm.slane %v7882, 1
    %v7889 = vperm.slane %v7882, 2
    %v7890 = vperm.slane %v7882, 3
    %v7891 = vperm.slane %v7882, 4
    %v7892 = vperm.slane %v7882, 5
    %v7893 = vperm.slane %v7882, 6
    %v7894 = vperm.slane %v7882, 7
    %v7895 = vperm.slane %v7884, 0
    %v7896 = vperm.slane %v7884, 1
    %v7897 = vperm.slane %v7884, 2
    %v7898 = vperm.slane %v7884, 3
    %v7899 = vperm.slane %v7884, 4
    %v7900 = vperm.slane %v7884, 5
    %v7901 = vperm.slane %v7884, 6
    %v7902 = vperm.slane %v7884, 7
    %v7919 = vmul.f32 %v7887, %v7046
    %v7920 = vmul.f32 %v7888, %v7065
    %v7921 = vmul.f32 %v7889, %v7084
    %v7922 = vmul.f32 %v7890, %v7103
    %v7923 = vmul.f32 %v7891, %v7122
    %v7924 = vmul.f32 %v7892, %v7141
    %v7925 = vmul.f32 %v7893, %v7160
    %v7926 = vmul.f32 %v7894, %v7179
    %v7927 = vmul.f32 %v7895, %v7198
    %v7928 = vmul.f32 %v7896, %v7217
    %v7929 = vmul.f32 %v7897, %v7236
    %v7930 = vmul.f32 %v7898, %v7255
    %v7931 = vmul.f32 %v7899, %v7274
    %v7932 = vmul.f32 %v7900, %v7293
    %v7933 = vmul.f32 %v7901, %v7312
    %v7934 = vmul.f32 %v7902, %v7331
    %v7935 = vmul.f32 %v7887, %v7048
    %v7936 = vmul.f32 %v7888, %v7067
    %v7937 = vmul.f32 %v7889, %v7086
    %v7938 = vmul.f32 %v7890, %v7105
    %v7939 = vmul.f32 %v7891, %v7124
    %v7940 = vmul.f32 %v7892, %v7143
    %v7941 = vmul.f32 %v7893, %v7162
    %v7942 = vmul.f32 %v7894, %v7181
    %v7943 = vmul.f32 %v7895, %v7200
    %v7944 = vmul.f32 %v7896, %v7219
    %v7945 = vmul.f32 %v7897, %v7238
    %v7946 = vmul.f32 %v7898, %v7257
    %v7947 = vmul.f32 %v7899, %v7276
    %v7948 = vmul.f32 %v7900, %v7295
    %v7949 = vmul.f32 %v7901, %v7314
    %v7950 = vmul.f32 %v7902, %v7333
    %v7951 = vmul.f32 %v7887, %v7051
    %v7952 = vmul.f32 %v7888, %v7070
    %v7953 = vmul.f32 %v7889, %v7089
    %v7954 = vmul.f32 %v7890, %v7108
    %v7955 = vmul.f32 %v7891, %v7127
    %v7956 = vmul.f32 %v7892, %v7146
    %v7957 = vmul.f32 %v7893, %v7165
    %v7958 = vmul.f32 %v7894, %v7184
    %v7959 = vmul.f32 %v7895, %v7203
    %v7960 = vmul.f32 %v7896, %v7222
    %v7961 = vmul.f32 %v7897, %v7241
    %v7962 = vmul.f32 %v7898, %v7260
    %v7963 = vmul.f32 %v7899, %v7279
    %v7964 = vmul.f32 %v7900, %v7298
    %v7965 = vmul.f32 %v7901, %v7317
    %v7966 = vmul.f32 %v7902, %v7336
    %v7967 = vmul.f32 %v7887, %v7053
    %v7968 = vmul.f32 %v7888, %v7072
    %v7969 = vmul.f32 %v7889, %v7091
    %v7970 = vmul.f32 %v7890, %v7110
    %v7971 = vmul.f32 %v7891, %v7129
    %v7972 = vmul.f32 %v7892, %v7148
    %v7973 = vmul.f32 %v7893, %v7167
    %v7974 = vmul.f32 %v7894, %v7186
    %v7975 = vmul.f32 %v7895, %v7205
    %v7976 = vmul.f32 %v7896, %v7224
    %v7977 = vmul.f32 %v7897, %v7243
    %v7978 = vmul.f32 %v7898, %v7262
    %v7979 = vmul.f32 %v7899, %v7281
    %v7980 = vmul.f32 %v7900, %v7300
    %v7981 = vmul.f32 %v7901, %v7319
    %v7982 = vmul.f32 %v7902, %v7338
    %7983 = vset.pattern.permute.xlu0 1
    %7984 = vperm.xlu0 %7983, %v7340
    %v7985 = vpop.permute.xlu0 %7984
    %7987 = vset.pattern.permute.xlu0 1
    %7988 = vperm.xlu0 %7987, %v7341
    %v7989 = vpop.permute.xlu0 %7988
    %7991 = vset.pattern.permute.xlu0 1
    %7992 = vperm.xlu0 %7991, %v7342
    %v7993 = vpop.permute.xlu0 %7992
    %7995 = vset.pattern.permute.xlu0 1
    %7996 = vperm.xlu0 %7995, %v7343
    %v7997 = vpop.permute.xlu0 %7996
    %v7999 = vmul.f32 %v7985, %v7919
    %v8000 = vmul.f32 %v7985, %v7920
    %v8001 = vmul.f32 %v7985, %v7921
    %v8002 = vmul.f32 %v7985, %v7922
    %v8003 = vmul.f32 %v7985, %v7923
    %v8004 = vmul.f32 %v7985, %v7924
    %v8005 = vmul.f32 %v7985, %v7925
    %v8006 = vmul.f32 %v7985, %v7926
    %v8007 = vmul.f32 %v7985, %v7927
    %v8008 = vmul.f32 %v7985, %v7928
    %v8009 = vmul.f32 %v7985, %v7929
    %v8010 = vmul.f32 %v7985, %v7930
    %v8011 = vmul.f32 %v7985, %v7931
    %v8012 = vmul.f32 %v7985, %v7932
    %v8013 = vmul.f32 %v7985, %v7933
    %v8014 = vmul.f32 %v7985, %v7934
    %v8015 = vmul.f32 %v7989, %v7935
    %v8016 = vmul.f32 %v7989, %v7936
    %v8017 = vmul.f32 %v7989, %v7937
    %v8018 = vmul.f32 %v7989, %v7938
    %v8019 = vmul.f32 %v7989, %v7939
    %v8020 = vmul.f32 %v7989, %v7940
    %v8021 = vmul.f32 %v7989, %v7941
    %v8022 = vmul.f32 %v7989, %v7942
    %v8023 = vmul.f32 %v7989, %v7943
    %v8024 = vmul.f32 %v7989, %v7944
    %v8025 = vmul.f32 %v7989, %v7945
    %v8026 = vmul.f32 %v7989, %v7946
    %v8027 = vmul.f32 %v7989, %v7947
    %v8028 = vmul.f32 %v7989, %v7948
    %v8029 = vmul.f32 %v7989, %v7949
    %v8030 = vmul.f32 %v7989, %v7950
    %v8031 = vmul.f32 %v7993, %v7951
    %v8032 = vmul.f32 %v7993, %v7952
    %v8033 = vmul.f32 %v7993, %v7953
    %v8034 = vmul.f32 %v7993, %v7954
    %v8035 = vmul.f32 %v7993, %v7955
    %v8036 = vmul.f32 %v7993, %v7956
    %v8037 = vmul.f32 %v7993, %v7957
    %v8038 = vmul.f32 %v7993, %v7958
    %v8039 = vmul.f32 %v7993, %v7959
    %v8040 = vmul.f32 %v7993, %v7960
    %v8041 = vmul.f32 %v7993, %v7961
    %v8042 = vmul.f32 %v7993, %v7962
    %v8043 = vmul.f32 %v7993, %v7963
    %v8044 = vmul.f32 %v7993, %v7964
    %v8045 = vmul.f32 %v7993, %v7965
    %v8046 = vmul.f32 %v7993, %v7966
    %v8047 = vmul.f32 %v7997, %v7967
    %v8048 = vmul.f32 %v7997, %v7968
    %v8049 = vmul.f32 %v7997, %v7969
    %v8050 = vmul.f32 %v7997, %v7970
    %v8051 = vmul.f32 %v7997, %v7971
    %v8052 = vmul.f32 %v7997, %v7972
    %v8053 = vmul.f32 %v7997, %v7973
    %v8054 = vmul.f32 %v7997, %v7974
    %v8055 = vmul.f32 %v7997, %v7975
    %v8056 = vmul.f32 %v7997, %v7976
    %v8057 = vmul.f32 %v7997, %v7977
    %v8058 = vmul.f32 %v7997, %v7978
    %v8059 = vmul.f32 %v7997, %v7979
    %v8060 = vmul.f32 %v7997, %v7980
    %v8061 = vmul.f32 %v7997, %v7981
    %v8062 = vmul.f32 %v7997, %v7982
    %v8063 = vadd.f32 %v7657, %v7999
    %v8064 = vadd.f32 %v7658, %v8000
    %v8065 = vadd.f32 %v7659, %v8001
    %v8066 = vadd.f32 %v7660, %v8002
    %v8067 = vadd.f32 %v7661, %v8003
    %v8068 = vadd.f32 %v7662, %v8004
    %v8069 = vadd.f32 %v7663, %v8005
    %v8070 = vadd.f32 %v7664, %v8006
    %v8071 = vadd.f32 %v7665, %v8007
    %v8072 = vadd.f32 %v7666, %v8008
    %v8073 = vadd.f32 %v7667, %v8009
    %v8074 = vadd.f32 %v7668, %v8010
    %v8075 = vadd.f32 %v7669, %v8011
    %v8076 = vadd.f32 %v7670, %v8012
    %v8077 = vadd.f32 %v7671, %v8013
    %v8078 = vadd.f32 %v7672, %v8014
    %v8079 = vadd.f32 %v7673, %v8015
    %v8080 = vadd.f32 %v7674, %v8016
    %v8081 = vadd.f32 %v7675, %v8017
    %v8082 = vadd.f32 %v7676, %v8018
    %v8083 = vadd.f32 %v7677, %v8019
    %v8084 = vadd.f32 %v7678, %v8020
    %v8085 = vadd.f32 %v7679, %v8021
    %v8086 = vadd.f32 %v7680, %v8022
    %v8087 = vadd.f32 %v7681, %v8023
    %v8088 = vadd.f32 %v7682, %v8024
    %v8089 = vadd.f32 %v7683, %v8025
    %v8090 = vadd.f32 %v7684, %v8026
    %v8091 = vadd.f32 %v7685, %v8027
    %v8092 = vadd.f32 %v7686, %v8028
    %v8093 = vadd.f32 %v7687, %v8029
    %v8094 = vadd.f32 %v7688, %v8030
    %v8095 = vadd.f32 %v7689, %v8031
    %v8096 = vadd.f32 %v7690, %v8032
    %v8097 = vadd.f32 %v7691, %v8033
    %v8098 = vadd.f32 %v7692, %v8034
    %v8099 = vadd.f32 %v7693, %v8035
    %v8100 = vadd.f32 %v7694, %v8036
    %v8101 = vadd.f32 %v7695, %v8037
    %v8102 = vadd.f32 %v7696, %v8038
    %v8103 = vadd.f32 %v7697, %v8039
    %v8104 = vadd.f32 %v7698, %v8040
    %v8105 = vadd.f32 %v7699, %v8041
    %v8106 = vadd.f32 %v7700, %v8042
    %v8107 = vadd.f32 %v7701, %v8043
    %v8108 = vadd.f32 %v7702, %v8044
    %v8109 = vadd.f32 %v7703, %v8045
    %v8110 = vadd.f32 %v7704, %v8046
    %v8111 = vadd.f32 %v7705, %v8047
    %v8112 = vadd.f32 %v7706, %v8048
    %v8113 = vadd.f32 %v7707, %v8049
    %v8114 = vadd.f32 %v7708, %v8050
    %v8115 = vadd.f32 %v7709, %v8051
    %v8116 = vadd.f32 %v7710, %v8052
    %v8117 = vadd.f32 %v7711, %v8053
    %v8118 = vadd.f32 %v7712, %v8054
    %v8119 = vadd.f32 %v7713, %v8055
    %v8120 = vadd.f32 %v7714, %v8056
    %v8121 = vadd.f32 %v7715, %v8057
    %v8122 = vadd.f32 %v7716, %v8058
    %v8123 = vadd.f32 %v7717, %v8059
    %v8124 = vadd.f32 %v7718, %v8060
    %v8125 = vadd.f32 %v7719, %v8061
    %v8126 = vadd.f32 %v7720, %v8062
    %8127 = vset.pattern.permute.xlu0 4
    %8128 = vperm.xlu0 %8127, %v7340
    %v8129 = vpop.permute.xlu0 %8128
    %8131 = vset.pattern.permute.xlu0 4
    %8132 = vperm.xlu0 %8131, %v7341
    %v8133 = vpop.permute.xlu0 %8132
    %8135 = vset.pattern.permute.xlu0 4
    %8136 = vperm.xlu0 %8135, %v7342
    %v8137 = vpop.permute.xlu0 %8136
    %8139 = vset.pattern.permute.xlu0 4
    %8140 = vperm.xlu0 %8139, %v7343
    %v8141 = vpop.permute.xlu0 %8140
    %v8143 = vmul.f32 %v8129, %v7919
    %v8144 = vmul.f32 %v8129, %v7920
    %v8145 = vmul.f32 %v8129, %v7921
    %v8146 = vmul.f32 %v8129, %v7922
    %v8147 = vmul.f32 %v8129, %v7923
    %v8148 = vmul.f32 %v8129, %v7924
    %v8149 = vmul.f32 %v8129, %v7925
    %v8150 = vmul.f32 %v8129, %v7926
    %v8151 = vmul.f32 %v8129, %v7927
    %v8152 = vmul.f32 %v8129, %v7928
    %v8153 = vmul.f32 %v8129, %v7929
    %v8154 = vmul.f32 %v8129, %v7930
    %v8155 = vmul.f32 %v8129, %v7931
    %v8156 = vmul.f32 %v8129, %v7932
    %v8157 = vmul.f32 %v8129, %v7933
    %v8158 = vmul.f32 %v8129, %v7934
    %v8159 = vmul.f32 %v8133, %v7935
    %v8160 = vmul.f32 %v8133, %v7936
    %v8161 = vmul.f32 %v8133, %v7937
    %v8162 = vmul.f32 %v8133, %v7938
    %v8163 = vmul.f32 %v8133, %v7939
    %v8164 = vmul.f32 %v8133, %v7940
    %v8165 = vmul.f32 %v8133, %v7941
    %v8166 = vmul.f32 %v8133, %v7942
    %v8167 = vmul.f32 %v8133, %v7943
    %v8168 = vmul.f32 %v8133, %v7944
    %v8169 = vmul.f32 %v8133, %v7945
    %v8170 = vmul.f32 %v8133, %v7946
    %v8171 = vmul.f32 %v8133, %v7947
    %v8172 = vmul.f32 %v8133, %v7948
    %v8173 = vmul.f32 %v8133, %v7949
    %v8174 = vmul.f32 %v8133, %v7950
    %v8175 = vmul.f32 %v8137, %v7951
    %v8176 = vmul.f32 %v8137, %v7952
    %v8177 = vmul.f32 %v8137, %v7953
    %v8178 = vmul.f32 %v8137, %v7954
    %v8179 = vmul.f32 %v8137, %v7955
    %v8180 = vmul.f32 %v8137, %v7956
    %v8181 = vmul.f32 %v8137, %v7957
    %v8182 = vmul.f32 %v8137, %v7958
    %v8183 = vmul.f32 %v8137, %v7959
    %v8184 = vmul.f32 %v8137, %v7960
    %v8185 = vmul.f32 %v8137, %v7961
    %v8186 = vmul.f32 %v8137, %v7962
    %v8187 = vmul.f32 %v8137, %v7963
    %v8188 = vmul.f32 %v8137, %v7964
    %v8189 = vmul.f32 %v8137, %v7965
    %v8190 = vmul.f32 %v8137, %v7966
    %v8191 = vmul.f32 %v8141, %v7967
    %v8192 = vmul.f32 %v8141, %v7968
    %v8193 = vmul.f32 %v8141, %v7969
    %v8194 = vmul.f32 %v8141, %v7970
    %v8195 = vmul.f32 %v8141, %v7971
    %v8196 = vmul.f32 %v8141, %v7972
    %v8197 = vmul.f32 %v8141, %v7973
    %v8198 = vmul.f32 %v8141, %v7974
    %v8199 = vmul.f32 %v8141, %v7975
    %v8200 = vmul.f32 %v8141, %v7976
    %v8201 = vmul.f32 %v8141, %v7977
    %v8202 = vmul.f32 %v8141, %v7978
    %v8203 = vmul.f32 %v8141, %v7979
    %v8204 = vmul.f32 %v8141, %v7980
    %v8205 = vmul.f32 %v8141, %v7981
    %v8206 = vmul.f32 %v8141, %v7982
    %v8207 = vadd.f32 %v7737, %v8143
    %v8208 = vadd.f32 %v7738, %v8144
    %v8209 = vadd.f32 %v7739, %v8145
    %v8210 = vadd.f32 %v7740, %v8146
    %v8211 = vadd.f32 %v7741, %v8147
    %v8212 = vadd.f32 %v7742, %v8148
    %v8213 = vadd.f32 %v7743, %v8149
    %v8214 = vadd.f32 %v7744, %v8150
    %v8215 = vadd.f32 %v7745, %v8151
    %v8216 = vadd.f32 %v7746, %v8152
    %v8217 = vadd.f32 %v7747, %v8153
    %v8218 = vadd.f32 %v7748, %v8154
    %v8219 = vadd.f32 %v7749, %v8155
    %v8220 = vadd.f32 %v7750, %v8156
    %v8221 = vadd.f32 %v7751, %v8157
    %v8222 = vadd.f32 %v7752, %v8158
    %v8223 = vadd.f32 %v7753, %v8159
    %v8224 = vadd.f32 %v7754, %v8160
    %v8225 = vadd.f32 %v7755, %v8161
    %v8226 = vadd.f32 %v7756, %v8162
    %v8227 = vadd.f32 %v7757, %v8163
    %v8228 = vadd.f32 %v7758, %v8164
    %v8229 = vadd.f32 %v7759, %v8165
    %v8230 = vadd.f32 %v7760, %v8166
    %v8231 = vadd.f32 %v7761, %v8167
    %v8232 = vadd.f32 %v7762, %v8168
    %v8233 = vadd.f32 %v7763, %v8169
    %v8234 = vadd.f32 %v7764, %v8170
    %v8235 = vadd.f32 %v7765, %v8171
    %v8236 = vadd.f32 %v7766, %v8172
    %v8237 = vadd.f32 %v7767, %v8173
    %v8238 = vadd.f32 %v7768, %v8174
    %v8239 = vadd.f32 %v7769, %v8175
    %v8240 = vadd.f32 %v7770, %v8176
    %v8241 = vadd.f32 %v7771, %v8177
    %v8242 = vadd.f32 %v7772, %v8178
    %v8243 = vadd.f32 %v7773, %v8179
    %v8244 = vadd.f32 %v7774, %v8180
    %v8245 = vadd.f32 %v7775, %v8181
    %v8246 = vadd.f32 %v7776, %v8182
    %v8247 = vadd.f32 %v7777, %v8183
    %v8248 = vadd.f32 %v7778, %v8184
    %v8249 = vadd.f32 %v7779, %v8185
    %v8250 = vadd.f32 %v7780, %v8186
    %v8251 = vadd.f32 %v7781, %v8187
    %v8252 = vadd.f32 %v7782, %v8188
    %v8253 = vadd.f32 %v7783, %v8189
    %v8254 = vadd.f32 %v7784, %v8190
    %v8255 = vadd.f32 %v7785, %v8191
    %v8256 = vadd.f32 %v7786, %v8192
    %v8257 = vadd.f32 %v7787, %v8193
    %v8258 = vadd.f32 %v7788, %v8194
    %v8259 = vadd.f32 %v7789, %v8195
    %v8260 = vadd.f32 %v7790, %v8196
    %v8261 = vadd.f32 %v7791, %v8197
    %v8262 = vadd.f32 %v7792, %v8198
    %v8263 = vadd.f32 %v7793, %v8199
    %v8264 = vadd.f32 %v7794, %v8200
    %v8265 = vadd.f32 %v7795, %v8201
    %v8266 = vadd.f32 %v7796, %v8202
    %v8267 = vadd.f32 %v7797, %v8203
    %v8268 = vadd.f32 %v7798, %v8204
    %v8269 = vadd.f32 %v7799, %v8205
    %v8270 = vadd.f32 %v7800, %v8206
    %8271 = vset.pattern.permute.xlu0 7
    %8272 = vperm.xlu0 %8271, %v7340
    %v8273 = vpop.permute.xlu0 %8272
    %8275 = vset.pattern.permute.xlu0 7
    %8276 = vperm.xlu0 %8275, %v7341
    %v8277 = vpop.permute.xlu0 %8276
    %8279 = vset.pattern.permute.xlu0 7
    %8280 = vperm.xlu0 %8279, %v7342
    %v8281 = vpop.permute.xlu0 %8280
    %8283 = vset.pattern.permute.xlu0 7
    %8284 = vperm.xlu0 %8283, %v7343
    %v8285 = vpop.permute.xlu0 %8284
    %v8287 = vmul.f32 %v8273, %v7919
    %v8288 = vmul.f32 %v8273, %v7920
    %v8289 = vmul.f32 %v8273, %v7921
    %v8290 = vmul.f32 %v8273, %v7922
    %v8291 = vmul.f32 %v8273, %v7923
    %v8292 = vmul.f32 %v8273, %v7924
    %v8293 = vmul.f32 %v8273, %v7925
    %v8294 = vmul.f32 %v8273, %v7926
    %v8295 = vmul.f32 %v8273, %v7927
    %v8296 = vmul.f32 %v8273, %v7928
    %v8297 = vmul.f32 %v8273, %v7929
    %v8298 = vmul.f32 %v8273, %v7930
    %v8299 = vmul.f32 %v8273, %v7931
    %v8300 = vmul.f32 %v8273, %v7932
    %v8301 = vmul.f32 %v8273, %v7933
    %v8302 = vmul.f32 %v8273, %v7934
    %v8303 = vmul.f32 %v8277, %v7935
    %v8304 = vmul.f32 %v8277, %v7936
    %v8305 = vmul.f32 %v8277, %v7937
    %v8306 = vmul.f32 %v8277, %v7938
    %v8307 = vmul.f32 %v8277, %v7939
    %v8308 = vmul.f32 %v8277, %v7940
    %v8309 = vmul.f32 %v8277, %v7941
    %v8310 = vmul.f32 %v8277, %v7942
    %v8311 = vmul.f32 %v8277, %v7943
    %v8312 = vmul.f32 %v8277, %v7944
    %v8313 = vmul.f32 %v8277, %v7945
    %v8314 = vmul.f32 %v8277, %v7946
    %v8315 = vmul.f32 %v8277, %v7947
    %v8316 = vmul.f32 %v8277, %v7948
    %v8317 = vmul.f32 %v8277, %v7949
    %v8318 = vmul.f32 %v8277, %v7950
    %v8319 = vmul.f32 %v8281, %v7951
    %v8320 = vmul.f32 %v8281, %v7952
    %v8321 = vmul.f32 %v8281, %v7953
    %v8322 = vmul.f32 %v8281, %v7954
    %v8323 = vmul.f32 %v8281, %v7955
    %v8324 = vmul.f32 %v8281, %v7956
    %v8325 = vmul.f32 %v8281, %v7957
    %v8326 = vmul.f32 %v8281, %v7958
    %v8327 = vmul.f32 %v8281, %v7959
    %v8328 = vmul.f32 %v8281, %v7960
    %v8329 = vmul.f32 %v8281, %v7961
    %v8330 = vmul.f32 %v8281, %v7962
    %v8331 = vmul.f32 %v8281, %v7963
    %v8332 = vmul.f32 %v8281, %v7964
    %v8333 = vmul.f32 %v8281, %v7965
    %v8334 = vmul.f32 %v8281, %v7966
    %v8335 = vmul.f32 %v8285, %v7967
    %v8336 = vmul.f32 %v8285, %v7968
    %v8337 = vmul.f32 %v8285, %v7969
    %v8338 = vmul.f32 %v8285, %v7970
    %v8339 = vmul.f32 %v8285, %v7971
    %v8340 = vmul.f32 %v8285, %v7972
    %v8341 = vmul.f32 %v8285, %v7973
    %v8342 = vmul.f32 %v8285, %v7974
    %v8343 = vmul.f32 %v8285, %v7975
    %v8344 = vmul.f32 %v8285, %v7976
    %v8345 = vmul.f32 %v8285, %v7977
    %v8346 = vmul.f32 %v8285, %v7978
    %v8347 = vmul.f32 %v8285, %v7979
    %v8348 = vmul.f32 %v8285, %v7980
    %v8349 = vmul.f32 %v8285, %v7981
    %v8350 = vmul.f32 %v8285, %v7982
    %v8351 = vadd.f32 %v7817, %v8287
    %v8352 = vadd.f32 %v7818, %v8288
    %v8353 = vadd.f32 %v7819, %v8289
    %v8354 = vadd.f32 %v7820, %v8290
    %v8355 = vadd.f32 %v7821, %v8291
    %v8356 = vadd.f32 %v7822, %v8292
    %v8357 = vadd.f32 %v7823, %v8293
    %v8358 = vadd.f32 %v7824, %v8294
    %v8359 = vadd.f32 %v7825, %v8295
    %v8360 = vadd.f32 %v7826, %v8296
    %v8361 = vadd.f32 %v7827, %v8297
    %v8362 = vadd.f32 %v7828, %v8298
    %v8363 = vadd.f32 %v7829, %v8299
    %v8364 = vadd.f32 %v7830, %v8300
    %v8365 = vadd.f32 %v7831, %v8301
    %v8366 = vadd.f32 %v7832, %v8302
    %v8367 = vadd.f32 %v7833, %v8303
    %v8368 = vadd.f32 %v7834, %v8304
    %v8369 = vadd.f32 %v7835, %v8305
    %v8370 = vadd.f32 %v7836, %v8306
    %v8371 = vadd.f32 %v7837, %v8307
    %v8372 = vadd.f32 %v7838, %v8308
    %v8373 = vadd.f32 %v7839, %v8309
    %v8374 = vadd.f32 %v7840, %v8310
    %v8375 = vadd.f32 %v7841, %v8311
    %v8376 = vadd.f32 %v7842, %v8312
    %v8377 = vadd.f32 %v7843, %v8313
    %v8378 = vadd.f32 %v7844, %v8314
    %v8379 = vadd.f32 %v7845, %v8315
    %v8380 = vadd.f32 %v7846, %v8316
    %v8381 = vadd.f32 %v7847, %v8317
    %v8382 = vadd.f32 %v7848, %v8318
    %v8383 = vadd.f32 %v7849, %v8319
    %v8384 = vadd.f32 %v7850, %v8320
    %v8385 = vadd.f32 %v7851, %v8321
    %v8386 = vadd.f32 %v7852, %v8322
    %v8387 = vadd.f32 %v7853, %v8323
    %v8388 = vadd.f32 %v7854, %v8324
    %v8389 = vadd.f32 %v7855, %v8325
    %v8390 = vadd.f32 %v7856, %v8326
    %v8391 = vadd.f32 %v7857, %v8327
    %v8392 = vadd.f32 %v7858, %v8328
    %v8393 = vadd.f32 %v7859, %v8329
    %v8394 = vadd.f32 %v7860, %v8330
    %v8395 = vadd.f32 %v7861, %v8331
    %v8396 = vadd.f32 %v7862, %v8332
    %v8397 = vadd.f32 %v7863, %v8333
    %v8398 = vadd.f32 %v7864, %v8334
    %v8399 = vadd.f32 %v7865, %v8335
    %v8400 = vadd.f32 %v7866, %v8336
    %v8401 = vadd.f32 %v7867, %v8337
    %v8402 = vadd.f32 %v7868, %v8338
    %v8403 = vadd.f32 %v7869, %v8339
    %v8404 = vadd.f32 %v7870, %v8340
    %v8405 = vadd.f32 %v7871, %v8341
    %v8406 = vadd.f32 %v7872, %v8342
    %v8407 = vadd.f32 %v7873, %v8343
    %v8408 = vadd.f32 %v7874, %v8344
    %v8409 = vadd.f32 %v7875, %v8345
    %v8410 = vadd.f32 %v7876, %v8346
    %v8411 = vadd.f32 %v7877, %v8347
    %v8412 = vadd.f32 %v7878, %v8348
    %v8413 = vadd.f32 %v7879, %v8349
    %v8414 = vadd.f32 %v7880, %v8350
    %8415 = vrot.lane.b32.xlu0 %v7046, 127
    %v8416 = vpop.permute.xlu0 %8415
    %8417 = vrot.lane.b32.xlu0 %v7048, 127
    %v8418 = vpop.permute.xlu0 %8417
    %8419 = vrot.lane.b32.xlu0 %v7051, 127
    %v8420 = vpop.permute.xlu0 %8419
    %8421 = vrot.lane.b32.xlu0 %v7053, 127
    %v8422 = vpop.permute.xlu0 %8421
    %8423 = vrot.lane.b32.xlu0 %v7065, 127
    %v8424 = vpop.permute.xlu0 %8423
    %8425 = vrot.lane.b32.xlu0 %v7067, 127
    %v8426 = vpop.permute.xlu0 %8425
    %8427 = vrot.lane.b32.xlu0 %v7070, 127
    %v8428 = vpop.permute.xlu0 %8427
    %8429 = vrot.lane.b32.xlu0 %v7072, 127
    %v8430 = vpop.permute.xlu0 %8429
    %8431 = vrot.lane.b32.xlu0 %v7084, 127
    %v8432 = vpop.permute.xlu0 %8431
    %8433 = vrot.lane.b32.xlu0 %v7086, 127
    %v8434 = vpop.permute.xlu0 %8433
    %8435 = vrot.lane.b32.xlu0 %v7089, 127
    %v8436 = vpop.permute.xlu0 %8435
    %8437 = vrot.lane.b32.xlu0 %v7091, 127
    %v8438 = vpop.permute.xlu0 %8437
    %8439 = vrot.lane.b32.xlu0 %v7103, 127
    %v8440 = vpop.permute.xlu0 %8439
    %8441 = vrot.lane.b32.xlu0 %v7105, 127
    %v8442 = vpop.permute.xlu0 %8441
    %8443 = vrot.lane.b32.xlu0 %v7108, 127
    %v8444 = vpop.permute.xlu0 %8443
    %8445 = vrot.lane.b32.xlu0 %v7110, 127
    %v8446 = vpop.permute.xlu0 %8445
    %8447 = vrot.lane.b32.xlu0 %v7122, 127
    %v8448 = vpop.permute.xlu0 %8447
    %8449 = vrot.lane.b32.xlu0 %v7124, 127
    %v8450 = vpop.permute.xlu0 %8449
    %8451 = vrot.lane.b32.xlu0 %v7127, 127
    %v8452 = vpop.permute.xlu0 %8451
    %8453 = vrot.lane.b32.xlu0 %v7129, 127
    %v8454 = vpop.permute.xlu0 %8453
    %8455 = vrot.lane.b32.xlu0 %v7141, 127
    %v8456 = vpop.permute.xlu0 %8455
    %8457 = vrot.lane.b32.xlu0 %v7143, 127
    %v8458 = vpop.permute.xlu0 %8457
    %8459 = vrot.lane.b32.xlu0 %v7146, 127
    %v8460 = vpop.permute.xlu0 %8459
    %8461 = vrot.lane.b32.xlu0 %v7148, 127
    %v8462 = vpop.permute.xlu0 %8461
    %8463 = vrot.lane.b32.xlu0 %v7160, 127
    %v8464 = vpop.permute.xlu0 %8463
    %8465 = vrot.lane.b32.xlu0 %v7162, 127
    %v8466 = vpop.permute.xlu0 %8465
    %8467 = vrot.lane.b32.xlu0 %v7165, 127
    %v8468 = vpop.permute.xlu0 %8467
    %8469 = vrot.lane.b32.xlu0 %v7167, 127
    %v8470 = vpop.permute.xlu0 %8469
    %8471 = vrot.lane.b32.xlu0 %v7179, 127
    %v8472 = vpop.permute.xlu0 %8471
    %8473 = vrot.lane.b32.xlu0 %v7181, 127
    %v8474 = vpop.permute.xlu0 %8473
    %8475 = vrot.lane.b32.xlu0 %v7184, 127
    %v8476 = vpop.permute.xlu0 %8475
    %8477 = vrot.lane.b32.xlu0 %v7186, 127
    %v8478 = vpop.permute.xlu0 %8477
    %8479 = vrot.lane.b32.xlu0 %v7198, 127
    %v8480 = vpop.permute.xlu0 %8479
    %8481 = vrot.lane.b32.xlu0 %v7200, 127
    %v8482 = vpop.permute.xlu0 %8481
    %8483 = vrot.lane.b32.xlu0 %v7203, 127
    %v8484 = vpop.permute.xlu0 %8483
    %8485 = vrot.lane.b32.xlu0 %v7205, 127
    %v8486 = vpop.permute.xlu0 %8485
    %8487 = vrot.lane.b32.xlu0 %v7217, 127
    %v8488 = vpop.permute.xlu0 %8487
    %8489 = vrot.lane.b32.xlu0 %v7219, 127
    %v8490 = vpop.permute.xlu0 %8489
    %8491 = vrot.lane.b32.xlu0 %v7222, 127
    %v8492 = vpop.permute.xlu0 %8491
    %8493 = vrot.lane.b32.xlu0 %v7224, 127
    %v8494 = vpop.permute.xlu0 %8493
    %8495 = vrot.lane.b32.xlu0 %v7236, 127
    %v8496 = vpop.permute.xlu0 %8495
    %8497 = vrot.lane.b32.xlu0 %v7238, 127
    %v8498 = vpop.permute.xlu0 %8497
    %8499 = vrot.lane.b32.xlu0 %v7241, 127
    %v8500 = vpop.permute.xlu0 %8499
    %8501 = vrot.lane.b32.xlu0 %v7243, 127
    %v8502 = vpop.permute.xlu0 %8501
    %8503 = vrot.lane.b32.xlu0 %v7255, 127
    %v8504 = vpop.permute.xlu0 %8503
    %8505 = vrot.lane.b32.xlu0 %v7257, 127
    %v8506 = vpop.permute.xlu0 %8505
    %8507 = vrot.lane.b32.xlu0 %v7260, 127
    %v8508 = vpop.permute.xlu0 %8507
    %8509 = vrot.lane.b32.xlu0 %v7262, 127
    %v8510 = vpop.permute.xlu0 %8509
    %8511 = vrot.lane.b32.xlu0 %v7274, 127
    %v8512 = vpop.permute.xlu0 %8511
    %8513 = vrot.lane.b32.xlu0 %v7276, 127
    %v8514 = vpop.permute.xlu0 %8513
    %8515 = vrot.lane.b32.xlu0 %v7279, 127
    %v8516 = vpop.permute.xlu0 %8515
    %8517 = vrot.lane.b32.xlu0 %v7281, 127
    %v8518 = vpop.permute.xlu0 %8517
    %8519 = vrot.lane.b32.xlu0 %v7293, 127
    %v8520 = vpop.permute.xlu0 %8519
    %8521 = vrot.lane.b32.xlu0 %v7295, 127
    %v8522 = vpop.permute.xlu0 %8521
    %8523 = vrot.lane.b32.xlu0 %v7298, 127
    %v8524 = vpop.permute.xlu0 %8523
    %8525 = vrot.lane.b32.xlu0 %v7300, 127
    %v8526 = vpop.permute.xlu0 %8525
    %8527 = vrot.lane.b32.xlu0 %v7312, 127
    %v8528 = vpop.permute.xlu0 %8527
    %8529 = vrot.lane.b32.xlu0 %v7314, 127
    %v8530 = vpop.permute.xlu0 %8529
    %8531 = vrot.lane.b32.xlu0 %v7317, 127
    %v8532 = vpop.permute.xlu0 %8531
    %8533 = vrot.lane.b32.xlu0 %v7319, 127
    %v8534 = vpop.permute.xlu0 %8533
    %8535 = vrot.lane.b32.xlu0 %v7331, 127
    %v8536 = vpop.permute.xlu0 %8535
    %8537 = vrot.lane.b32.xlu0 %v7333, 127
    %v8538 = vpop.permute.xlu0 %8537
    %8539 = vrot.lane.b32.xlu0 %v7336, 127
    %v8540 = vpop.permute.xlu0 %8539
    %8541 = vrot.lane.b32.xlu0 %v7338, 127
    %v8542 = vpop.permute.xlu0 %8541
    %v8543 = vsel %vm1394, %v8528, %v8536
    %v8544 = vsel %vm1394, %v8530, %v8538
    %v8545 = vsel %vm1394, %v8532, %v8540
    %v8546 = vsel %vm1394, %v8534, %v8542
    %v8547 = vsel %vm1394, %v8520, %v8528
    %v8548 = vsel %vm1394, %v8522, %v8530
    %v8549 = vsel %vm1394, %v8524, %v8532
    %v8550 = vsel %vm1394, %v8526, %v8534
    %v8551 = vsel %vm1394, %v8512, %v8520
    %v8552 = vsel %vm1394, %v8514, %v8522
    %v8553 = vsel %vm1394, %v8516, %v8524
    %v8554 = vsel %vm1394, %v8518, %v8526
    %v8555 = vsel %vm1394, %v8504, %v8512
    %v8556 = vsel %vm1394, %v8506, %v8514
    %v8557 = vsel %vm1394, %v8508, %v8516
    %v8558 = vsel %vm1394, %v8510, %v8518
    %v8559 = vsel %vm1394, %v8496, %v8504
    %v8560 = vsel %vm1394, %v8498, %v8506
    %v8561 = vsel %vm1394, %v8500, %v8508
    %v8562 = vsel %vm1394, %v8502, %v8510
    %v8563 = vsel %vm1394, %v8488, %v8496
    %v8564 = vsel %vm1394, %v8490, %v8498
    %v8565 = vsel %vm1394, %v8492, %v8500
    %v8566 = vsel %vm1394, %v8494, %v8502
    %v8567 = vsel %vm1394, %v8480, %v8488
    %v8568 = vsel %vm1394, %v8482, %v8490
    %v8569 = vsel %vm1394, %v8484, %v8492
    %v8570 = vsel %vm1394, %v8486, %v8494
    %v8571 = vsel %vm1394, %v8472, %v8480
    %v8572 = vsel %vm1394, %v8474, %v8482
    %v8573 = vsel %vm1394, %v8476, %v8484
    %v8574 = vsel %vm1394, %v8478, %v8486
    %v8575 = vsel %vm1394, %v8464, %v8472
    %v8576 = vsel %vm1394, %v8466, %v8474
    %v8577 = vsel %vm1394, %v8468, %v8476
    %v8578 = vsel %vm1394, %v8470, %v8478
    %v8579 = vsel %vm1394, %v8456, %v8464
    %v8580 = vsel %vm1394, %v8458, %v8466
    %v8581 = vsel %vm1394, %v8460, %v8468
    %v8582 = vsel %vm1394, %v8462, %v8470
    %v8583 = vsel %vm1394, %v8448, %v8456
    %v8584 = vsel %vm1394, %v8450, %v8458
    %v8585 = vsel %vm1394, %v8452, %v8460
    %v8586 = vsel %vm1394, %v8454, %v8462
    %v8587 = vsel %vm1394, %v8440, %v8448
    %v8588 = vsel %vm1394, %v8442, %v8450
    %v8589 = vsel %vm1394, %v8444, %v8452
    %v8590 = vsel %vm1394, %v8446, %v8454
    %v8591 = vsel %vm1394, %v8432, %v8440
    %v8592 = vsel %vm1394, %v8434, %v8442
    %v8593 = vsel %vm1394, %v8436, %v8444
    %v8594 = vsel %vm1394, %v8438, %v8446
    %v8595 = vsel %vm1394, %v8424, %v8432
    %v8596 = vsel %vm1394, %v8426, %v8434
    %v8597 = vsel %vm1394, %v8428, %v8436
    %v8598 = vsel %vm1394, %v8430, %v8438
    %v8599 = vsel %vm1394, %v8416, %v8424
    %v8600 = vsel %vm1394, %v8418, %v8426
    %v8601 = vsel %vm1394, %v8420, %v8428
    %v8602 = vsel %vm1394, %v8422, %v8430
    %v8603 = vsel %vm1394, %v8536, %v8416
    %v8604 = vsel %vm1394, %v8538, %v8418
    %v8605 = vsel %vm1394, %v8540, %v8420
    %v8606 = vsel %vm1394, %v8542, %v8422
    %s8607 = scalar_lea.vmem [#allocation13], 2
    %v8608 = vld [vmem:[%s8607] ss:$4 sm:$0xff]
    %s8609 = scalar_lea.vmem [#allocation13], 34
    %v8610 = vld [vmem:[%s8609] ss:$4 sm:$0xff]
    %v8613 = vperm.slane %v8608, 0
    %v8614 = vperm.slane %v8608, 1
    %v8615 = vperm.slane %v8608, 2
    %v8616 = vperm.slane %v8608, 3
    %v8617 = vperm.slane %v8608, 4
    %v8618 = vperm.slane %v8608, 5
    %v8619 = vperm.slane %v8608, 6
    %v8620 = vperm.slane %v8608, 7
    %v8621 = vperm.slane %v8610, 0
    %v8622 = vperm.slane %v8610, 1
    %v8623 = vperm.slane %v8610, 2
    %v8624 = vperm.slane %v8610, 3
    %v8625 = vperm.slane %v8610, 4
    %v8626 = vperm.slane %v8610, 5
    %v8627 = vperm.slane %v8610, 6
    %v8628 = vperm.slane %v8610, 7
    %v8645 = vmul.f32 %v8613, %v8599
    %v8646 = vmul.f32 %v8614, %v8595
    %v8647 = vmul.f32 %v8615, %v8591
    %v8648 = vmul.f32 %v8616, %v8587
    %v8649 = vmul.f32 %v8617, %v8583
    %v8650 = vmul.f32 %v8618, %v8579
    %v8651 = vmul.f32 %v8619, %v8575
    %v8652 = vmul.f32 %v8620, %v8571
    %v8653 = vmul.f32 %v8621, %v8567
    %v8654 = vmul.f32 %v8622, %v8563
    %v8655 = vmul.f32 %v8623, %v8559
    %v8656 = vmul.f32 %v8624, %v8555
    %v8657 = vmul.f32 %v8625, %v8551
    %v8658 = vmul.f32 %v8626, %v8547
    %v8659 = vmul.f32 %v8627, %v8543
    %v8660 = vmul.f32 %v8628, %v8603
    %v8661 = vmul.f32 %v8613, %v8600
    %v8662 = vmul.f32 %v8614, %v8596
    %v8663 = vmul.f32 %v8615, %v8592
    %v8664 = vmul.f32 %v8616, %v8588
    %v8665 = vmul.f32 %v8617, %v8584
    %v8666 = vmul.f32 %v8618, %v8580
    %v8667 = vmul.f32 %v8619, %v8576
    %v8668 = vmul.f32 %v8620, %v8572
    %v8669 = vmul.f32 %v8621, %v8568
    %v8670 = vmul.f32 %v8622, %v8564
    %v8671 = vmul.f32 %v8623, %v8560
    %v8672 = vmul.f32 %v8624, %v8556
    %v8673 = vmul.f32 %v8625, %v8552
    %v8674 = vmul.f32 %v8626, %v8548
    %v8675 = vmul.f32 %v8627, %v8544
    %v8676 = vmul.f32 %v8628, %v8604
    %v8677 = vmul.f32 %v8613, %v8601
    %v8678 = vmul.f32 %v8614, %v8597
    %v8679 = vmul.f32 %v8615, %v8593
    %v8680 = vmul.f32 %v8616, %v8589
    %v8681 = vmul.f32 %v8617, %v8585
    %v8682 = vmul.f32 %v8618, %v8581
    %v8683 = vmul.f32 %v8619, %v8577
    %v8684 = vmul.f32 %v8620, %v8573
    %v8685 = vmul.f32 %v8621, %v8569
    %v8686 = vmul.f32 %v8622, %v8565
    %v8687 = vmul.f32 %v8623, %v8561
    %v8688 = vmul.f32 %v8624, %v8557
    %v8689 = vmul.f32 %v8625, %v8553
    %v8690 = vmul.f32 %v8626, %v8549
    %v8691 = vmul.f32 %v8627, %v8545
    %v8692 = vmul.f32 %v8628, %v8605
    %v8693 = vmul.f32 %v8613, %v8602
    %v8694 = vmul.f32 %v8614, %v8598
    %v8695 = vmul.f32 %v8615, %v8594
    %v8696 = vmul.f32 %v8616, %v8590
    %v8697 = vmul.f32 %v8617, %v8586
    %v8698 = vmul.f32 %v8618, %v8582
    %v8699 = vmul.f32 %v8619, %v8578
    %v8700 = vmul.f32 %v8620, %v8574
    %v8701 = vmul.f32 %v8621, %v8570
    %v8702 = vmul.f32 %v8622, %v8566
    %v8703 = vmul.f32 %v8623, %v8562
    %v8704 = vmul.f32 %v8624, %v8558
    %v8705 = vmul.f32 %v8625, %v8554
    %v8706 = vmul.f32 %v8626, %v8550
    %v8707 = vmul.f32 %v8627, %v8546
    %v8708 = vmul.f32 %v8628, %v8606
    %8709 = vset.pattern.permute.xlu0 2
    %8710 = vperm.xlu0 %8709, %v7340
    %v8711 = vpop.permute.xlu0 %8710
    %8713 = vset.pattern.permute.xlu0 2
    %8714 = vperm.xlu0 %8713, %v7341
    %v8715 = vpop.permute.xlu0 %8714
    %8717 = vset.pattern.permute.xlu0 2
    %8718 = vperm.xlu0 %8717, %v7342
    %v8719 = vpop.permute.xlu0 %8718
    %8721 = vset.pattern.permute.xlu0 2
    %8722 = vperm.xlu0 %8721, %v7343
    %v8723 = vpop.permute.xlu0 %8722
    %v8725 = vmul.f32 %v8711, %v8645
    %v8726 = vmul.f32 %v8711, %v8646
    %v8727 = vmul.f32 %v8711, %v8647
    %v8728 = vmul.f32 %v8711, %v8648
    %v8729 = vmul.f32 %v8711, %v8649
    %v8730 = vmul.f32 %v8711, %v8650
    %v8731 = vmul.f32 %v8711, %v8651
    %v8732 = vmul.f32 %v8711, %v8652
    %v8733 = vmul.f32 %v8711, %v8653
    %v8734 = vmul.f32 %v8711, %v8654
    %v8735 = vmul.f32 %v8711, %v8655
    %v8736 = vmul.f32 %v8711, %v8656
    %v8737 = vmul.f32 %v8711, %v8657
    %v8738 = vmul.f32 %v8711, %v8658
    %v8739 = vmul.f32 %v8711, %v8659
    %v8740 = vmul.f32 %v8711, %v8660
    %v8741 = vmul.f32 %v8715, %v8661
    %v8742 = vmul.f32 %v8715, %v8662
    %v8743 = vmul.f32 %v8715, %v8663
    %v8744 = vmul.f32 %v8715, %v8664
    %v8745 = vmul.f32 %v8715, %v8665
    %v8746 = vmul.f32 %v8715, %v8666
    %v8747 = vmul.f32 %v8715, %v8667
    %v8748 = vmul.f32 %v8715, %v8668
    %v8749 = vmul.f32 %v8715, %v8669
    %v8750 = vmul.f32 %v8715, %v8670
    %v8751 = vmul.f32 %v8715, %v8671
    %v8752 = vmul.f32 %v8715, %v8672
    %v8753 = vmul.f32 %v8715, %v8673
    %v8754 = vmul.f32 %v8715, %v8674
    %v8755 = vmul.f32 %v8715, %v8675
    %v8756 = vmul.f32 %v8715, %v8676
    %v8757 = vmul.f32 %v8719, %v8677
    %v8758 = vmul.f32 %v8719, %v8678
    %v8759 = vmul.f32 %v8719, %v8679
    %v8760 = vmul.f32 %v8719, %v8680
    %v8761 = vmul.f32 %v8719, %v8681
    %v8762 = vmul.f32 %v8719, %v8682
    %v8763 = vmul.f32 %v8719, %v8683
    %v8764 = vmul.f32 %v8719, %v8684
    %v8765 = vmul.f32 %v8719, %v8685
    %v8766 = vmul.f32 %v8719, %v8686
    %v8767 = vmul.f32 %v8719, %v8687
    %v8768 = vmul.f32 %v8719, %v8688
    %v8769 = vmul.f32 %v8719, %v8689
    %v8770 = vmul.f32 %v8719, %v8690
    %v8771 = vmul.f32 %v8719, %v8691
    %v8772 = vmul.f32 %v8719, %v8692
    %v8773 = vmul.f32 %v8723, %v8693
    %v8774 = vmul.f32 %v8723, %v8694
    %v8775 = vmul.f32 %v8723, %v8695
    %v8776 = vmul.f32 %v8723, %v8696
    %v8777 = vmul.f32 %v8723, %v8697
    %v8778 = vmul.f32 %v8723, %v8698
    %v8779 = vmul.f32 %v8723, %v8699
    %v8780 = vmul.f32 %v8723, %v8700
    %v8781 = vmul.f32 %v8723, %v8701
    %v8782 = vmul.f32 %v8723, %v8702
    %v8783 = vmul.f32 %v8723, %v8703
    %v8784 = vmul.f32 %v8723, %v8704
    %v8785 = vmul.f32 %v8723, %v8705
    %v8786 = vmul.f32 %v8723, %v8706
    %v8787 = vmul.f32 %v8723, %v8707
    %v8788 = vmul.f32 %v8723, %v8708
    %v8789 = vadd.f32 %v8063, %v8725
    %v8790 = vadd.f32 %v8064, %v8726
    %v8791 = vadd.f32 %v8065, %v8727
    %v8792 = vadd.f32 %v8066, %v8728
    %v8793 = vadd.f32 %v8067, %v8729
    %v8794 = vadd.f32 %v8068, %v8730
    %v8795 = vadd.f32 %v8069, %v8731
    %v8796 = vadd.f32 %v8070, %v8732
    %v8797 = vadd.f32 %v8071, %v8733
    %v8798 = vadd.f32 %v8072, %v8734
    %v8799 = vadd.f32 %v8073, %v8735
    %v8800 = vadd.f32 %v8074, %v8736
    %v8801 = vadd.f32 %v8075, %v8737
    %v8802 = vadd.f32 %v8076, %v8738
    %v8803 = vadd.f32 %v8077, %v8739
    %v8804 = vadd.f32 %v8078, %v8740
    %v8805 = vadd.f32 %v8079, %v8741
    %v8806 = vadd.f32 %v8080, %v8742
    %v8807 = vadd.f32 %v8081, %v8743
    %v8808 = vadd.f32 %v8082, %v8744
    %v8809 = vadd.f32 %v8083, %v8745
    %v8810 = vadd.f32 %v8084, %v8746
    %v8811 = vadd.f32 %v8085, %v8747
    %v8812 = vadd.f32 %v8086, %v8748
    %v8813 = vadd.f32 %v8087, %v8749
    %v8814 = vadd.f32 %v8088, %v8750
    %v8815 = vadd.f32 %v8089, %v8751
    %v8816 = vadd.f32 %v8090, %v8752
    %v8817 = vadd.f32 %v8091, %v8753
    %v8818 = vadd.f32 %v8092, %v8754
    %v8819 = vadd.f32 %v8093, %v8755
    %v8820 = vadd.f32 %v8094, %v8756
    %v8821 = vadd.f32 %v8095, %v8757
    %v8822 = vadd.f32 %v8096, %v8758
    %v8823 = vadd.f32 %v8097, %v8759
    %v8824 = vadd.f32 %v8098, %v8760
    %v8825 = vadd.f32 %v8099, %v8761
    %v8826 = vadd.f32 %v8100, %v8762
    %v8827 = vadd.f32 %v8101, %v8763
    %v8828 = vadd.f32 %v8102, %v8764
    %v8829 = vadd.f32 %v8103, %v8765
    %v8830 = vadd.f32 %v8104, %v8766
    %v8831 = vadd.f32 %v8105, %v8767
    %v8832 = vadd.f32 %v8106, %v8768
    %v8833 = vadd.f32 %v8107, %v8769
    %v8834 = vadd.f32 %v8108, %v8770
    %v8835 = vadd.f32 %v8109, %v8771
    %v8836 = vadd.f32 %v8110, %v8772
    %v8837 = vadd.f32 %v8111, %v8773
    %v8838 = vadd.f32 %v8112, %v8774
    %v8839 = vadd.f32 %v8113, %v8775
    %v8840 = vadd.f32 %v8114, %v8776
    %v8841 = vadd.f32 %v8115, %v8777
    %v8842 = vadd.f32 %v8116, %v8778
    %v8843 = vadd.f32 %v8117, %v8779
    %v8844 = vadd.f32 %v8118, %v8780
    %v8845 = vadd.f32 %v8119, %v8781
    %v8846 = vadd.f32 %v8120, %v8782
    %v8847 = vadd.f32 %v8121, %v8783
    %v8848 = vadd.f32 %v8122, %v8784
    %v8849 = vadd.f32 %v8123, %v8785
    %v8850 = vadd.f32 %v8124, %v8786
    %v8851 = vadd.f32 %v8125, %v8787
    %v8852 = vadd.f32 %v8126, %v8788
    %8853 = vset.pattern.permute.xlu0 5
    %8854 = vperm.xlu0 %8853, %v7340
    %v8855 = vpop.permute.xlu0 %8854
    %8857 = vset.pattern.permute.xlu0 5
    %8858 = vperm.xlu0 %8857, %v7341
    %v8859 = vpop.permute.xlu0 %8858
    %8861 = vset.pattern.permute.xlu0 5
    %8862 = vperm.xlu0 %8861, %v7342
    %v8863 = vpop.permute.xlu0 %8862
    %8865 = vset.pattern.permute.xlu0 5
    %8866 = vperm.xlu0 %8865, %v7343
    %v8867 = vpop.permute.xlu0 %8866
    %v8869 = vmul.f32 %v8855, %v8645
    %v8870 = vmul.f32 %v8855, %v8646
    %v8871 = vmul.f32 %v8855, %v8647
    %v8872 = vmul.f32 %v8855, %v8648
    %v8873 = vmul.f32 %v8855, %v8649
    %v8874 = vmul.f32 %v8855, %v8650
    %v8875 = vmul.f32 %v8855, %v8651
    %v8876 = vmul.f32 %v8855, %v8652
    %v8877 = vmul.f32 %v8855, %v8653
    %v8878 = vmul.f32 %v8855, %v8654
    %v8879 = vmul.f32 %v8855, %v8655
    %v8880 = vmul.f32 %v8855, %v8656
    %v8881 = vmul.f32 %v8855, %v8657
    %v8882 = vmul.f32 %v8855, %v8658
    %v8883 = vmul.f32 %v8855, %v8659
    %v8884 = vmul.f32 %v8855, %v8660
    %v8885 = vmul.f32 %v8859, %v8661
    %v8886 = vmul.f32 %v8859, %v8662
    %v8887 = vmul.f32 %v8859, %v8663
    %v8888 = vmul.f32 %v8859, %v8664
    %v8889 = vmul.f32 %v8859, %v8665
    %v8890 = vmul.f32 %v8859, %v8666
    %v8891 = vmul.f32 %v8859, %v8667
    %v8892 = vmul.f32 %v8859, %v8668
    %v8893 = vmul.f32 %v8859, %v8669
    %v8894 = vmul.f32 %v8859, %v8670
    %v8895 = vmul.f32 %v8859, %v8671
    %v8896 = vmul.f32 %v8859, %v8672
    %v8897 = vmul.f32 %v8859, %v8673
    %v8898 = vmul.f32 %v8859, %v8674
    %v8899 = vmul.f32 %v8859, %v8675
    %v8900 = vmul.f32 %v8859, %v8676
    %v8901 = vmul.f32 %v8863, %v8677
    %v8902 = vmul.f32 %v8863, %v8678
    %v8903 = vmul.f32 %v8863, %v8679
    %v8904 = vmul.f32 %v8863, %v8680
    %v8905 = vmul.f32 %v8863, %v8681
    %v8906 = vmul.f32 %v8863, %v8682
    %v8907 = vmul.f32 %v8863, %v8683
    %v8908 = vmul.f32 %v8863, %v8684
    %v8909 = vmul.f32 %v8863, %v8685
    %v8910 = vmul.f32 %v8863, %v8686
    %v8911 = vmul.f32 %v8863, %v8687
    %v8912 = vmul.f32 %v8863, %v8688
    %v8913 = vmul.f32 %v8863, %v8689
    %v8914 = vmul.f32 %v8863, %v8690
    %v8915 = vmul.f32 %v8863, %v8691
    %v8916 = vmul.f32 %v8863, %v8692
    %v8917 = vmul.f32 %v8867, %v8693
    %v8918 = vmul.f32 %v8867, %v8694
    %v8919 = vmul.f32 %v8867, %v8695
    %v8920 = vmul.f32 %v8867, %v8696
    %v8921 = vmul.f32 %v8867, %v8697
    %v8922 = vmul.f32 %v8867, %v8698
    %v8923 = vmul.f32 %v8867, %v8699
    %v8924 = vmul.f32 %v8867, %v8700
    %v8925 = vmul.f32 %v8867, %v8701
    %v8926 = vmul.f32 %v8867, %v8702
    %v8927 = vmul.f32 %v8867, %v8703
    %v8928 = vmul.f32 %v8867, %v8704
    %v8929 = vmul.f32 %v8867, %v8705
    %v8930 = vmul.f32 %v8867, %v8706
    %v8931 = vmul.f32 %v8867, %v8707
    %v8932 = vmul.f32 %v8867, %v8708
    %v8933 = vadd.f32 %v8207, %v8869
    %v8934 = vadd.f32 %v8208, %v8870
    %v8935 = vadd.f32 %v8209, %v8871
    %v8936 = vadd.f32 %v8210, %v8872
    %v8937 = vadd.f32 %v8211, %v8873
    %v8938 = vadd.f32 %v8212, %v8874
    %v8939 = vadd.f32 %v8213, %v8875
    %v8940 = vadd.f32 %v8214, %v8876
    %v8941 = vadd.f32 %v8215, %v8877
    %v8942 = vadd.f32 %v8216, %v8878
    %v8943 = vadd.f32 %v8217, %v8879
    %v8944 = vadd.f32 %v8218, %v8880
    %v8945 = vadd.f32 %v8219, %v8881
    %v8946 = vadd.f32 %v8220, %v8882
    %v8947 = vadd.f32 %v8221, %v8883
    %v8948 = vadd.f32 %v8222, %v8884
    %v8949 = vadd.f32 %v8223, %v8885
    %v8950 = vadd.f32 %v8224, %v8886
    %v8951 = vadd.f32 %v8225, %v8887
    %v8952 = vadd.f32 %v8226, %v8888
    %v8953 = vadd.f32 %v8227, %v8889
    %v8954 = vadd.f32 %v8228, %v8890
    %v8955 = vadd.f32 %v8229, %v8891
    %v8956 = vadd.f32 %v8230, %v8892
    %v8957 = vadd.f32 %v8231, %v8893
    %v8958 = vadd.f32 %v8232, %v8894
    %v8959 = vadd.f32 %v8233, %v8895
    %v8960 = vadd.f32 %v8234, %v8896
    %v8961 = vadd.f32 %v8235, %v8897
    %v8962 = vadd.f32 %v8236, %v8898
    %v8963 = vadd.f32 %v8237, %v8899
    %v8964 = vadd.f32 %v8238, %v8900
    %v8965 = vadd.f32 %v8239, %v8901
    %v8966 = vadd.f32 %v8240, %v8902
    %v8967 = vadd.f32 %v8241, %v8903
    %v8968 = vadd.f32 %v8242, %v8904
    %v8969 = vadd.f32 %v8243, %v8905
    %v8970 = vadd.f32 %v8244, %v8906
    %v8971 = vadd.f32 %v8245, %v8907
    %v8972 = vadd.f32 %v8246, %v8908
    %v8973 = vadd.f32 %v8247, %v8909
    %v8974 = vadd.f32 %v8248, %v8910
    %v8975 = vadd.f32 %v8249, %v8911
    %v8976 = vadd.f32 %v8250, %v8912
    %v8977 = vadd.f32 %v8251, %v8913
    %v8978 = vadd.f32 %v8252, %v8914
    %v8979 = vadd.f32 %v8253, %v8915
    %v8980 = vadd.f32 %v8254, %v8916
    %v8981 = vadd.f32 %v8255, %v8917
    %v8982 = vadd.f32 %v8256, %v8918
    %v8983 = vadd.f32 %v8257, %v8919
    %v8984 = vadd.f32 %v8258, %v8920
    %v8985 = vadd.f32 %v8259, %v8921
    %v8986 = vadd.f32 %v8260, %v8922
    %v8987 = vadd.f32 %v8261, %v8923
    %v8988 = vadd.f32 %v8262, %v8924
    %v8989 = vadd.f32 %v8263, %v8925
    %v8990 = vadd.f32 %v8264, %v8926
    %v8991 = vadd.f32 %v8265, %v8927
    %v8992 = vadd.f32 %v8266, %v8928
    %v8993 = vadd.f32 %v8267, %v8929
    %v8994 = vadd.f32 %v8268, %v8930
    %v8995 = vadd.f32 %v8269, %v8931
    %v8996 = vadd.f32 %v8270, %v8932
    %8997 = vset.pattern.permute.xlu0 8
    %8998 = vperm.xlu0 %8997, %v7340
    %v8999 = vpop.permute.xlu0 %8998
    %9001 = vset.pattern.permute.xlu0 8
    %9002 = vperm.xlu0 %9001, %v7341
    %v9003 = vpop.permute.xlu0 %9002
    %9005 = vset.pattern.permute.xlu0 8
    %9006 = vperm.xlu0 %9005, %v7342
    %v9007 = vpop.permute.xlu0 %9006
    %9009 = vset.pattern.permute.xlu0 8
    %9010 = vperm.xlu0 %9009, %v7343
    %v9011 = vpop.permute.xlu0 %9010
    %v9013 = vmul.f32 %v8999, %v8645
    %v9014 = vmul.f32 %v8999, %v8646
    %v9015 = vmul.f32 %v8999, %v8647
    %v9016 = vmul.f32 %v8999, %v8648
    %v9017 = vmul.f32 %v8999, %v8649
    %v9018 = vmul.f32 %v8999, %v8650
    %v9019 = vmul.f32 %v8999, %v8651
    %v9020 = vmul.f32 %v8999, %v8652
    %v9021 = vmul.f32 %v8999, %v8653
    %v9022 = vmul.f32 %v8999, %v8654
    %v9023 = vmul.f32 %v8999, %v8655
    %v9024 = vmul.f32 %v8999, %v8656
    %v9025 = vmul.f32 %v8999, %v8657
    %v9026 = vmul.f32 %v8999, %v8658
    %v9027 = vmul.f32 %v8999, %v8659
    %v9028 = vmul.f32 %v8999, %v8660
    %v9029 = vmul.f32 %v9003, %v8661
    %v9030 = vmul.f32 %v9003, %v8662
    %v9031 = vmul.f32 %v9003, %v8663
    %v9032 = vmul.f32 %v9003, %v8664
    %v9033 = vmul.f32 %v9003, %v8665
    %v9034 = vmul.f32 %v9003, %v8666
    %v9035 = vmul.f32 %v9003, %v8667
    %v9036 = vmul.f32 %v9003, %v8668
    %v9037 = vmul.f32 %v9003, %v8669
    %v9038 = vmul.f32 %v9003, %v8670
    %v9039 = vmul.f32 %v9003, %v8671
    %v9040 = vmul.f32 %v9003, %v8672
    %v9041 = vmul.f32 %v9003, %v8673
    %v9042 = vmul.f32 %v9003, %v8674
    %v9043 = vmul.f32 %v9003, %v8675
    %v9044 = vmul.f32 %v9003, %v8676
    %v9045 = vmul.f32 %v9007, %v8677
    %v9046 = vmul.f32 %v9007, %v8678
    %v9047 = vmul.f32 %v9007, %v8679
    %v9048 = vmul.f32 %v9007, %v8680
    %v9049 = vmul.f32 %v9007, %v8681
    %v9050 = vmul.f32 %v9007, %v8682
    %v9051 = vmul.f32 %v9007, %v8683
    %v9052 = vmul.f32 %v9007, %v8684
    %v9053 = vmul.f32 %v9007, %v8685
    %v9054 = vmul.f32 %v9007, %v8686
    %v9055 = vmul.f32 %v9007, %v8687
    %v9056 = vmul.f32 %v9007, %v8688
    %v9057 = vmul.f32 %v9007, %v8689
    %v9058 = vmul.f32 %v9007, %v8690
    %v9059 = vmul.f32 %v9007, %v8691
    %v9060 = vmul.f32 %v9007, %v8692
    %v9061 = vmul.f32 %v9011, %v8693
    %v9062 = vmul.f32 %v9011, %v8694
    %v9063 = vmul.f32 %v9011, %v8695
    %v9064 = vmul.f32 %v9011, %v8696
    %v9065 = vmul.f32 %v9011, %v8697
    %v9066 = vmul.f32 %v9011, %v8698
    %v9067 = vmul.f32 %v9011, %v8699
    %v9068 = vmul.f32 %v9011, %v8700
    %v9069 = vmul.f32 %v9011, %v8701
    %v9070 = vmul.f32 %v9011, %v8702
    %v9071 = vmul.f32 %v9011, %v8703
    %v9072 = vmul.f32 %v9011, %v8704
    %v9073 = vmul.f32 %v9011, %v8705
    %v9074 = vmul.f32 %v9011, %v8706
    %v9075 = vmul.f32 %v9011, %v8707
    %v9076 = vmul.f32 %v9011, %v8708
    %v9077 = vadd.f32 %v8351, %v9013
    %v9078 = vadd.f32 %v8352, %v9014
    %v9079 = vadd.f32 %v8353, %v9015
    %v9080 = vadd.f32 %v8354, %v9016
    %v9081 = vadd.f32 %v8355, %v9017
    %v9082 = vadd.f32 %v8356, %v9018
    %v9083 = vadd.f32 %v8357, %v9019
    %v9084 = vadd.f32 %v8358, %v9020
    %v9085 = vadd.f32 %v8359, %v9021
    %v9086 = vadd.f32 %v8360, %v9022
    %v9087 = vadd.f32 %v8361, %v9023
    %v9088 = vadd.f32 %v8362, %v9024
    %v9089 = vadd.f32 %v8363, %v9025
    %v9090 = vadd.f32 %v8364, %v9026
    %v9091 = vadd.f32 %v8365, %v9027
    %v9092 = vadd.f32 %v8366, %v9028
    %v9093 = vadd.f32 %v8367, %v9029
    %v9094 = vadd.f32 %v8368, %v9030
    %v9095 = vadd.f32 %v8369, %v9031
    %v9096 = vadd.f32 %v8370, %v9032
    %v9097 = vadd.f32 %v8371, %v9033
    %v9098 = vadd.f32 %v8372, %v9034
    %v9099 = vadd.f32 %v8373, %v9035
    %v9100 = vadd.f32 %v8374, %v9036
    %v9101 = vadd.f32 %v8375, %v9037
    %v9102 = vadd.f32 %v8376, %v9038
    %v9103 = vadd.f32 %v8377, %v9039
    %v9104 = vadd.f32 %v8378, %v9040
    %v9105 = vadd.f32 %v8379, %v9041
    %v9106 = vadd.f32 %v8380, %v9042
    %v9107 = vadd.f32 %v8381, %v9043
    %v9108 = vadd.f32 %v8382, %v9044
    %v9109 = vadd.f32 %v8383, %v9045
    %v9110 = vadd.f32 %v8384, %v9046
    %v9111 = vadd.f32 %v8385, %v9047
    %v9112 = vadd.f32 %v8386, %v9048
    %v9113 = vadd.f32 %v8387, %v9049
    %v9114 = vadd.f32 %v8388, %v9050
    %v9115 = vadd.f32 %v8389, %v9051
    %v9116 = vadd.f32 %v8390, %v9052
    %v9117 = vadd.f32 %v8391, %v9053
    %v9118 = vadd.f32 %v8392, %v9054
    %v9119 = vadd.f32 %v8393, %v9055
    %v9120 = vadd.f32 %v8394, %v9056
    %v9121 = vadd.f32 %v8395, %v9057
    %v9122 = vadd.f32 %v8396, %v9058
    %v9123 = vadd.f32 %v8397, %v9059
    %v9124 = vadd.f32 %v8398, %v9060
    %v9125 = vadd.f32 %v8399, %v9061
    %v9126 = vadd.f32 %v8400, %v9062
    %v9127 = vadd.f32 %v8401, %v9063
    %v9128 = vadd.f32 %v8402, %v9064
    %v9129 = vadd.f32 %v8403, %v9065
    %v9130 = vadd.f32 %v8404, %v9066
    %v9131 = vadd.f32 %v8405, %v9067
    %v9132 = vadd.f32 %v8406, %v9068
    %v9133 = vadd.f32 %v8407, %v9069
    %v9134 = vadd.f32 %v8408, %v9070
    %v9135 = vadd.f32 %v8409, %v9071
    %v9136 = vadd.f32 %v8410, %v9072
    %v9137 = vadd.f32 %v8411, %v9073
    %v9138 = vadd.f32 %v8412, %v9074
    %v9139 = vadd.f32 %v8413, %v9075
    %v9140 = vadd.f32 %v8414, %v9076
    %9141 = vrot.lane.b32.xlu0 %v8789, 16
    %v9142 = vpop.permute.xlu0 %9141
    %9143 = vrot.lane.b32.xlu0 %v8805, 16
    %v9144 = vpop.permute.xlu0 %9143
    %9145 = vrot.lane.b32.xlu0 %v8821, 16
    %v9146 = vpop.permute.xlu0 %9145
    %9147 = vrot.lane.b32.xlu0 %v8837, 16
    %v9148 = vpop.permute.xlu0 %9147
    %9149 = vrot.lane.b32.xlu0 %v8790, 16
    %v9150 = vpop.permute.xlu0 %9149
    %9151 = vrot.lane.b32.xlu0 %v8806, 16
    %v9152 = vpop.permute.xlu0 %9151
    %9153 = vrot.lane.b32.xlu0 %v8822, 16
    %v9154 = vpop.permute.xlu0 %9153
    %9155 = vrot.lane.b32.xlu0 %v8838, 16
    %v9156 = vpop.permute.xlu0 %9155
    %9157 = vrot.lane.b32.xlu0 %v8791, 16
    %v9158 = vpop.permute.xlu0 %9157
    %9159 = vrot.lane.b32.xlu0 %v8807, 16
    %v9160 = vpop.permute.xlu0 %9159
    %9161 = vrot.lane.b32.xlu0 %v8823, 16
    %v9162 = vpop.permute.xlu0 %9161
    %9163 = vrot.lane.b32.xlu0 %v8839, 16
    %v9164 = vpop.permute.xlu0 %9163
    %9165 = vrot.lane.b32.xlu0 %v8792, 16
    %v9166 = vpop.permute.xlu0 %9165
    %9167 = vrot.lane.b32.xlu0 %v8808, 16
    %v9168 = vpop.permute.xlu0 %9167
    %9169 = vrot.lane.b32.xlu0 %v8824, 16
    %v9170 = vpop.permute.xlu0 %9169
    %9171 = vrot.lane.b32.xlu0 %v8840, 16
    %v9172 = vpop.permute.xlu0 %9171
    %9173 = vrot.lane.b32.xlu0 %v8793, 16
    %v9174 = vpop.permute.xlu0 %9173
    %9175 = vrot.lane.b32.xlu0 %v8809, 16
    %v9176 = vpop.permute.xlu0 %9175
    %9177 = vrot.lane.b32.xlu0 %v8825, 16
    %v9178 = vpop.permute.xlu0 %9177
    %9179 = vrot.lane.b32.xlu0 %v8841, 16
    %v9180 = vpop.permute.xlu0 %9179
    %9181 = vrot.lane.b32.xlu0 %v8794, 16
    %v9182 = vpop.permute.xlu0 %9181
    %9183 = vrot.lane.b32.xlu0 %v8810, 16
    %v9184 = vpop.permute.xlu0 %9183
    %9185 = vrot.lane.b32.xlu0 %v8826, 16
    %v9186 = vpop.permute.xlu0 %9185
    %9187 = vrot.lane.b32.xlu0 %v8842, 16
    %v9188 = vpop.permute.xlu0 %9187
    %9189 = vrot.lane.b32.xlu0 %v8795, 16
    %v9190 = vpop.permute.xlu0 %9189
    %9191 = vrot.lane.b32.xlu0 %v8811, 16
    %v9192 = vpop.permute.xlu0 %9191
    %9193 = vrot.lane.b32.xlu0 %v8827, 16
    %v9194 = vpop.permute.xlu0 %9193
    %9195 = vrot.lane.b32.xlu0 %v8843, 16
    %v9196 = vpop.permute.xlu0 %9195
    %9197 = vrot.lane.b32.xlu0 %v8796, 16
    %v9198 = vpop.permute.xlu0 %9197
    %9199 = vrot.lane.b32.xlu0 %v8812, 16
    %v9200 = vpop.permute.xlu0 %9199
    %9201 = vrot.lane.b32.xlu0 %v8828, 16
    %v9202 = vpop.permute.xlu0 %9201
    %9203 = vrot.lane.b32.xlu0 %v8844, 16
    %v9204 = vpop.permute.xlu0 %9203
    %9205 = vrot.lane.b32.xlu0 %v8797, 16
    %v9206 = vpop.permute.xlu0 %9205
    %9207 = vrot.lane.b32.xlu0 %v8813, 16
    %v9208 = vpop.permute.xlu0 %9207
    %9209 = vrot.lane.b32.xlu0 %v8829, 16
    %v9210 = vpop.permute.xlu0 %9209
    %9211 = vrot.lane.b32.xlu0 %v8845, 16
    %v9212 = vpop.permute.xlu0 %9211
    %9213 = vrot.lane.b32.xlu0 %v8798, 16
    %v9214 = vpop.permute.xlu0 %9213
    %9215 = vrot.lane.b32.xlu0 %v8814, 16
    %v9216 = vpop.permute.xlu0 %9215
    %9217 = vrot.lane.b32.xlu0 %v8830, 16
    %v9218 = vpop.permute.xlu0 %9217
    %9219 = vrot.lane.b32.xlu0 %v8846, 16
    %v9220 = vpop.permute.xlu0 %9219
    %9221 = vrot.lane.b32.xlu0 %v8799, 16
    %v9222 = vpop.permute.xlu0 %9221
    %9223 = vrot.lane.b32.xlu0 %v8815, 16
    %v9224 = vpop.permute.xlu0 %9223
    %9225 = vrot.lane.b32.xlu0 %v8831, 16
    %v9226 = vpop.permute.xlu0 %9225
    %9227 = vrot.lane.b32.xlu0 %v8847, 16
    %v9228 = vpop.permute.xlu0 %9227
    %9229 = vrot.lane.b32.xlu0 %v8800, 16
    %v9230 = vpop.permute.xlu0 %9229
    %9231 = vrot.lane.b32.xlu0 %v8816, 16
    %v9232 = vpop.permute.xlu0 %9231
    %9233 = vrot.lane.b32.xlu0 %v8832, 16
    %v9234 = vpop.permute.xlu0 %9233
    %9235 = vrot.lane.b32.xlu0 %v8848, 16
    %v9236 = vpop.permute.xlu0 %9235
    %9237 = vrot.lane.b32.xlu0 %v8801, 16
    %v9238 = vpop.permute.xlu0 %9237
    %9239 = vrot.lane.b32.xlu0 %v8817, 16
    %v9240 = vpop.permute.xlu0 %9239
    %9241 = vrot.lane.b32.xlu0 %v8833, 16
    %v9242 = vpop.permute.xlu0 %9241
    %9243 = vrot.lane.b32.xlu0 %v8849, 16
    %v9244 = vpop.permute.xlu0 %9243
    %9245 = vrot.lane.b32.xlu0 %v8802, 16
    %v9246 = vpop.permute.xlu0 %9245
    %9247 = vrot.lane.b32.xlu0 %v8818, 16
    %v9248 = vpop.permute.xlu0 %9247
    %9249 = vrot.lane.b32.xlu0 %v8834, 16
    %v9250 = vpop.permute.xlu0 %9249
    %9251 = vrot.lane.b32.xlu0 %v8850, 16
    %v9252 = vpop.permute.xlu0 %9251
    %9253 = vrot.lane.b32.xlu0 %v8803, 16
    %v9254 = vpop.permute.xlu0 %9253
    %9255 = vrot.lane.b32.xlu0 %v8819, 16
    %v9256 = vpop.permute.xlu0 %9255
    %9257 = vrot.lane.b32.xlu0 %v8835, 16
    %v9258 = vpop.permute.xlu0 %9257
    %9259 = vrot.lane.b32.xlu0 %v8851, 16
    %v9260 = vpop.permute.xlu0 %9259
    %9261 = vrot.lane.b32.xlu0 %v8804, 16
    %v9262 = vpop.permute.xlu0 %9261
    %9263 = vrot.lane.b32.xlu0 %v8820, 16
    %v9264 = vpop.permute.xlu0 %9263
    %9265 = vrot.lane.b32.xlu0 %v8836, 16
    %v9266 = vpop.permute.xlu0 %9265
    %9267 = vrot.lane.b32.xlu0 %v8852, 16
    %v9268 = vpop.permute.xlu0 %9267
    %v9269 = vsel %vm2074, %v9254, %v9262
    %v9270 = vsel %vm2074, %v9256, %v9264
    %v9271 = vsel %vm2074, %v9258, %v9266
    %v9272 = vsel %vm2074, %v9260, %v9268
    %v9273 = vsel %vm2074, %v9246, %v9254
    %v9274 = vsel %vm2074, %v9248, %v9256
    %v9275 = vsel %vm2074, %v9250, %v9258
    %v9276 = vsel %vm2074, %v9252, %v9260
    %v9277 = vsel %vm2074, %v9238, %v9246
    %v9278 = vsel %vm2074, %v9240, %v9248
    %v9279 = vsel %vm2074, %v9242, %v9250
    %v9280 = vsel %vm2074, %v9244, %v9252
    %v9281 = vsel %vm2074, %v9230, %v9238
    %v9282 = vsel %vm2074, %v9232, %v9240
    %v9283 = vsel %vm2074, %v9234, %v9242
    %v9284 = vsel %vm2074, %v9236, %v9244
    %v9285 = vsel %vm2074, %v9222, %v9230
    %v9286 = vsel %vm2074, %v9224, %v9232
    %v9287 = vsel %vm2074, %v9226, %v9234
    %v9288 = vsel %vm2074, %v9228, %v9236
    %v9289 = vsel %vm2074, %v9214, %v9222
    %v9290 = vsel %vm2074, %v9216, %v9224
    %v9291 = vsel %vm2074, %v9218, %v9226
    %v9292 = vsel %vm2074, %v9220, %v9228
    %v9293 = vsel %vm2074, %v9206, %v9214
    %v9294 = vsel %vm2074, %v9208, %v9216
    %v9295 = vsel %vm2074, %v9210, %v9218
    %v9296 = vsel %vm2074, %v9212, %v9220
    %v9297 = vsel %vm2074, %v9198, %v9206
    %v9298 = vsel %vm2074, %v9200, %v9208
    %v9299 = vsel %vm2074, %v9202, %v9210
    %v9300 = vsel %vm2074, %v9204, %v9212
    %v9301 = vsel %vm2074, %v9190, %v9198
    %v9302 = vsel %vm2074, %v9192, %v9200
    %v9303 = vsel %vm2074, %v9194, %v9202
    %v9304 = vsel %vm2074, %v9196, %v9204
    %v9305 = vsel %vm2074, %v9182, %v9190
    %v9306 = vsel %vm2074, %v9184, %v9192
    %v9307 = vsel %vm2074, %v9186, %v9194
    %v9308 = vsel %vm2074, %v9188, %v9196
    %v9309 = vsel %vm2074, %v9174, %v9182
    %v9310 = vsel %vm2074, %v9176, %v9184
    %v9311 = vsel %vm2074, %v9178, %v9186
    %v9312 = vsel %vm2074, %v9180, %v9188
    %v9313 = vsel %vm2074, %v9166, %v9174
    %v9314 = vsel %vm2074, %v9168, %v9176
    %v9315 = vsel %vm2074, %v9170, %v9178
    %v9316 = vsel %vm2074, %v9172, %v9180
    %v9317 = vsel %vm2074, %v9158, %v9166
    %v9318 = vsel %vm2074, %v9160, %v9168
    %v9319 = vsel %vm2074, %v9162, %v9170
    %v9320 = vsel %vm2074, %v9164, %v9172
    %v9321 = vsel %vm2074, %v9150, %v9158
    %v9322 = vsel %vm2074, %v9152, %v9160
    %v9323 = vsel %vm2074, %v9154, %v9162
    %v9324 = vsel %vm2074, %v9156, %v9164
    %v9325 = vsel %vm2074, %v9142, %v9150
    %v9326 = vsel %vm2074, %v9144, %v9152
    %v9327 = vsel %vm2074, %v9146, %v9154
    %v9328 = vsel %vm2074, %v9148, %v9156
    %v9329 = vsel %vm2074, %v9262, %v9142
    %v9330 = vsel %vm2074, %v9264, %v9144
    %v9331 = vsel %vm2074, %v9266, %v9146
    %v9332 = vsel %vm2074, %v9268, %v9148
    %v9333 = vld [vmem:[#allocation11] ss:$4 sm:$0xff]
    %s9334 = scalar_lea.vmem [#allocation11], 32
    %v9335 = vld [vmem:[%s9334] ss:$4 sm:$0xff]
    %v9338 = vperm.slane %v9333, 0
    %v9339 = vperm.slane %v9333, 1
    %v9340 = vperm.slane %v9333, 2
    %v9341 = vperm.slane %v9333, 3
    %v9342 = vperm.slane %v9333, 4
    %v9343 = vperm.slane %v9333, 5
    %v9344 = vperm.slane %v9333, 6
    %v9345 = vperm.slane %v9333, 7
    %v9346 = vperm.slane %v9335, 0
    %v9347 = vperm.slane %v9335, 1
    %v9348 = vperm.slane %v9335, 2
    %v9349 = vperm.slane %v9335, 3
    %v9350 = vperm.slane %v9335, 4
    %v9351 = vperm.slane %v9335, 5
    %v9352 = vperm.slane %v9335, 6
    %v9353 = vperm.slane %v9335, 7
    %v9370 = vmul.f32 %v9338, %v9329
    %v9371 = vmul.f32 %v9339, %v9325
    %v9372 = vmul.f32 %v9340, %v9321
    %v9373 = vmul.f32 %v9341, %v9317
    %v9374 = vmul.f32 %v9342, %v9313
    %v9375 = vmul.f32 %v9343, %v9309
    %v9376 = vmul.f32 %v9344, %v9305
    %v9377 = vmul.f32 %v9345, %v9301
    %v9378 = vmul.f32 %v9346, %v9297
    %v9379 = vmul.f32 %v9347, %v9293
    %v9380 = vmul.f32 %v9348, %v9289
    %v9381 = vmul.f32 %v9349, %v9285
    %v9382 = vmul.f32 %v9350, %v9281
    %v9383 = vmul.f32 %v9351, %v9277
    %v9384 = vmul.f32 %v9352, %v9273
    %v9385 = vmul.f32 %v9353, %v9269
    %v9386 = vmul.f32 %v9338, %v9330
    %v9387 = vmul.f32 %v9339, %v9326
    %v9388 = vmul.f32 %v9340, %v9322
    %v9389 = vmul.f32 %v9341, %v9318
    %v9390 = vmul.f32 %v9342, %v9314
    %v9391 = vmul.f32 %v9343, %v9310
    %v9392 = vmul.f32 %v9344, %v9306
    %v9393 = vmul.f32 %v9345, %v9302
    %v9394 = vmul.f32 %v9346, %v9298
    %v9395 = vmul.f32 %v9347, %v9294
    %v9396 = vmul.f32 %v9348, %v9290
    %v9397 = vmul.f32 %v9349, %v9286
    %v9398 = vmul.f32 %v9350, %v9282
    %v9399 = vmul.f32 %v9351, %v9278
    %v9400 = vmul.f32 %v9352, %v9274
    %v9401 = vmul.f32 %v9353, %v9270
    %v9402 = vmul.f32 %v9338, %v9331
    %v9403 = vmul.f32 %v9339, %v9327
    %v9404 = vmul.f32 %v9340, %v9323
    %v9405 = vmul.f32 %v9341, %v9319
    %v9406 = vmul.f32 %v9342, %v9315
    %v9407 = vmul.f32 %v9343, %v9311
    %v9408 = vmul.f32 %v9344, %v9307
    %v9409 = vmul.f32 %v9345, %v9303
    %v9410 = vmul.f32 %v9346, %v9299
    %v9411 = vmul.f32 %v9347, %v9295
    %v9412 = vmul.f32 %v9348, %v9291
    %v9413 = vmul.f32 %v9349, %v9287
    %v9414 = vmul.f32 %v9350, %v9283
    %v9415 = vmul.f32 %v9351, %v9279
    %v9416 = vmul.f32 %v9352, %v9275
    %v9417 = vmul.f32 %v9353, %v9271
    %v9418 = vmul.f32 %v9338, %v9332
    %v9419 = vmul.f32 %v9339, %v9328
    %v9420 = vmul.f32 %v9340, %v9324
    %v9421 = vmul.f32 %v9341, %v9320
    %v9422 = vmul.f32 %v9342, %v9316
    %v9423 = vmul.f32 %v9343, %v9312
    %v9424 = vmul.f32 %v9344, %v9308
    %v9425 = vmul.f32 %v9345, %v9304
    %v9426 = vmul.f32 %v9346, %v9300
    %v9427 = vmul.f32 %v9347, %v9296
    %v9428 = vmul.f32 %v9348, %v9292
    %v9429 = vmul.f32 %v9349, %v9288
    %v9430 = vmul.f32 %v9350, %v9284
    %v9431 = vmul.f32 %v9351, %v9280
    %v9432 = vmul.f32 %v9352, %v9276
    %v9433 = vmul.f32 %v9353, %v9272
    %s9434 = scalar_lea.vmem [#allocation11], 1
    %v9435 = vld [vmem:[%s9434] ss:$4 sm:$0xff]
    %s9436 = scalar_lea.vmem [#allocation11], 33
    %v9437 = vld [vmem:[%s9436] ss:$4 sm:$0xff]
    %v9440 = vperm.slane %v9435, 0
    %v9441 = vperm.slane %v9435, 1
    %v9442 = vperm.slane %v9435, 2
    %v9443 = vperm.slane %v9435, 3
    %v9444 = vperm.slane %v9435, 4
    %v9445 = vperm.slane %v9435, 5
    %v9446 = vperm.slane %v9435, 6
    %v9447 = vperm.slane %v9435, 7
    %v9448 = vperm.slane %v9437, 0
    %v9449 = vperm.slane %v9437, 1
    %v9450 = vperm.slane %v9437, 2
    %v9451 = vperm.slane %v9437, 3
    %v9452 = vperm.slane %v9437, 4
    %v9453 = vperm.slane %v9437, 5
    %v9454 = vperm.slane %v9437, 6
    %v9455 = vperm.slane %v9437, 7
    %v9472 = vmul.f32 %v9440, %v8933
    %v9473 = vmul.f32 %v9441, %v8934
    %v9474 = vmul.f32 %v9442, %v8935
    %v9475 = vmul.f32 %v9443, %v8936
    %v9476 = vmul.f32 %v9444, %v8937
    %v9477 = vmul.f32 %v9445, %v8938
    %v9478 = vmul.f32 %v9446, %v8939
    %v9479 = vmul.f32 %v9447, %v8940
    %v9480 = vmul.f32 %v9448, %v8941
    %v9481 = vmul.f32 %v9449, %v8942
    %v9482 = vmul.f32 %v9450, %v8943
    %v9483 = vmul.f32 %v9451, %v8944
    %v9484 = vmul.f32 %v9452, %v8945
    %v9485 = vmul.f32 %v9453, %v8946
    %v9486 = vmul.f32 %v9454, %v8947
    %v9487 = vmul.f32 %v9455, %v8948
    %v9488 = vmul.f32 %v9440, %v8949
    %v9489 = vmul.f32 %v9441, %v8950
    %v9490 = vmul.f32 %v9442, %v8951
    %v9491 = vmul.f32 %v9443, %v8952
    %v9492 = vmul.f32 %v9444, %v8953
    %v9493 = vmul.f32 %v9445, %v8954
    %v9494 = vmul.f32 %v9446, %v8955
    %v9495 = vmul.f32 %v9447, %v8956
    %v9496 = vmul.f32 %v9448, %v8957
    %v9497 = vmul.f32 %v9449, %v8958
    %v9498 = vmul.f32 %v9450, %v8959
    %v9499 = vmul.f32 %v9451, %v8960
    %v9500 = vmul.f32 %v9452, %v8961
    %v9501 = vmul.f32 %v9453, %v8962
    %v9502 = vmul.f32 %v9454, %v8963
    %v9503 = vmul.f32 %v9455, %v8964
    %v9504 = vmul.f32 %v9440, %v8965
    %v9505 = vmul.f32 %v9441, %v8966
    %v9506 = vmul.f32 %v9442, %v8967
    %v9507 = vmul.f32 %v9443, %v8968
    %v9508 = vmul.f32 %v9444, %v8969
    %v9509 = vmul.f32 %v9445, %v8970
    %v9510 = vmul.f32 %v9446, %v8971
    %v9511 = vmul.f32 %v9447, %v8972
    %v9512 = vmul.f32 %v9448, %v8973
    %v9513 = vmul.f32 %v9449, %v8974
    %v9514 = vmul.f32 %v9450, %v8975
    %v9515 = vmul.f32 %v9451, %v8976
    %v9516 = vmul.f32 %v9452, %v8977
    %v9517 = vmul.f32 %v9453, %v8978
    %v9518 = vmul.f32 %v9454, %v8979
    %v9519 = vmul.f32 %v9455, %v8980
    %v9520 = vmul.f32 %v9440, %v8981
    %v9521 = vmul.f32 %v9441, %v8982
    %v9522 = vmul.f32 %v9442, %v8983
    %v9523 = vmul.f32 %v9443, %v8984
    %v9524 = vmul.f32 %v9444, %v8985
    %v9525 = vmul.f32 %v9445, %v8986
    %v9526 = vmul.f32 %v9446, %v8987
    %v9527 = vmul.f32 %v9447, %v8988
    %v9528 = vmul.f32 %v9448, %v8989
    %v9529 = vmul.f32 %v9449, %v8990
    %v9530 = vmul.f32 %v9450, %v8991
    %v9531 = vmul.f32 %v9451, %v8992
    %v9532 = vmul.f32 %v9452, %v8993
    %v9533 = vmul.f32 %v9453, %v8994
    %v9534 = vmul.f32 %v9454, %v8995
    %v9535 = vmul.f32 %v9455, %v8996
    %v9536 = vadd.f32 %v9370, %v9472
    %v9537 = vadd.f32 %v9371, %v9473
    %v9538 = vadd.f32 %v9372, %v9474
    %v9539 = vadd.f32 %v9373, %v9475
    %v9540 = vadd.f32 %v9374, %v9476
    %v9541 = vadd.f32 %v9375, %v9477
    %v9542 = vadd.f32 %v9376, %v9478
    %v9543 = vadd.f32 %v9377, %v9479
    %v9544 = vadd.f32 %v9378, %v9480
    %v9545 = vadd.f32 %v9379, %v9481
    %v9546 = vadd.f32 %v9380, %v9482
    %v9547 = vadd.f32 %v9381, %v9483
    %v9548 = vadd.f32 %v9382, %v9484
    %v9549 = vadd.f32 %v9383, %v9485
    %v9550 = vadd.f32 %v9384, %v9486
    %v9551 = vadd.f32 %v9385, %v9487
    %v9552 = vadd.f32 %v9386, %v9488
    %v9553 = vadd.f32 %v9387, %v9489
    %v9554 = vadd.f32 %v9388, %v9490
    %v9555 = vadd.f32 %v9389, %v9491
    %v9556 = vadd.f32 %v9390, %v9492
    %v9557 = vadd.f32 %v9391, %v9493
    %v9558 = vadd.f32 %v9392, %v9494
    %v9559 = vadd.f32 %v9393, %v9495
    %v9560 = vadd.f32 %v9394, %v9496
    %v9561 = vadd.f32 %v9395, %v9497
    %v9562 = vadd.f32 %v9396, %v9498
    %v9563 = vadd.f32 %v9397, %v9499
    %v9564 = vadd.f32 %v9398, %v9500
    %v9565 = vadd.f32 %v9399, %v9501
    %v9566 = vadd.f32 %v9400, %v9502
    %v9567 = vadd.f32 %v9401, %v9503
    %v9568 = vadd.f32 %v9402, %v9504
    %v9569 = vadd.f32 %v9403, %v9505
    %v9570 = vadd.f32 %v9404, %v9506
    %v9571 = vadd.f32 %v9405, %v9507
    %v9572 = vadd.f32 %v9406, %v9508
    %v9573 = vadd.f32 %v9407, %v9509
    %v9574 = vadd.f32 %v9408, %v9510
    %v9575 = vadd.f32 %v9409, %v9511
    %v9576 = vadd.f32 %v9410, %v9512
    %v9577 = vadd.f32 %v9411, %v9513
    %v9578 = vadd.f32 %v9412, %v9514
    %v9579 = vadd.f32 %v9413, %v9515
    %v9580 = vadd.f32 %v9414, %v9516
    %v9581 = vadd.f32 %v9415, %v9517
    %v9582 = vadd.f32 %v9416, %v9518
    %v9583 = vadd.f32 %v9417, %v9519
    %v9584 = vadd.f32 %v9418, %v9520
    %v9585 = vadd.f32 %v9419, %v9521
    %v9586 = vadd.f32 %v9420, %v9522
    %v9587 = vadd.f32 %v9421, %v9523
    %v9588 = vadd.f32 %v9422, %v9524
    %v9589 = vadd.f32 %v9423, %v9525
    %v9590 = vadd.f32 %v9424, %v9526
    %v9591 = vadd.f32 %v9425, %v9527
    %v9592 = vadd.f32 %v9426, %v9528
    %v9593 = vadd.f32 %v9427, %v9529
    %v9594 = vadd.f32 %v9428, %v9530
    %v9595 = vadd.f32 %v9429, %v9531
    %v9596 = vadd.f32 %v9430, %v9532
    %v9597 = vadd.f32 %v9431, %v9533
    %v9598 = vadd.f32 %v9432, %v9534
    %v9599 = vadd.f32 %v9433, %v9535
    %9600 = vrot.lane.b32.xlu0 %v9077, 112
    %v9601 = vpop.permute.xlu0 %9600
    %9602 = vrot.lane.b32.xlu0 %v9093, 112
    %v9603 = vpop.permute.xlu0 %9602
    %9604 = vrot.lane.b32.xlu0 %v9109, 112
    %v9605 = vpop.permute.xlu0 %9604
    %9606 = vrot.lane.b32.xlu0 %v9125, 112
    %v9607 = vpop.permute.xlu0 %9606
    %9608 = vrot.lane.b32.xlu0 %v9078, 112
    %v9609 = vpop.permute.xlu0 %9608
    %9610 = vrot.lane.b32.xlu0 %v9094, 112
    %v9611 = vpop.permute.xlu0 %9610
    %9612 = vrot.lane.b32.xlu0 %v9110, 112
    %v9613 = vpop.permute.xlu0 %9612
    %9614 = vrot.lane.b32.xlu0 %v9126, 112
    %v9615 = vpop.permute.xlu0 %9614
    %9616 = vrot.lane.b32.xlu0 %v9079, 112
    %v9617 = vpop.permute.xlu0 %9616
    %9618 = vrot.lane.b32.xlu0 %v9095, 112
    %v9619 = vpop.permute.xlu0 %9618
    %9620 = vrot.lane.b32.xlu0 %v9111, 112
    %v9621 = vpop.permute.xlu0 %9620
    %9622 = vrot.lane.b32.xlu0 %v9127, 112
    %v9623 = vpop.permute.xlu0 %9622
    %9624 = vrot.lane.b32.xlu0 %v9080, 112
    %v9625 = vpop.permute.xlu0 %9624
    %9626 = vrot.lane.b32.xlu0 %v9096, 112
    %v9627 = vpop.permute.xlu0 %9626
    %9628 = vrot.lane.b32.xlu0 %v9112, 112
    %v9629 = vpop.permute.xlu0 %9628
    %9630 = vrot.lane.b32.xlu0 %v9128, 112
    %v9631 = vpop.permute.xlu0 %9630
    %9632 = vrot.lane.b32.xlu0 %v9081, 112
    %v9633 = vpop.permute.xlu0 %9632
    %9634 = vrot.lane.b32.xlu0 %v9097, 112
    %v9635 = vpop.permute.xlu0 %9634
    %9636 = vrot.lane.b32.xlu0 %v9113, 112
    %v9637 = vpop.permute.xlu0 %9636
    %9638 = vrot.lane.b32.xlu0 %v9129, 112
    %v9639 = vpop.permute.xlu0 %9638
    %9640 = vrot.lane.b32.xlu0 %v9082, 112
    %v9641 = vpop.permute.xlu0 %9640
    %9642 = vrot.lane.b32.xlu0 %v9098, 112
    %v9643 = vpop.permute.xlu0 %9642
    %9644 = vrot.lane.b32.xlu0 %v9114, 112
    %v9645 = vpop.permute.xlu0 %9644
    %9646 = vrot.lane.b32.xlu0 %v9130, 112
    %v9647 = vpop.permute.xlu0 %9646
    %9648 = vrot.lane.b32.xlu0 %v9083, 112
    %v9649 = vpop.permute.xlu0 %9648
    %9650 = vrot.lane.b32.xlu0 %v9099, 112
    %v9651 = vpop.permute.xlu0 %9650
    %9652 = vrot.lane.b32.xlu0 %v9115, 112
    %v9653 = vpop.permute.xlu0 %9652
    %9654 = vrot.lane.b32.xlu0 %v9131, 112
    %v9655 = vpop.permute.xlu0 %9654
    %9656 = vrot.lane.b32.xlu0 %v9084, 112
    %v9657 = vpop.permute.xlu0 %9656
    %9658 = vrot.lane.b32.xlu0 %v9100, 112
    %v9659 = vpop.permute.xlu0 %9658
    %9660 = vrot.lane.b32.xlu0 %v9116, 112
    %v9661 = vpop.permute.xlu0 %9660
    %9662 = vrot.lane.b32.xlu0 %v9132, 112
    %v9663 = vpop.permute.xlu0 %9662
    %9664 = vrot.lane.b32.xlu0 %v9085, 112
    %v9665 = vpop.permute.xlu0 %9664
    %9666 = vrot.lane.b32.xlu0 %v9101, 112
    %v9667 = vpop.permute.xlu0 %9666
    %9668 = vrot.lane.b32.xlu0 %v9117, 112
    %v9669 = vpop.permute.xlu0 %9668
    %9670 = vrot.lane.b32.xlu0 %v9133, 112
    %v9671 = vpop.permute.xlu0 %9670
    %9672 = vrot.lane.b32.xlu0 %v9086, 112
    %v9673 = vpop.permute.xlu0 %9672
    %9674 = vrot.lane.b32.xlu0 %v9102, 112
    %v9675 = vpop.permute.xlu0 %9674
    %9676 = vrot.lane.b32.xlu0 %v9118, 112
    %v9677 = vpop.permute.xlu0 %9676
    %9678 = vrot.lane.b32.xlu0 %v9134, 112
    %v9679 = vpop.permute.xlu0 %9678
    %9680 = vrot.lane.b32.xlu0 %v9087, 112
    %v9681 = vpop.permute.xlu0 %9680
    %9682 = vrot.lane.b32.xlu0 %v9103, 112
    %v9683 = vpop.permute.xlu0 %9682
    %9684 = vrot.lane.b32.xlu0 %v9119, 112
    %v9685 = vpop.permute.xlu0 %9684
    %9686 = vrot.lane.b32.xlu0 %v9135, 112
    %v9687 = vpop.permute.xlu0 %9686
    %9688 = vrot.lane.b32.xlu0 %v9088, 112
    %v9689 = vpop.permute.xlu0 %9688
    %9690 = vrot.lane.b32.xlu0 %v9104, 112
    %v9691 = vpop.permute.xlu0 %9690
    %9692 = vrot.lane.b32.xlu0 %v9120, 112
    %v9693 = vpop.permute.xlu0 %9692
    %9694 = vrot.lane.b32.xlu0 %v9136, 112
    %v9695 = vpop.permute.xlu0 %9694
    %9696 = vrot.lane.b32.xlu0 %v9089, 112
    %v9697 = vpop.permute.xlu0 %9696
    %9698 = vrot.lane.b32.xlu0 %v9105, 112
    %v9699 = vpop.permute.xlu0 %9698
    %9700 = vrot.lane.b32.xlu0 %v9121, 112
    %v9701 = vpop.permute.xlu0 %9700
    %9702 = vrot.lane.b32.xlu0 %v9137, 112
    %v9703 = vpop.permute.xlu0 %9702
    %9704 = vrot.lane.b32.xlu0 %v9090, 112
    %v9705 = vpop.permute.xlu0 %9704
    %9706 = vrot.lane.b32.xlu0 %v9106, 112
    %v9707 = vpop.permute.xlu0 %9706
    %9708 = vrot.lane.b32.xlu0 %v9122, 112
    %v9709 = vpop.permute.xlu0 %9708
    %9710 = vrot.lane.b32.xlu0 %v9138, 112
    %v9711 = vpop.permute.xlu0 %9710
    %9712 = vrot.lane.b32.xlu0 %v9091, 112
    %v9713 = vpop.permute.xlu0 %9712
    %9714 = vrot.lane.b32.xlu0 %v9107, 112
    %v9715 = vpop.permute.xlu0 %9714
    %9716 = vrot.lane.b32.xlu0 %v9123, 112
    %v9717 = vpop.permute.xlu0 %9716
    %9718 = vrot.lane.b32.xlu0 %v9139, 112
    %v9719 = vpop.permute.xlu0 %9718
    %9720 = vrot.lane.b32.xlu0 %v9092, 112
    %v9721 = vpop.permute.xlu0 %9720
    %9722 = vrot.lane.b32.xlu0 %v9108, 112
    %v9723 = vpop.permute.xlu0 %9722
    %9724 = vrot.lane.b32.xlu0 %v9124, 112
    %v9725 = vpop.permute.xlu0 %9724
    %9726 = vrot.lane.b32.xlu0 %v9140, 112
    %v9727 = vpop.permute.xlu0 %9726
    %v9728 = vsel %vm2271, %v9713, %v9721
    %v9729 = vsel %vm2271, %v9715, %v9723
    %v9730 = vsel %vm2271, %v9717, %v9725
    %v9731 = vsel %vm2271, %v9719, %v9727
    %v9732 = vsel %vm2271, %v9705, %v9713
    %v9733 = vsel %vm2271, %v9707, %v9715
    %v9734 = vsel %vm2271, %v9709, %v9717
    %v9735 = vsel %vm2271, %v9711, %v9719
    %v9736 = vsel %vm2271, %v9697, %v9705
    %v9737 = vsel %vm2271, %v9699, %v9707
    %v9738 = vsel %vm2271, %v9701, %v9709
    %v9739 = vsel %vm2271, %v9703, %v9711
    %v9740 = vsel %vm2271, %v9689, %v9697
    %v9741 = vsel %vm2271, %v9691, %v9699
    %v9742 = vsel %vm2271, %v9693, %v9701
    %v9743 = vsel %vm2271, %v9695, %v9703
    %v9744 = vsel %vm2271, %v9681, %v9689
    %v9745 = vsel %vm2271, %v9683, %v9691
    %v9746 = vsel %vm2271, %v9685, %v9693
    %v9747 = vsel %vm2271, %v9687, %v9695
    %v9748 = vsel %vm2271, %v9673, %v9681
    %v9749 = vsel %vm2271, %v9675, %v9683
    %v9750 = vsel %vm2271, %v9677, %v9685
    %v9751 = vsel %vm2271, %v9679, %v9687
    %v9752 = vsel %vm2271, %v9665, %v9673
    %v9753 = vsel %vm2271, %v9667, %v9675
    %v9754 = vsel %vm2271, %v9669, %v9677
    %v9755 = vsel %vm2271, %v9671, %v9679
    %v9756 = vsel %vm2271, %v9657, %v9665
    %v9757 = vsel %vm2271, %v9659, %v9667
    %v9758 = vsel %vm2271, %v9661, %v9669
    %v9759 = vsel %vm2271, %v9663, %v9671
    %v9760 = vsel %vm2271, %v9649, %v9657
    %v9761 = vsel %vm2271, %v9651, %v9659
    %v9762 = vsel %vm2271, %v9653, %v9661
    %v9763 = vsel %vm2271, %v9655, %v9663
    %v9764 = vsel %vm2271, %v9641, %v9649
    %v9765 = vsel %vm2271, %v9643, %v9651
    %v9766 = vsel %vm2271, %v9645, %v9653
    %v9767 = vsel %vm2271, %v9647, %v9655
    %v9768 = vsel %vm2271, %v9633, %v9641
    %v9769 = vsel %vm2271, %v9635, %v9643
    %v9770 = vsel %vm2271, %v9637, %v9645
    %v9771 = vsel %vm2271, %v9639, %v9647
    %v9772 = vsel %vm2271, %v9625, %v9633
    %v9773 = vsel %vm2271, %v9627, %v9635
    %v9774 = vsel %vm2271, %v9629, %v9637
    %v9775 = vsel %vm2271, %v9631, %v9639
    %v9776 = vsel %vm2271, %v9617, %v9625
    %v9777 = vsel %vm2271, %v9619, %v9627
    %v9778 = vsel %vm2271, %v9621, %v9629
    %v9779 = vsel %vm2271, %v9623, %v9631
    %v9780 = vsel %vm2271, %v9609, %v9617
    %v9781 = vsel %vm2271, %v9611, %v9619
    %v9782 = vsel %vm2271, %v9613, %v9621
    %v9783 = vsel %vm2271, %v9615, %v9623
    %v9784 = vsel %vm2271, %v9601, %v9609
    %v9785 = vsel %vm2271, %v9603, %v9611
    %v9786 = vsel %vm2271, %v9605, %v9613
    %v9787 = vsel %vm2271, %v9607, %v9615
    %v9788 = vsel %vm2271, %v9721, %v9601
    %v9789 = vsel %vm2271, %v9723, %v9603
    %v9790 = vsel %vm2271, %v9725, %v9605
    %v9791 = vsel %vm2271, %v9727, %v9607
    %s9792 = scalar_lea.vmem [#allocation11], 2
    %v9793 = vld [vmem:[%s9792] ss:$4 sm:$0xff]
    %s9794 = scalar_lea.vmem [#allocation11], 34
    %v9795 = vld [vmem:[%s9794] ss:$4 sm:$0xff]
    %v9798 = vperm.slane %v9793, 0
    %v9799 = vperm.slane %v9793, 1
    %v9800 = vperm.slane %v9793, 2
    %v9801 = vperm.slane %v9793, 3
    %v9802 = vperm.slane %v9793, 4
    %v9803 = vperm.slane %v9793, 5
    %v9804 = vperm.slane %v9793, 6
    %v9805 = vperm.slane %v9793, 7
    %v9806 = vperm.slane %v9795, 0
    %v9807 = vperm.slane %v9795, 1
    %v9808 = vperm.slane %v9795, 2
    %v9809 = vperm.slane %v9795, 3
    %v9810 = vperm.slane %v9795, 4
    %v9811 = vperm.slane %v9795, 5
    %v9812 = vperm.slane %v9795, 6
    %v9813 = vperm.slane %v9795, 7
    %v9830 = vmul.f32 %v9798, %v9784
    %v9831 = vmul.f32 %v9799, %v9780
    %v9832 = vmul.f32 %v9800, %v9776
    %v9833 = vmul.f32 %v9801, %v9772
    %v9834 = vmul.f32 %v9802, %v9768
    %v9835 = vmul.f32 %v9803, %v9764
    %v9836 = vmul.f32 %v9804, %v9760
    %v9837 = vmul.f32 %v9805, %v9756
    %v9838 = vmul.f32 %v9806, %v9752
    %v9839 = vmul.f32 %v9807, %v9748
    %v9840 = vmul.f32 %v9808, %v9744
    %v9841 = vmul.f32 %v9809, %v9740
    %v9842 = vmul.f32 %v9810, %v9736
    %v9843 = vmul.f32 %v9811, %v9732
    %v9844 = vmul.f32 %v9812, %v9728
    %v9845 = vmul.f32 %v9813, %v9788
    %v9846 = vmul.f32 %v9798, %v9785
    %v9847 = vmul.f32 %v9799, %v9781
    %v9848 = vmul.f32 %v9800, %v9777
    %v9849 = vmul.f32 %v9801, %v9773
    %v9850 = vmul.f32 %v9802, %v9769
    %v9851 = vmul.f32 %v9803, %v9765
    %v9852 = vmul.f32 %v9804, %v9761
    %v9853 = vmul.f32 %v9805, %v9757
    %v9854 = vmul.f32 %v9806, %v9753
    %v9855 = vmul.f32 %v9807, %v9749
    %v9856 = vmul.f32 %v9808, %v9745
    %v9857 = vmul.f32 %v9809, %v9741
    %v9858 = vmul.f32 %v9810, %v9737
    %v9859 = vmul.f32 %v9811, %v9733
    %v9860 = vmul.f32 %v9812, %v9729
    %v9861 = vmul.f32 %v9813, %v9789
    %v9862 = vmul.f32 %v9798, %v9786
    %v9863 = vmul.f32 %v9799, %v9782
    %v9864 = vmul.f32 %v9800, %v9778
    %v9865 = vmul.f32 %v9801, %v9774
    %v9866 = vmul.f32 %v9802, %v9770
    %v9867 = vmul.f32 %v9803, %v9766
    %v9868 = vmul.f32 %v9804, %v9762
    %v9869 = vmul.f32 %v9805, %v9758
    %v9870 = vmul.f32 %v9806, %v9754
    %v9871 = vmul.f32 %v9807, %v9750
    %v9872 = vmul.f32 %v9808, %v9746
    %v9873 = vmul.f32 %v9809, %v9742
    %v9874 = vmul.f32 %v9810, %v9738
    %v9875 = vmul.f32 %v9811, %v9734
    %v9876 = vmul.f32 %v9812, %v9730
    %v9877 = vmul.f32 %v9813, %v9790
    %v9878 = vmul.f32 %v9798, %v9787
    %v9879 = vmul.f32 %v9799, %v9783
    %v9880 = vmul.f32 %v9800, %v9779
    %v9881 = vmul.f32 %v9801, %v9775
    %v9882 = vmul.f32 %v9802, %v9771
    %v9883 = vmul.f32 %v9803, %v9767
    %v9884 = vmul.f32 %v9804, %v9763
    %v9885 = vmul.f32 %v9805, %v9759
    %v9886 = vmul.f32 %v9806, %v9755
    %v9887 = vmul.f32 %v9807, %v9751
    %v9888 = vmul.f32 %v9808, %v9747
    %v9889 = vmul.f32 %v9809, %v9743
    %v9890 = vmul.f32 %v9810, %v9739
    %v9891 = vmul.f32 %v9811, %v9735
    %v9892 = vmul.f32 %v9812, %v9731
    %v9893 = vmul.f32 %v9813, %v9791
    %v9894 = vadd.f32 %v9536, %v9830
    %v9895 = vadd.f32 %v9537, %v9831
    %v9896 = vadd.f32 %v9538, %v9832
    %v9897 = vadd.f32 %v9539, %v9833
    %v9898 = vadd.f32 %v9540, %v9834
    %v9899 = vadd.f32 %v9541, %v9835
    %v9900 = vadd.f32 %v9542, %v9836
    %v9901 = vadd.f32 %v9543, %v9837
    %v9902 = vadd.f32 %v9544, %v9838
    %v9903 = vadd.f32 %v9545, %v9839
    %v9904 = vadd.f32 %v9546, %v9840
    %v9905 = vadd.f32 %v9547, %v9841
    %v9906 = vadd.f32 %v9548, %v9842
    %v9907 = vadd.f32 %v9549, %v9843
    %v9908 = vadd.f32 %v9550, %v9844
    %v9909 = vadd.f32 %v9551, %v9845
    %v9910 = vadd.f32 %v9552, %v9846
    %v9911 = vadd.f32 %v9553, %v9847
    %v9912 = vadd.f32 %v9554, %v9848
    %v9913 = vadd.f32 %v9555, %v9849
    %v9914 = vadd.f32 %v9556, %v9850
    %v9915 = vadd.f32 %v9557, %v9851
    %v9916 = vadd.f32 %v9558, %v9852
    %v9917 = vadd.f32 %v9559, %v9853
    %v9918 = vadd.f32 %v9560, %v9854
    %v9919 = vadd.f32 %v9561, %v9855
    %v9920 = vadd.f32 %v9562, %v9856
    %v9921 = vadd.f32 %v9563, %v9857
    %v9922 = vadd.f32 %v9564, %v9858
    %v9923 = vadd.f32 %v9565, %v9859
    %v9924 = vadd.f32 %v9566, %v9860
    %v9925 = vadd.f32 %v9567, %v9861
    %v9926 = vadd.f32 %v9568, %v9862
    %v9927 = vadd.f32 %v9569, %v9863
    %v9928 = vadd.f32 %v9570, %v9864
    %v9929 = vadd.f32 %v9571, %v9865
    %v9930 = vadd.f32 %v9572, %v9866
    %v9931 = vadd.f32 %v9573, %v9867
    %v9932 = vadd.f32 %v9574, %v9868
    %v9933 = vadd.f32 %v9575, %v9869
    %v9934 = vadd.f32 %v9576, %v9870
    %v9935 = vadd.f32 %v9577, %v9871
    %v9936 = vadd.f32 %v9578, %v9872
    %v9937 = vadd.f32 %v9579, %v9873
    %v9938 = vadd.f32 %v9580, %v9874
    %v9939 = vadd.f32 %v9581, %v9875
    %v9940 = vadd.f32 %v9582, %v9876
    %v9941 = vadd.f32 %v9583, %v9877
    %v9942 = vadd.f32 %v9584, %v9878
    %v9943 = vadd.f32 %v9585, %v9879
    %v9944 = vadd.f32 %v9586, %v9880
    %v9945 = vadd.f32 %v9587, %v9881
    %v9946 = vadd.f32 %v9588, %v9882
    %v9947 = vadd.f32 %v9589, %v9883
    %v9948 = vadd.f32 %v9590, %v9884
    %v9949 = vadd.f32 %v9591, %v9885
    %v9950 = vadd.f32 %v9592, %v9886
    %v9951 = vadd.f32 %v9593, %v9887
    %v9952 = vadd.f32 %v9594, %v9888
    %v9953 = vadd.f32 %v9595, %v9889
    %v9954 = vadd.f32 %v9596, %v9890
    %v9955 = vadd.f32 %v9597, %v9891
    %v9956 = vadd.f32 %v9598, %v9892
    %v9957 = vadd.f32 %v9599, %v9893
    %v9958 = vld [vmem:[%s24] sm:$0xff]
    %v9959 = vld [vmem:[%s24 + $0x8] sm:$0xff]
    %v9960 = vld [vmem:[%s24 + $0x10] sm:$0xff]
    %v9961 = vld [vmem:[%s24 + $0x18] sm:$0xff]
    %9963 = vset.pattern.permute.xlu0 0
    %9964 = vperm.xlu0 %9963, %v9958
    %v9965 = vpop.permute.xlu0 %9964
    %9968 = vset.pattern.permute.xlu0 0
    %9969 = vperm.xlu0 %9968, %v9959
    %v9970 = vpop.permute.xlu0 %9969
    %9973 = vset.pattern.permute.xlu0 0
    %9974 = vperm.xlu0 %9973, %v9960
    %v9975 = vpop.permute.xlu0 %9974
    %9978 = vset.pattern.permute.xlu0 0
    %9979 = vperm.xlu0 %9978, %v9961
    %v9980 = vpop.permute.xlu0 %9979
    %v9982 = vadd.f32 %v9894, %v9965
    %v9983 = vadd.f32 %v9895, %v9965
    %v9984 = vadd.f32 %v9896, %v9965
    %v9985 = vadd.f32 %v9897, %v9965
    %v9986 = vadd.f32 %v9898, %v9965
    %v9987 = vadd.f32 %v9899, %v9965
    %v9988 = vadd.f32 %v9900, %v9965
    %v9989 = vadd.f32 %v9901, %v9965
    %v9990 = vadd.f32 %v9902, %v9965
    %v9991 = vadd.f32 %v9903, %v9965
    %v9992 = vadd.f32 %v9904, %v9965
    %v9993 = vadd.f32 %v9905, %v9965
    %v9994 = vadd.f32 %v9906, %v9965
    %v9995 = vadd.f32 %v9907, %v9965
    %v9996 = vadd.f32 %v9908, %v9965
    %v9997 = vadd.f32 %v9909, %v9965
    %v9998 = vadd.f32 %v9910, %v9970
    %v9999 = vadd.f32 %v9911, %v9970
    %v10000 = vadd.f32 %v9912, %v9970
    %v10001 = vadd.f32 %v9913, %v9970
    %v10002 = vadd.f32 %v9914, %v9970
    %v10003 = vadd.f32 %v9915, %v9970
    %v10004 = vadd.f32 %v9916, %v9970
    %v10005 = vadd.f32 %v9917, %v9970
    %v10006 = vadd.f32 %v9918, %v9970
    %v10007 = vadd.f32 %v9919, %v9970
    %v10008 = vadd.f32 %v9920, %v9970
    %v10009 = vadd.f32 %v9921, %v9970
    %v10010 = vadd.f32 %v9922, %v9970
    %v10011 = vadd.f32 %v9923, %v9970
    %v10012 = vadd.f32 %v9924, %v9970
    %v10013 = vadd.f32 %v9925, %v9970
    %v10014 = vadd.f32 %v9926, %v9975
    %v10015 = vadd.f32 %v9927, %v9975
    %v10016 = vadd.f32 %v9928, %v9975
    %v10017 = vadd.f32 %v9929, %v9975
    %v10018 = vadd.f32 %v9930, %v9975
    %v10019 = vadd.f32 %v9931, %v9975
    %v10020 = vadd.f32 %v9932, %v9975
    %v10021 = vadd.f32 %v9933, %v9975
    %v10022 = vadd.f32 %v9934, %v9975
    %v10023 = vadd.f32 %v9935, %v9975
    %v10024 = vadd.f32 %v9936, %v9975
    %v10025 = vadd.f32 %v9937, %v9975
    %v10026 = vadd.f32 %v9938, %v9975
    %v10027 = vadd.f32 %v9939, %v9975
    %v10028 = vadd.f32 %v9940, %v9975
    %v10029 = vadd.f32 %v9941, %v9975
    %v10030 = vadd.f32 %v9942, %v9980
    %v10031 = vadd.f32 %v9943, %v9980
    %v10032 = vadd.f32 %v9944, %v9980
    %v10033 = vadd.f32 %v9945, %v9980
    %v10034 = vadd.f32 %v9946, %v9980
    %v10035 = vadd.f32 %v9947, %v9980
    %v10036 = vadd.f32 %v9948, %v9980
    %v10037 = vadd.f32 %v9949, %v9980
    %v10038 = vadd.f32 %v9950, %v9980
    %v10039 = vadd.f32 %v9951, %v9980
    %v10040 = vadd.f32 %v9952, %v9980
    %v10041 = vadd.f32 %v9953, %v9980
    %v10042 = vadd.f32 %v9954, %v9980
    %v10043 = vadd.f32 %v9955, %v9980
    %v10044 = vadd.f32 %v9956, %v9980
    %v10045 = vadd.f32 %v9957, %v9980
    %v10046 = vmul.f32 %v9982, 0.5
    %v10047 = vmul.f32 %v9983, 0.5
    %v10048 = vmul.f32 %v9984, 0.5
    %v10049 = vmul.f32 %v9985, 0.5
    %v10050 = vmul.f32 %v9986, 0.5
    %v10051 = vmul.f32 %v9987, 0.5
    %v10052 = vmul.f32 %v9988, 0.5
    %v10053 = vmul.f32 %v9989, 0.5
    %v10054 = vmul.f32 %v9990, 0.5
    %v10055 = vmul.f32 %v9991, 0.5
    %v10056 = vmul.f32 %v9992, 0.5
    %v10057 = vmul.f32 %v9993, 0.5
    %v10058 = vmul.f32 %v9994, 0.5
    %v10059 = vmul.f32 %v9995, 0.5
    %v10060 = vmul.f32 %v9996, 0.5
    %v10061 = vmul.f32 %v9997, 0.5
    %v10062 = vmul.f32 %v9998, 0.5
    %v10063 = vmul.f32 %v9999, 0.5
    %v10064 = vmul.f32 %v10000, 0.5
    %v10065 = vmul.f32 %v10001, 0.5
    %v10066 = vmul.f32 %v10002, 0.5
    %v10067 = vmul.f32 %v10003, 0.5
    %v10068 = vmul.f32 %v10004, 0.5
    %v10069 = vmul.f32 %v10005, 0.5
    %v10070 = vmul.f32 %v10006, 0.5
    %v10071 = vmul.f32 %v10007, 0.5
    %v10072 = vmul.f32 %v10008, 0.5
    %v10073 = vmul.f32 %v10009, 0.5
    %v10074 = vmul.f32 %v10010, 0.5
    %v10075 = vmul.f32 %v10011, 0.5
    %v10076 = vmul.f32 %v10012, 0.5
    %v10077 = vmul.f32 %v10013, 0.5
    %v10078 = vmul.f32 %v10014, 0.5
    %v10079 = vmul.f32 %v10015, 0.5
    %v10080 = vmul.f32 %v10016, 0.5
    %v10081 = vmul.f32 %v10017, 0.5
    %v10082 = vmul.f32 %v10018, 0.5
    %v10083 = vmul.f32 %v10019, 0.5
    %v10084 = vmul.f32 %v10020, 0.5
    %v10085 = vmul.f32 %v10021, 0.5
    %v10086 = vmul.f32 %v10022, 0.5
    %v10087 = vmul.f32 %v10023, 0.5
    %v10088 = vmul.f32 %v10024, 0.5
    %v10089 = vmul.f32 %v10025, 0.5
    %v10090 = vmul.f32 %v10026, 0.5
    %v10091 = vmul.f32 %v10027, 0.5
    %v10092 = vmul.f32 %v10028, 0.5
    %v10093 = vmul.f32 %v10029, 0.5
    %v10094 = vmul.f32 %v10030, 0.5
    %v10095 = vmul.f32 %v10031, 0.5
    %v10096 = vmul.f32 %v10032, 0.5
    %v10097 = vmul.f32 %v10033, 0.5
    %v10098 = vmul.f32 %v10034, 0.5
    %v10099 = vmul.f32 %v10035, 0.5
    %v10100 = vmul.f32 %v10036, 0.5
    %v10101 = vmul.f32 %v10037, 0.5
    %v10102 = vmul.f32 %v10038, 0.5
    %v10103 = vmul.f32 %v10039, 0.5
    %v10104 = vmul.f32 %v10040, 0.5
    %v10105 = vmul.f32 %v10041, 0.5
    %v10106 = vmul.f32 %v10042, 0.5
    %v10107 = vmul.f32 %v10043, 0.5
    %v10108 = vmul.f32 %v10044, 0.5
    %v10109 = vmul.f32 %v10045, 0.5
    %v10110 = vmul.f32 %v9982, %v9982
    %v10111 = vmul.f32 %v9983, %v9983
    %v10112 = vmul.f32 %v9984, %v9984
    %v10113 = vmul.f32 %v9985, %v9985
    %v10114 = vmul.f32 %v9986, %v9986
    %v10115 = vmul.f32 %v9987, %v9987
    %v10116 = vmul.f32 %v9988, %v9988
    %v10117 = vmul.f32 %v9989, %v9989
    %v10118 = vmul.f32 %v9990, %v9990
    %v10119 = vmul.f32 %v9991, %v9991
    %v10120 = vmul.f32 %v9992, %v9992
    %v10121 = vmul.f32 %v9993, %v9993
    %v10122 = vmul.f32 %v9994, %v9994
    %v10123 = vmul.f32 %v9995, %v9995
    %v10124 = vmul.f32 %v9996, %v9996
    %v10125 = vmul.f32 %v9997, %v9997
    %v10126 = vmul.f32 %v9998, %v9998
    %v10127 = vmul.f32 %v9999, %v9999
    %v10128 = vmul.f32 %v10000, %v10000
    %v10129 = vmul.f32 %v10001, %v10001
    %v10130 = vmul.f32 %v10002, %v10002
    %v10131 = vmul.f32 %v10003, %v10003
    %v10132 = vmul.f32 %v10004, %v10004
    %v10133 = vmul.f32 %v10005, %v10005
    %v10134 = vmul.f32 %v10006, %v10006
    %v10135 = vmul.f32 %v10007, %v10007
    %v10136 = vmul.f32 %v10008, %v10008
    %v10137 = vmul.f32 %v10009, %v10009
    %v10138 = vmul.f32 %v10010, %v10010
    %v10139 = vmul.f32 %v10011, %v10011
    %v10140 = vmul.f32 %v10012, %v10012
    %v10141 = vmul.f32 %v10013, %v10013
    %v10142 = vmul.f32 %v10014, %v10014
    %v10143 = vmul.f32 %v10015, %v10015
    %v10144 = vmul.f32 %v10016, %v10016
    %v10145 = vmul.f32 %v10017, %v10017
    %v10146 = vmul.f32 %v10018, %v10018
    %v10147 = vmul.f32 %v10019, %v10019
    %v10148 = vmul.f32 %v10020, %v10020
    %v10149 = vmul.f32 %v10021, %v10021
    %v10150 = vmul.f32 %v10022, %v10022
    %v10151 = vmul.f32 %v10023, %v10023
    %v10152 = vmul.f32 %v10024, %v10024
    %v10153 = vmul.f32 %v10025, %v10025
    %v10154 = vmul.f32 %v10026, %v10026
    %v10155 = vmul.f32 %v10027, %v10027
    %v10156 = vmul.f32 %v10028, %v10028
    %v10157 = vmul.f32 %v10029, %v10029
    %v10158 = vmul.f32 %v10030, %v10030
    %v10159 = vmul.f32 %v10031, %v10031
    %v10160 = vmul.f32 %v10032, %v10032
    %v10161 = vmul.f32 %v10033, %v10033
    %v10162 = vmul.f32 %v10034, %v10034
    %v10163 = vmul.f32 %v10035, %v10035
    %v10164 = vmul.f32 %v10036, %v10036
    %v10165 = vmul.f32 %v10037, %v10037
    %v10166 = vmul.f32 %v10038, %v10038
    %v10167 = vmul.f32 %v10039, %v10039
    %v10168 = vmul.f32 %v10040, %v10040
    %v10169 = vmul.f32 %v10041, %v10041
    %v10170 = vmul.f32 %v10042, %v10042
    %v10171 = vmul.f32 %v10043, %v10043
    %v10172 = vmul.f32 %v10044, %v10044
    %v10173 = vmul.f32 %v10045, %v10045
    %v10174 = vmul.f32 %v10110, %v9982
    %v10175 = vmul.f32 %v10111, %v9983
    %v10176 = vmul.f32 %v10112, %v9984
    %v10177 = vmul.f32 %v10113, %v9985
    %v10178 = vmul.f32 %v10114, %v9986
    %v10179 = vmul.f32 %v10115, %v9987
    %v10180 = vmul.f32 %v10116, %v9988
    %v10181 = vmul.f32 %v10117, %v9989
    %v10182 = vmul.f32 %v10118, %v9990
    %v10183 = vmul.f32 %v10119, %v9991
    %v10184 = vmul.f32 %v10120, %v9992
    %v10185 = vmul.f32 %v10121, %v9993
    %v10186 = vmul.f32 %v10122, %v9994
    %v10187 = vmul.f32 %v10123, %v9995
    %v10188 = vmul.f32 %v10124, %v9996
    %v10189 = vmul.f32 %v10125, %v9997
    %v10190 = vmul.f32 %v10126, %v9998
    %v10191 = vmul.f32 %v10127, %v9999
    %v10192 = vmul.f32 %v10128, %v10000
    %v10193 = vmul.f32 %v10129, %v10001
    %v10194 = vmul.f32 %v10130, %v10002
    %v10195 = vmul.f32 %v10131, %v10003
    %v10196 = vmul.f32 %v10132, %v10004
    %v10197 = vmul.f32 %v10133, %v10005
    %v10198 = vmul.f32 %v10134, %v10006
    %v10199 = vmul.f32 %v10135, %v10007
    %v10200 = vmul.f32 %v10136, %v10008
    %v10201 = vmul.f32 %v10137, %v10009
    %v10202 = vmul.f32 %v10138, %v10010
    %v10203 = vmul.f32 %v10139, %v10011
    %v10204 = vmul.f32 %v10140, %v10012
    %v10205 = vmul.f32 %v10141, %v10013
    %v10206 = vmul.f32 %v10142, %v10014
    %v10207 = vmul.f32 %v10143, %v10015
    %v10208 = vmul.f32 %v10144, %v10016
    %v10209 = vmul.f32 %v10145, %v10017
    %v10210 = vmul.f32 %v10146, %v10018
    %v10211 = vmul.f32 %v10147, %v10019
    %v10212 = vmul.f32 %v10148, %v10020
    %v10213 = vmul.f32 %v10149, %v10021
    %v10214 = vmul.f32 %v10150, %v10022
    %v10215 = vmul.f32 %v10151, %v10023
    %v10216 = vmul.f32 %v10152, %v10024
    %v10217 = vmul.f32 %v10153, %v10025
    %v10218 = vmul.f32 %v10154, %v10026
    %v10219 = vmul.f32 %v10155, %v10027
    %v10220 = vmul.f32 %v10156, %v10028
    %v10221 = vmul.f32 %v10157, %v10029
    %v10222 = vmul.f32 %v10158, %v10030
    %v10223 = vmul.f32 %v10159, %v10031
    %v10224 = vmul.f32 %v10160, %v10032
    %v10225 = vmul.f32 %v10161, %v10033
    %v10226 = vmul.f32 %v10162, %v10034
    %v10227 = vmul.f32 %v10163, %v10035
    %v10228 = vmul.f32 %v10164, %v10036
    %v10229 = vmul.f32 %v10165, %v10037
    %v10230 = vmul.f32 %v10166, %v10038
    %v10231 = vmul.f32 %v10167, %v10039
    %v10232 = vmul.f32 %v10168, %v10040
    %v10233 = vmul.f32 %v10169, %v10041
    %v10234 = vmul.f32 %v10170, %v10042
    %v10235 = vmul.f32 %v10171, %v10043
    %v10236 = vmul.f32 %v10172, %v10044
    %v10237 = vmul.f32 %v10173, %v10045
    %v10238 = vmul.f32 %v10174, 0.044715
    %v10239 = vmul.f32 %v10175, 0.044715
    %v10240 = vmul.f32 %v10176, 0.044715
    %v10241 = vmul.f32 %v10177, 0.044715
    %v10242 = vmul.f32 %v10178, 0.044715
    %v10243 = vmul.f32 %v10179, 0.044715
    %v10244 = vmul.f32 %v10180, 0.044715
    %v10245 = vmul.f32 %v10181, 0.044715
    %v10246 = vmul.f32 %v10182, 0.044715
    %v10247 = vmul.f32 %v10183, 0.044715
    %v10248 = vmul.f32 %v10184, 0.044715
    %v10249 = vmul.f32 %v10185, 0.044715
    %v10250 = vmul.f32 %v10186, 0.044715
    %v10251 = vmul.f32 %v10187, 0.044715
    %v10252 = vmul.f32 %v10188, 0.044715
    %v10253 = vmul.f32 %v10189, 0.044715
    %v10254 = vmul.f32 %v10190, 0.044715
    %v10255 = vmul.f32 %v10191, 0.044715
    %v10256 = vmul.f32 %v10192, 0.044715
    %v10257 = vmul.f32 %v10193, 0.044715
    %v10258 = vmul.f32 %v10194, 0.044715
    %v10259 = vmul.f32 %v10195, 0.044715
    %v10260 = vmul.f32 %v10196, 0.044715
    %v10261 = vmul.f32 %v10197, 0.044715
    %v10262 = vmul.f32 %v10198, 0.044715
    %v10263 = vmul.f32 %v10199, 0.044715
    %v10264 = vmul.f32 %v10200, 0.044715
    %v10265 = vmul.f32 %v10201, 0.044715
    %v10266 = vmul.f32 %v10202, 0.044715
    %v10267 = vmul.f32 %v10203, 0.044715
    %v10268 = vmul.f32 %v10204, 0.044715
    %v10269 = vmul.f32 %v10205, 0.044715
    %v10270 = vmul.f32 %v10206, 0.044715
    %v10271 = vmul.f32 %v10207, 0.044715
    %v10272 = vmul.f32 %v10208, 0.044715
    %v10273 = vmul.f32 %v10209, 0.044715
    %v10274 = vmul.f32 %v10210, 0.044715
    %v10275 = vmul.f32 %v10211, 0.044715
    %v10276 = vmul.f32 %v10212, 0.044715
    %v10277 = vmul.f32 %v10213, 0.044715
    %v10278 = vmul.f32 %v10214, 0.044715
    %v10279 = vmul.f32 %v10215, 0.044715
    %v10280 = vmul.f32 %v10216, 0.044715
    %v10281 = vmul.f32 %v10217, 0.044715
    %v10282 = vmul.f32 %v10218, 0.044715
    %v10283 = vmul.f32 %v10219, 0.044715
    %v10284 = vmul.f32 %v10220, 0.044715
    %v10285 = vmul.f32 %v10221, 0.044715
    %v10286 = vmul.f32 %v10222, 0.044715
    %v10287 = vmul.f32 %v10223, 0.044715
    %v10288 = vmul.f32 %v10224, 0.044715
    %v10289 = vmul.f32 %v10225, 0.044715
    %v10290 = vmul.f32 %v10226, 0.044715
    %v10291 = vmul.f32 %v10227, 0.044715
    %v10292 = vmul.f32 %v10228, 0.044715
    %v10293 = vmul.f32 %v10229, 0.044715
    %v10294 = vmul.f32 %v10230, 0.044715
    %v10295 = vmul.f32 %v10231, 0.044715
    %v10296 = vmul.f32 %v10232, 0.044715
    %v10297 = vmul.f32 %v10233, 0.044715
    %v10298 = vmul.f32 %v10234, 0.044715
    %v10299 = vmul.f32 %v10235, 0.044715
    %v10300 = vmul.f32 %v10236, 0.044715
    %v10301 = vmul.f32 %v10237, 0.044715
    %v10302 = vadd.f32 %v9982, %v10238
    %v10303 = vadd.f32 %v9983, %v10239
    %v10304 = vadd.f32 %v9984, %v10240
    %v10305 = vadd.f32 %v9985, %v10241
    %v10306 = vadd.f32 %v9986, %v10242
    %v10307 = vadd.f32 %v9987, %v10243
    %v10308 = vadd.f32 %v9988, %v10244
    %v10309 = vadd.f32 %v9989, %v10245
    %v10310 = vadd.f32 %v9990, %v10246
    %v10311 = vadd.f32 %v9991, %v10247
    %v10312 = vadd.f32 %v9992, %v10248
    %v10313 = vadd.f32 %v9993, %v10249
    %v10314 = vadd.f32 %v9994, %v10250
    %v10315 = vadd.f32 %v9995, %v10251
    %v10316 = vadd.f32 %v9996, %v10252
    %v10317 = vadd.f32 %v9997, %v10253
    %v10318 = vadd.f32 %v9998, %v10254
    %v10319 = vadd.f32 %v9999, %v10255
    %v10320 = vadd.f32 %v10000, %v10256
    %v10321 = vadd.f32 %v10001, %v10257
    %v10322 = vadd.f32 %v10002, %v10258
    %v10323 = vadd.f32 %v10003, %v10259
    %v10324 = vadd.f32 %v10004, %v10260
    %v10325 = vadd.f32 %v10005, %v10261
    %v10326 = vadd.f32 %v10006, %v10262
    %v10327 = vadd.f32 %v10007, %v10263
    %v10328 = vadd.f32 %v10008, %v10264
    %v10329 = vadd.f32 %v10009, %v10265
    %v10330 = vadd.f32 %v10010, %v10266
    %v10331 = vadd.f32 %v10011, %v10267
    %v10332 = vadd.f32 %v10012, %v10268
    %v10333 = vadd.f32 %v10013, %v10269
    %v10334 = vadd.f32 %v10014, %v10270
    %v10335 = vadd.f32 %v10015, %v10271
    %v10336 = vadd.f32 %v10016, %v10272
    %v10337 = vadd.f32 %v10017, %v10273
    %v10338 = vadd.f32 %v10018, %v10274
    %v10339 = vadd.f32 %v10019, %v10275
    %v10340 = vadd.f32 %v10020, %v10276
    %v10341 = vadd.f32 %v10021, %v10277
    %v10342 = vadd.f32 %v10022, %v10278
    %v10343 = vadd.f32 %v10023, %v10279
    %v10344 = vadd.f32 %v10024, %v10280
    %v10345 = vadd.f32 %v10025, %v10281
    %v10346 = vadd.f32 %v10026, %v10282
    %v10347 = vadd.f32 %v10027, %v10283
    %v10348 = vadd.f32 %v10028, %v10284
    %v10349 = vadd.f32 %v10029, %v10285
    %v10350 = vadd.f32 %v10030, %v10286
    %v10351 = vadd.f32 %v10031, %v10287
    %v10352 = vadd.f32 %v10032, %v10288
    %v10353 = vadd.f32 %v10033, %v10289
    %v10354 = vadd.f32 %v10034, %v10290
    %v10355 = vadd.f32 %v10035, %v10291
    %v10356 = vadd.f32 %v10036, %v10292
    %v10357 = vadd.f32 %v10037, %v10293
    %v10358 = vadd.f32 %v10038, %v10294
    %v10359 = vadd.f32 %v10039, %v10295
    %v10360 = vadd.f32 %v10040, %v10296
    %v10361 = vadd.f32 %v10041, %v10297
    %v10362 = vadd.f32 %v10042, %v10298
    %v10363 = vadd.f32 %v10043, %v10299
    %v10364 = vadd.f32 %v10044, %v10300
    %v10365 = vadd.f32 %v10045, %v10301
    %v10366 = vmul.f32 %v10302, 0.7978846
    %v10367 = vmul.f32 %v10303, 0.7978846
    %v10368 = vmul.f32 %v10304, 0.7978846
    %v10369 = vmul.f32 %v10305, 0.7978846
    %v10370 = vmul.f32 %v10306, 0.7978846
    %v10371 = vmul.f32 %v10307, 0.7978846
    %v10372 = vmul.f32 %v10308, 0.7978846
    %v10373 = vmul.f32 %v10309, 0.7978846
    %v10374 = vmul.f32 %v10310, 0.7978846
    %v10375 = vmul.f32 %v10311, 0.7978846
    %v10376 = vmul.f32 %v10312, 0.7978846
    %v10377 = vmul.f32 %v10313, 0.7978846
    %v10378 = vmul.f32 %v10314, 0.7978846
    %v10379 = vmul.f32 %v10315, 0.7978846
    %v10380 = vmul.f32 %v10316, 0.7978846
    %v10381 = vmul.f32 %v10317, 0.7978846
    %v10382 = vmul.f32 %v10318, 0.7978846
    %v10383 = vmul.f32 %v10319, 0.7978846
    %v10384 = vmul.f32 %v10320, 0.7978846
    %v10385 = vmul.f32 %v10321, 0.7978846
    %v10386 = vmul.f32 %v10322, 0.7978846
    %v10387 = vmul.f32 %v10323, 0.7978846
    %v10388 = vmul.f32 %v10324, 0.7978846
    %v10389 = vmul.f32 %v10325, 0.7978846
    %v10390 = vmul.f32 %v10326, 0.7978846
    %v10391 = vmul.f32 %v10327, 0.7978846
    %v10392 = vmul.f32 %v10328, 0.7978846
    %v10393 = vmul.f32 %v10329, 0.7978846
    %v10394 = vmul.f32 %v10330, 0.7978846
    %v10395 = vmul.f32 %v10331, 0.7978846
    %v10396 = vmul.f32 %v10332, 0.7978846
    %v10397 = vmul.f32 %v10333, 0.7978846
    %v10398 = vmul.f32 %v10334, 0.7978846
    %v10399 = vmul.f32 %v10335, 0.7978846
    %v10400 = vmul.f32 %v10336, 0.7978846
    %v10401 = vmul.f32 %v10337, 0.7978846
    %v10402 = vmul.f32 %v10338, 0.7978846
    %v10403 = vmul.f32 %v10339, 0.7978846
    %v10404 = vmul.f32 %v10340, 0.7978846
    %v10405 = vmul.f32 %v10341, 0.7978846
    %v10406 = vmul.f32 %v10342, 0.7978846
    %v10407 = vmul.f32 %v10343, 0.7978846
    %v10408 = vmul.f32 %v10344, 0.7978846
    %v10409 = vmul.f32 %v10345, 0.7978846
    %v10410 = vmul.f32 %v10346, 0.7978846
    %v10411 = vmul.f32 %v10347, 0.7978846
    %v10412 = vmul.f32 %v10348, 0.7978846
    %v10413 = vmul.f32 %v10349, 0.7978846
    %v10414 = vmul.f32 %v10350, 0.7978846
    %v10415 = vmul.f32 %v10351, 0.7978846
    %v10416 = vmul.f32 %v10352, 0.7978846
    %v10417 = vmul.f32 %v10353, 0.7978846
    %v10418 = vmul.f32 %v10354, 0.7978846
    %v10419 = vmul.f32 %v10355, 0.7978846
    %v10420 = vmul.f32 %v10356, 0.7978846
    %v10421 = vmul.f32 %v10357, 0.7978846
    %v10422 = vmul.f32 %v10358, 0.7978846
    %v10423 = vmul.f32 %v10359, 0.7978846
    %v10424 = vmul.f32 %v10360, 0.7978846
    %v10425 = vmul.f32 %v10361, 0.7978846
    %v10426 = vmul.f32 %v10362, 0.7978846
    %v10427 = vmul.f32 %v10363, 0.7978846
    %v10428 = vmul.f32 %v10364, 0.7978846
    %v10429 = vmul.f32 %v10365, 0.7978846
    %v10430 = vtanh.pop %v10366
    %v10431 = vtanh.pop %v10367
    %v10432 = vtanh.pop %v10368
    %v10433 = vtanh.pop %v10369
    %v10434 = vtanh.pop %v10370
    %v10435 = vtanh.pop %v10371
    %v10436 = vtanh.pop %v10372
    %v10437 = vtanh.pop %v10373
    %v10438 = vtanh.pop %v10374
    %v10439 = vtanh.pop %v10375
    %v10440 = vtanh.pop %v10376
    %v10441 = vtanh.pop %v10377
    %v10442 = vtanh.pop %v10378
    %v10443 = vtanh.pop %v10379
    %v10444 = vtanh.pop %v10380
    %v10445 = vtanh.pop %v10381
    %v10446 = vtanh.pop %v10382
    %v10447 = vtanh.pop %v10383
    %v10448 = vtanh.pop %v10384
    %v10449 = vtanh.pop %v10385
    %v10450 = vtanh.pop %v10386
    %v10451 = vtanh.pop %v10387
    %v10452 = vtanh.pop %v10388
    %v10453 = vtanh.pop %v10389
    %v10454 = vtanh.pop %v10390
    %v10455 = vtanh.pop %v10391
    %v10456 = vtanh.pop %v10392
    %v10457 = vtanh.pop %v10393
    %v10458 = vtanh.pop %v10394
    %v10459 = vtanh.pop %v10395
    %v10460 = vtanh.pop %v10396
    %v10461 = vtanh.pop %v10397
    %v10462 = vtanh.pop %v10398
    %v10463 = vtanh.pop %v10399
    %v10464 = vtanh.pop %v10400
    %v10465 = vtanh.pop %v10401
    %v10466 = vtanh.pop %v10402
    %v10467 = vtanh.pop %v10403
    %v10468 = vtanh.pop %v10404
    %v10469 = vtanh.pop %v10405
    %v10470 = vtanh.pop %v10406
    %v10471 = vtanh.pop %v10407
    %v10472 = vtanh.pop %v10408
    %v10473 = vtanh.pop %v10409
    %v10474 = vtanh.pop %v10410
    %v10475 = vtanh.pop %v10411
    %v10476 = vtanh.pop %v10412
    %v10477 = vtanh.pop %v10413
    %v10478 = vtanh.pop %v10414
    %v10479 = vtanh.pop %v10415
    %v10480 = vtanh.pop %v10416
    %v10481 = vtanh.pop %v10417
    %v10482 = vtanh.pop %v10418
    %v10483 = vtanh.pop %v10419
    %v10484 = vtanh.pop %v10420
    %v10485 = vtanh.pop %v10421
    %v10486 = vtanh.pop %v10422
    %v10487 = vtanh.pop %v10423
    %v10488 = vtanh.pop %v10424
    %v10489 = vtanh.pop %v10425
    %v10490 = vtanh.pop %v10426
    %v10491 = vtanh.pop %v10427
    %v10492 = vtanh.pop %v10428
    %v10493 = vtanh.pop %v10429
    %v10494 = vadd.f32 %v10430, 1.0
    %v10495 = vadd.f32 %v10431, 1.0
    %v10496 = vadd.f32 %v10432, 1.0
    %v10497 = vadd.f32 %v10433, 1.0
    %v10498 = vadd.f32 %v10434, 1.0
    %v10499 = vadd.f32 %v10435, 1.0
    %v10500 = vadd.f32 %v10436, 1.0
    %v10501 = vadd.f32 %v10437, 1.0
    %v10502 = vadd.f32 %v10438, 1.0
    %v10503 = vadd.f32 %v10439, 1.0
    %v10504 = vadd.f32 %v10440, 1.0
    %v10505 = vadd.f32 %v10441, 1.0
    %v10506 = vadd.f32 %v10442, 1.0
    %v10507 = vadd.f32 %v10443, 1.0
    %v10508 = vadd.f32 %v10444, 1.0
    %v10509 = vadd.f32 %v10445, 1.0
    %v10510 = vadd.f32 %v10446, 1.0
    %v10511 = vadd.f32 %v10447, 1.0
    %v10512 = vadd.f32 %v10448, 1.0
    %v10513 = vadd.f32 %v10449, 1.0
    %v10514 = vadd.f32 %v10450, 1.0
    %v10515 = vadd.f32 %v10451, 1.0
    %v10516 = vadd.f32 %v10452, 1.0
    %v10517 = vadd.f32 %v10453, 1.0
    %v10518 = vadd.f32 %v10454, 1.0
    %v10519 = vadd.f32 %v10455, 1.0
    %v10520 = vadd.f32 %v10456, 1.0
    %v10521 = vadd.f32 %v10457, 1.0
    %v10522 = vadd.f32 %v10458, 1.0
    %v10523 = vadd.f32 %v10459, 1.0
    %v10524 = vadd.f32 %v10460, 1.0
    %v10525 = vadd.f32 %v10461, 1.0
    %v10526 = vadd.f32 %v10462, 1.0
    %v10527 = vadd.f32 %v10463, 1.0
    %v10528 = vadd.f32 %v10464, 1.0
    %v10529 = vadd.f32 %v10465, 1.0
    %v10530 = vadd.f32 %v10466, 1.0
    %v10531 = vadd.f32 %v10467, 1.0
    %v10532 = vadd.f32 %v10468, 1.0
    %v10533 = vadd.f32 %v10469, 1.0
    %v10534 = vadd.f32 %v10470, 1.0
    %v10535 = vadd.f32 %v10471, 1.0
    %v10536 = vadd.f32 %v10472, 1.0
    %v10537 = vadd.f32 %v10473, 1.0
    %v10538 = vadd.f32 %v10474, 1.0
    %v10539 = vadd.f32 %v10475, 1.0
    %v10540 = vadd.f32 %v10476, 1.0
    %v10541 = vadd.f32 %v10477, 1.0
    %v10542 = vadd.f32 %v10478, 1.0
    %v10543 = vadd.f32 %v10479, 1.0
    %v10544 = vadd.f32 %v10480, 1.0
    %v10545 = vadd.f32 %v10481, 1.0
    %v10546 = vadd.f32 %v10482, 1.0
    %v10547 = vadd.f32 %v10483, 1.0
    %v10548 = vadd.f32 %v10484, 1.0
    %v10549 = vadd.f32 %v10485, 1.0
    %v10550 = vadd.f32 %v10486, 1.0
    %v10551 = vadd.f32 %v10487, 1.0
    %v10552 = vadd.f32 %v10488, 1.0
    %v10553 = vadd.f32 %v10489, 1.0
    %v10554 = vadd.f32 %v10490, 1.0
    %v10555 = vadd.f32 %v10491, 1.0
    %v10556 = vadd.f32 %v10492, 1.0
    %v10557 = vadd.f32 %v10493, 1.0
    %v10558 = vmul.f32 %v10046, %v10494
    %v10559 = vmul.f32 %v10047, %v10495
    %v10560 = vmul.f32 %v10048, %v10496
    %v10561 = vmul.f32 %v10049, %v10497
    %v10562 = vmul.f32 %v10050, %v10498
    %v10563 = vmul.f32 %v10051, %v10499
    %v10564 = vmul.f32 %v10052, %v10500
    %v10565 = vmul.f32 %v10053, %v10501
    %v10566 = vmul.f32 %v10054, %v10502
    %v10567 = vmul.f32 %v10055, %v10503
    %v10568 = vmul.f32 %v10056, %v10504
    %v10569 = vmul.f32 %v10057, %v10505
    %v10570 = vmul.f32 %v10058, %v10506
    %v10571 = vmul.f32 %v10059, %v10507
    %v10572 = vmul.f32 %v10060, %v10508
    %v10573 = vmul.f32 %v10061, %v10509
    %v10574 = vmul.f32 %v10062, %v10510
    %v10575 = vmul.f32 %v10063, %v10511
    %v10576 = vmul.f32 %v10064, %v10512
    %v10577 = vmul.f32 %v10065, %v10513
    %v10578 = vmul.f32 %v10066, %v10514
    %v10579 = vmul.f32 %v10067, %v10515
    %v10580 = vmul.f32 %v10068, %v10516
    %v10581 = vmul.f32 %v10069, %v10517
    %v10582 = vmul.f32 %v10070, %v10518
    %v10583 = vmul.f32 %v10071, %v10519
    %v10584 = vmul.f32 %v10072, %v10520
    %v10585 = vmul.f32 %v10073, %v10521
    %v10586 = vmul.f32 %v10074, %v10522
    %v10587 = vmul.f32 %v10075, %v10523
    %v10588 = vmul.f32 %v10076, %v10524
    %v10589 = vmul.f32 %v10077, %v10525
    %v10590 = vmul.f32 %v10078, %v10526
    %v10591 = vmul.f32 %v10079, %v10527
    %v10592 = vmul.f32 %v10080, %v10528
    %v10593 = vmul.f32 %v10081, %v10529
    %v10594 = vmul.f32 %v10082, %v10530
    %v10595 = vmul.f32 %v10083, %v10531
    %v10596 = vmul.f32 %v10084, %v10532
    %v10597 = vmul.f32 %v10085, %v10533
    %v10598 = vmul.f32 %v10086, %v10534
    %v10599 = vmul.f32 %v10087, %v10535
    %v10600 = vmul.f32 %v10088, %v10536
    %v10601 = vmul.f32 %v10089, %v10537
    %v10602 = vmul.f32 %v10090, %v10538
    %v10603 = vmul.f32 %v10091, %v10539
    %v10604 = vmul.f32 %v10092, %v10540
    %v10605 = vmul.f32 %v10093, %v10541
    %v10606 = vmul.f32 %v10094, %v10542
    %v10607 = vmul.f32 %v10095, %v10543
    %v10608 = vmul.f32 %v10096, %v10544
    %v10609 = vmul.f32 %v10097, %v10545
    %v10610 = vmul.f32 %v10098, %v10546
    %v10611 = vmul.f32 %v10099, %v10547
    %v10612 = vmul.f32 %v10100, %v10548
    %v10613 = vmul.f32 %v10101, %v10549
    %v10614 = vmul.f32 %v10102, %v10550
    %v10615 = vmul.f32 %v10103, %v10551
    %v10616 = vmul.f32 %v10104, %v10552
    %v10617 = vmul.f32 %v10105, %v10553
    %v10618 = vmul.f32 %v10106, %v10554
    %v10619 = vmul.f32 %v10107, %v10555
    %v10620 = vmul.f32 %v10108, %v10556
    %v10621 = vmul.f32 %v10109, %v10557
    %v10622 = vld [vmem:[%s25] sm:$0xf]
    %v10623 = vpack.c.bf16 %v10574, %v10558
    %v10624 = vpack.c.bf16 %v10575, %v10559
    %v10625 = vpack.c.bf16 %v10576, %v10560
    %v10626 = vpack.c.bf16 %v10577, %v10561
    %v10627 = vpack.c.bf16 %v10578, %v10562
    %v10628 = vpack.c.bf16 %v10579, %v10563
    %v10629 = vpack.c.bf16 %v10580, %v10564
    %v10630 = vpack.c.bf16 %v10581, %v10565
    %v10631 = vpack.c.bf16 %v10582, %v10566
    %v10632 = vpack.c.bf16 %v10583, %v10567
    %v10633 = vpack.c.bf16 %v10584, %v10568
    %v10634 = vpack.c.bf16 %v10585, %v10569
    %v10635 = vpack.c.bf16 %v10586, %v10570
    %v10636 = vpack.c.bf16 %v10587, %v10571
    %v10637 = vpack.c.bf16 %v10588, %v10572
    %v10638 = vpack.c.bf16 %v10589, %v10573
    %v10639 = vpack.c.bf16 %v10606, %v10590
    %v10640 = vpack.c.bf16 %v10607, %v10591
    %v10641 = vpack.c.bf16 %v10608, %v10592
    %v10642 = vpack.c.bf16 %v10609, %v10593
    %v10643 = vpack.c.bf16 %v10610, %v10594
    %v10644 = vpack.c.bf16 %v10611, %v10595
    %v10645 = vpack.c.bf16 %v10612, %v10596
    %v10646 = vpack.c.bf16 %v10613, %v10597
    %v10647 = vpack.c.bf16 %v10614, %v10598
    %v10648 = vpack.c.bf16 %v10615, %v10599
    %v10649 = vpack.c.bf16 %v10616, %v10600
    %v10650 = vpack.c.bf16 %v10617, %v10601
    %v10651 = vpack.c.bf16 %v10618, %v10602
    %v10652 = vpack.c.bf16 %v10619, %v10603
    %v10653 = vpack.c.bf16 %v10620, %v10604
    %v10654 = vpack.c.bf16 %v10621, %v10605
    %v10655 = vld [vmem:[%s26] sm:$0xff]
    %10657 = vset.pattern.permute.xlu0 0
    %10658 = vperm.xlu0 %10657, %v10655
    %v10659 = vpop.permute.xlu0 %10658
    %vm10661 = vcmask 261120
    %v10663 = vsel %vm10661, %v10622, 0
    %10665 = vmatpush.bf16.msra.mxu0 0
    %10666 = vmatpush.bf16.msra.mxu0 0
    %10667 = vmatpush.bf16.msra.mxu0 0
    %10668 = vmatpush.bf16.msra.mxu0 0
    %10669 = vmatpush.bf16.msra.mxu0 0
    %10670 = vmatpush.bf16.msra.mxu0 0
    %10671 = vmatpush.bf16.msra.mxu0 %v10639
    %10672 = vmatpush.bf16.msra.mxu0 %v10623
    %10673 = vmatmul.bf16.gmra.mxu0 %v10663
    %v10674 = vpop.f32.mrf.mxu0
    %v10675 = vadd.f32 %v10659, %v10674
    %v10676 = vpop.f32.mrf.mxu0
    %10677 = vdwg.mxu0
    %10678 = vmatpush.bf16.msra.mxu0 0
    %10679 = vmatpush.bf16.msra.mxu0 0
    %10680 = vmatpush.bf16.msra.mxu0 0
    %10681 = vmatpush.bf16.msra.mxu0 0
    %10682 = vmatpush.bf16.msra.mxu0 0
    %10683 = vmatpush.bf16.msra.mxu0 0
    %10684 = vmatpush.bf16.msra.mxu0 %v10640
    %10685 = vmatpush.bf16.msra.mxu0 %v10624
    %10686 = vmatmul.bf16.gmra.mxu0 %v10663
    %v10687 = vpop.f32.mrf.mxu0
    %v10688 = vadd.f32 %v10659, %v10687
    %v10689 = vpop.f32.mrf.mxu0
    %10690 = vdwg.mxu0
    %10691 = vmatpush.bf16.msra.mxu0 0
    %10692 = vmatpush.bf16.msra.mxu0 0
    %10693 = vmatpush.bf16.msra.mxu0 0
    %10694 = vmatpush.bf16.msra.mxu0 0
    %10695 = vmatpush.bf16.msra.mxu0 0
    %10696 = vmatpush.bf16.msra.mxu0 0
    %10697 = vmatpush.bf16.msra.mxu0 %v10641
    %10698 = vmatpush.bf16.msra.mxu0 %v10625
    %10699 = vmatmul.bf16.gmra.mxu0 %v10663
    %v10700 = vpop.f32.mrf.mxu0
    %v10701 = vadd.f32 %v10659, %v10700
    %v10702 = vpop.f32.mrf.mxu0
    %10703 = vdwg.mxu0
    %10704 = vmatpush.bf16.msra.mxu0 0
    %10705 = vmatpush.bf16.msra.mxu0 0
    %10706 = vmatpush.bf16.msra.mxu0 0
    %10707 = vmatpush.bf16.msra.mxu0 0
    %10708 = vmatpush.bf16.msra.mxu0 0
    %10709 = vmatpush.bf16.msra.mxu0 0
    %10710 = vmatpush.bf16.msra.mxu0 %v10642
    %10711 = vmatpush.bf16.msra.mxu0 %v10626
    %10712 = vmatmul.bf16.gmra.mxu0 %v10663
    %v10713 = vpop.f32.mrf.mxu0
    %v10714 = vadd.f32 %v10659, %v10713
    %v10715 = vpop.f32.mrf.mxu0
    %10716 = vdwg.mxu0
    %10717 = vmatpush.bf16.msra.mxu0 0
    %10718 = vmatpush.bf16.msra.mxu0 0
    %10719 = vmatpush.bf16.msra.mxu0 0
    %10720 = vmatpush.bf16.msra.mxu0 0
    %10721 = vmatpush.bf16.msra.mxu0 0
    %10722 = vmatpush.bf16.msra.mxu0 0
    %10723 = vmatpush.bf16.msra.mxu0 %v10643
    %10724 = vmatpush.bf16.msra.mxu0 %v10627
    %10725 = vmatmul.bf16.gmra.mxu0 %v10663
    %v10726 = vpop.f32.mrf.mxu0
    %v10727 = vadd.f32 %v10659, %v10726
    %v10728 = vpop.f32.mrf.mxu0
    %10729 = vdwg.mxu0
    %10730 = vmatpush.bf16.msra.mxu0 0
    %10731 = vmatpush.bf16.msra.mxu0 0
    %10732 = vmatpush.bf16.msra.mxu0 0
    %10733 = vmatpush.bf16.msra.mxu0 0
    %10734 = vmatpush.bf16.msra.mxu0 0
    %10735 = vmatpush.bf16.msra.mxu0 0
    %10736 = vmatpush.bf16.msra.mxu0 %v10644
    %10737 = vmatpush.bf16.msra.mxu0 %v10628
    %10738 = vmatmul.bf16.gmra.mxu0 %v10663
    %v10739 = vpop.f32.mrf.mxu0
    %v10740 = vadd.f32 %v10659, %v10739
    %v10741 = vpop.f32.mrf.mxu0
    %10742 = vdwg.mxu0
    %10743 = vmatpush.bf16.msra.mxu0 0
    %10744 = vmatpush.bf16.msra.mxu0 0
    %10745 = vmatpush.bf16.msra.mxu0 0
    %10746 = vmatpush.bf16.msra.mxu0 0
    %10747 = vmatpush.bf16.msra.mxu0 0
    %10748 = vmatpush.bf16.msra.mxu0 0
    %10749 = vmatpush.bf16.msra.mxu0 %v10645
    %10750 = vmatpush.bf16.msra.mxu0 %v10629
    %10751 = vmatmul.bf16.gmra.mxu0 %v10663
    %v10752 = vpop.f32.mrf.mxu0
    %v10753 = vadd.f32 %v10659, %v10752
    %v10754 = vpop.f32.mrf.mxu0
    %10755 = vdwg.mxu0
    %10756 = vmatpush.bf16.msra.mxu0 0
    %10757 = vmatpush.bf16.msra.mxu0 0
    %10758 = vmatpush.bf16.msra.mxu0 0
    %10759 = vmatpush.bf16.msra.mxu0 0
    %10760 = vmatpush.bf16.msra.mxu0 0
    %10761 = vmatpush.bf16.msra.mxu0 0
    %10762 = vmatpush.bf16.msra.mxu0 %v10646
    %10763 = vmatpush.bf16.msra.mxu0 %v10630
    %10764 = vmatmul.bf16.gmra.mxu0 %v10663
    %v10765 = vpop.f32.mrf.mxu0
    %v10766 = vadd.f32 %v10659, %v10765
    %v10767 = vpop.f32.mrf.mxu0
    %10768 = vdwg.mxu0
    %10769 = vmatpush.bf16.msra.mxu0 0
    %10770 = vmatpush.bf16.msra.mxu0 0
    %10771 = vmatpush.bf16.msra.mxu0 0
    %10772 = vmatpush.bf16.msra.mxu0 0
    %10773 = vmatpush.bf16.msra.mxu0 0
    %10774 = vmatpush.bf16.msra.mxu0 0
    %10775 = vmatpush.bf16.msra.mxu0 %v10647
    %10776 = vmatpush.bf16.msra.mxu0 %v10631
    %10777 = vmatmul.bf16.gmra.mxu0 %v10663
    %v10778 = vpop.f32.mrf.mxu0
    %v10779 = vadd.f32 %v10659, %v10778
    %v10780 = vpop.f32.mrf.mxu0
    %10781 = vdwg.mxu0
    %10782 = vmatpush.bf16.msra.mxu0 0
    %10783 = vmatpush.bf16.msra.mxu0 0
    %10784 = vmatpush.bf16.msra.mxu0 0
    %10785 = vmatpush.bf16.msra.mxu0 0
    %10786 = vmatpush.bf16.msra.mxu0 0
    %10787 = vmatpush.bf16.msra.mxu0 0
    %10788 = vmatpush.bf16.msra.mxu0 %v10648
    %10789 = vmatpush.bf16.msra.mxu0 %v10632
    %10790 = vmatmul.bf16.gmra.mxu0 %v10663
    %v10791 = vpop.f32.mrf.mxu0
    %v10792 = vadd.f32 %v10659, %v10791
    %v10793 = vpop.f32.mrf.mxu0
    %10794 = vdwg.mxu0
    %10795 = vmatpush.bf16.msra.mxu0 0
    %10796 = vmatpush.bf16.msra.mxu0 0
    %10797 = vmatpush.bf16.msra.mxu0 0
    %10798 = vmatpush.bf16.msra.mxu0 0
    %10799 = vmatpush.bf16.msra.mxu0 0
    %10800 = vmatpush.bf16.msra.mxu0 0
    %10801 = vmatpush.bf16.msra.mxu0 %v10649
    %10802 = vmatpush.bf16.msra.mxu0 %v10633
    %10803 = vmatmul.bf16.gmra.mxu0 %v10663
    %v10804 = vpop.f32.mrf.mxu0
    %v10805 = vadd.f32 %v10659, %v10804
    %v10806 = vpop.f32.mrf.mxu0
    %10807 = vdwg.mxu0
    %10808 = vmatpush.bf16.msra.mxu0 0
    %10809 = vmatpush.bf16.msra.mxu0 0
    %10810 = vmatpush.bf16.msra.mxu0 0
    %10811 = vmatpush.bf16.msra.mxu0 0
    %10812 = vmatpush.bf16.msra.mxu0 0
    %10813 = vmatpush.bf16.msra.mxu0 0
    %10814 = vmatpush.bf16.msra.mxu0 %v10650
    %10815 = vmatpush.bf16.msra.mxu0 %v10634
    %10816 = vmatmul.bf16.gmra.mxu0 %v10663
    %v10817 = vpop.f32.mrf.mxu0
    %v10818 = vadd.f32 %v10659, %v10817
    %v10819 = vpop.f32.mrf.mxu0
    %10820 = vdwg.mxu0
    %10821 = vmatpush.bf16.msra.mxu0 0
    %10822 = vmatpush.bf16.msra.mxu0 0
    %10823 = vmatpush.bf16.msra.mxu0 0
    %10824 = vmatpush.bf16.msra.mxu0 0
    %10825 = vmatpush.bf16.msra.mxu0 0
    %10826 = vmatpush.bf16.msra.mxu0 0
    %10827 = vmatpush.bf16.msra.mxu0 %v10651
    %10828 = vmatpush.bf16.msra.mxu0 %v10635
    %10829 = vmatmul.bf16.gmra.mxu0 %v10663
    %v10830 = vpop.f32.mrf.mxu0
    %v10831 = vadd.f32 %v10659, %v10830
    %v10832 = vpop.f32.mrf.mxu0
    %10833 = vdwg.mxu0
    %10834 = vmatpush.bf16.msra.mxu0 0
    %10835 = vmatpush.bf16.msra.mxu0 0
    %10836 = vmatpush.bf16.msra.mxu0 0
    %10837 = vmatpush.bf16.msra.mxu0 0
    %10838 = vmatpush.bf16.msra.mxu0 0
    %10839 = vmatpush.bf16.msra.mxu0 0
    %10840 = vmatpush.bf16.msra.mxu0 %v10652
    %10841 = vmatpush.bf16.msra.mxu0 %v10636
    %10842 = vmatmul.bf16.gmra.mxu0 %v10663
    %v10843 = vpop.f32.mrf.mxu0
    %v10844 = vadd.f32 %v10659, %v10843
    %v10845 = vpop.f32.mrf.mxu0
    %10846 = vdwg.mxu0
    %10847 = vmatpush.bf16.msra.mxu0 0
    %10848 = vmatpush.bf16.msra.mxu0 0
    %10849 = vmatpush.bf16.msra.mxu0 0
    %10850 = vmatpush.bf16.msra.mxu0 0
    %10851 = vmatpush.bf16.msra.mxu0 0
    %10852 = vmatpush.bf16.msra.mxu0 0
    %10853 = vmatpush.bf16.msra.mxu0 %v10653
    %10854 = vmatpush.bf16.msra.mxu0 %v10637
    %10855 = vmatmul.bf16.gmra.mxu0 %v10663
    %v10856 = vpop.f32.mrf.mxu0
    %v10857 = vadd.f32 %v10659, %v10856
    %v10858 = vpop.f32.mrf.mxu0
    %10859 = vdwg.mxu0
    %10860 = vmatpush.bf16.msra.mxu0 0
    %10861 = vmatpush.bf16.msra.mxu0 0
    %10862 = vmatpush.bf16.msra.mxu0 0
    %10863 = vmatpush.bf16.msra.mxu0 0
    %10864 = vmatpush.bf16.msra.mxu0 0
    %10865 = vmatpush.bf16.msra.mxu0 0
    %10866 = vmatpush.bf16.msra.mxu0 %v10654
    %10867 = vmatpush.bf16.msra.mxu0 %v10638
    %10868 = vmatmul.bf16.gmra.mxu0 %v10663
    %v10869 = vpop.f32.mrf.mxu0
    %v10870 = vadd.f32 %v10659, %v10869
    %v10871 = vpop.f32.mrf.mxu0
    %10872 = vdwg.mxu0
    %v10873 = vadd.f32 %v6912, %v10675
    %v10874 = vadd.f32 %v6913, %v10688
    %v10875 = vadd.f32 %v6914, %v10701
    %v10876 = vadd.f32 %v6915, %v10714
    %v10877 = vadd.f32 %v6916, %v10727
    %v10878 = vadd.f32 %v6917, %v10740
    %v10879 = vadd.f32 %v6918, %v10753
    %v10880 = vadd.f32 %v6919, %v10766
    %v10881 = vadd.f32 %v6920, %v10779
    %v10882 = vadd.f32 %v6921, %v10792
    %v10883 = vadd.f32 %v6922, %v10805
    %v10884 = vadd.f32 %v6923, %v10818
    %v10885 = vadd.f32 %v6924, %v10831
    %v10886 = vadd.f32 %v6925, %v10844
    %v10887 = vadd.f32 %v6926, %v10857
    %v10888 = vadd.f32 %v6927, %v10870
    %v10889 = vadd.f32 %v183, %v10873
    %v10890 = vadd.f32 %v184, %v10874
    %v10891 = vadd.f32 %v185, %v10875
    %v10892 = vadd.f32 %v186, %v10876
    %v10893 = vadd.f32 %v187, %v10877
    %v10894 = vadd.f32 %v188, %v10878
    %v10895 = vadd.f32 %v189, %v10879
    %v10896 = vadd.f32 %v190, %v10880
    %v10897 = vadd.f32 %v191, %v10881
    %v10898 = vadd.f32 %v192, %v10882
    %v10899 = vadd.f32 %v193, %v10883
    %v10900 = vadd.f32 %v194, %v10884
    %v10901 = vadd.f32 %v195, %v10885
    %v10902 = vadd.f32 %v196, %v10886
    %v10903 = vadd.f32 %v197, %v10887
    %v10904 = vadd.f32 %v198, %v10888
    %10905 = vst [vmem:[#allocation14] sm:$0xff] %v10889
    %10906 = vst [vmem:[#allocation14 + $0x8] sm:$0xff] %v10890
    %10907 = vst [vmem:[#allocation14 + $0x10] sm:$0xff] %v10891
    %10908 = vst [vmem:[#allocation14 + $0x18] sm:$0xff] %v10892
    %10909 = vst [vmem:[#allocation14 + $0x20] sm:$0xff] %v10893
    %10910 = vst [vmem:[#allocation14 + $0x28] sm:$0xff] %v10894
    %10911 = vst [vmem:[#allocation14 + $0x30] sm:$0xff] %v10895
    %10912 = vst [vmem:[#allocation14 + $0x38] sm:$0xff] %v10896
    %10913 = vst [vmem:[#allocation14 + $0x40] sm:$0xff] %v10897
    %10914 = vst [vmem:[#allocation14 + $0x48] sm:$0xff] %v10898
    %10915 = vst [vmem:[#allocation14 + $0x50] sm:$0xff] %v10899
    %10916 = vst [vmem:[#allocation14 + $0x58] sm:$0xff] %v10900
    %10917 = vst [vmem:[#allocation14 + $0x60] sm:$0xff] %v10901
    %10918 = vst [vmem:[#allocation14 + $0x68] sm:$0xff] %v10902
    %10919 = vst [vmem:[#allocation14 + $0x70] sm:$0xff] %v10903
    %10920 = vst [vmem:[#allocation14 + $0x78] sm:$0xff] %v10904
    // Predicated region
    $region138: #{tpu_custom_call.1} parent=1 // pred_check
      _
    $region139: #{tpu_custom_call.1} parent=1 // pred_check_branch
      %10922 = sbr.rel (0) target = $region141
    $region140: #{tpu_custom_call.1} parent=1 // pred_region
      %10924 = vsyncadd [#allocation4], 0
      %s10926 = sshll.u32 [#allocation14], 4
      %s10927 = int_to_ptr.vmem [resolvable:$true] %s10926
      %s10928 = sshll.u32 %s27, 4
      %s10929 = int_to_ptr.hbm [resolvable:$true] %s10928
      %10931 = dma.vmem_to_hbm [thread:$0]  %s10927, 2048, %s10929, [#allocation4]
    $region141: #{tpu_custom_call.1} parent=1 // pred_fallthru
      _
    // Predicated region
    $region142: #{tpu_custom_call.1} parent=1 // pred_check
      _
    $region143: #{tpu_custom_call.1} parent=1 // pred_check_branch
      %10933 = sbr.rel (0) target = $region145
    $region144: #{tpu_custom_call.1} parent=1 // pred_region
      %10935 = dma.done [#allocation4], 2048
    $region145: #{tpu_custom_call.1} parent=1 // pred_fallthru
      _
    %10936 = vsyncpa [#allocation3], 1
    %10937 = vsyncpa [#allocation6], 1
    %10938 = vsyncpa [#allocation9], 1
    %10939 = vsyncpa [#allocation12], 1
    %10940 = vsyncpa [#allocation4], 1

</llo_original>
